<compile_context>
chip_gen: v5e
topology: v5e:2x2
jax: 0.10.0
libtpu: 0.0.40
codegen_flags: <defaults>
</compile_context>

<pallas_src>
import functools

import jax
import jax.numpy as jnp
from jax.experimental import pallas as pl
from jax.experimental.pallas import tpu as pltpu

EPS = 1e-5           # torch InstanceNorm2d default
LEAKY_SLOPE = 0.2
VMEM_LIMIT = 48 << 20   # < 64 MiB physical VMEM on v7x; safe on v5e/v6e too.

# (param name, stride, use_instance_norm) for conv_block1..4
BLOCKS = (("w1", 2, False), ("w2", 2, True), ("w3", 2, True), ("w4", 1, True))


# ---------------------------------------------------------------------------
# Kernels
# ---------------------------------------------------------------------------
def conv_in_lrelu_kernel(p_ref, w_ref, o_ref, *, norm):
    """Per sample(-tile): (M,K)@(K,Cout) conv-as-matmul + InstanceNorm + LeakyReLU."""
    # Single long-K MXU matmul, bf16 operands, f32 accumulation.
    y = jnp.dot(p_ref[0], w_ref[...], preferred_element_type=jnp.float32)  # (M, Cout)
    if norm:
        # One-pass InstanceNorm stats over the spatial axis (per sample, per channel).
        mean = jnp.mean(y, axis=0, keepdims=True)
        msq = jnp.mean(y * y, axis=0, keepdims=True)
        var = jnp.maximum(msq - mean * mean, 0.0)
        y = (y - mean) * jax.lax.rsqrt(var + EPS)
    y = jnp.where(y >= 0.0, y, LEAKY_SLOPE * y)          # LeakyReLU(0.2)
    o_ref[...] = y[None].astype(o_ref.dtype)


def head_kernel(p_ref, w_ref, b_ref, o_ref):
    """Final Conv2d(512, 1, k=4, bias=True) + spatial mean, per sample."""
    prod = p_ref[0].astype(jnp.float32) * w_ref[...]      # (M, K) * (1, K)
    y = jnp.sum(prod, axis=1, keepdims=True) + b_ref[...] # (M, 1)
    o_ref[...] = jnp.mean(y).reshape(1, 1, 1).astype(o_ref.dtype)


# ---------------------------------------------------------------------------
# Wrapper-side glue (im2col, weight layout)
# ---------------------------------------------------------------------------
def _im2col(x_nhwc, k, stride, pad):
    """(N,H,W,C) -> (N, Ho*Wo, k*k*C) zero-padded patches, plus (Ho, Wo)."""
    N, H, W, C = x_nhwc.shape
    Ho = (H + 2 * pad - k) // stride + 1
    Wo = (W + 2 * pad - k) // stride + 1
    xp = jnp.pad(x_nhwc, ((0, 0), (pad, pad), (pad, pad), (0, 0)))
    taps = []
    for dy in range(k):
        for dx in range(k):
            taps.append(xp[:, dy:dy + (Ho - 1) * stride + 1:stride,
                           dx:dx + (Wo - 1) * stride + 1:stride, :])
    patches = jnp.stack(taps, axis=3)                     # (N, Ho, Wo, k*k, C)
    return patches.reshape(N, Ho * Wo, k * k * C), Ho, Wo


def _w_to_matrix(w_oihw):
    """(Cout,Cin,kh,kw) -> (kh*kw*Cin, Cout), matching the im2col tap/channel order."""
    Cout, Cin, kh, kw = w_oihw.shape
    return jnp.transpose(w_oihw, (2, 3, 1, 0)).reshape(kh * kw * Cin, Cout)


# ---------------------------------------------------------------------------
# pallas_call wrappers
# ---------------------------------------------------------------------------
def _conv_block_call(patches, w_mat, *, norm, m_block=None):
    """patches: (N, M, K) bf16. w_mat: (K, Cout) bf16. Returns (N, M, Cout) bf16."""
    N, M, K = patches.shape
    Cout = w_mat.shape[1]
    # Spatial M-tiling is only legal when there is no InstanceNorm (no cross-tile
    # stats); it gives the pipeline more grid steps to hide weight/input DMAs.
    if norm or m_block is None or M % m_block != 0:
        m_block = M
    m_tiles = M // m_block
    kern = functools.partial(conv_in_lrelu_kernel, norm=norm)
    return pl.pallas_call(
        kern,
        out_shape=jax.ShapeDtypeStruct((N, M, Cout), jnp.bfloat16),
        grid_spec=pltpu.PrefetchScalarGridSpec(
            num_scalar_prefetch=0,
            grid=(N, m_tiles),
            in_specs=[pl.BlockSpec((1, m_block, K), lambda n, m: (n, m, 0)),
                      pl.BlockSpec((K, Cout), lambda n, m: (0, 0))],
            out_specs=pl.BlockSpec((1, m_block, Cout), lambda n, m: (n, m, 0)),
        ),
        compiler_params=pltpu.CompilerParams(
            dimension_semantics=("parallel", "parallel"),
            vmem_limit_bytes=VMEM_LIMIT,
        ),
    )(patches, w_mat)


def _head_call(patches, w_row, bias):
    """patches: (N, M, K) bf16. w_row: (1, K) f32. bias: (1, 1) f32. -> (N, 1) f32."""
    N, M, K = patches.shape
    out = pl.pallas_call(
        head_kernel,
        out_shape=jax.ShapeDtypeStruct((N, 1, 1), jnp.float32),
        grid_spec=pltpu.PrefetchScalarGridSpec(
            num_scalar_prefetch=0,
            grid=(N,),
            in_specs=[pl.BlockSpec((1, M, K), lambda n: (n, 0, 0)),
                      pl.BlockSpec((1, K), lambda n: (0, 0)),
                      pl.BlockSpec((1, 1), lambda n: (0, 0))],
            out_specs=pl.BlockSpec((1, 1, 1), lambda n: (n, 0, 0)),
        ),
        compiler_params=pltpu.CompilerParams(
            dimension_semantics=("parallel",),
            vmem_limit_bytes=VMEM_LIMIT,
        ),
    )(patches, w_row, bias)
    return out.reshape(N, 1)


# ---------------------------------------------------------------------------
# Full forward pass
# ---------------------------------------------------------------------------
def discriminator(x_nchw, params):
    """x_nchw: (N, 3, H, W) f32. params: dict of OIHW conv weights + final bias."""
    N = x_nchw.shape[0]
    h = jnp.transpose(x_nchw, (0, 2, 3, 1))               # NHWC
    for name, stride, norm in BLOCKS:
        w = params[name]
        Cout = w.shape[0]
        patches, Ho, Wo = _im2col(h, 4, stride, 1)
        out = _conv_block_call(
            patches.astype(jnp.bfloat16),
            _w_to_matrix(w).astype(jnp.bfloat16),
            norm=norm, m_block=128)
        h = out.reshape(N, Ho, Wo, Cout)                   # bf16 intermediates
    # Final Conv2d(512, 1, k=4, s=1, p=1, bias=True) + mean over spatial.
    patches, _, _ = _im2col(h, 4, 1, 1)
    w_row = _w_to_matrix(params["w5"]).reshape(1, -1).astype(jnp.float32)
    bias = params["b5"].reshape(1, 1).astype(jnp.float32)
    return _head_call(patches.astype(jnp.bfloat16), w_row, bias)


# ---------------------------------------------------------------------------
# Pure-JAX reference (same bf16 conv-operand precision as the kernels)
# ---------------------------------------------------------------------------
def _reference(x_nchw, params):
    def conv(x, w, stride):
        return jax.lax.conv_general_dilated(
            x.astype(jnp.bfloat16), w.astype(jnp.bfloat16),
            window_strides=(stride, stride), padding=((1, 1), (1, 1)),
            dimension_numbers=("NCHW", "OIHW", "NCHW"),
            preferred_element_type=jnp.float32)

    h = x_nchw
    for name, stride, norm in BLOCKS:
        y = conv(h, params[name], stride)
        if norm:
            mean = y.mean(axis=(2, 3), keepdims=True)
            var = ((y - mean) ** 2).mean(axis=(2, 3), keepdims=True)
            y = (y - mean) * jax.lax.rsqrt(var + EPS)
        h = jnp.where(y >= 0.0, y, LEAKY_SLOPE * y)
    y = conv(h, params["w5"], 1) + params["b5"].reshape(1, 1, 1, 1)
    return y.mean(axis=(2, 3))


if __name__ == "__main__":
    N, C, H, W = 2, 3, 32, 32
    key = jax.random.PRNGKey(0)
    keys = jax.random.split(key, 7)
    x = jax.random.normal(keys[0], (N, C, H, W), dtype=jnp.float32)

    def conv_w(k, cout, cin):
        # matches _init_weights: weight ~ N(0, 0.02), bias untouched
        return 0.02 * jax.random.normal(k, (cout, cin, 4, 4), dtype=jnp.float32)

    params = {
        "w1": conv_w(keys[1], 64, 3),
        "w2": conv_w(keys[2], 128, 64),
        "w3": conv_w(keys[3], 256, 128),
        "w4": conv_w(keys[4], 512, 256),
        "w5": conv_w(keys[5], 1, 512),
        "b5": 0.01 * jax.random.normal(keys[6], (1,), dtype=jnp.float32),
    }

    out = jax.jit(discriminator)(x, params)
    out = jax.block_until_ready(out)
    assert out.shape == (N, 1)

    ref = _reference(x, params)
    assert jnp.allclose(out, ref, atol=1e-2, rtol=1e-2), \
        f"mismatch vs JAX reference: {out} vs {ref}"

    print("KERNEL_OK")
</pallas_src>

<mosaic_0001>
module attributes {stable_mosaic.version = 11 : i64} {
  func.func @conv_in_lrelu_kernel(%arg0: i32, %arg1: i32, %arg2: memref<1x128x48xbf16, #tpu.memory_space<vmem>>, %arg3: memref<48x64xbf16, #tpu.memory_space<vmem>>, %arg4: memref<1x128x64xbf16, #tpu.memory_space<vmem>>) attributes {dimension_semantics = [#tpu.dimension_semantics<parallel>, #tpu.dimension_semantics<parallel>], iteration_bounds = array<i64: 2, 2>, scalar_prefetch = 0 : i64, scratch_operands = 0 : i64, tpu.core_type = #tpu.core_type<tc>, window_params = [{transform_indices = @transform_0, window_bounds = array<i64: 1, 128, 48>}, {pipeline_mode = #tpu.pipeline_mode<synchronous>, transform_indices = @transform_1, window_bounds = array<i64: 48, 64>}, {transform_indices = @transform_2, window_bounds = array<i64: 1, 128, 64>}]} {
    %c0 = arith.constant 0 : index
    %c0_0 = arith.constant 0 : index
    %c0_1 = arith.constant 0 : index
    %0 = vector.load %arg2[%c0, %c0_0, %c0_1] : memref<1x128x48xbf16, #tpu.memory_space<vmem>>, vector<1x128x48xbf16>
    %1 = vector.shape_cast %0 : vector<1x128x48xbf16> to vector<128x48xbf16>
    %c0_2 = arith.constant 0 : index
    %c0_3 = arith.constant 0 : index
    %2 = vector.load %arg3[%c0_2, %c0_3] : memref<48x64xbf16, #tpu.memory_space<vmem>>, vector<48x64xbf16>
    %cst = arith.constant dense<0.000000e+00> : vector<128x64xf32>
    %3 = tpu.matmul %1, %2, %cst {dimension_numbers = #tpu.dot_dimension_numbers<[1], [0], [0], [1], [0, 0, 1, 1], [], []>} : vector<128x48xbf16>, vector<48x64xbf16>, vector<128x64xf32> -> vector<128x64xf32>
    %cst_4 = arith.constant 0.000000e+00 : f32
    %4 = vector.broadcast %cst_4 : f32 to vector<128x64xf32>
    %5 = arith.cmpf oge, %3, %4 : vector<128x64xf32>
    %cst_5 = arith.constant 2.000000e-01 : f32
    %6 = vector.broadcast %cst_5 : f32 to vector<128x64xf32>
    %7 = arith.mulf %6, %3 : vector<128x64xf32>
    %8 = arith.select %5, %3, %7 : vector<128x64xi1>, vector<128x64xf32>
    %9 = vector.shape_cast %8 : vector<128x64xf32> to vector<1x128x64xf32>
    %10 = arith.truncf %9 : vector<1x128x64xf32> to vector<1x128x64xbf16>
    %c0_6 = arith.constant 0 : index
    %c0_7 = arith.constant 0 : index
    %c0_8 = arith.constant 0 : index
    %11 = vector.load %arg4[%c0_6, %c0_7, %c0_8] : memref<1x128x64xbf16, #tpu.memory_space<vmem>>, vector<1x128x64xbf16>
    tpu.vector_store %arg4[%c0_6, %c0_7, %c0_8], %10 {strides = array<i32>} : memref<1x128x64xbf16, #tpu.memory_space<vmem>>, vector<1x128x64xbf16>,
    return
  }
  func.func @transform_0(%arg0: i32, %arg1: i32) -> (i32, i32, i32) {
    %c0_i32 = arith.constant 0 : i32
    %c0_i32_0 = arith.constant 0 : i32
    return %arg0, %arg1, %c0_i32 : i32, i32, i32
  }
  func.func @transform_1(%arg0: i32, %arg1: i32) -> (i32, i32) {
    %c0_i32 = arith.constant 0 : i32
    %c0_i32_0 = arith.constant 0 : i32
    %c0_i32_1 = arith.constant 0 : i32
    return %c0_i32, %c0_i32_0 : i32, i32
  }
  func.func @transform_2(%arg0: i32, %arg1: i32) -> (i32, i32, i32) {
    %c0_i32 = arith.constant 0 : i32
    %c0_i32_0 = arith.constant 0 : i32
    return %arg0, %arg1, %c0_i32 : i32, i32, i32
  }
}

module attributes {stable_mosaic.version = 11 : i64} {
  func.func @conv_in_lrelu_kernel(%arg0: i32, %arg1: i32, %arg2: memref<1x64x1024xbf16, #tpu.memory_space<vmem>>, %arg3: memref<1024x128xbf16, #tpu.memory_space<vmem>>, %arg4: memref<1x64x128xbf16, #tpu.memory_space<vmem>>) attributes {dimension_semantics = [#tpu.dimension_semantics<parallel>, #tpu.dimension_semantics<parallel>], iteration_bounds = array<i64: 2, 1>, scalar_prefetch = 0 : i64, scratch_operands = 0 : i64, tpu.core_type = #tpu.core_type<tc>, window_params = [{transform_indices = @transform_0, window_bounds = array<i64: 1, 64, 1024>}, {pipeline_mode = #tpu.pipeline_mode<synchronous>, transform_indices = @transform_1, window_bounds = array<i64: 1024, 128>}, {transform_indices = @transform_2, window_bounds = array<i64: 1, 64, 128>}]} {
    %c0 = arith.constant 0 : index
    %c0_0 = arith.constant 0 : index
    %c0_1 = arith.constant 0 : index
    %0 = vector.load %arg2[%c0, %c0_0, %c0_1] : memref<1x64x1024xbf16, #tpu.memory_space<vmem>>, vector<1x64x1024xbf16>
    %1 = vector.shape_cast %0 : vector<1x64x1024xbf16> to vector<64x1024xbf16>
    %c0_2 = arith.constant 0 : index
    %c0_3 = arith.constant 0 : index
    %2 = vector.load %arg3[%c0_2, %c0_3] : memref<1024x128xbf16, #tpu.memory_space<vmem>>, vector<1024x128xbf16>
    %cst = arith.constant dense<0.000000e+00> : vector<64x128xf32>
    %3 = tpu.matmul %1, %2, %cst {dimension_numbers = #tpu.dot_dimension_numbers<[1], [0], [0], [1], [0, 0, 1, 1], [], []>} : vector<64x1024xbf16>, vector<1024x128xbf16>, vector<64x128xf32> -> vector<64x128xf32>
    %cst_4 = arith.constant dense<0.000000e+00> : vector<128xf32>
    %4 = vector.multi_reduction <add>, %3, %cst_4 [0] : vector<64x128xf32> to vector<128xf32>
    %5 = vector.shape_cast %4 : vector<128xf32> to vector<1x128xf32>
    %cst_5 = arith.constant 6.400000e+01 : f32
    %6 = vector.broadcast %cst_5 : f32 to vector<1x128xf32>
    %7 = arith.divf %5, %6 : vector<1x128xf32>
    %8 = arith.mulf %3, %3 : vector<64x128xf32>
    %cst_6 = arith.constant dense<0.000000e+00> : vector<128xf32>
    %9 = vector.multi_reduction <add>, %8, %cst_6 [0] : vector<64x128xf32> to vector<128xf32>
    %10 = vector.shape_cast %9 : vector<128xf32> to vector<1x128xf32>
    %cst_7 = arith.constant 6.400000e+01 : f32
    %11 = vector.broadcast %cst_7 : f32 to vector<1x128xf32>
    %12 = arith.divf %10, %11 : vector<1x128xf32>
    %13 = arith.mulf %7, %7 : vector<1x128xf32>
    %14 = arith.subf %12, %13 : vector<1x128xf32>
    %cst_8 = arith.constant 0.000000e+00 : f32
    %15 = vector.broadcast %cst_8 : f32 to vector<1x128xf32>
    %16 = arith.maximumf %14, %15 : vector<1x128xf32>
    %17 = vector.broadcast %7 : vector<1x128xf32> to vector<64x128xf32>
    %18 = arith.subf %3, %17 : vector<64x128xf32>
    %cst_9 = arith.constant 9.99999974E-6 : f32
    %19 = vector.broadcast %cst_9 : f32 to vector<1x128xf32>
    %20 = arith.addf %16, %19 : vector<1x128xf32>
    %21 = math.rsqrt %20 : vector<1x128xf32>
    %22 = vector.broadcast %21 : vector<1x128xf32> to vector<64x128xf32>
    %23 = arith.mulf %18, %22 : vector<64x128xf32>
    %cst_10 = arith.constant 0.000000e+00 : f32
    %24 = vector.broadcast %cst_10 : f32 to vector<64x128xf32>
    %25 = arith.cmpf oge, %23, %24 : vector<64x128xf32>
    %cst_11 = arith.constant 2.000000e-01 : f32
    %26 = vector.broadcast %cst_11 : f32 to vector<64x128xf32>
    %27 = arith.mulf %26, %23 : vector<64x128xf32>
    %28 = arith.select %25, %23, %27 : vector<64x128xi1>, vector<64x128xf32>
    %29 = vector.shape_cast %28 : vector<64x128xf32> to vector<1x64x128xf32>
    %30 = arith.truncf %29 : vector<1x64x128xf32> to vector<1x64x128xbf16>
    %c0_12 = arith.constant 0 : index
    %c0_13 = arith.constant 0 : index
    %c0_14 = arith.constant 0 : index
    %31 = vector.load %arg4[%c0_12, %c0_13, %c0_14] : memref<1x64x128xbf16, #tpu.memory_space<vmem>>, vector<1x64x128xbf16>
    tpu.vector_store %arg4[%c0_12, %c0_13, %c0_14], %30 {strides = array<i32>} : memref<1x64x128xbf16, #tpu.memory_space<vmem>>, vector<1x64x128xbf16>,
    return
  }
  func.func @transform_0(%arg0: i32, %arg1: i32) -> (i32, i32, i32) {
    %c0_i32 = arith.constant 0 : i32
    %c0_i32_0 = arith.constant 0 : i32
    return %arg0, %arg1, %c0_i32 : i32, i32, i32
  }
  func.func @transform_1(%arg0: i32, %arg1: i32) -> (i32, i32) {
    %c0_i32 = arith.constant 0 : i32
    %c0_i32_0 = arith.constant 0 : i32
    %c0_i32_1 = arith.constant 0 : i32
    return %c0_i32, %c0_i32_0 : i32, i32
  }
  func.func @transform_2(%arg0: i32, %arg1: i32) -> (i32, i32, i32) {
    %c0_i32 = arith.constant 0 : i32
    %c0_i32_0 = arith.constant 0 : i32
    return %arg0, %arg1, %c0_i32 : i32, i32, i32
  }
}

module attributes {stable_mosaic.version = 11 : i64} {
  func.func @conv_in_lrelu_kernel(%arg0: i32, %arg1: i32, %arg2: memref<1x16x2048xbf16, #tpu.memory_space<vmem>>, %arg3: memref<2048x256xbf16, #tpu.memory_space<vmem>>, %arg4: memref<1x16x256xbf16, #tpu.memory_space<vmem>>) attributes {dimension_semantics = [#tpu.dimension_semantics<parallel>, #tpu.dimension_semantics<parallel>], iteration_bounds = array<i64: 2, 1>, scalar_prefetch = 0 : i64, scratch_operands = 0 : i64, tpu.core_type = #tpu.core_type<tc>, window_params = [{transform_indices = @transform_0, window_bounds = array<i64: 1, 16, 2048>}, {pipeline_mode = #tpu.pipeline_mode<synchronous>, transform_indices = @transform_1, window_bounds = array<i64: 2048, 256>}, {transform_indices = @transform_2, window_bounds = array<i64: 1, 16, 256>}]} {
    %c0 = arith.constant 0 : index
    %c0_0 = arith.constant 0 : index
    %c0_1 = arith.constant 0 : index
    %0 = vector.load %arg2[%c0, %c0_0, %c0_1] : memref<1x16x2048xbf16, #tpu.memory_space<vmem>>, vector<1x16x2048xbf16>
    %1 = vector.shape_cast %0 : vector<1x16x2048xbf16> to vector<16x2048xbf16>
    %c0_2 = arith.constant 0 : index
    %c0_3 = arith.constant 0 : index
    %2 = vector.load %arg3[%c0_2, %c0_3] : memref<2048x256xbf16, #tpu.memory_space<vmem>>, vector<2048x256xbf16>
    %cst = arith.constant dense<0.000000e+00> : vector<16x256xf32>
    %3 = tpu.matmul %1, %2, %cst {dimension_numbers = #tpu.dot_dimension_numbers<[1], [0], [0], [1], [0, 0, 1, 1], [], []>} : vector<16x2048xbf16>, vector<2048x256xbf16>, vector<16x256xf32> -> vector<16x256xf32>
    %cst_4 = arith.constant dense<0.000000e+00> : vector<256xf32>
    %4 = vector.multi_reduction <add>, %3, %cst_4 [0] : vector<16x256xf32> to vector<256xf32>
    %5 = vector.shape_cast %4 : vector<256xf32> to vector<1x256xf32>
    %cst_5 = arith.constant 1.600000e+01 : f32
    %6 = vector.broadcast %cst_5 : f32 to vector<1x256xf32>
    %7 = arith.divf %5, %6 : vector<1x256xf32>
    %8 = arith.mulf %3, %3 : vector<16x256xf32>
    %cst_6 = arith.constant dense<0.000000e+00> : vector<256xf32>
    %9 = vector.multi_reduction <add>, %8, %cst_6 [0] : vector<16x256xf32> to vector<256xf32>
    %10 = vector.shape_cast %9 : vector<256xf32> to vector<1x256xf32>
    %cst_7 = arith.constant 1.600000e+01 : f32
    %11 = vector.broadcast %cst_7 : f32 to vector<1x256xf32>
    %12 = arith.divf %10, %11 : vector<1x256xf32>
    %13 = arith.mulf %7, %7 : vector<1x256xf32>
    %14 = arith.subf %12, %13 : vector<1x256xf32>
    %cst_8 = arith.constant 0.000000e+00 : f32
    %15 = vector.broadcast %cst_8 : f32 to vector<1x256xf32>
    %16 = arith.maximumf %14, %15 : vector<1x256xf32>
    %17 = vector.broadcast %7 : vector<1x256xf32> to vector<16x256xf32>
    %18 = arith.subf %3, %17 : vector<16x256xf32>
    %cst_9 = arith.constant 9.99999974E-6 : f32
    %19 = vector.broadcast %cst_9 : f32 to vector<1x256xf32>
    %20 = arith.addf %16, %19 : vector<1x256xf32>
    %21 = math.rsqrt %20 : vector<1x256xf32>
    %22 = vector.broadcast %21 : vector<1x256xf32> to vector<16x256xf32>
    %23 = arith.mulf %18, %22 : vector<16x256xf32>
    %cst_10 = arith.constant 0.000000e+00 : f32
    %24 = vector.broadcast %cst_10 : f32 to vector<16x256xf32>
    %25 = arith.cmpf oge, %23, %24 : vector<16x256xf32>
    %cst_11 = arith.constant 2.000000e-01 : f32
    %26 = vector.broadcast %cst_11 : f32 to vector<16x256xf32>
    %27 = arith.mulf %26, %23 : vector<16x256xf32>
    %28 = arith.select %25, %23, %27 : vector<16x256xi1>, vector<16x256xf32>
    %29 = vector.shape_cast %28 : vector<16x256xf32> to vector<1x16x256xf32>
    %30 = arith.truncf %29 : vector<1x16x256xf32> to vector<1x16x256xbf16>
    %c0_12 = arith.constant 0 : index
    %c0_13 = arith.constant 0 : index
    %c0_14 = arith.constant 0 : index
    %31 = vector.load %arg4[%c0_12, %c0_13, %c0_14] : memref<1x16x256xbf16, #tpu.memory_space<vmem>>, vector<1x16x256xbf16>
    tpu.vector_store %arg4[%c0_12, %c0_13, %c0_14], %30 {strides = array<i32>} : memref<1x16x256xbf16, #tpu.memory_space<vmem>>, vector<1x16x256xbf16>,
    return
  }
  func.func @transform_0(%arg0: i32, %arg1: i32) -> (i32, i32, i32) {
    %c0_i32 = arith.constant 0 : i32
    %c0_i32_0 = arith.constant 0 : i32
    return %arg0, %arg1, %c0_i32 : i32, i32, i32
  }
  func.func @transform_1(%arg0: i32, %arg1: i32) -> (i32, i32) {
    %c0_i32 = arith.constant 0 : i32
    %c0_i32_0 = arith.constant 0 : i32
    %c0_i32_1 = arith.constant 0 : i32
    return %c0_i32, %c0_i32_0 : i32, i32
  }
  func.func @transform_2(%arg0: i32, %arg1: i32) -> (i32, i32, i32) {
    %c0_i32 = arith.constant 0 : i32
    %c0_i32_0 = arith.constant 0 : i32
    return %arg0, %arg1, %c0_i32 : i32, i32, i32
  }
}

module attributes {stable_mosaic.version = 11 : i64} {
  func.func @conv_in_lrelu_kernel(%arg0: i32, %arg1: i32, %arg2: memref<1x9x4096xbf16, #tpu.memory_space<vmem>>, %arg3: memref<4096x512xbf16, #tpu.memory_space<vmem>>, %arg4: memref<1x9x512xbf16, #tpu.memory_space<vmem>>) attributes {dimension_semantics = [#tpu.dimension_semantics<parallel>, #tpu.dimension_semantics<parallel>], iteration_bounds = array<i64: 2, 1>, scalar_prefetch = 0 : i64, scratch_operands = 0 : i64, tpu.core_type = #tpu.core_type<tc>, window_params = [{transform_indices = @transform_0, window_bounds = array<i64: 1, 9, 4096>}, {pipeline_mode = #tpu.pipeline_mode<synchronous>, transform_indices = @transform_1, window_bounds = array<i64: 4096, 512>}, {transform_indices = @transform_2, window_bounds = array<i64: 1, 9, 512>}]} {
    %c0 = arith.constant 0 : index
    %c0_0 = arith.constant 0 : index
    %c0_1 = arith.constant 0 : index
    %0 = vector.load %arg2[%c0, %c0_0, %c0_1] : memref<1x9x4096xbf16, #tpu.memory_space<vmem>>, vector<1x9x4096xbf16>
    %1 = vector.shape_cast %0 : vector<1x9x4096xbf16> to vector<9x4096xbf16>
    %c0_2 = arith.constant 0 : index
    %c0_3 = arith.constant 0 : index
    %2 = vector.load %arg3[%c0_2, %c0_3] : memref<4096x512xbf16, #tpu.memory_space<vmem>>, vector<4096x512xbf16>
    %cst = arith.constant dense<0.000000e+00> : vector<9x512xf32>
    %3 = tpu.matmul %1, %2, %cst {dimension_numbers = #tpu.dot_dimension_numbers<[1], [0], [0], [1], [0, 0, 1, 1], [], []>} : vector<9x4096xbf16>, vector<4096x512xbf16>, vector<9x512xf32> -> vector<9x512xf32>
    %cst_4 = arith.constant dense<0.000000e+00> : vector<512xf32>
    %4 = vector.multi_reduction <add>, %3, %cst_4 [0] : vector<9x512xf32> to vector<512xf32>
    %5 = vector.shape_cast %4 : vector<512xf32> to vector<1x512xf32>
    %cst_5 = arith.constant 9.000000e+00 : f32
    %6 = vector.broadcast %cst_5 : f32 to vector<1x512xf32>
    %7 = arith.divf %5, %6 : vector<1x512xf32>
    %8 = arith.mulf %3, %3 : vector<9x512xf32>
    %cst_6 = arith.constant dense<0.000000e+00> : vector<512xf32>
    %9 = vector.multi_reduction <add>, %8, %cst_6 [0] : vector<9x512xf32> to vector<512xf32>
    %10 = vector.shape_cast %9 : vector<512xf32> to vector<1x512xf32>
    %cst_7 = arith.constant 9.000000e+00 : f32
    %11 = vector.broadcast %cst_7 : f32 to vector<1x512xf32>
    %12 = arith.divf %10, %11 : vector<1x512xf32>
    %13 = arith.mulf %7, %7 : vector<1x512xf32>
    %14 = arith.subf %12, %13 : vector<1x512xf32>
    %cst_8 = arith.constant 0.000000e+00 : f32
    %15 = vector.broadcast %cst_8 : f32 to vector<1x512xf32>
    %16 = arith.maximumf %14, %15 : vector<1x512xf32>
    %17 = vector.broadcast %7 : vector<1x512xf32> to vector<9x512xf32>
    %18 = arith.subf %3, %17 : vector<9x512xf32>
    %cst_9 = arith.constant 9.99999974E-6 : f32
    %19 = vector.broadcast %cst_9 : f32 to vector<1x512xf32>
    %20 = arith.addf %16, %19 : vector<1x512xf32>
    %21 = math.rsqrt %20 : vector<1x512xf32>
    %22 = vector.broadcast %21 : vector<1x512xf32> to vector<9x512xf32>
    %23 = arith.mulf %18, %22 : vector<9x512xf32>
    %cst_10 = arith.constant 0.000000e+00 : f32
    %24 = vector.broadcast %cst_10 : f32 to vector<9x512xf32>
    %25 = arith.cmpf oge, %23, %24 : vector<9x512xf32>
    %cst_11 = arith.constant 2.000000e-01 : f32
    %26 = vector.broadcast %cst_11 : f32 to vector<9x512xf32>
    %27 = arith.mulf %26, %23 : vector<9x512xf32>
    %28 = arith.select %25, %23, %27 : vector<9x512xi1>, vector<9x512xf32>
    %29 = vector.shape_cast %28 : vector<9x512xf32> to vector<1x9x512xf32>
    %30 = arith.truncf %29 : vector<1x9x512xf32> to vector<1x9x512xbf16>
    %c0_12 = arith.constant 0 : index
    %c0_13 = arith.constant 0 : index
    %c0_14 = arith.constant 0 : index
    %31 = vector.load %arg4[%c0_12, %c0_13, %c0_14] : memref<1x9x512xbf16, #tpu.memory_space<vmem>>, vector<1x9x512xbf16>
    tpu.vector_store %arg4[%c0_12, %c0_13, %c0_14], %30 {strides = array<i32>} : memref<1x9x512xbf16, #tpu.memory_space<vmem>>, vector<1x9x512xbf16>,
    return
  }
  func.func @transform_0(%arg0: i32, %arg1: i32) -> (i32, i32, i32) {
    %c0_i32 = arith.constant 0 : i32
    %c0_i32_0 = arith.constant 0 : i32
    return %arg0, %arg1, %c0_i32 : i32, i32, i32
  }
  func.func @transform_1(%arg0: i32, %arg1: i32) -> (i32, i32) {
    %c0_i32 = arith.constant 0 : i32
    %c0_i32_0 = arith.constant 0 : i32
    %c0_i32_1 = arith.constant 0 : i32
    return %c0_i32, %c0_i32_0 : i32, i32
  }
  func.func @transform_2(%arg0: i32, %arg1: i32) -> (i32, i32, i32) {
    %c0_i32 = arith.constant 0 : i32
    %c0_i32_0 = arith.constant 0 : i32
    return %arg0, %arg1, %c0_i32 : i32, i32, i32
  }
}

module attributes {stable_mosaic.version = 11 : i64} {
  func.func @head_kernel(%arg0: i32, %arg1: memref<1x4x8192xbf16, #tpu.memory_space<vmem>>, %arg2: memref<1x8192xf32, #tpu.memory_space<vmem>>, %arg3: memref<1x1xf32, #tpu.memory_space<vmem>>, %arg4: memref<1x1x1xf32, #tpu.memory_space<vmem>>) attributes {dimension_semantics = [#tpu.dimension_semantics<parallel>], iteration_bounds = array<i64: 2>, scalar_prefetch = 0 : i64, scratch_operands = 0 : i64, tpu.core_type = #tpu.core_type<tc>, window_params = [{transform_indices = @transform_0, window_bounds = array<i64: 1, 4, 8192>}, {pipeline_mode = #tpu.pipeline_mode<synchronous>, transform_indices = @transform_1, window_bounds = array<i64: 1, 8192>}, {pipeline_mode = #tpu.pipeline_mode<synchronous>, transform_indices = @transform_2, window_bounds = array<i64: 1, 1>}, {transform_indices = @transform_3, window_bounds = array<i64: 1, 1, 1>}]} {
    %c0 = arith.constant 0 : index
    %c0_0 = arith.constant 0 : index
    %c0_1 = arith.constant 0 : index
    %0 = vector.load %arg1[%c0, %c0_0, %c0_1] : memref<1x4x8192xbf16, #tpu.memory_space<vmem>>, vector<1x4x8192xbf16>
    %1 = vector.shape_cast %0 : vector<1x4x8192xbf16> to vector<4x8192xbf16>
    %2 = arith.extf %1 : vector<4x8192xbf16> to vector<4x8192xf32>
    %c0_2 = arith.constant 0 : index
    %c0_3 = arith.constant 0 : index
    %3 = vector.load %arg2[%c0_2, %c0_3] : memref<1x8192xf32, #tpu.memory_space<vmem>>, vector<1x8192xf32>
    %4 = vector.broadcast %3 : vector<1x8192xf32> to vector<4x8192xf32>
    %5 = arith.mulf %2, %4 : vector<4x8192xf32>
    %cst = arith.constant dense<0.000000e+00> : vector<4xf32>
    %6 = vector.multi_reduction <add>, %5, %cst [1] : vector<4x8192xf32> to vector<4xf32>
    %7 = vector.shape_cast %6 : vector<4xf32> to vector<4x1xf32>
    %c0_4 = arith.constant 0 : index
    %c0_5 = arith.constant 0 : index
    %8 = vector.load %arg3[%c0_4, %c0_5] : memref<1x1xf32, #tpu.memory_space<vmem>>, vector<1x1xf32>
    %9 = vector.broadcast %8 : vector<1x1xf32> to vector<4x1xf32>
    %10 = arith.addf %7, %9 : vector<4x1xf32>
    %11 = vector.shape_cast %10 : vector<4x1xf32> to vector<1x4x1xf32>
    %cst_6 = arith.constant dense<0.000000e+00> : vector<1xf32>
    %12 = vector.multi_reduction <add>, %11, %cst_6 [1, 2] : vector<1x4x1xf32> to vector<1xf32>
    %13 = vector.shape_cast %12 : vector<1xf32> to vector<1x1x1xf32>
    %14 = vector.extract %13[0, 0, 0] : f32 from vector<1x1x1xf32>
    %cst_7 = arith.constant 4.000000e+00 : f32
    %15 = arith.divf %14, %cst_7 : f32
    %16 = vector.broadcast %15 : f32 to vector<1x1x1xf32>
    %c0_8 = arith.constant 0 : index
    %c0_9 = arith.constant 0 : index
    %c0_10 = arith.constant 0 : index
    %17 = vector.load %arg4[%c0_8, %c0_9, %c0_10] : memref<1x1x1xf32, #tpu.memory_space<vmem>>, vector<1x1x1xf32>
    tpu.vector_store %arg4[%c0_8, %c0_9, %c0_10], %16 {strides = array<i32>} : memref<1x1x1xf32, #tpu.memory_space<vmem>>, vector<1x1x1xf32>,
    return
  }
  func.func @transform_0(%arg0: i32) -> (i32, i32, i32) {
    %c0_i32 = arith.constant 0 : i32
    %c0_i32_0 = arith.constant 0 : i32
    %c0_i32_1 = arith.constant 0 : i32
    return %arg0, %c0_i32, %c0_i32_0 : i32, i32, i32
  }
  func.func @transform_1(%arg0: i32) -> (i32, i32) {
    %c0_i32 = arith.constant 0 : i32
    %c0_i32_0 = arith.constant 0 : i32
    %c0_i32_1 = arith.constant 0 : i32
    return %c0_i32, %c0_i32_0 : i32, i32
  }
  func.func @transform_2(%arg0: i32) -> (i32, i32) {
    %c0_i32 = arith.constant 0 : i32
    %c0_i32_0 = arith.constant 0 : i32
    %c0_i32_1 = arith.constant 0 : i32
    return %c0_i32, %c0_i32_0 : i32, i32
  }
  func.func @transform_3(%arg0: i32) -> (i32, i32, i32) {
    %c0_i32 = arith.constant 0 : i32
    %c0_i32_0 = arith.constant 0 : i32
    %c0_i32_1 = arith.constant 0 : i32
    return %arg0, %c0_i32, %c0_i32_0 : i32, i32, i32
  }
}

</mosaic_0001>

<llo_original>
// kernel: discriminator.5
$region0: #{discriminator.5}
  #allocation0 [shape = 'u32[]', space=smem, size = 0x4, offset = 0x4, fixed_abs, tag = 'smem constant byte address 0x4 - core index']
  #allocation1 [shape = 'u32[72,128]{1,0:T(1,128)}', space=vmem, size = 0x9000, scoped, tag = 'internal scratch']
  %s0 = inlined_call_operand.vmem [shape: bf16[2,256,48], index: 0, kind: input, shape index: {}]
  %s1 = inlined_call_operand.vmem [shape: bf16[48,64], index: 1, kind: input, shape index: {}]
  %s2 = inlined_call_operand.vmem [shape: bf16[2,256,64], index: 2, kind: output, shape index: {}]
  %s3 = sld [smem:[#allocation0]]
  $region41: #{discriminator.5} parent=0
    _
  %s5 = ssub.s32 1, %s3
  %s6 = scalar_select 0, %s5, %s3
  loop: start=0, step=1, limit=6
  $region2: #{discriminator.5} parent=0 // loop_pre_header
    _
  $region3: #{discriminator.5} parent=0 // loop_header
    %s8 = sphi 0, %s12
    %p9 = scmp.ge.s32.totalorder %s8, 6
    %s15 = sphi 0, %s27
    %s16 = sphi 0, %s23
    %s17 = sphi 0, %s15
    %s18 = sphi 0, %s16
    %s19 = sphi 0, %s17
    %s20 = sphi 0, %s18
    %s32 = sphi 0, %s34
    %s35 = sphi 0, %s32
    %s36 = sphi 0, %s35
    %s52 = sphi 0, %s36
    %s56 = sphi 0, %s56
    %s58 = sphi 0, %s56
    %s59 = sphi 0, %s58
    %s73 = sphi 0, %s59
    %s81 = sphi 0, %s83
    %s84 = sphi 0, %s81
    %s85 = sphi 0, %s84
    %s101 = sphi 0, %s85
  $region4: #{discriminator.5} parent=0 // loop_header_branch
    %11 = sbr.rel (%p9) target = $region8
  $region5: #{discriminator.5} parent=0 // loop_body
    %s13 = ssub.s32 %s8, 1
    %s14 = ssub.s32 %s8, 2
    %s21 = sadd.s32 1, %s16
    %p22 = scmp.ge.s32.totalorder %s21, 2
    %s23 = scalar_select %p22, 0, %s21
    %s24 = sadd.s32 1, %s15
    %s25 = scalar_select %p22, %s24, %s15
    %p26 = scmp.ge.s32.totalorder %s25, 2
    %s27 = scalar_select %p26, 0, %s25
    %s28 = ssub.s32 %s15, %s27
    %s29 = ssub.s32 %s16, %s23
    %s30 = sor.u32 %s28, %s29
    %p31 = scmp.eq.s32.totalorder %s30, 0
    %s33 = sadd.s32 %s32, 1
    %s34 = scalar_select %p31, %s32, %s33
    %p37 = pneg %p31
    %p38 = scmp.eq.s32.totalorder %s8, 3
    %p39 = por %p37, %p38
    %p40 = scmp.ne.s32.totalorder %s32, %s35
    %p41 = scmp.eq.s32.totalorder %s8, 0
    %p42 = por %p40, %p41
    %p43 = scmp.ne.s32.totalorder %s32, %s35
    %p44 = scmp.eq.s32.totalorder %s13, 3
    %p45 = por %p43, %p44
    %p46 = scmp.ne.s32.totalorder %s35, %s36
    %p47 = scmp.eq.s32.totalorder %s13, 0
    %p48 = por %p46, %p47
    %p49 = scmp.ne.s32.totalorder %s35, %s36
    %p50 = scmp.eq.s32.totalorder %s14, 3
    %p51 = por %p49, %p50
    %p53 = scmp.ne.s32.totalorder %s36, %s52
    %p54 = scmp.eq.s32.totalorder %s14, 0
    %p55 = por %p53, %p54
    %s57 = sadd.s32 %s56, 1
    %p60 = scmp.eq.s32.totalorder %s8, 3
    %p61 = scmp.ne.s32.totalorder %s56, %s58
    %p62 = scmp.eq.s32.totalorder %s8, 0
    %p63 = por %p61, %p62
    %p64 = scmp.ne.s32.totalorder %s56, %s58
    %p65 = scmp.eq.s32.totalorder %s13, 3
    %p66 = por %p64, %p65
    %p67 = scmp.ne.s32.totalorder %s58, %s59
    %p68 = scmp.eq.s32.totalorder %s13, 0
    %p69 = por %p67, %p68
    %p70 = scmp.ne.s32.totalorder %s58, %s59
    %p71 = scmp.eq.s32.totalorder %s14, 3
    %p72 = por %p70, %p71
    %p74 = scmp.ne.s32.totalorder %s59, %s73
    %p75 = scmp.eq.s32.totalorder %s14, 0
    %p76 = por %p74, %p75
    %s77 = ssub.s32 %s15, %s27
    %s78 = ssub.s32 %s16, %s23
    %s79 = sor.u32 %s77, %s78
    %p80 = scmp.eq.s32.totalorder %s79, 0
    %s82 = sadd.s32 %s81, 1
    %s83 = scalar_select %p80, %s81, %s82
    %p86 = pneg %p80
    %p87 = scmp.eq.s32.totalorder %s8, 3
    %p88 = por %p86, %p87
    %p89 = scmp.ne.s32.totalorder %s81, %s84
    %p90 = scmp.eq.s32.totalorder %s8, 0
    %p91 = por %p89, %p90
    %p92 = scmp.ne.s32.totalorder %s81, %s84
    %p93 = scmp.eq.s32.totalorder %s13, 3
    %p94 = por %p92, %p93
    %p95 = scmp.ne.s32.totalorder %s84, %s85
    %p96 = scmp.eq.s32.totalorder %s13, 0
    %p97 = por %p95, %p96
    %p98 = scmp.ne.s32.totalorder %s84, %s85
    %p99 = scmp.eq.s32.totalorder %s14, 3
    %p100 = por %p98, %p99
    %p102 = scmp.ne.s32.totalorder %s85, %s101
    %p103 = scmp.eq.s32.totalorder %s14, 0
    %p104 = por %p102, %p103
    %p105 = scmp.le.s32.totalorder 1, %s8
    %p106 = scmp.lt.s32.totalorder %s8, 5
    %p107 = pnand %p105, %p106
    %p108 = pneg %p107
    // Predicated region
    $region9: #{discriminator.5} parent=5 // pred_check
      _
    $region10: #{discriminator.5} parent=5 // pred_check_branch
      %110 = sbr.rel (%p107) target = $region12
    $region11: #{discriminator.5} parent=5 // pred_region
      %s111 = ssub.s32 %s8, 1
      // Predicated region
      $region13: #{discriminator.5} parent=11 // pred_check
        %p112 = pneg %p69
      $region14: #{discriminator.5} parent=11 // pred_check_branch
        %114 = sbr.rel (%p112) target = $region16
      $region15: #{discriminator.5} parent=11 // pred_region
        _
      $region16: #{discriminator.5} parent=11 // pred_fallthru
        _
    $region12: #{discriminator.5} parent=5 // pred_fallthru
      _
    %p115 = scmp.lt.s32.totalorder %s8, 4
    // Predicated region
    $region17: #{discriminator.5} parent=5 // pred_check
      %p116 = pneg %p115
    $region18: #{discriminator.5} parent=5 // pred_check_branch
      %118 = sbr.rel (%p116) target = $region20
    $region19: #{discriminator.5} parent=5 // pred_region
      // Predicated region
      $region21: #{discriminator.5} parent=19 // pred_check
        %p119 = pneg %p42
      $region22: #{discriminator.5} parent=19 // pred_check_branch
        %121 = sbr.rel (%p119) target = $region24
      $region23: #{discriminator.5} parent=19 // pred_region
        %s122 = smul.u32 16, %s16
        %p123 = scmp.lt.s32.totalorder %s15, 1
        %s124 = scalar_select %p123, %s15, 1
        %p125 = scmp.lt.s32.totalorder %s122, 31
        %s126 = scalar_select %p125, %s122, 31
        %s127 = smul.addr %s124, 32
        %s128 = sadd.s32 %s126, %s127
        %s129 = smul.addr %s128, 4
        %s130 = scalar_lea.vmem %s0, %s129
        %s131 = smul.u32 16, %s16
      $region24: #{discriminator.5} parent=19 // pred_fallthru
        _
    $region20: #{discriminator.5} parent=5 // pred_fallthru
      _
    %p132 = scmp.le.s32.totalorder 1, %s8
    %p133 = scmp.lt.s32.totalorder %s8, 5
    %p134 = pnand %p132, %p133
    %p135 = pneg %p134
    // Predicated region
    $region25: #{discriminator.5} parent=5 // pred_check
      _
    $region26: #{discriminator.5} parent=5 // pred_check_branch
      %137 = sbr.rel (%p134) target = $region28
    $region27: #{discriminator.5} parent=5 // pred_region
      %s138 = ssub.s32 %s8, 1
      %s139 = smul.u32 16, %s18
      %p140 = scmp.lt.s32.totalorder %s17, 1
      %s141 = scalar_select %p140, %s17, 1
      %p142 = scmp.lt.s32.totalorder %s139, 31
      %s143 = scalar_select %p142, %s139, 31
      %s144 = smul.addr %s141, 32
      %s145 = sadd.s32 %s143, %s144
      %s146 = smul.addr %s145, 4
      %s147 = scalar_lea.vmem %s0, %s146
      %p148 = pneg %p48
      %p149 = pneg %p45
      %p150 = pneg %p69
      %p151 = pneg %p66
      %p152 = pneg %p97
      %p153 = pneg %p94
      %s154 = smul.u32 16, %s18
      %p155 = scmp.lt.s32.totalorder %s17, 1
      %s156 = scalar_select %p155, %s17, 1
      %p157 = scmp.lt.s32.totalorder %s154, 31
      %s158 = scalar_select %p157, %s154, 31
      %s159 = smul.addr %s156, 32
      %s160 = sadd.s32 %s158, %s159
      %s161 = smul.addr %s160, 4
      %s162 = scalar_lea.vmem %s2, %s161
      %s163 = smul.u32 16, %s18
      %p164 = scmp.lt.s32.totalorder %s17, 1
      %s165 = scalar_select %p164, %s17, 1
      %p166 = scmp.lt.s32.totalorder %s163, 31
      %s167 = scalar_select %p166, %s163, 31
      %s168 = smul.addr %s165, 32
      %s169 = sadd.s32 %s167, %s168
      %s170 = smul.addr %s169, 4
      %s171 = scalar_lea.vmem %s0, %s170
      %s172 = smul.u32 16, %s18
      %s173 = smul.u32 16, %s18
      %p174 = scmp.lt.s32.totalorder %s17, 1
      %s175 = scalar_select %p174, %s17, 1
      %p176 = scmp.lt.s32.totalorder %s173, 31
      %s177 = scalar_select %p176, %s173, 31
      %s178 = smul.addr %s175, 32
      %s179 = sadd.s32 %s177, %s178
      %s180 = smul.addr %s179, 4
      %s181 = scalar_lea.vmem %s2, %s180
      %s182 = smul.u32 16, %s18
      %v184 = vld [vmem:[%s171] sm:$0xf]
      %v185 = vld [vmem:[%s171 + $0x4] sm:$0xf]
      %v186 = vld [vmem:[%s171 + $0x8] sm:$0xf]
      %v187 = vld [vmem:[%s171 + $0xc] sm:$0xf]
      %v188 = vld [vmem:[%s171 + $0x10] sm:$0xf]
      %v189 = vld [vmem:[%s171 + $0x14] sm:$0xf]
      %v190 = vld [vmem:[%s171 + $0x18] sm:$0xf]
      %v191 = vld [vmem:[%s171 + $0x1c] sm:$0xf]
      %v192 = vld [vmem:[%s171 + $0x20] sm:$0xf]
      %v193 = vld [vmem:[%s171 + $0x24] sm:$0xf]
      %v194 = vld [vmem:[%s171 + $0x28] sm:$0xf]
      %v195 = vld [vmem:[%s171 + $0x2c] sm:$0xf]
      %v196 = vld [vmem:[%s171 + $0x30] sm:$0xf]
      %v197 = vld [vmem:[%s171 + $0x34] sm:$0xf]
      %v198 = vld [vmem:[%s171 + $0x38] sm:$0xf]
      %v199 = vld [vmem:[%s171 + $0x3c] sm:$0xf]
      %v200 = vld [vmem:[%s1] sm:$0xf]
      %v201 = vld [vmem:[%s1 + $0x4] sm:$0xf]
      %v202 = vld [vmem:[%s1 + $0x8] sm:$0xf]
      %v203 = vld [vmem:[%s1 + $0xc] sm:$0xf]
      %v204 = vld [vmem:[%s1 + $0x10] sm:$0xf]
      %v205 = vld [vmem:[%s1 + $0x14] sm:$0xf]
      %v222 = vunpack.c.l.b16 %v184
      %v223 = vunpack.c.l.b16 %v185
      %v224 = vunpack.c.l.b16 %v186
      %v225 = vunpack.c.l.b16 %v187
      %v226 = vunpack.c.l.b16 %v188
      %v227 = vunpack.c.l.b16 %v189
      %v228 = vunpack.c.l.b16 %v190
      %v229 = vunpack.c.l.b16 %v191
      %v230 = vunpack.c.l.b16 %v192
      %v231 = vunpack.c.l.b16 %v193
      %v232 = vunpack.c.l.b16 %v194
      %v233 = vunpack.c.l.b16 %v195
      %v234 = vunpack.c.l.b16 %v196
      %v235 = vunpack.c.l.b16 %v197
      %v236 = vunpack.c.l.b16 %v198
      %v237 = vunpack.c.l.b16 %v199
      %v238 = vpack.c.b16 %v223, %v222
      %v239 = vpack.c.b16 %v225, %v224
      %v240 = vpack.c.b16 %v227, %v226
      %v241 = vpack.c.b16 %v229, %v228
      %v242 = vpack.c.b16 %v231, %v230
      %v243 = vpack.c.b16 %v233, %v232
      %v244 = vpack.c.b16 %v235, %v234
      %v245 = vpack.c.b16 %v237, %v236
      %v252 = vunpack.c.l.b16 %v200
      %v253 = vunpack.c.l.b16 %v201
      %v254 = vunpack.c.l.b16 %v202
      %v255 = vunpack.c.l.b16 %v203
      %v256 = vunpack.c.l.b16 %v204
      %v257 = vunpack.c.l.b16 %v205
      %v258 = vpack.c.b16 %v253, %v252
      %v259 = vpack.c.b16 %v255, %v254
      %v260 = vpack.c.b16 %v257, %v256
      %vm264 = vcmask 392192
      %v266 = vsel %vm264, %v238, 0
      %v269 = vsel %vm264, %v239, 0
      %v272 = vsel %vm264, %v240, 0
      %v275 = vsel %vm264, %v241, 0
      %v278 = vsel %vm264, %v242, 0
      %v281 = vsel %vm264, %v243, 0
      %v284 = vsel %vm264, %v244, 0
      %v287 = vsel %vm264, %v245, 0
      %289 = vmatpush.bf16.msra.mxu0 0
      %290 = vmatpush.bf16.msra.mxu0 0
      %291 = vmatpush.bf16.msra.mxu0 0
      %292 = vmatpush.bf16.msra.mxu0 0
      %293 = vmatpush.bf16.msra.mxu0 0
      %294 = vmatpush.bf16.msra.mxu0 %v260
      %295 = vmatpush.bf16.msra.mxu0 %v259
      %296 = vmatpush.bf16.msra.mxu0 %v258
      %297 = vmatmul.bf16.gmra.mxu0 %v266
      %v298 = vpop.f32.mrf.mxu0
      %v299 = vadd.f32 0.0, %v298
      %v300 = vpop.f32.mrf.mxu0
      %v301 = vadd.f32 0.0, %v300
      %302 = vmatmul.bf16.gmra.mxu0 %v269
      %v303 = vpop.f32.mrf.mxu0
      %v304 = vadd.f32 0.0, %v303
      %v305 = vpop.f32.mrf.mxu0
      %v306 = vadd.f32 0.0, %v305
      %307 = vmatmul.bf16.gmra.mxu0 %v272
      %v308 = vpop.f32.mrf.mxu0
      %v309 = vadd.f32 0.0, %v308
      %v310 = vpop.f32.mrf.mxu0
      %v311 = vadd.f32 0.0, %v310
      %312 = vmatmul.bf16.gmra.mxu0 %v275
      %v313 = vpop.f32.mrf.mxu0
      %v314 = vadd.f32 0.0, %v313
      %v315 = vpop.f32.mrf.mxu0
      %v316 = vadd.f32 0.0, %v315
      %317 = vmatmul.bf16.gmra.mxu0 %v278
      %v318 = vpop.f32.mrf.mxu0
      %v319 = vadd.f32 0.0, %v318
      %v320 = vpop.f32.mrf.mxu0
      %v321 = vadd.f32 0.0, %v320
      %322 = vmatmul.bf16.gmra.mxu0 %v281
      %v323 = vpop.f32.mrf.mxu0
      %v324 = vadd.f32 0.0, %v323
      %v325 = vpop.f32.mrf.mxu0
      %v326 = vadd.f32 0.0, %v325
      %327 = vmatmul.bf16.gmra.mxu0 %v284
      %v328 = vpop.f32.mrf.mxu0
      %v329 = vadd.f32 0.0, %v328
      %v330 = vpop.f32.mrf.mxu0
      %v331 = vadd.f32 0.0, %v330
      %332 = vmatmul.bf16.gmra.mxu0 %v287
      %v333 = vpop.f32.mrf.mxu0
      %v334 = vadd.f32 0.0, %v333
      %v335 = vpop.f32.mrf.mxu0
      %v336 = vadd.f32 0.0, %v335
      %337 = vdwg.mxu0
      %vm338 = vcmp.ge.f32.partialorder %v299, 0.0
      %vm339 = vcmp.ge.f32.partialorder %v301, 0.0
      %vm340 = vcmp.ge.f32.partialorder %v304, 0.0
      %vm341 = vcmp.ge.f32.partialorder %v306, 0.0
      %vm342 = vcmp.ge.f32.partialorder %v309, 0.0
      %vm343 = vcmp.ge.f32.partialorder %v311, 0.0
      %vm344 = vcmp.ge.f32.partialorder %v314, 0.0
      %vm345 = vcmp.ge.f32.partialorder %v316, 0.0
      %vm346 = vcmp.ge.f32.partialorder %v319, 0.0
      %vm347 = vcmp.ge.f32.partialorder %v321, 0.0
      %vm348 = vcmp.ge.f32.partialorder %v324, 0.0
      %vm349 = vcmp.ge.f32.partialorder %v326, 0.0
      %vm350 = vcmp.ge.f32.partialorder %v329, 0.0
      %vm351 = vcmp.ge.f32.partialorder %v331, 0.0
      %vm352 = vcmp.ge.f32.partialorder %v334, 0.0
      %vm353 = vcmp.ge.f32.partialorder %v336, 0.0
      %v354 = vmul.f32 %v299, 0.2
      %v355 = vmul.f32 %v301, 0.2
      %v356 = vmul.f32 %v304, 0.2
      %v357 = vmul.f32 %v306, 0.2
      %v358 = vmul.f32 %v309, 0.2
      %v359 = vmul.f32 %v311, 0.2
      %v360 = vmul.f32 %v314, 0.2
      %v361 = vmul.f32 %v316, 0.2
      %v362 = vmul.f32 %v319, 0.2
      %v363 = vmul.f32 %v321, 0.2
      %v364 = vmul.f32 %v324, 0.2
      %v365 = vmul.f32 %v326, 0.2
      %v366 = vmul.f32 %v329, 0.2
      %v367 = vmul.f32 %v331, 0.2
      %v368 = vmul.f32 %v334, 0.2
      %v369 = vmul.f32 %v336, 0.2
      %v370 = vsel %vm338, %v299, %v354
      %v371 = vsel %vm339, %v301, %v355
      %v372 = vsel %vm340, %v304, %v356
      %v373 = vsel %vm341, %v306, %v357
      %v374 = vsel %vm342, %v309, %v358
      %v375 = vsel %vm343, %v311, %v359
      %v376 = vsel %vm344, %v314, %v360
      %v377 = vsel %vm345, %v316, %v361
      %v378 = vsel %vm346, %v319, %v362
      %v379 = vsel %vm347, %v321, %v363
      %v380 = vsel %vm348, %v324, %v364
      %v381 = vsel %vm349, %v326, %v365
      %v382 = vsel %vm350, %v329, %v366
      %v383 = vsel %vm351, %v331, %v367
      %v384 = vsel %vm352, %v334, %v368
      %v385 = vsel %vm353, %v336, %v369
      %v386 = vpack.c.bf16 %v370, %v370
      %v387 = vpack.c.bf16 %v371, %v371
      %v388 = vpack.c.bf16 %v372, %v372
      %v389 = vpack.c.bf16 %v373, %v373
      %v390 = vpack.c.bf16 %v374, %v374
      %v391 = vpack.c.bf16 %v375, %v375
      %v392 = vpack.c.bf16 %v376, %v376
      %v393 = vpack.c.bf16 %v377, %v377
      %v394 = vpack.c.bf16 %v378, %v378
      %v395 = vpack.c.bf16 %v379, %v379
      %v396 = vpack.c.bf16 %v380, %v380
      %v397 = vpack.c.bf16 %v381, %v381
      %v398 = vpack.c.bf16 %v382, %v382
      %v399 = vpack.c.bf16 %v383, %v383
      %v400 = vpack.c.bf16 %v384, %v384
      %v401 = vpack.c.bf16 %v385, %v385
      %vm402 = vcmask 519168
      %403 = vst.msk [vmem:[%s181] sm:$0xf] %vm402, %v386
      %404 = vst.msk [vmem:[%s181 + $0x4] sm:$0xf] %vm402, %v387
      %405 = vst.msk [vmem:[%s181 + $0x8] sm:$0xf] %vm402, %v388
      %406 = vst.msk [vmem:[%s181 + $0xc] sm:$0xf] %vm402, %v389
      %407 = vst.msk [vmem:[%s181 + $0x10] sm:$0xf] %vm402, %v390
      %408 = vst.msk [vmem:[%s181 + $0x14] sm:$0xf] %vm402, %v391
      %409 = vst.msk [vmem:[%s181 + $0x18] sm:$0xf] %vm402, %v392
      %410 = vst.msk [vmem:[%s181 + $0x1c] sm:$0xf] %vm402, %v393
      %411 = vst.msk [vmem:[%s181 + $0x20] sm:$0xf] %vm402, %v394
      %412 = vst.msk [vmem:[%s181 + $0x24] sm:$0xf] %vm402, %v395
      %413 = vst.msk [vmem:[%s181 + $0x28] sm:$0xf] %vm402, %v396
      %414 = vst.msk [vmem:[%s181 + $0x2c] sm:$0xf] %vm402, %v397
      %415 = vst.msk [vmem:[%s181 + $0x30] sm:$0xf] %vm402, %v398
      %416 = vst.msk [vmem:[%s181 + $0x34] sm:$0xf] %vm402, %v399
      %417 = vst.msk [vmem:[%s181 + $0x38] sm:$0xf] %vm402, %v400
      %418 = vst.msk [vmem:[%s181 + $0x3c] sm:$0xf] %vm402, %v401
      %s419 = smul.u32 16, %s18
      %p420 = scmp.lt.s32.totalorder %s17, 1
      %s421 = scalar_select %p420, %s17, 1
      %p422 = scmp.lt.s32.totalorder %s419, 31
      %s423 = scalar_select %p422, %s419, 31
      %s424 = smul.addr %s421, 32
      %s425 = sadd.s32 %s423, %s424
      %s426 = smul.addr %s425, 4
      %s427 = scalar_lea.vmem %s2, %s426
      // Predicated region
      $region29: #{discriminator.5} parent=27 // pred_check
        %p428 = pneg %p94
      $region30: #{discriminator.5} parent=27 // pred_check_branch
        %430 = sbr.rel (%p428) target = $region32
      $region31: #{discriminator.5} parent=27 // pred_region
        %s431 = smul.u32 16, %s18
      $region32: #{discriminator.5} parent=27 // pred_fallthru
        _
    $region28: #{discriminator.5} parent=5 // pred_fallthru
      _
    %p432 = scmp.le.s32.totalorder 2, %s8
    // Predicated region
    $region33: #{discriminator.5} parent=5 // pred_check
      %p433 = pneg %p432
    $region34: #{discriminator.5} parent=5 // pred_check_branch
      %435 = sbr.rel (%p433) target = $region36
    $region35: #{discriminator.5} parent=5 // pred_region
      %s436 = ssub.s32 %s8, 2
      // Predicated region
      $region37: #{discriminator.5} parent=35 // pred_check
        %p437 = pneg %p100
      $region38: #{discriminator.5} parent=35 // pred_check_branch
        %439 = sbr.rel (%p437) target = $region40
      $region39: #{discriminator.5} parent=35 // pred_region
        %s440 = smul.u32 16, %s20
        %p441 = scmp.lt.s32.totalorder %s19, 1
        %s442 = scalar_select %p441, %s19, 1
        %p443 = scmp.lt.s32.totalorder %s440, 31
        %s444 = scalar_select %p443, %s440, 31
        %s445 = smul.addr %s442, 32
        %s446 = sadd.s32 %s444, %s445
        %s447 = smul.addr %s446, 4
        %s448 = scalar_lea.vmem %s2, %s447
      $region40: #{discriminator.5} parent=35 // pred_fallthru
        _
    $region36: #{discriminator.5} parent=5 // pred_fallthru
      _
  $region6: #{discriminator.5} parent=0 // loop_footer
    %s12 = sadd.s32 1, %s8
  $region7: #{discriminator.5} parent=0 // loop_footer_branch
    %7 = sbr.rel target = $region3
  $region8: #{discriminator.5} parent=0 // loop_exit
    _

// kernel: discriminator.6
$region0: #{discriminator.6}
  #allocation0 [shape = 'u32[]', space=smem, size = 0x4, offset = 0x4, fixed_abs, tag = 'smem constant byte address 0x4 - core index']
  #allocation1 [shape = 'u32[72,128]{1,0:T(1,128)}', space=vmem, size = 0x9000, scoped, tag = 'internal scratch']
  %s0 = inlined_call_operand.vmem [shape: bf16[2,64,1024], index: 0, kind: input, shape index: {}]
  %s1 = inlined_call_operand.vmem [shape: bf16[1024,128], index: 1, kind: input, shape index: {}]
  %s2 = inlined_call_operand.vmem [shape: bf16[2,64,128], index: 2, kind: output, shape index: {}]
  %s3 = sld [smem:[#allocation0]]
  $region41: #{discriminator.6} parent=0
    _
  %s5 = ssub.s32 1, %s3
  %s6 = scalar_select 0, %s5, %s3
  loop: start=0, step=1, limit=4
  $region2: #{discriminator.6} parent=0 // loop_pre_header
    _
  $region3: #{discriminator.6} parent=0 // loop_header
    %s8 = sphi 0, %s12
    %p9 = scmp.ge.s32.totalorder %s8, 4
    %s15 = sphi 0, %s27
    %s16 = sphi 0, %s23
    %s17 = sphi 0, %s15
    %s18 = sphi 0, %s16
    %s19 = sphi 0, %s17
    %s20 = sphi 0, %s18
    %s32 = sphi 0, %s34
    %s35 = sphi 0, %s32
    %s36 = sphi 0, %s35
    %s52 = sphi 0, %s36
    %s56 = sphi 0, %s56
    %s58 = sphi 0, %s56
    %s59 = sphi 0, %s58
    %s73 = sphi 0, %s59
    %s81 = sphi 0, %s83
    %s84 = sphi 0, %s81
    %s85 = sphi 0, %s84
    %s101 = sphi 0, %s85
  $region4: #{discriminator.6} parent=0 // loop_header_branch
    %11 = sbr.rel (%p9) target = $region8
  $region5: #{discriminator.6} parent=0 // loop_body
    %s13 = ssub.s32 %s8, 1
    %s14 = ssub.s32 %s8, 2
    %s21 = sadd.s32 1, %s16
    %p22 = scmp.ge.s32.totalorder %s21, 1
    %s23 = scalar_select %p22, 0, %s21
    %s24 = sadd.s32 1, %s15
    %s25 = scalar_select %p22, %s24, %s15
    %p26 = scmp.ge.s32.totalorder %s25, 2
    %s27 = scalar_select %p26, 0, %s25
    %s28 = ssub.s32 %s15, %s27
    %s29 = ssub.s32 %s16, %s23
    %s30 = sor.u32 %s28, %s29
    %p31 = scmp.eq.s32.totalorder %s30, 0
    %s33 = sadd.s32 %s32, 1
    %s34 = scalar_select %p31, %s32, %s33
    %p37 = pneg %p31
    %p38 = scmp.eq.s32.totalorder %s8, 1
    %p39 = por %p37, %p38
    %p40 = scmp.ne.s32.totalorder %s32, %s35
    %p41 = scmp.eq.s32.totalorder %s8, 0
    %p42 = por %p40, %p41
    %p43 = scmp.ne.s32.totalorder %s32, %s35
    %p44 = scmp.eq.s32.totalorder %s13, 1
    %p45 = por %p43, %p44
    %p46 = scmp.ne.s32.totalorder %s35, %s36
    %p47 = scmp.eq.s32.totalorder %s13, 0
    %p48 = por %p46, %p47
    %p49 = scmp.ne.s32.totalorder %s35, %s36
    %p50 = scmp.eq.s32.totalorder %s14, 1
    %p51 = por %p49, %p50
    %p53 = scmp.ne.s32.totalorder %s36, %s52
    %p54 = scmp.eq.s32.totalorder %s14, 0
    %p55 = por %p53, %p54
    %s57 = sadd.s32 %s56, 1
    %p60 = scmp.eq.s32.totalorder %s8, 1
    %p61 = scmp.ne.s32.totalorder %s56, %s58
    %p62 = scmp.eq.s32.totalorder %s8, 0
    %p63 = por %p61, %p62
    %p64 = scmp.ne.s32.totalorder %s56, %s58
    %p65 = scmp.eq.s32.totalorder %s13, 1
    %p66 = por %p64, %p65
    %p67 = scmp.ne.s32.totalorder %s58, %s59
    %p68 = scmp.eq.s32.totalorder %s13, 0
    %p69 = por %p67, %p68
    %p70 = scmp.ne.s32.totalorder %s58, %s59
    %p71 = scmp.eq.s32.totalorder %s14, 1
    %p72 = por %p70, %p71
    %p74 = scmp.ne.s32.totalorder %s59, %s73
    %p75 = scmp.eq.s32.totalorder %s14, 0
    %p76 = por %p74, %p75
    %s77 = ssub.s32 %s15, %s27
    %s78 = ssub.s32 %s16, %s23
    %s79 = sor.u32 %s77, %s78
    %p80 = scmp.eq.s32.totalorder %s79, 0
    %s82 = sadd.s32 %s81, 1
    %s83 = scalar_select %p80, %s81, %s82
    %p86 = pneg %p80
    %p87 = scmp.eq.s32.totalorder %s8, 1
    %p88 = por %p86, %p87
    %p89 = scmp.ne.s32.totalorder %s81, %s84
    %p90 = scmp.eq.s32.totalorder %s8, 0
    %p91 = por %p89, %p90
    %p92 = scmp.ne.s32.totalorder %s81, %s84
    %p93 = scmp.eq.s32.totalorder %s13, 1
    %p94 = por %p92, %p93
    %p95 = scmp.ne.s32.totalorder %s84, %s85
    %p96 = scmp.eq.s32.totalorder %s13, 0
    %p97 = por %p95, %p96
    %p98 = scmp.ne.s32.totalorder %s84, %s85
    %p99 = scmp.eq.s32.totalorder %s14, 1
    %p100 = por %p98, %p99
    %p102 = scmp.ne.s32.totalorder %s85, %s101
    %p103 = scmp.eq.s32.totalorder %s14, 0
    %p104 = por %p102, %p103
    %p105 = scmp.le.s32.totalorder 1, %s8
    %p106 = scmp.lt.s32.totalorder %s8, 3
    %p107 = pnand %p105, %p106
    %p108 = pneg %p107
    // Predicated region
    $region9: #{discriminator.6} parent=5 // pred_check
      _
    $region10: #{discriminator.6} parent=5 // pred_check_branch
      %110 = sbr.rel (%p107) target = $region12
    $region11: #{discriminator.6} parent=5 // pred_region
      %s111 = ssub.s32 %s8, 1
      // Predicated region
      $region13: #{discriminator.6} parent=11 // pred_check
        %p112 = pneg %p69
      $region14: #{discriminator.6} parent=11 // pred_check_branch
        %114 = sbr.rel (%p112) target = $region16
      $region15: #{discriminator.6} parent=11 // pred_region
        _
      $region16: #{discriminator.6} parent=11 // pred_fallthru
        _
    $region12: #{discriminator.6} parent=5 // pred_fallthru
      _
    %p115 = scmp.lt.s32.totalorder %s8, 2
    // Predicated region
    $region17: #{discriminator.6} parent=5 // pred_check
      %p116 = pneg %p115
    $region18: #{discriminator.6} parent=5 // pred_check_branch
      %118 = sbr.rel (%p116) target = $region20
    $region19: #{discriminator.6} parent=5 // pred_region
      // Predicated region
      $region21: #{discriminator.6} parent=19 // pred_check
        %p119 = pneg %p42
      $region22: #{discriminator.6} parent=19 // pred_check_branch
        %121 = sbr.rel (%p119) target = $region24
      $region23: #{discriminator.6} parent=19 // pred_region
        %s122 = smul.u32 8, %s16
        %p123 = scmp.lt.s32.totalorder %s15, 1
        %s124 = scalar_select %p123, %s15, 1
        %p125 = scmp.lt.s32.totalorder %s122, 7
        %s126 = scalar_select %p125, %s122, 7
        %s127 = smul.addr %s126, 8
        %s128 = smul.addr %s124, 64
        %s129 = sadd.s32 %s127, %s128
        %s130 = smul.addr %s129, 4
        %s131 = scalar_lea.vmem %s0, %s130
        %s132 = smul.u32 8, %s16
      $region24: #{discriminator.6} parent=19 // pred_fallthru
        _
    $region20: #{discriminator.6} parent=5 // pred_fallthru
      _
    %p133 = scmp.le.s32.totalorder 1, %s8
    %p134 = scmp.lt.s32.totalorder %s8, 3
    %p135 = pnand %p133, %p134
    %p136 = pneg %p135
    // Predicated region
    $region25: #{discriminator.6} parent=5 // pred_check
      _
    $region26: #{discriminator.6} parent=5 // pred_check_branch
      %138 = sbr.rel (%p135) target = $region28
    $region27: #{discriminator.6} parent=5 // pred_region
      %s139 = ssub.s32 %s8, 1
      %s140 = smul.u32 8, %s18
      %p141 = scmp.lt.s32.totalorder %s17, 1
      %s142 = scalar_select %p141, %s17, 1
      %p143 = scmp.lt.s32.totalorder %s140, 7
      %s144 = scalar_select %p143, %s140, 7
      %s145 = smul.addr %s144, 8
      %s146 = smul.addr %s142, 64
      %s147 = sadd.s32 %s145, %s146
      %s148 = smul.addr %s147, 4
      %s149 = scalar_lea.vmem %s0, %s148
      %p150 = pneg %p48
      %p151 = pneg %p45
      %p152 = pneg %p69
      %p153 = pneg %p66
      %p154 = pneg %p97
      %p155 = pneg %p94
      %s156 = smul.u32 8, %s18
      %p157 = scmp.lt.s32.totalorder %s17, 1
      %s158 = scalar_select %p157, %s17, 1
      %p159 = scmp.lt.s32.totalorder %s156, 7
      %s160 = scalar_select %p159, %s156, 7
      %s161 = smul.addr %s158, 8
      %s162 = sadd.s32 %s160, %s161
      %s163 = smul.addr %s162, 4
      %s164 = scalar_lea.vmem %s2, %s163
      %s165 = smul.u32 8, %s18
      %p166 = scmp.lt.s32.totalorder %s17, 1
      %s167 = scalar_select %p166, %s17, 1
      %p168 = scmp.lt.s32.totalorder %s165, 7
      %s169 = scalar_select %p168, %s165, 7
      %s170 = smul.addr %s169, 8
      %s171 = smul.addr %s167, 64
      %s172 = sadd.s32 %s170, %s171
      %s173 = smul.addr %s172, 4
      %s174 = scalar_lea.vmem %s0, %s173
      %s175 = smul.u32 8, %s18
      %s176 = smul.u32 8, %s18
      %p177 = scmp.lt.s32.totalorder %s17, 1
      %s178 = scalar_select %p177, %s17, 1
      %p179 = scmp.lt.s32.totalorder %s176, 7
      %s180 = scalar_select %p179, %s176, 7
      %s181 = smul.addr %s178, 8
      %s182 = sadd.s32 %s180, %s181
      %s183 = smul.addr %s182, 4
      %s184 = scalar_lea.vmem %s2, %s183
      %s185 = smul.u32 8, %s18
      %v186 = vld [vmem:[%s174] sm:$0xff]
      %v187 = vld [vmem:[%s174 + $0x8] sm:$0xff]
      %v188 = vld [vmem:[%s174 + $0x10] sm:$0xff]
      %v189 = vld [vmem:[%s174 + $0x18] sm:$0xff]
      %v190 = vld [vmem:[%s174 + $0x20] sm:$0xff]
      %v191 = vld [vmem:[%s174 + $0x28] sm:$0xff]
      %v192 = vld [vmem:[%s174 + $0x30] sm:$0xff]
      %v193 = vld [vmem:[%s174 + $0x38] sm:$0xff]
      %v194 = vld [vmem:[%s174 + $0x40] sm:$0xff]
      %v195 = vld [vmem:[%s174 + $0x48] sm:$0xff]
      %v196 = vld [vmem:[%s174 + $0x50] sm:$0xff]
      %v197 = vld [vmem:[%s174 + $0x58] sm:$0xff]
      %v198 = vld [vmem:[%s174 + $0x60] sm:$0xff]
      %v199 = vld [vmem:[%s174 + $0x68] sm:$0xff]
      %v200 = vld [vmem:[%s174 + $0x70] sm:$0xff]
      %v201 = vld [vmem:[%s174 + $0x78] sm:$0xff]
      %v202 = vld [vmem:[%s174 + $0x80] sm:$0xff]
      %v203 = vld [vmem:[%s174 + $0x88] sm:$0xff]
      %v204 = vld [vmem:[%s174 + $0x90] sm:$0xff]
      %v205 = vld [vmem:[%s174 + $0x98] sm:$0xff]
      %v206 = vld [vmem:[%s174 + $0xa0] sm:$0xff]
      %v207 = vld [vmem:[%s174 + $0xa8] sm:$0xff]
      %v208 = vld [vmem:[%s174 + $0xb0] sm:$0xff]
      %v209 = vld [vmem:[%s174 + $0xb8] sm:$0xff]
      %v210 = vld [vmem:[%s174 + $0xc0] sm:$0xff]
      %v211 = vld [vmem:[%s174 + $0xc8] sm:$0xff]
      %v212 = vld [vmem:[%s174 + $0xd0] sm:$0xff]
      %v213 = vld [vmem:[%s174 + $0xd8] sm:$0xff]
      %v214 = vld [vmem:[%s174 + $0xe0] sm:$0xff]
      %v215 = vld [vmem:[%s174 + $0xe8] sm:$0xff]
      %v216 = vld [vmem:[%s174 + $0xf0] sm:$0xff]
      %v217 = vld [vmem:[%s174 + $0xf8] sm:$0xff]
      %v218 = vld [vmem:[%s1] sm:$0xf]
      %v219 = vld [vmem:[%s1 + $0x4] sm:$0xf]
      %v220 = vld [vmem:[%s1 + $0x8] sm:$0xf]
      %v221 = vld [vmem:[%s1 + $0xc] sm:$0xf]
      %v222 = vld [vmem:[%s1 + $0x10] sm:$0xf]
      %v223 = vld [vmem:[%s1 + $0x14] sm:$0xf]
      %v224 = vld [vmem:[%s1 + $0x18] sm:$0xf]
      %v225 = vld [vmem:[%s1 + $0x1c] sm:$0xf]
      %v226 = vld [vmem:[%s1 + $0x20] sm:$0xf]
      %v227 = vld [vmem:[%s1 + $0x24] sm:$0xf]
      %v228 = vld [vmem:[%s1 + $0x28] sm:$0xf]
      %v229 = vld [vmem:[%s1 + $0x2c] sm:$0xf]
      %v230 = vld [vmem:[%s1 + $0x30] sm:$0xf]
      %v231 = vld [vmem:[%s1 + $0x34] sm:$0xf]
      %v232 = vld [vmem:[%s1 + $0x38] sm:$0xf]
      %v233 = vld [vmem:[%s1 + $0x3c] sm:$0xf]
      %v234 = vld [vmem:[%s1 + $0x40] sm:$0xf]
      %v235 = vld [vmem:[%s1 + $0x44] sm:$0xf]
      %v236 = vld [vmem:[%s1 + $0x48] sm:$0xf]
      %v237 = vld [vmem:[%s1 + $0x4c] sm:$0xf]
      %v238 = vld [vmem:[%s1 + $0x50] sm:$0xf]
      %v239 = vld [vmem:[%s1 + $0x54] sm:$0xf]
      %v240 = vld [vmem:[%s1 + $0x58] sm:$0xf]
      %v241 = vld [vmem:[%s1 + $0x5c] sm:$0xf]
      %v242 = vld [vmem:[%s1 + $0x60] sm:$0xf]
      %v243 = vld [vmem:[%s1 + $0x64] sm:$0xf]
      %v244 = vld [vmem:[%s1 + $0x68] sm:$0xf]
      %v245 = vld [vmem:[%s1 + $0x6c] sm:$0xf]
      %v246 = vld [vmem:[%s1 + $0x70] sm:$0xf]
      %v247 = vld [vmem:[%s1 + $0x74] sm:$0xf]
      %v248 = vld [vmem:[%s1 + $0x78] sm:$0xf]
      %v249 = vld [vmem:[%s1 + $0x7c] sm:$0xf]
      %v250 = vld [vmem:[%s1 + $0x80] sm:$0xf]
      %v251 = vld [vmem:[%s1 + $0x84] sm:$0xf]
      %v252 = vld [vmem:[%s1 + $0x88] sm:$0xf]
      %v253 = vld [vmem:[%s1 + $0x8c] sm:$0xf]
      %v254 = vld [vmem:[%s1 + $0x90] sm:$0xf]
      %v255 = vld [vmem:[%s1 + $0x94] sm:$0xf]
      %v256 = vld [vmem:[%s1 + $0x98] sm:$0xf]
      %v257 = vld [vmem:[%s1 + $0x9c] sm:$0xf]
      %v258 = vld [vmem:[%s1 + $0xa0] sm:$0xf]
      %v259 = vld [vmem:[%s1 + $0xa4] sm:$0xf]
      %v260 = vld [vmem:[%s1 + $0xa8] sm:$0xf]
      %v261 = vld [vmem:[%s1 + $0xac] sm:$0xf]
      %v262 = vld [vmem:[%s1 + $0xb0] sm:$0xf]
      %v263 = vld [vmem:[%s1 + $0xb4] sm:$0xf]
      %v264 = vld [vmem:[%s1 + $0xb8] sm:$0xf]
      %v265 = vld [vmem:[%s1 + $0xbc] sm:$0xf]
      %v266 = vld [vmem:[%s1 + $0xc0] sm:$0xf]
      %v267 = vld [vmem:[%s1 + $0xc4] sm:$0xf]
      %v268 = vld [vmem:[%s1 + $0xc8] sm:$0xf]
      %v269 = vld [vmem:[%s1 + $0xcc] sm:$0xf]
      %v270 = vld [vmem:[%s1 + $0xd0] sm:$0xf]
      %v271 = vld [vmem:[%s1 + $0xd4] sm:$0xf]
      %v272 = vld [vmem:[%s1 + $0xd8] sm:$0xf]
      %v273 = vld [vmem:[%s1 + $0xdc] sm:$0xf]
      %v274 = vld [vmem:[%s1 + $0xe0] sm:$0xf]
      %v275 = vld [vmem:[%s1 + $0xe4] sm:$0xf]
      %v276 = vld [vmem:[%s1 + $0xe8] sm:$0xf]
      %v277 = vld [vmem:[%s1 + $0xec] sm:$0xf]
      %v278 = vld [vmem:[%s1 + $0xf0] sm:$0xf]
      %v279 = vld [vmem:[%s1 + $0xf4] sm:$0xf]
      %v280 = vld [vmem:[%s1 + $0xf8] sm:$0xf]
      %v281 = vld [vmem:[%s1 + $0xfc] sm:$0xf]
      %v282 = vld [vmem:[%s1 + $0x100] sm:$0xf]
      %v283 = vld [vmem:[%s1 + $0x104] sm:$0xf]
      %v284 = vld [vmem:[%s1 + $0x108] sm:$0xf]
      %v285 = vld [vmem:[%s1 + $0x10c] sm:$0xf]
      %v286 = vld [vmem:[%s1 + $0x110] sm:$0xf]
      %v287 = vld [vmem:[%s1 + $0x114] sm:$0xf]
      %v288 = vld [vmem:[%s1 + $0x118] sm:$0xf]
      %v289 = vld [vmem:[%s1 + $0x11c] sm:$0xf]
      %v290 = vld [vmem:[%s1 + $0x120] sm:$0xf]
      %v291 = vld [vmem:[%s1 + $0x124] sm:$0xf]
      %v292 = vld [vmem:[%s1 + $0x128] sm:$0xf]
      %v293 = vld [vmem:[%s1 + $0x12c] sm:$0xf]
      %v294 = vld [vmem:[%s1 + $0x130] sm:$0xf]
      %v295 = vld [vmem:[%s1 + $0x134] sm:$0xf]
      %v296 = vld [vmem:[%s1 + $0x138] sm:$0xf]
      %v297 = vld [vmem:[%s1 + $0x13c] sm:$0xf]
      %v298 = vld [vmem:[%s1 + $0x140] sm:$0xf]
      %v299 = vld [vmem:[%s1 + $0x144] sm:$0xf]
      %v300 = vld [vmem:[%s1 + $0x148] sm:$0xf]
      %v301 = vld [vmem:[%s1 + $0x14c] sm:$0xf]
      %v302 = vld [vmem:[%s1 + $0x150] sm:$0xf]
      %v303 = vld [vmem:[%s1 + $0x154] sm:$0xf]
      %v304 = vld [vmem:[%s1 + $0x158] sm:$0xf]
      %v305 = vld [vmem:[%s1 + $0x15c] sm:$0xf]
      %v306 = vld [vmem:[%s1 + $0x160] sm:$0xf]
      %v307 = vld [vmem:[%s1 + $0x164] sm:$0xf]
      %v308 = vld [vmem:[%s1 + $0x168] sm:$0xf]
      %v309 = vld [vmem:[%s1 + $0x16c] sm:$0xf]
      %v310 = vld [vmem:[%s1 + $0x170] sm:$0xf]
      %v311 = vld [vmem:[%s1 + $0x174] sm:$0xf]
      %v312 = vld [vmem:[%s1 + $0x178] sm:$0xf]
      %v313 = vld [vmem:[%s1 + $0x17c] sm:$0xf]
      %v314 = vld [vmem:[%s1 + $0x180] sm:$0xf]
      %v315 = vld [vmem:[%s1 + $0x184] sm:$0xf]
      %v316 = vld [vmem:[%s1 + $0x188] sm:$0xf]
      %v317 = vld [vmem:[%s1 + $0x18c] sm:$0xf]
      %v318 = vld [vmem:[%s1 + $0x190] sm:$0xf]
      %v319 = vld [vmem:[%s1 + $0x194] sm:$0xf]
      %v320 = vld [vmem:[%s1 + $0x198] sm:$0xf]
      %v321 = vld [vmem:[%s1 + $0x19c] sm:$0xf]
      %v322 = vld [vmem:[%s1 + $0x1a0] sm:$0xf]
      %v323 = vld [vmem:[%s1 + $0x1a4] sm:$0xf]
      %v324 = vld [vmem:[%s1 + $0x1a8] sm:$0xf]
      %v325 = vld [vmem:[%s1 + $0x1ac] sm:$0xf]
      %v326 = vld [vmem:[%s1 + $0x1b0] sm:$0xf]
      %v327 = vld [vmem:[%s1 + $0x1b4] sm:$0xf]
      %v328 = vld [vmem:[%s1 + $0x1b8] sm:$0xf]
      %v329 = vld [vmem:[%s1 + $0x1bc] sm:$0xf]
      %v330 = vld [vmem:[%s1 + $0x1c0] sm:$0xf]
      %v331 = vld [vmem:[%s1 + $0x1c4] sm:$0xf]
      %v332 = vld [vmem:[%s1 + $0x1c8] sm:$0xf]
      %v333 = vld [vmem:[%s1 + $0x1cc] sm:$0xf]
      %v334 = vld [vmem:[%s1 + $0x1d0] sm:$0xf]
      %v335 = vld [vmem:[%s1 + $0x1d4] sm:$0xf]
      %v336 = vld [vmem:[%s1 + $0x1d8] sm:$0xf]
      %v337 = vld [vmem:[%s1 + $0x1dc] sm:$0xf]
      %v338 = vld [vmem:[%s1 + $0x1e0] sm:$0xf]
      %v339 = vld [vmem:[%s1 + $0x1e4] sm:$0xf]
      %v340 = vld [vmem:[%s1 + $0x1e8] sm:$0xf]
      %v341 = vld [vmem:[%s1 + $0x1ec] sm:$0xf]
      %v342 = vld [vmem:[%s1 + $0x1f0] sm:$0xf]
      %v343 = vld [vmem:[%s1 + $0x1f4] sm:$0xf]
      %v344 = vld [vmem:[%s1 + $0x1f8] sm:$0xf]
      %v345 = vld [vmem:[%s1 + $0x1fc] sm:$0xf]
      %v378 = vunpack.c.l.b16 %v186
      %v379 = vunpack.c.h.b16 %v186
      %v380 = vunpack.c.l.b16 %v187
      %v381 = vunpack.c.h.b16 %v187
      %v382 = vunpack.c.l.b16 %v188
      %v383 = vunpack.c.h.b16 %v188
      %v384 = vunpack.c.l.b16 %v189
      %v385 = vunpack.c.h.b16 %v189
      %v386 = vunpack.c.l.b16 %v190
      %v387 = vunpack.c.h.b16 %v190
      %v388 = vunpack.c.l.b16 %v191
      %v389 = vunpack.c.h.b16 %v191
      %v390 = vunpack.c.l.b16 %v192
      %v391 = vunpack.c.h.b16 %v192
      %v392 = vunpack.c.l.b16 %v193
      %v393 = vunpack.c.h.b16 %v193
      %v394 = vunpack.c.l.b16 %v194
      %v395 = vunpack.c.h.b16 %v194
      %v396 = vunpack.c.l.b16 %v195
      %v397 = vunpack.c.h.b16 %v195
      %v398 = vunpack.c.l.b16 %v196
      %v399 = vunpack.c.h.b16 %v196
      %v400 = vunpack.c.l.b16 %v197
      %v401 = vunpack.c.h.b16 %v197
      %v402 = vunpack.c.l.b16 %v198
      %v403 = vunpack.c.h.b16 %v198
      %v404 = vunpack.c.l.b16 %v199
      %v405 = vunpack.c.h.b16 %v199
      %v406 = vunpack.c.l.b16 %v200
      %v407 = vunpack.c.h.b16 %v200
      %v408 = vunpack.c.l.b16 %v201
      %v409 = vunpack.c.h.b16 %v201
      %v410 = vunpack.c.l.b16 %v202
      %v411 = vunpack.c.h.b16 %v202
      %v412 = vunpack.c.l.b16 %v203
      %v413 = vunpack.c.h.b16 %v203
      %v414 = vunpack.c.l.b16 %v204
      %v415 = vunpack.c.h.b16 %v204
      %v416 = vunpack.c.l.b16 %v205
      %v417 = vunpack.c.h.b16 %v205
      %v418 = vunpack.c.l.b16 %v206
      %v419 = vunpack.c.h.b16 %v206
      %v420 = vunpack.c.l.b16 %v207
      %v421 = vunpack.c.h.b16 %v207
      %v422 = vunpack.c.l.b16 %v208
      %v423 = vunpack.c.h.b16 %v208
      %v424 = vunpack.c.l.b16 %v209
      %v425 = vunpack.c.h.b16 %v209
      %v426 = vunpack.c.l.b16 %v210
      %v427 = vunpack.c.h.b16 %v210
      %v428 = vunpack.c.l.b16 %v211
      %v429 = vunpack.c.h.b16 %v211
      %v430 = vunpack.c.l.b16 %v212
      %v431 = vunpack.c.h.b16 %v212
      %v432 = vunpack.c.l.b16 %v213
      %v433 = vunpack.c.h.b16 %v213
      %v434 = vunpack.c.l.b16 %v214
      %v435 = vunpack.c.h.b16 %v214
      %v436 = vunpack.c.l.b16 %v215
      %v437 = vunpack.c.h.b16 %v215
      %v438 = vunpack.c.l.b16 %v216
      %v439 = vunpack.c.h.b16 %v216
      %v440 = vunpack.c.l.b16 %v217
      %v441 = vunpack.c.h.b16 %v217
      %v442 = vpack.c.b16 %v386, %v378
      %v443 = vpack.c.b16 %v387, %v379
      %v444 = vpack.c.b16 %v388, %v380
      %v445 = vpack.c.b16 %v389, %v381
      %v446 = vpack.c.b16 %v390, %v382
      %v447 = vpack.c.b16 %v391, %v383
      %v448 = vpack.c.b16 %v392, %v384
      %v449 = vpack.c.b16 %v393, %v385
      %v450 = vpack.c.b16 %v402, %v394
      %v451 = vpack.c.b16 %v403, %v395
      %v452 = vpack.c.b16 %v404, %v396
      %v453 = vpack.c.b16 %v405, %v397
      %v454 = vpack.c.b16 %v406, %v398
      %v455 = vpack.c.b16 %v407, %v399
      %v456 = vpack.c.b16 %v408, %v400
      %v457 = vpack.c.b16 %v409, %v401
      %v458 = vpack.c.b16 %v418, %v410
      %v459 = vpack.c.b16 %v419, %v411
      %v460 = vpack.c.b16 %v420, %v412
      %v461 = vpack.c.b16 %v421, %v413
      %v462 = vpack.c.b16 %v422, %v414
      %v463 = vpack.c.b16 %v423, %v415
      %v464 = vpack.c.b16 %v424, %v416
      %v465 = vpack.c.b16 %v425, %v417
      %v466 = vpack.c.b16 %v434, %v426
      %v467 = vpack.c.b16 %v435, %v427
      %v468 = vpack.c.b16 %v436, %v428
      %v469 = vpack.c.b16 %v437, %v429
      %v470 = vpack.c.b16 %v438, %v430
      %v471 = vpack.c.b16 %v439, %v431
      %v472 = vpack.c.b16 %v440, %v432
      %v473 = vpack.c.b16 %v441, %v433
      %v634 = vunpack.c.l.b16 %v218
      %v635 = vunpack.c.l.b16 %v219
      %v636 = vunpack.c.l.b16 %v220
      %v637 = vunpack.c.l.b16 %v221
      %v638 = vunpack.c.l.b16 %v222
      %v639 = vunpack.c.l.b16 %v223
      %v640 = vunpack.c.l.b16 %v224
      %v641 = vunpack.c.l.b16 %v225
      %v642 = vunpack.c.l.b16 %v226
      %v643 = vunpack.c.l.b16 %v227
      %v644 = vunpack.c.l.b16 %v228
      %v645 = vunpack.c.l.b16 %v229
      %v646 = vunpack.c.l.b16 %v230
      %v647 = vunpack.c.l.b16 %v231
      %v648 = vunpack.c.l.b16 %v232
      %v649 = vunpack.c.l.b16 %v233
      %v650 = vunpack.c.l.b16 %v234
      %v651 = vunpack.c.l.b16 %v235
      %v652 = vunpack.c.l.b16 %v236
      %v653 = vunpack.c.l.b16 %v237
      %v654 = vunpack.c.l.b16 %v238
      %v655 = vunpack.c.l.b16 %v239
      %v656 = vunpack.c.l.b16 %v240
      %v657 = vunpack.c.l.b16 %v241
      %v658 = vunpack.c.l.b16 %v242
      %v659 = vunpack.c.l.b16 %v243
      %v660 = vunpack.c.l.b16 %v244
      %v661 = vunpack.c.l.b16 %v245
      %v662 = vunpack.c.l.b16 %v246
      %v663 = vunpack.c.l.b16 %v247
      %v664 = vunpack.c.l.b16 %v248
      %v665 = vunpack.c.l.b16 %v249
      %v666 = vunpack.c.l.b16 %v250
      %v667 = vunpack.c.l.b16 %v251
      %v668 = vunpack.c.l.b16 %v252
      %v669 = vunpack.c.l.b16 %v253
      %v670 = vunpack.c.l.b16 %v254
      %v671 = vunpack.c.l.b16 %v255
      %v672 = vunpack.c.l.b16 %v256
      %v673 = vunpack.c.l.b16 %v257
      %v674 = vunpack.c.l.b16 %v258
      %v675 = vunpack.c.l.b16 %v259
      %v676 = vunpack.c.l.b16 %v260
      %v677 = vunpack.c.l.b16 %v261
      %v678 = vunpack.c.l.b16 %v262
      %v679 = vunpack.c.l.b16 %v263
      %v680 = vunpack.c.l.b16 %v264
      %v681 = vunpack.c.l.b16 %v265
      %v682 = vunpack.c.l.b16 %v266
      %v683 = vunpack.c.l.b16 %v267
      %v684 = vunpack.c.l.b16 %v268
      %v685 = vunpack.c.l.b16 %v269
      %v686 = vunpack.c.l.b16 %v270
      %v687 = vunpack.c.l.b16 %v271
      %v688 = vunpack.c.l.b16 %v272
      %v689 = vunpack.c.l.b16 %v273
      %v690 = vunpack.c.l.b16 %v274
      %v691 = vunpack.c.l.b16 %v275
      %v692 = vunpack.c.l.b16 %v276
      %v693 = vunpack.c.l.b16 %v277
      %v694 = vunpack.c.l.b16 %v278
      %v695 = vunpack.c.l.b16 %v279
      %v696 = vunpack.c.l.b16 %v280
      %v697 = vunpack.c.l.b16 %v281
      %v698 = vunpack.c.l.b16 %v282
      %v699 = vunpack.c.l.b16 %v283
      %v700 = vunpack.c.l.b16 %v284
      %v701 = vunpack.c.l.b16 %v285
      %v702 = vunpack.c.l.b16 %v286
      %v703 = vunpack.c.l.b16 %v287
      %v704 = vunpack.c.l.b16 %v288
      %v705 = vunpack.c.l.b16 %v289
      %v706 = vunpack.c.l.b16 %v290
      %v707 = vunpack.c.l.b16 %v291
      %v708 = vunpack.c.l.b16 %v292
      %v709 = vunpack.c.l.b16 %v293
      %v710 = vunpack.c.l.b16 %v294
      %v711 = vunpack.c.l.b16 %v295
      %v712 = vunpack.c.l.b16 %v296
      %v713 = vunpack.c.l.b16 %v297
      %v714 = vunpack.c.l.b16 %v298
      %v715 = vunpack.c.l.b16 %v299
      %v716 = vunpack.c.l.b16 %v300
      %v717 = vunpack.c.l.b16 %v301
      %v718 = vunpack.c.l.b16 %v302
      %v719 = vunpack.c.l.b16 %v303
      %v720 = vunpack.c.l.b16 %v304
      %v721 = vunpack.c.l.b16 %v305
      %v722 = vunpack.c.l.b16 %v306
      %v723 = vunpack.c.l.b16 %v307
      %v724 = vunpack.c.l.b16 %v308
      %v725 = vunpack.c.l.b16 %v309
      %v726 = vunpack.c.l.b16 %v310
      %v727 = vunpack.c.l.b16 %v311
      %v728 = vunpack.c.l.b16 %v312
      %v729 = vunpack.c.l.b16 %v313
      %v730 = vunpack.c.l.b16 %v314
      %v731 = vunpack.c.l.b16 %v315
      %v732 = vunpack.c.l.b16 %v316
      %v733 = vunpack.c.l.b16 %v317
      %v734 = vunpack.c.l.b16 %v318
      %v735 = vunpack.c.l.b16 %v319
      %v736 = vunpack.c.l.b16 %v320
      %v737 = vunpack.c.l.b16 %v321
      %v738 = vunpack.c.l.b16 %v322
      %v739 = vunpack.c.l.b16 %v323
      %v740 = vunpack.c.l.b16 %v324
      %v741 = vunpack.c.l.b16 %v325
      %v742 = vunpack.c.l.b16 %v326
      %v743 = vunpack.c.l.b16 %v327
      %v744 = vunpack.c.l.b16 %v328
      %v745 = vunpack.c.l.b16 %v329
      %v746 = vunpack.c.l.b16 %v330
      %v747 = vunpack.c.l.b16 %v331
      %v748 = vunpack.c.l.b16 %v332
      %v749 = vunpack.c.l.b16 %v333
      %v750 = vunpack.c.l.b16 %v334
      %v751 = vunpack.c.l.b16 %v335
      %v752 = vunpack.c.l.b16 %v336
      %v753 = vunpack.c.l.b16 %v337
      %v754 = vunpack.c.l.b16 %v338
      %v755 = vunpack.c.l.b16 %v339
      %v756 = vunpack.c.l.b16 %v340
      %v757 = vunpack.c.l.b16 %v341
      %v758 = vunpack.c.l.b16 %v342
      %v759 = vunpack.c.l.b16 %v343
      %v760 = vunpack.c.l.b16 %v344
      %v761 = vunpack.c.l.b16 %v345
      %v762 = vpack.c.b16 %v635, %v634
      %v763 = vpack.c.b16 %v637, %v636
      %v764 = vpack.c.b16 %v639, %v638
      %v765 = vpack.c.b16 %v641, %v640
      %v766 = vpack.c.b16 %v643, %v642
      %v767 = vpack.c.b16 %v645, %v644
      %v768 = vpack.c.b16 %v647, %v646
      %v769 = vpack.c.b16 %v649, %v648
      %v770 = vpack.c.b16 %v651, %v650
      %v771 = vpack.c.b16 %v653, %v652
      %v772 = vpack.c.b16 %v655, %v654
      %v773 = vpack.c.b16 %v657, %v656
      %v774 = vpack.c.b16 %v659, %v658
      %v775 = vpack.c.b16 %v661, %v660
      %v776 = vpack.c.b16 %v663, %v662
      %v777 = vpack.c.b16 %v665, %v664
      %v778 = vpack.c.b16 %v667, %v666
      %v779 = vpack.c.b16 %v669, %v668
      %v780 = vpack.c.b16 %v671, %v670
      %v781 = vpack.c.b16 %v673, %v672
      %v782 = vpack.c.b16 %v675, %v674
      %v783 = vpack.c.b16 %v677, %v676
      %v784 = vpack.c.b16 %v679, %v678
      %v785 = vpack.c.b16 %v681, %v680
      %v786 = vpack.c.b16 %v683, %v682
      %v787 = vpack.c.b16 %v685, %v684
      %v788 = vpack.c.b16 %v687, %v686
      %v789 = vpack.c.b16 %v689, %v688
      %v790 = vpack.c.b16 %v691, %v690
      %v791 = vpack.c.b16 %v693, %v692
      %v792 = vpack.c.b16 %v695, %v694
      %v793 = vpack.c.b16 %v697, %v696
      %v794 = vpack.c.b16 %v699, %v698
      %v795 = vpack.c.b16 %v701, %v700
      %v796 = vpack.c.b16 %v703, %v702
      %v797 = vpack.c.b16 %v705, %v704
      %v798 = vpack.c.b16 %v707, %v706
      %v799 = vpack.c.b16 %v709, %v708
      %v800 = vpack.c.b16 %v711, %v710
      %v801 = vpack.c.b16 %v713, %v712
      %v802 = vpack.c.b16 %v715, %v714
      %v803 = vpack.c.b16 %v717, %v716
      %v804 = vpack.c.b16 %v719, %v718
      %v805 = vpack.c.b16 %v721, %v720
      %v806 = vpack.c.b16 %v723, %v722
      %v807 = vpack.c.b16 %v725, %v724
      %v808 = vpack.c.b16 %v727, %v726
      %v809 = vpack.c.b16 %v729, %v728
      %v810 = vpack.c.b16 %v731, %v730
      %v811 = vpack.c.b16 %v733, %v732
      %v812 = vpack.c.b16 %v735, %v734
      %v813 = vpack.c.b16 %v737, %v736
      %v814 = vpack.c.b16 %v739, %v738
      %v815 = vpack.c.b16 %v741, %v740
      %v816 = vpack.c.b16 %v743, %v742
      %v817 = vpack.c.b16 %v745, %v744
      %v818 = vpack.c.b16 %v747, %v746
      %v819 = vpack.c.b16 %v749, %v748
      %v820 = vpack.c.b16 %v751, %v750
      %v821 = vpack.c.b16 %v753, %v752
      %v822 = vpack.c.b16 %v755, %v754
      %v823 = vpack.c.b16 %v757, %v756
      %v824 = vpack.c.b16 %v759, %v758
      %v825 = vpack.c.b16 %v761, %v760
      %890 = vmatpush.bf16.msra.mxu0 %v769
      %891 = vmatpush.bf16.msra.mxu0 %v768
      %892 = vmatpush.bf16.msra.mxu0 %v767
      %893 = vmatpush.bf16.msra.mxu0 %v766
      %894 = vmatpush.bf16.msra.mxu0 %v765
      %895 = vmatpush.bf16.msra.mxu0 %v764
      %896 = vmatpush.bf16.msra.mxu0 %v763
      %897 = vmatpush.bf16.msra.mxu0 %v762
      %898 = vmatmul.bf16.gmra.mxu0 %v442
      %v899 = vpop.f32.mrf.mxu0
      %v900 = vadd.f32 0.0, %v899
      %v901 = vpop.f32.mrf.mxu0
      %v902 = vadd.f32 0.0, %v901
      %903 = vmatmul.bf16.gmra.mxu0 %v450
      %v904 = vpop.f32.mrf.mxu0
      %v905 = vadd.f32 0.0, %v904
      %v906 = vpop.f32.mrf.mxu0
      %v907 = vadd.f32 0.0, %v906
      %908 = vmatmul.bf16.gmra.mxu0 %v458
      %v909 = vpop.f32.mrf.mxu0
      %v910 = vadd.f32 0.0, %v909
      %v911 = vpop.f32.mrf.mxu0
      %v912 = vadd.f32 0.0, %v911
      %913 = vmatmul.bf16.gmra.mxu0 %v466
      %v914 = vpop.f32.mrf.mxu0
      %v915 = vadd.f32 0.0, %v914
      %v916 = vpop.f32.mrf.mxu0
      %v917 = vadd.f32 0.0, %v916
      %918 = vdwg.mxu0
      %919 = vmatpush.bf16.msra.mxu0 %v777
      %920 = vmatpush.bf16.msra.mxu0 %v776
      %921 = vmatpush.bf16.msra.mxu0 %v775
      %922 = vmatpush.bf16.msra.mxu0 %v774
      %923 = vmatpush.bf16.msra.mxu0 %v773
      %924 = vmatpush.bf16.msra.mxu0 %v772
      %925 = vmatpush.bf16.msra.mxu0 %v771
      %926 = vmatpush.bf16.msra.mxu0 %v770
      %927 = vmatmul.bf16.gmra.mxu0 %v443
      %v928 = vpop.f32.mrf.mxu0
      %v929 = vadd.f32 %v900, %v928
      %v930 = vpop.f32.mrf.mxu0
      %v931 = vadd.f32 %v902, %v930
      %932 = vmatmul.bf16.gmra.mxu0 %v451
      %v933 = vpop.f32.mrf.mxu0
      %v934 = vadd.f32 %v905, %v933
      %v935 = vpop.f32.mrf.mxu0
      %v936 = vadd.f32 %v907, %v935
      %937 = vmatmul.bf16.gmra.mxu0 %v459
      %v938 = vpop.f32.mrf.mxu0
      %v939 = vadd.f32 %v910, %v938
      %v940 = vpop.f32.mrf.mxu0
      %v941 = vadd.f32 %v912, %v940
      %942 = vmatmul.bf16.gmra.mxu0 %v467
      %v943 = vpop.f32.mrf.mxu0
      %v944 = vadd.f32 %v915, %v943
      %v945 = vpop.f32.mrf.mxu0
      %v946 = vadd.f32 %v917, %v945
      %947 = vdwg.mxu0
      %948 = vmatpush.bf16.msra.mxu0 %v785
      %949 = vmatpush.bf16.msra.mxu0 %v784
      %950 = vmatpush.bf16.msra.mxu0 %v783
      %951 = vmatpush.bf16.msra.mxu0 %v782
      %952 = vmatpush.bf16.msra.mxu0 %v781
      %953 = vmatpush.bf16.msra.mxu0 %v780
      %954 = vmatpush.bf16.msra.mxu0 %v779
      %955 = vmatpush.bf16.msra.mxu0 %v778
      %956 = vmatmul.bf16.gmra.mxu0 %v444
      %v957 = vpop.f32.mrf.mxu0
      %v958 = vadd.f32 %v929, %v957
      %v959 = vpop.f32.mrf.mxu0
      %v960 = vadd.f32 %v931, %v959
      %961 = vmatmul.bf16.gmra.mxu0 %v452
      %v962 = vpop.f32.mrf.mxu0
      %v963 = vadd.f32 %v934, %v962
      %v964 = vpop.f32.mrf.mxu0
      %v965 = vadd.f32 %v936, %v964
      %966 = vmatmul.bf16.gmra.mxu0 %v460
      %v967 = vpop.f32.mrf.mxu0
      %v968 = vadd.f32 %v939, %v967
      %v969 = vpop.f32.mrf.mxu0
      %v970 = vadd.f32 %v941, %v969
      %971 = vmatmul.bf16.gmra.mxu0 %v468
      %v972 = vpop.f32.mrf.mxu0
      %v973 = vadd.f32 %v944, %v972
      %v974 = vpop.f32.mrf.mxu0
      %v975 = vadd.f32 %v946, %v974
      %976 = vdwg.mxu0
      %977 = vmatpush.bf16.msra.mxu0 %v793
      %978 = vmatpush.bf16.msra.mxu0 %v792
      %979 = vmatpush.bf16.msra.mxu0 %v791
      %980 = vmatpush.bf16.msra.mxu0 %v790
      %981 = vmatpush.bf16.msra.mxu0 %v789
      %982 = vmatpush.bf16.msra.mxu0 %v788
      %983 = vmatpush.bf16.msra.mxu0 %v787
      %984 = vmatpush.bf16.msra.mxu0 %v786
      %985 = vmatmul.bf16.gmra.mxu0 %v445
      %v986 = vpop.f32.mrf.mxu0
      %v987 = vadd.f32 %v958, %v986
      %v988 = vpop.f32.mrf.mxu0
      %v989 = vadd.f32 %v960, %v988
      %990 = vmatmul.bf16.gmra.mxu0 %v453
      %v991 = vpop.f32.mrf.mxu0
      %v992 = vadd.f32 %v963, %v991
      %v993 = vpop.f32.mrf.mxu0
      %v994 = vadd.f32 %v965, %v993
      %995 = vmatmul.bf16.gmra.mxu0 %v461
      %v996 = vpop.f32.mrf.mxu0
      %v997 = vadd.f32 %v968, %v996
      %v998 = vpop.f32.mrf.mxu0
      %v999 = vadd.f32 %v970, %v998
      %1000 = vmatmul.bf16.gmra.mxu0 %v469
      %v1001 = vpop.f32.mrf.mxu0
      %v1002 = vadd.f32 %v973, %v1001
      %v1003 = vpop.f32.mrf.mxu0
      %v1004 = vadd.f32 %v975, %v1003
      %1005 = vdwg.mxu0
      %1006 = vmatpush.bf16.msra.mxu0 %v801
      %1007 = vmatpush.bf16.msra.mxu0 %v800
      %1008 = vmatpush.bf16.msra.mxu0 %v799
      %1009 = vmatpush.bf16.msra.mxu0 %v798
      %1010 = vmatpush.bf16.msra.mxu0 %v797
      %1011 = vmatpush.bf16.msra.mxu0 %v796
      %1012 = vmatpush.bf16.msra.mxu0 %v795
      %1013 = vmatpush.bf16.msra.mxu0 %v794
      %1014 = vmatmul.bf16.gmra.mxu0 %v446
      %v1015 = vpop.f32.mrf.mxu0
      %v1016 = vadd.f32 %v987, %v1015
      %v1017 = vpop.f32.mrf.mxu0
      %v1018 = vadd.f32 %v989, %v1017
      %1019 = vmatmul.bf16.gmra.mxu0 %v454
      %v1020 = vpop.f32.mrf.mxu0
      %v1021 = vadd.f32 %v992, %v1020
      %v1022 = vpop.f32.mrf.mxu0
      %v1023 = vadd.f32 %v994, %v1022
      %1024 = vmatmul.bf16.gmra.mxu0 %v462
      %v1025 = vpop.f32.mrf.mxu0
      %v1026 = vadd.f32 %v997, %v1025
      %v1027 = vpop.f32.mrf.mxu0
      %v1028 = vadd.f32 %v999, %v1027
      %1029 = vmatmul.bf16.gmra.mxu0 %v470
      %v1030 = vpop.f32.mrf.mxu0
      %v1031 = vadd.f32 %v1002, %v1030
      %v1032 = vpop.f32.mrf.mxu0
      %v1033 = vadd.f32 %v1004, %v1032
      %1034 = vdwg.mxu0
      %1035 = vmatpush.bf16.msra.mxu0 %v809
      %1036 = vmatpush.bf16.msra.mxu0 %v808
      %1037 = vmatpush.bf16.msra.mxu0 %v807
      %1038 = vmatpush.bf16.msra.mxu0 %v806
      %1039 = vmatpush.bf16.msra.mxu0 %v805
      %1040 = vmatpush.bf16.msra.mxu0 %v804
      %1041 = vmatpush.bf16.msra.mxu0 %v803
      %1042 = vmatpush.bf16.msra.mxu0 %v802
      %1043 = vmatmul.bf16.gmra.mxu0 %v447
      %v1044 = vpop.f32.mrf.mxu0
      %v1045 = vadd.f32 %v1016, %v1044
      %v1046 = vpop.f32.mrf.mxu0
      %v1047 = vadd.f32 %v1018, %v1046
      %1048 = vmatmul.bf16.gmra.mxu0 %v455
      %v1049 = vpop.f32.mrf.mxu0
      %v1050 = vadd.f32 %v1021, %v1049
      %v1051 = vpop.f32.mrf.mxu0
      %v1052 = vadd.f32 %v1023, %v1051
      %1053 = vmatmul.bf16.gmra.mxu0 %v463
      %v1054 = vpop.f32.mrf.mxu0
      %v1055 = vadd.f32 %v1026, %v1054
      %v1056 = vpop.f32.mrf.mxu0
      %v1057 = vadd.f32 %v1028, %v1056
      %1058 = vmatmul.bf16.gmra.mxu0 %v471
      %v1059 = vpop.f32.mrf.mxu0
      %v1060 = vadd.f32 %v1031, %v1059
      %v1061 = vpop.f32.mrf.mxu0
      %v1062 = vadd.f32 %v1033, %v1061
      %1063 = vdwg.mxu0
      %1064 = vmatpush.bf16.msra.mxu0 %v817
      %1065 = vmatpush.bf16.msra.mxu0 %v816
      %1066 = vmatpush.bf16.msra.mxu0 %v815
      %1067 = vmatpush.bf16.msra.mxu0 %v814
      %1068 = vmatpush.bf16.msra.mxu0 %v813
      %1069 = vmatpush.bf16.msra.mxu0 %v812
      %1070 = vmatpush.bf16.msra.mxu0 %v811
      %1071 = vmatpush.bf16.msra.mxu0 %v810
      %1072 = vmatmul.bf16.gmra.mxu0 %v448
      %v1073 = vpop.f32.mrf.mxu0
      %v1074 = vadd.f32 %v1045, %v1073
      %v1075 = vpop.f32.mrf.mxu0
      %v1076 = vadd.f32 %v1047, %v1075
      %1077 = vmatmul.bf16.gmra.mxu0 %v456
      %v1078 = vpop.f32.mrf.mxu0
      %v1079 = vadd.f32 %v1050, %v1078
      %v1080 = vpop.f32.mrf.mxu0
      %v1081 = vadd.f32 %v1052, %v1080
      %1082 = vmatmul.bf16.gmra.mxu0 %v464
      %v1083 = vpop.f32.mrf.mxu0
      %v1084 = vadd.f32 %v1055, %v1083
      %v1085 = vpop.f32.mrf.mxu0
      %v1086 = vadd.f32 %v1057, %v1085
      %1087 = vmatmul.bf16.gmra.mxu0 %v472
      %v1088 = vpop.f32.mrf.mxu0
      %v1089 = vadd.f32 %v1060, %v1088
      %v1090 = vpop.f32.mrf.mxu0
      %v1091 = vadd.f32 %v1062, %v1090
      %1092 = vdwg.mxu0
      %1093 = vmatpush.bf16.msra.mxu0 %v825
      %1094 = vmatpush.bf16.msra.mxu0 %v824
      %1095 = vmatpush.bf16.msra.mxu0 %v823
      %1096 = vmatpush.bf16.msra.mxu0 %v822
      %1097 = vmatpush.bf16.msra.mxu0 %v821
      %1098 = vmatpush.bf16.msra.mxu0 %v820
      %1099 = vmatpush.bf16.msra.mxu0 %v819
      %1100 = vmatpush.bf16.msra.mxu0 %v818
      %1101 = vmatmul.bf16.gmra.mxu0 %v449
      %v1102 = vpop.f32.mrf.mxu0
      %v1103 = vadd.f32 %v1074, %v1102
      %v1104 = vpop.f32.mrf.mxu0
      %v1105 = vadd.f32 %v1076, %v1104
      %1106 = vmatmul.bf16.gmra.mxu0 %v457
      %v1107 = vpop.f32.mrf.mxu0
      %v1108 = vadd.f32 %v1079, %v1107
      %v1109 = vpop.f32.mrf.mxu0
      %v1110 = vadd.f32 %v1081, %v1109
      %1111 = vmatmul.bf16.gmra.mxu0 %v465
      %v1112 = vpop.f32.mrf.mxu0
      %v1113 = vadd.f32 %v1084, %v1112
      %v1114 = vpop.f32.mrf.mxu0
      %v1115 = vadd.f32 %v1086, %v1114
      %1116 = vmatmul.bf16.gmra.mxu0 %v473
      %v1117 = vpop.f32.mrf.mxu0
      %v1118 = vadd.f32 %v1089, %v1117
      %v1119 = vpop.f32.mrf.mxu0
      %v1120 = vadd.f32 %v1091, %v1119
      %1121 = vdwg.mxu0
      %v1122 = vadd.f32 %v1103, %v1105
      %v1123 = vadd.f32 %v1122, %v1108
      %v1124 = vadd.f32 %v1123, %v1110
      %v1125 = vadd.f32 %v1124, %v1113
      %v1126 = vadd.f32 %v1125, %v1115
      %v1127 = vadd.f32 %v1126, %v1118
      %v1128 = vadd.f32 %v1127, %v1120
      %v1129 = vrot.slane %v1128, 4
      %v1130 = vadd.f32 %v1128, %v1129
      %v1131 = vrot.slane %v1130, 2
      %v1132 = vadd.f32 %v1130, %v1131
      %v1133 = vrot.slane %v1132, 1
      %v1134 = vadd.f32 %v1132, %v1133
      %v1135 = vrcp.pop 64.0
      %v1136 = vmul.f32 64.0, %v1135
      %v1137 = vsub.f32 1.0, %v1136
      %v1138 = vmul.f32 %v1135, %v1137
      %v1139 = vadd.f32 %v1135, %v1138
      %vm1140 = vweird.f32 %v1135
      %v1141 = vsel %vm1140, %v1135, %v1139
      %v1142 = vmul.f32 %v1134, %v1141
      %v1143 = vmul.f32 %v1103, %v1103
      %v1144 = vmul.f32 %v1105, %v1105
      %v1145 = vmul.f32 %v1108, %v1108
      %v1146 = vmul.f32 %v1110, %v1110
      %v1147 = vmul.f32 %v1113, %v1113
      %v1148 = vmul.f32 %v1115, %v1115
      %v1149 = vmul.f32 %v1118, %v1118
      %v1150 = vmul.f32 %v1120, %v1120
      %v1151 = vadd.f32 %v1143, %v1144
      %v1152 = vadd.f32 %v1151, %v1145
      %v1153 = vadd.f32 %v1152, %v1146
      %v1154 = vadd.f32 %v1153, %v1147
      %v1155 = vadd.f32 %v1154, %v1148
      %v1156 = vadd.f32 %v1155, %v1149
      %v1157 = vadd.f32 %v1156, %v1150
      %v1158 = vrot.slane %v1157, 4
      %v1159 = vadd.f32 %v1157, %v1158
      %v1160 = vrot.slane %v1159, 2
      %v1161 = vadd.f32 %v1159, %v1160
      %v1162 = vrot.slane %v1161, 1
      %v1163 = vadd.f32 %v1161, %v1162
      %v1164 = vmul.f32 %v1163, %v1141
      %v1165 = vmul.f32 %v1142, %v1142
      %v1166 = vsub.f32 %v1164, %v1165
      %v1167 = vmax.f32 %v1166, 0.0
      %v1168 = vsub.f32 %v1103, %v1142
      %v1169 = vsub.f32 %v1105, %v1142
      %v1170 = vsub.f32 %v1108, %v1142
      %v1171 = vsub.f32 %v1110, %v1142
      %v1172 = vsub.f32 %v1113, %v1142
      %v1173 = vsub.f32 %v1115, %v1142
      %v1174 = vsub.f32 %v1118, %v1142
      %v1175 = vsub.f32 %v1120, %v1142
      %v1176 = vadd.f32 %v1167, 1e-05
      %v1177 = vrsqrt.pop %v1176
      %v1178 = vmul.f32 %v1177, %v1176
      %v1179 = vmul.f32 %v1178, %v1177
      %v1180 = vmul.f32 0.5, %v1179
      %v1181 = vsub.f32 1.5, %v1180
      %v1182 = vmul.f32 %v1177, %v1181
      %vm1183 = vweird.f32 %v1176
      %vm1184 = vweird.f32 %v1177
      %vm1185 = vmor %vm1183, %vm1184
      %v1186 = vsel %vm1185, %v1177, %v1182
      %v1187 = vmul.f32 %v1168, %v1186
      %v1188 = vmul.f32 %v1169, %v1186
      %v1189 = vmul.f32 %v1170, %v1186
      %v1190 = vmul.f32 %v1171, %v1186
      %v1191 = vmul.f32 %v1172, %v1186
      %v1192 = vmul.f32 %v1173, %v1186
      %v1193 = vmul.f32 %v1174, %v1186
      %v1194 = vmul.f32 %v1175, %v1186
      %vm1195 = vcmp.ge.f32.partialorder %v1187, 0.0
      %vm1196 = vcmp.ge.f32.partialorder %v1188, 0.0
      %vm1197 = vcmp.ge.f32.partialorder %v1189, 0.0
      %vm1198 = vcmp.ge.f32.partialorder %v1190, 0.0
      %vm1199 = vcmp.ge.f32.partialorder %v1191, 0.0
      %vm1200 = vcmp.ge.f32.partialorder %v1192, 0.0
      %vm1201 = vcmp.ge.f32.partialorder %v1193, 0.0
      %vm1202 = vcmp.ge.f32.partialorder %v1194, 0.0
      %v1203 = vmul.f32 %v1187, 0.2
      %v1204 = vmul.f32 %v1188, 0.2
      %v1205 = vmul.f32 %v1189, 0.2
      %v1206 = vmul.f32 %v1190, 0.2
      %v1207 = vmul.f32 %v1191, 0.2
      %v1208 = vmul.f32 %v1192, 0.2
      %v1209 = vmul.f32 %v1193, 0.2
      %v1210 = vmul.f32 %v1194, 0.2
      %v1211 = vsel %vm1195, %v1187, %v1203
      %v1212 = vsel %vm1196, %v1188, %v1204
      %v1213 = vsel %vm1197, %v1189, %v1205
      %v1214 = vsel %vm1198, %v1190, %v1206
      %v1215 = vsel %vm1199, %v1191, %v1207
      %v1216 = vsel %vm1200, %v1192, %v1208
      %v1217 = vsel %vm1201, %v1193, %v1209
      %v1218 = vsel %vm1202, %v1194, %v1210
      %v1219 = vpack.c.bf16 %v1211, %v1211
      %v1220 = vpack.c.bf16 %v1212, %v1212
      %v1221 = vpack.c.bf16 %v1213, %v1213
      %v1222 = vpack.c.bf16 %v1214, %v1214
      %v1223 = vpack.c.bf16 %v1215, %v1215
      %v1224 = vpack.c.bf16 %v1216, %v1216
      %v1225 = vpack.c.bf16 %v1217, %v1217
      %v1226 = vpack.c.bf16 %v1218, %v1218
      %1227 = vst [vmem:[%s184] sm:$0xf] %v1219
      %1228 = vst [vmem:[%s184 + $0x4] sm:$0xf] %v1220
      %1229 = vst [vmem:[%s184 + $0x8] sm:$0xf] %v1221
      %1230 = vst [vmem:[%s184 + $0xc] sm:$0xf] %v1222
      %1231 = vst [vmem:[%s184 + $0x10] sm:$0xf] %v1223
      %1232 = vst [vmem:[%s184 + $0x14] sm:$0xf] %v1224
      %1233 = vst [vmem:[%s184 + $0x18] sm:$0xf] %v1225
      %1234 = vst [vmem:[%s184 + $0x1c] sm:$0xf] %v1226
      %s1235 = smul.u32 8, %s18
      %p1236 = scmp.lt.s32.totalorder %s17, 1
      %s1237 = scalar_select %p1236, %s17, 1
      %p1238 = scmp.lt.s32.totalorder %s1235, 7
      %s1239 = scalar_select %p1238, %s1235, 7
      %s1240 = smul.addr %s1237, 8
      %s1241 = sadd.s32 %s1239, %s1240
      %s1242 = smul.addr %s1241, 4
      %s1243 = scalar_lea.vmem %s2, %s1242
      // Predicated region
      $region29: #{discriminator.6} parent=27 // pred_check
        %p1244 = pneg %p94
      $region30: #{discriminator.6} parent=27 // pred_check_branch
        %1246 = sbr.rel (%p1244) target = $region32
      $region31: #{discriminator.6} parent=27 // pred_region
        %s1247 = smul.u32 8, %s18
      $region32: #{discriminator.6} parent=27 // pred_fallthru
        _
    $region28: #{discriminator.6} parent=5 // pred_fallthru
      _
    %p1248 = scmp.le.s32.totalorder 2, %s8
    // Predicated region
    $region33: #{discriminator.6} parent=5 // pred_check
      %p1249 = pneg %p1248
    $region34: #{discriminator.6} parent=5 // pred_check_branch
      %1251 = sbr.rel (%p1249) target = $region36
    $region35: #{discriminator.6} parent=5 // pred_region
      %s1252 = ssub.s32 %s8, 2
      // Predicated region
      $region37: #{discriminator.6} parent=35 // pred_check
        %p1253 = pneg %p100
      $region38: #{discriminator.6} parent=35 // pred_check_branch
        %1255 = sbr.rel (%p1253) target = $region40
      $region39: #{discriminator.6} parent=35 // pred_region
        %s1256 = smul.u32 8, %s20
        %p1257 = scmp.lt.s32.totalorder %s19, 1
        %s1258 = scalar_select %p1257, %s19, 1
        %p1259 = scmp.lt.s32.totalorder %s1256, 7
        %s1260 = scalar_select %p1259, %s1256, 7
        %s1261 = smul.addr %s1258, 8
        %s1262 = sadd.s32 %s1260, %s1261
        %s1263 = smul.addr %s1262, 4
        %s1264 = scalar_lea.vmem %s2, %s1263
      $region40: #{discriminator.6} parent=35 // pred_fallthru
        _
    $region36: #{discriminator.6} parent=5 // pred_fallthru
      _
  $region6: #{discriminator.6} parent=0 // loop_footer
    %s12 = sadd.s32 1, %s8
  $region7: #{discriminator.6} parent=0 // loop_footer_branch
    %7 = sbr.rel target = $region3
  $region8: #{discriminator.6} parent=0 // loop_exit
    _

// kernel: discriminator.7
$region0: #{discriminator.7}
  #allocation0 [shape = 'u32[]', space=smem, size = 0x4, offset = 0x4, fixed_abs, tag = 'smem constant byte address 0x4 - core index']
  #allocation1 [shape = 'u32[72,128]{1,0:T(1,128)}', space=vmem, size = 0x9000, scoped, tag = 'internal scratch']
  %s0 = inlined_call_operand.vmem [shape: bf16[2,16,2048], index: 0, kind: input, shape index: {}]
  %s1 = inlined_call_operand.vmem [shape: bf16[2048,256], index: 1, kind: input, shape index: {}]
  %s2 = inlined_call_operand.vmem [shape: bf16[2,16,256], index: 2, kind: output, shape index: {}]
  %s3 = sld [smem:[#allocation0]]
  $region41: #{discriminator.7} parent=0
    _
  %s5 = ssub.s32 1, %s3
  %s6 = scalar_select 0, %s5, %s3
  loop: start=0, step=1, limit=4
  $region2: #{discriminator.7} parent=0 // loop_pre_header
    _
  $region3: #{discriminator.7} parent=0 // loop_header
    %s8 = sphi 0, %s12
    %p9 = scmp.ge.s32.totalorder %s8, 4
    %s15 = sphi 0, %s27
    %s16 = sphi 0, %s23
    %s17 = sphi 0, %s15
    %s18 = sphi 0, %s16
    %s19 = sphi 0, %s17
    %s20 = sphi 0, %s18
    %s32 = sphi 0, %s34
    %s35 = sphi 0, %s32
    %s36 = sphi 0, %s35
    %s52 = sphi 0, %s36
    %s56 = sphi 0, %s56
    %s58 = sphi 0, %s56
    %s59 = sphi 0, %s58
    %s73 = sphi 0, %s59
    %s81 = sphi 0, %s83
    %s84 = sphi 0, %s81
    %s85 = sphi 0, %s84
    %s101 = sphi 0, %s85
  $region4: #{discriminator.7} parent=0 // loop_header_branch
    %11 = sbr.rel (%p9) target = $region8
  $region5: #{discriminator.7} parent=0 // loop_body
    %s13 = ssub.s32 %s8, 1
    %s14 = ssub.s32 %s8, 2
    %s21 = sadd.s32 1, %s16
    %p22 = scmp.ge.s32.totalorder %s21, 1
    %s23 = scalar_select %p22, 0, %s21
    %s24 = sadd.s32 1, %s15
    %s25 = scalar_select %p22, %s24, %s15
    %p26 = scmp.ge.s32.totalorder %s25, 2
    %s27 = scalar_select %p26, 0, %s25
    %s28 = ssub.s32 %s15, %s27
    %s29 = ssub.s32 %s16, %s23
    %s30 = sor.u32 %s28, %s29
    %p31 = scmp.eq.s32.totalorder %s30, 0
    %s33 = sadd.s32 %s32, 1
    %s34 = scalar_select %p31, %s32, %s33
    %p37 = pneg %p31
    %p38 = scmp.eq.s32.totalorder %s8, 1
    %p39 = por %p37, %p38
    %p40 = scmp.ne.s32.totalorder %s32, %s35
    %p41 = scmp.eq.s32.totalorder %s8, 0
    %p42 = por %p40, %p41
    %p43 = scmp.ne.s32.totalorder %s32, %s35
    %p44 = scmp.eq.s32.totalorder %s13, 1
    %p45 = por %p43, %p44
    %p46 = scmp.ne.s32.totalorder %s35, %s36
    %p47 = scmp.eq.s32.totalorder %s13, 0
    %p48 = por %p46, %p47
    %p49 = scmp.ne.s32.totalorder %s35, %s36
    %p50 = scmp.eq.s32.totalorder %s14, 1
    %p51 = por %p49, %p50
    %p53 = scmp.ne.s32.totalorder %s36, %s52
    %p54 = scmp.eq.s32.totalorder %s14, 0
    %p55 = por %p53, %p54
    %s57 = sadd.s32 %s56, 1
    %p60 = scmp.eq.s32.totalorder %s8, 1
    %p61 = scmp.ne.s32.totalorder %s56, %s58
    %p62 = scmp.eq.s32.totalorder %s8, 0
    %p63 = por %p61, %p62
    %p64 = scmp.ne.s32.totalorder %s56, %s58
    %p65 = scmp.eq.s32.totalorder %s13, 1
    %p66 = por %p64, %p65
    %p67 = scmp.ne.s32.totalorder %s58, %s59
    %p68 = scmp.eq.s32.totalorder %s13, 0
    %p69 = por %p67, %p68
    %p70 = scmp.ne.s32.totalorder %s58, %s59
    %p71 = scmp.eq.s32.totalorder %s14, 1
    %p72 = por %p70, %p71
    %p74 = scmp.ne.s32.totalorder %s59, %s73
    %p75 = scmp.eq.s32.totalorder %s14, 0
    %p76 = por %p74, %p75
    %s77 = ssub.s32 %s15, %s27
    %s78 = ssub.s32 %s16, %s23
    %s79 = sor.u32 %s77, %s78
    %p80 = scmp.eq.s32.totalorder %s79, 0
    %s82 = sadd.s32 %s81, 1
    %s83 = scalar_select %p80, %s81, %s82
    %p86 = pneg %p80
    %p87 = scmp.eq.s32.totalorder %s8, 1
    %p88 = por %p86, %p87
    %p89 = scmp.ne.s32.totalorder %s81, %s84
    %p90 = scmp.eq.s32.totalorder %s8, 0
    %p91 = por %p89, %p90
    %p92 = scmp.ne.s32.totalorder %s81, %s84
    %p93 = scmp.eq.s32.totalorder %s13, 1
    %p94 = por %p92, %p93
    %p95 = scmp.ne.s32.totalorder %s84, %s85
    %p96 = scmp.eq.s32.totalorder %s13, 0
    %p97 = por %p95, %p96
    %p98 = scmp.ne.s32.totalorder %s84, %s85
    %p99 = scmp.eq.s32.totalorder %s14, 1
    %p100 = por %p98, %p99
    %p102 = scmp.ne.s32.totalorder %s85, %s101
    %p103 = scmp.eq.s32.totalorder %s14, 0
    %p104 = por %p102, %p103
    %p105 = scmp.le.s32.totalorder 1, %s8
    %p106 = scmp.lt.s32.totalorder %s8, 3
    %p107 = pnand %p105, %p106
    %p108 = pneg %p107
    // Predicated region
    $region9: #{discriminator.7} parent=5 // pred_check
      _
    $region10: #{discriminator.7} parent=5 // pred_check_branch
      %110 = sbr.rel (%p107) target = $region12
    $region11: #{discriminator.7} parent=5 // pred_region
      %s111 = ssub.s32 %s8, 1
      // Predicated region
      $region13: #{discriminator.7} parent=11 // pred_check
        %p112 = pneg %p69
      $region14: #{discriminator.7} parent=11 // pred_check_branch
        %114 = sbr.rel (%p112) target = $region16
      $region15: #{discriminator.7} parent=11 // pred_region
        _
      $region16: #{discriminator.7} parent=11 // pred_fallthru
        _
    $region12: #{discriminator.7} parent=5 // pred_fallthru
      _
    %p115 = scmp.lt.s32.totalorder %s8, 2
    // Predicated region
    $region17: #{discriminator.7} parent=5 // pred_check
      %p116 = pneg %p115
    $region18: #{discriminator.7} parent=5 // pred_check_branch
      %118 = sbr.rel (%p116) target = $region20
    $region19: #{discriminator.7} parent=5 // pred_region
      // Predicated region
      $region21: #{discriminator.7} parent=19 // pred_check
        %p119 = pneg %p42
      $region22: #{discriminator.7} parent=19 // pred_check_branch
        %121 = sbr.rel (%p119) target = $region24
      $region23: #{discriminator.7} parent=19 // pred_region
        %s122 = smul.u32 2, %s16
        %p123 = scmp.lt.s32.totalorder %s15, 1
        %s124 = scalar_select %p123, %s15, 1
        %p125 = scmp.lt.s32.totalorder %s122, 1
        %s126 = scalar_select %p125, %s122, 1
        %s127 = smul.addr %s126, 16
        %s128 = smul.addr %s124, 32
        %s129 = sadd.s32 %s127, %s128
        %s130 = smul.addr %s129, 4
        %s131 = scalar_lea.vmem %s0, %s130
        %s132 = smul.u32 2, %s16
      $region24: #{discriminator.7} parent=19 // pred_fallthru
        _
    $region20: #{discriminator.7} parent=5 // pred_fallthru
      _
    %p133 = scmp.le.s32.totalorder 1, %s8
    %p134 = scmp.lt.s32.totalorder %s8, 3
    %p135 = pnand %p133, %p134
    %p136 = pneg %p135
    // Predicated region
    $region25: #{discriminator.7} parent=5 // pred_check
      _
    $region26: #{discriminator.7} parent=5 // pred_check_branch
      %138 = sbr.rel (%p135) target = $region28
    $region27: #{discriminator.7} parent=5 // pred_region
      %s139 = ssub.s32 %s8, 1
      %s140 = smul.u32 2, %s18
      %p141 = scmp.lt.s32.totalorder %s17, 1
      %s142 = scalar_select %p141, %s17, 1
      %p143 = scmp.lt.s32.totalorder %s140, 1
      %s144 = scalar_select %p143, %s140, 1
      %s145 = smul.addr %s144, 16
      %s146 = smul.addr %s142, 32
      %s147 = sadd.s32 %s145, %s146
      %s148 = smul.addr %s147, 4
      %s149 = scalar_lea.vmem %s0, %s148
      %p150 = pneg %p48
      %p151 = pneg %p45
      %p152 = pneg %p69
      %p153 = pneg %p66
      %p154 = pneg %p97
      %p155 = pneg %p94
      %s156 = smul.u32 2, %s18
      %p157 = scmp.lt.s32.totalorder %s17, 1
      %s158 = scalar_select %p157, %s17, 1
      %p159 = scmp.lt.s32.totalorder %s156, 1
      %s160 = scalar_select %p159, %s156, 1
      %s161 = smul.addr %s160, 2
      %s162 = smul.addr %s158, 4
      %s163 = sadd.s32 %s161, %s162
      %s164 = smul.addr %s163, 4
      %s165 = scalar_lea.vmem %s2, %s164
      %s166 = smul.u32 2, %s18
      %p167 = scmp.lt.s32.totalorder %s17, 1
      %s168 = scalar_select %p167, %s17, 1
      %p169 = scmp.lt.s32.totalorder %s166, 1
      %s170 = scalar_select %p169, %s166, 1
      %s171 = smul.addr %s170, 16
      %s172 = smul.addr %s168, 32
      %s173 = sadd.s32 %s171, %s172
      %s174 = smul.addr %s173, 4
      %s175 = scalar_lea.vmem %s0, %s174
      %s176 = smul.u32 2, %s18
      %s177 = smul.u32 2, %s18
      %p178 = scmp.lt.s32.totalorder %s17, 1
      %s179 = scalar_select %p178, %s17, 1
      %p180 = scmp.lt.s32.totalorder %s177, 1
      %s181 = scalar_select %p180, %s177, 1
      %s182 = smul.addr %s181, 2
      %s183 = smul.addr %s179, 4
      %s184 = sadd.s32 %s182, %s183
      %s185 = smul.addr %s184, 4
      %s186 = scalar_lea.vmem %s2, %s185
      %s187 = smul.u32 2, %s18
      %v188 = vld [vmem:[%s175] sm:$0xff]
      %v189 = vld [vmem:[%s175 + $0x8] sm:$0xff]
      %v190 = vld [vmem:[%s175 + $0x10] sm:$0xff]
      %v191 = vld [vmem:[%s175 + $0x18] sm:$0xff]
      %v192 = vld [vmem:[%s175 + $0x20] sm:$0xff]
      %v193 = vld [vmem:[%s175 + $0x28] sm:$0xff]
      %v194 = vld [vmem:[%s175 + $0x30] sm:$0xff]
      %v195 = vld [vmem:[%s175 + $0x38] sm:$0xff]
      %v196 = vld [vmem:[%s175 + $0x40] sm:$0xff]
      %v197 = vld [vmem:[%s175 + $0x48] sm:$0xff]
      %v198 = vld [vmem:[%s175 + $0x50] sm:$0xff]
      %v199 = vld [vmem:[%s175 + $0x58] sm:$0xff]
      %v200 = vld [vmem:[%s175 + $0x60] sm:$0xff]
      %v201 = vld [vmem:[%s175 + $0x68] sm:$0xff]
      %v202 = vld [vmem:[%s175 + $0x70] sm:$0xff]
      %v203 = vld [vmem:[%s175 + $0x78] sm:$0xff]
      %v204 = vld [vmem:[%s1] sm:$0xff]
      %v205 = vld [vmem:[%s1 + $0x8] sm:$0xff]
      %v206 = vld [vmem:[%s1 + $0x10] sm:$0xff]
      %v207 = vld [vmem:[%s1 + $0x18] sm:$0xff]
      %v208 = vld [vmem:[%s1 + $0x20] sm:$0xff]
      %v209 = vld [vmem:[%s1 + $0x28] sm:$0xff]
      %v210 = vld [vmem:[%s1 + $0x30] sm:$0xff]
      %v211 = vld [vmem:[%s1 + $0x38] sm:$0xff]
      %v212 = vld [vmem:[%s1 + $0x40] sm:$0xff]
      %v213 = vld [vmem:[%s1 + $0x48] sm:$0xff]
      %v214 = vld [vmem:[%s1 + $0x50] sm:$0xff]
      %v215 = vld [vmem:[%s1 + $0x58] sm:$0xff]
      %v216 = vld [vmem:[%s1 + $0x60] sm:$0xff]
      %v217 = vld [vmem:[%s1 + $0x68] sm:$0xff]
      %v218 = vld [vmem:[%s1 + $0x70] sm:$0xff]
      %v219 = vld [vmem:[%s1 + $0x78] sm:$0xff]
      %v220 = vld [vmem:[%s1 + $0x80] sm:$0xff]
      %v221 = vld [vmem:[%s1 + $0x88] sm:$0xff]
      %v222 = vld [vmem:[%s1 + $0x90] sm:$0xff]
      %v223 = vld [vmem:[%s1 + $0x98] sm:$0xff]
      %v224 = vld [vmem:[%s1 + $0xa0] sm:$0xff]
      %v225 = vld [vmem:[%s1 + $0xa8] sm:$0xff]
      %v226 = vld [vmem:[%s1 + $0xb0] sm:$0xff]
      %v227 = vld [vmem:[%s1 + $0xb8] sm:$0xff]
      %v228 = vld [vmem:[%s1 + $0xc0] sm:$0xff]
      %v229 = vld [vmem:[%s1 + $0xc8] sm:$0xff]
      %v230 = vld [vmem:[%s1 + $0xd0] sm:$0xff]
      %v231 = vld [vmem:[%s1 + $0xd8] sm:$0xff]
      %v232 = vld [vmem:[%s1 + $0xe0] sm:$0xff]
      %v233 = vld [vmem:[%s1 + $0xe8] sm:$0xff]
      %v234 = vld [vmem:[%s1 + $0xf0] sm:$0xff]
      %v235 = vld [vmem:[%s1 + $0xf8] sm:$0xff]
      %v236 = vld [vmem:[%s1 + $0x100] sm:$0xff]
      %v237 = vld [vmem:[%s1 + $0x108] sm:$0xff]
      %v238 = vld [vmem:[%s1 + $0x110] sm:$0xff]
      %v239 = vld [vmem:[%s1 + $0x118] sm:$0xff]
      %v240 = vld [vmem:[%s1 + $0x120] sm:$0xff]
      %v241 = vld [vmem:[%s1 + $0x128] sm:$0xff]
      %v242 = vld [vmem:[%s1 + $0x130] sm:$0xff]
      %v243 = vld [vmem:[%s1 + $0x138] sm:$0xff]
      %v244 = vld [vmem:[%s1 + $0x140] sm:$0xff]
      %v245 = vld [vmem:[%s1 + $0x148] sm:$0xff]
      %v246 = vld [vmem:[%s1 + $0x150] sm:$0xff]
      %v247 = vld [vmem:[%s1 + $0x158] sm:$0xff]
      %v248 = vld [vmem:[%s1 + $0x160] sm:$0xff]
      %v249 = vld [vmem:[%s1 + $0x168] sm:$0xff]
      %v250 = vld [vmem:[%s1 + $0x170] sm:$0xff]
      %v251 = vld [vmem:[%s1 + $0x178] sm:$0xff]
      %v252 = vld [vmem:[%s1 + $0x180] sm:$0xff]
      %v253 = vld [vmem:[%s1 + $0x188] sm:$0xff]
      %v254 = vld [vmem:[%s1 + $0x190] sm:$0xff]
      %v255 = vld [vmem:[%s1 + $0x198] sm:$0xff]
      %v256 = vld [vmem:[%s1 + $0x1a0] sm:$0xff]
      %v257 = vld [vmem:[%s1 + $0x1a8] sm:$0xff]
      %v258 = vld [vmem:[%s1 + $0x1b0] sm:$0xff]
      %v259 = vld [vmem:[%s1 + $0x1b8] sm:$0xff]
      %v260 = vld [vmem:[%s1 + $0x1c0] sm:$0xff]
      %v261 = vld [vmem:[%s1 + $0x1c8] sm:$0xff]
      %v262 = vld [vmem:[%s1 + $0x1d0] sm:$0xff]
      %v263 = vld [vmem:[%s1 + $0x1d8] sm:$0xff]
      %v264 = vld [vmem:[%s1 + $0x1e0] sm:$0xff]
      %v265 = vld [vmem:[%s1 + $0x1e8] sm:$0xff]
      %v266 = vld [vmem:[%s1 + $0x1f0] sm:$0xff]
      %v267 = vld [vmem:[%s1 + $0x1f8] sm:$0xff]
      %v268 = vld [vmem:[%s1 + $0x200] sm:$0xff]
      %v269 = vld [vmem:[%s1 + $0x208] sm:$0xff]
      %v270 = vld [vmem:[%s1 + $0x210] sm:$0xff]
      %v271 = vld [vmem:[%s1 + $0x218] sm:$0xff]
      %v272 = vld [vmem:[%s1 + $0x220] sm:$0xff]
      %v273 = vld [vmem:[%s1 + $0x228] sm:$0xff]
      %v274 = vld [vmem:[%s1 + $0x230] sm:$0xff]
      %v275 = vld [vmem:[%s1 + $0x238] sm:$0xff]
      %v276 = vld [vmem:[%s1 + $0x240] sm:$0xff]
      %v277 = vld [vmem:[%s1 + $0x248] sm:$0xff]
      %v278 = vld [vmem:[%s1 + $0x250] sm:$0xff]
      %v279 = vld [vmem:[%s1 + $0x258] sm:$0xff]
      %v280 = vld [vmem:[%s1 + $0x260] sm:$0xff]
      %v281 = vld [vmem:[%s1 + $0x268] sm:$0xff]
      %v282 = vld [vmem:[%s1 + $0x270] sm:$0xff]
      %v283 = vld [vmem:[%s1 + $0x278] sm:$0xff]
      %v284 = vld [vmem:[%s1 + $0x280] sm:$0xff]
      %v285 = vld [vmem:[%s1 + $0x288] sm:$0xff]
      %v286 = vld [vmem:[%s1 + $0x290] sm:$0xff]
      %v287 = vld [vmem:[%s1 + $0x298] sm:$0xff]
      %v288 = vld [vmem:[%s1 + $0x2a0] sm:$0xff]
      %v289 = vld [vmem:[%s1 + $0x2a8] sm:$0xff]
      %v290 = vld [vmem:[%s1 + $0x2b0] sm:$0xff]
      %v291 = vld [vmem:[%s1 + $0x2b8] sm:$0xff]
      %v292 = vld [vmem:[%s1 + $0x2c0] sm:$0xff]
      %v293 = vld [vmem:[%s1 + $0x2c8] sm:$0xff]
      %v294 = vld [vmem:[%s1 + $0x2d0] sm:$0xff]
      %v295 = vld [vmem:[%s1 + $0x2d8] sm:$0xff]
      %v296 = vld [vmem:[%s1 + $0x2e0] sm:$0xff]
      %v297 = vld [vmem:[%s1 + $0x2e8] sm:$0xff]
      %v298 = vld [vmem:[%s1 + $0x2f0] sm:$0xff]
      %v299 = vld [vmem:[%s1 + $0x2f8] sm:$0xff]
      %v300 = vld [vmem:[%s1 + $0x300] sm:$0xff]
      %v301 = vld [vmem:[%s1 + $0x308] sm:$0xff]
      %v302 = vld [vmem:[%s1 + $0x310] sm:$0xff]
      %v303 = vld [vmem:[%s1 + $0x318] sm:$0xff]
      %v304 = vld [vmem:[%s1 + $0x320] sm:$0xff]
      %v305 = vld [vmem:[%s1 + $0x328] sm:$0xff]
      %v306 = vld [vmem:[%s1 + $0x330] sm:$0xff]
      %v307 = vld [vmem:[%s1 + $0x338] sm:$0xff]
      %v308 = vld [vmem:[%s1 + $0x340] sm:$0xff]
      %v309 = vld [vmem:[%s1 + $0x348] sm:$0xff]
      %v310 = vld [vmem:[%s1 + $0x350] sm:$0xff]
      %v311 = vld [vmem:[%s1 + $0x358] sm:$0xff]
      %v312 = vld [vmem:[%s1 + $0x360] sm:$0xff]
      %v313 = vld [vmem:[%s1 + $0x368] sm:$0xff]
      %v314 = vld [vmem:[%s1 + $0x370] sm:$0xff]
      %v315 = vld [vmem:[%s1 + $0x378] sm:$0xff]
      %v316 = vld [vmem:[%s1 + $0x380] sm:$0xff]
      %v317 = vld [vmem:[%s1 + $0x388] sm:$0xff]
      %v318 = vld [vmem:[%s1 + $0x390] sm:$0xff]
      %v319 = vld [vmem:[%s1 + $0x398] sm:$0xff]
      %v320 = vld [vmem:[%s1 + $0x3a0] sm:$0xff]
      %v321 = vld [vmem:[%s1 + $0x3a8] sm:$0xff]
      %v322 = vld [vmem:[%s1 + $0x3b0] sm:$0xff]
      %v323 = vld [vmem:[%s1 + $0x3b8] sm:$0xff]
      %v324 = vld [vmem:[%s1 + $0x3c0] sm:$0xff]
      %v325 = vld [vmem:[%s1 + $0x3c8] sm:$0xff]
      %v326 = vld [vmem:[%s1 + $0x3d0] sm:$0xff]
      %v327 = vld [vmem:[%s1 + $0x3d8] sm:$0xff]
      %v328 = vld [vmem:[%s1 + $0x3e0] sm:$0xff]
      %v329 = vld [vmem:[%s1 + $0x3e8] sm:$0xff]
      %v330 = vld [vmem:[%s1 + $0x3f0] sm:$0xff]
      %v331 = vld [vmem:[%s1 + $0x3f8] sm:$0xff]
      %v332 = vld [vmem:[%s1 + $0x400] sm:$0xff]
      %v333 = vld [vmem:[%s1 + $0x408] sm:$0xff]
      %v334 = vld [vmem:[%s1 + $0x410] sm:$0xff]
      %v335 = vld [vmem:[%s1 + $0x418] sm:$0xff]
      %v336 = vld [vmem:[%s1 + $0x420] sm:$0xff]
      %v337 = vld [vmem:[%s1 + $0x428] sm:$0xff]
      %v338 = vld [vmem:[%s1 + $0x430] sm:$0xff]
      %v339 = vld [vmem:[%s1 + $0x438] sm:$0xff]
      %v340 = vld [vmem:[%s1 + $0x440] sm:$0xff]
      %v341 = vld [vmem:[%s1 + $0x448] sm:$0xff]
      %v342 = vld [vmem:[%s1 + $0x450] sm:$0xff]
      %v343 = vld [vmem:[%s1 + $0x458] sm:$0xff]
      %v344 = vld [vmem:[%s1 + $0x460] sm:$0xff]
      %v345 = vld [vmem:[%s1 + $0x468] sm:$0xff]
      %v346 = vld [vmem:[%s1 + $0x470] sm:$0xff]
      %v347 = vld [vmem:[%s1 + $0x478] sm:$0xff]
      %v348 = vld [vmem:[%s1 + $0x480] sm:$0xff]
      %v349 = vld [vmem:[%s1 + $0x488] sm:$0xff]
      %v350 = vld [vmem:[%s1 + $0x490] sm:$0xff]
      %v351 = vld [vmem:[%s1 + $0x498] sm:$0xff]
      %v352 = vld [vmem:[%s1 + $0x4a0] sm:$0xff]
      %v353 = vld [vmem:[%s1 + $0x4a8] sm:$0xff]
      %v354 = vld [vmem:[%s1 + $0x4b0] sm:$0xff]
      %v355 = vld [vmem:[%s1 + $0x4b8] sm:$0xff]
      %v356 = vld [vmem:[%s1 + $0x4c0] sm:$0xff]
      %v357 = vld [vmem:[%s1 + $0x4c8] sm:$0xff]
      %v358 = vld [vmem:[%s1 + $0x4d0] sm:$0xff]
      %v359 = vld [vmem:[%s1 + $0x4d8] sm:$0xff]
      %v360 = vld [vmem:[%s1 + $0x4e0] sm:$0xff]
      %v361 = vld [vmem:[%s1 + $0x4e8] sm:$0xff]
      %v362 = vld [vmem:[%s1 + $0x4f0] sm:$0xff]
      %v363 = vld [vmem:[%s1 + $0x4f8] sm:$0xff]
      %v364 = vld [vmem:[%s1 + $0x500] sm:$0xff]
      %v365 = vld [vmem:[%s1 + $0x508] sm:$0xff]
      %v366 = vld [vmem:[%s1 + $0x510] sm:$0xff]
      %v367 = vld [vmem:[%s1 + $0x518] sm:$0xff]
      %v368 = vld [vmem:[%s1 + $0x520] sm:$0xff]
      %v369 = vld [vmem:[%s1 + $0x528] sm:$0xff]
      %v370 = vld [vmem:[%s1 + $0x530] sm:$0xff]
      %v371 = vld [vmem:[%s1 + $0x538] sm:$0xff]
      %v372 = vld [vmem:[%s1 + $0x540] sm:$0xff]
      %v373 = vld [vmem:[%s1 + $0x548] sm:$0xff]
      %v374 = vld [vmem:[%s1 + $0x550] sm:$0xff]
      %v375 = vld [vmem:[%s1 + $0x558] sm:$0xff]
      %v376 = vld [vmem:[%s1 + $0x560] sm:$0xff]
      %v377 = vld [vmem:[%s1 + $0x568] sm:$0xff]
      %v378 = vld [vmem:[%s1 + $0x570] sm:$0xff]
      %v379 = vld [vmem:[%s1 + $0x578] sm:$0xff]
      %v380 = vld [vmem:[%s1 + $0x580] sm:$0xff]
      %v381 = vld [vmem:[%s1 + $0x588] sm:$0xff]
      %v382 = vld [vmem:[%s1 + $0x590] sm:$0xff]
      %v383 = vld [vmem:[%s1 + $0x598] sm:$0xff]
      %v384 = vld [vmem:[%s1 + $0x5a0] sm:$0xff]
      %v385 = vld [vmem:[%s1 + $0x5a8] sm:$0xff]
      %v386 = vld [vmem:[%s1 + $0x5b0] sm:$0xff]
      %v387 = vld [vmem:[%s1 + $0x5b8] sm:$0xff]
      %v388 = vld [vmem:[%s1 + $0x5c0] sm:$0xff]
      %v389 = vld [vmem:[%s1 + $0x5c8] sm:$0xff]
      %v390 = vld [vmem:[%s1 + $0x5d0] sm:$0xff]
      %v391 = vld [vmem:[%s1 + $0x5d8] sm:$0xff]
      %v392 = vld [vmem:[%s1 + $0x5e0] sm:$0xff]
      %v393 = vld [vmem:[%s1 + $0x5e8] sm:$0xff]
      %v394 = vld [vmem:[%s1 + $0x5f0] sm:$0xff]
      %v395 = vld [vmem:[%s1 + $0x5f8] sm:$0xff]
      %v396 = vld [vmem:[%s1 + $0x600] sm:$0xff]
      %v397 = vld [vmem:[%s1 + $0x608] sm:$0xff]
      %v398 = vld [vmem:[%s1 + $0x610] sm:$0xff]
      %v399 = vld [vmem:[%s1 + $0x618] sm:$0xff]
      %v400 = vld [vmem:[%s1 + $0x620] sm:$0xff]
      %v401 = vld [vmem:[%s1 + $0x628] sm:$0xff]
      %v402 = vld [vmem:[%s1 + $0x630] sm:$0xff]
      %v403 = vld [vmem:[%s1 + $0x638] sm:$0xff]
      %v404 = vld [vmem:[%s1 + $0x640] sm:$0xff]
      %v405 = vld [vmem:[%s1 + $0x648] sm:$0xff]
      %v406 = vld [vmem:[%s1 + $0x650] sm:$0xff]
      %v407 = vld [vmem:[%s1 + $0x658] sm:$0xff]
      %v408 = vld [vmem:[%s1 + $0x660] sm:$0xff]
      %v409 = vld [vmem:[%s1 + $0x668] sm:$0xff]
      %v410 = vld [vmem:[%s1 + $0x670] sm:$0xff]
      %v411 = vld [vmem:[%s1 + $0x678] sm:$0xff]
      %v412 = vld [vmem:[%s1 + $0x680] sm:$0xff]
      %v413 = vld [vmem:[%s1 + $0x688] sm:$0xff]
      %v414 = vld [vmem:[%s1 + $0x690] sm:$0xff]
      %v415 = vld [vmem:[%s1 + $0x698] sm:$0xff]
      %v416 = vld [vmem:[%s1 + $0x6a0] sm:$0xff]
      %v417 = vld [vmem:[%s1 + $0x6a8] sm:$0xff]
      %v418 = vld [vmem:[%s1 + $0x6b0] sm:$0xff]
      %v419 = vld [vmem:[%s1 + $0x6b8] sm:$0xff]
      %v420 = vld [vmem:[%s1 + $0x6c0] sm:$0xff]
      %v421 = vld [vmem:[%s1 + $0x6c8] sm:$0xff]
      %v422 = vld [vmem:[%s1 + $0x6d0] sm:$0xff]
      %v423 = vld [vmem:[%s1 + $0x6d8] sm:$0xff]
      %v424 = vld [vmem:[%s1 + $0x6e0] sm:$0xff]
      %v425 = vld [vmem:[%s1 + $0x6e8] sm:$0xff]
      %v426 = vld [vmem:[%s1 + $0x6f0] sm:$0xff]
      %v427 = vld [vmem:[%s1 + $0x6f8] sm:$0xff]
      %v428 = vld [vmem:[%s1 + $0x700] sm:$0xff]
      %v429 = vld [vmem:[%s1 + $0x708] sm:$0xff]
      %v430 = vld [vmem:[%s1 + $0x710] sm:$0xff]
      %v431 = vld [vmem:[%s1 + $0x718] sm:$0xff]
      %v432 = vld [vmem:[%s1 + $0x720] sm:$0xff]
      %v433 = vld [vmem:[%s1 + $0x728] sm:$0xff]
      %v434 = vld [vmem:[%s1 + $0x730] sm:$0xff]
      %v435 = vld [vmem:[%s1 + $0x738] sm:$0xff]
      %v436 = vld [vmem:[%s1 + $0x740] sm:$0xff]
      %v437 = vld [vmem:[%s1 + $0x748] sm:$0xff]
      %v438 = vld [vmem:[%s1 + $0x750] sm:$0xff]
      %v439 = vld [vmem:[%s1 + $0x758] sm:$0xff]
      %v440 = vld [vmem:[%s1 + $0x760] sm:$0xff]
      %v441 = vld [vmem:[%s1 + $0x768] sm:$0xff]
      %v442 = vld [vmem:[%s1 + $0x770] sm:$0xff]
      %v443 = vld [vmem:[%s1 + $0x778] sm:$0xff]
      %v444 = vld [vmem:[%s1 + $0x780] sm:$0xff]
      %v445 = vld [vmem:[%s1 + $0x788] sm:$0xff]
      %v446 = vld [vmem:[%s1 + $0x790] sm:$0xff]
      %v447 = vld [vmem:[%s1 + $0x798] sm:$0xff]
      %v448 = vld [vmem:[%s1 + $0x7a0] sm:$0xff]
      %v449 = vld [vmem:[%s1 + $0x7a8] sm:$0xff]
      %v450 = vld [vmem:[%s1 + $0x7b0] sm:$0xff]
      %v451 = vld [vmem:[%s1 + $0x7b8] sm:$0xff]
      %v452 = vld [vmem:[%s1 + $0x7c0] sm:$0xff]
      %v453 = vld [vmem:[%s1 + $0x7c8] sm:$0xff]
      %v454 = vld [vmem:[%s1 + $0x7d0] sm:$0xff]
      %v455 = vld [vmem:[%s1 + $0x7d8] sm:$0xff]
      %v456 = vld [vmem:[%s1 + $0x7e0] sm:$0xff]
      %v457 = vld [vmem:[%s1 + $0x7e8] sm:$0xff]
      %v458 = vld [vmem:[%s1 + $0x7f0] sm:$0xff]
      %v459 = vld [vmem:[%s1 + $0x7f8] sm:$0xff]
      %v476 = vunpack.c.l.b16 %v188
      %v477 = vunpack.c.h.b16 %v188
      %v478 = vunpack.c.l.b16 %v189
      %v479 = vunpack.c.h.b16 %v189
      %v480 = vunpack.c.l.b16 %v190
      %v481 = vunpack.c.h.b16 %v190
      %v482 = vunpack.c.l.b16 %v191
      %v483 = vunpack.c.h.b16 %v191
      %v484 = vunpack.c.l.b16 %v192
      %v485 = vunpack.c.h.b16 %v192
      %v486 = vunpack.c.l.b16 %v193
      %v487 = vunpack.c.h.b16 %v193
      %v488 = vunpack.c.l.b16 %v194
      %v489 = vunpack.c.h.b16 %v194
      %v490 = vunpack.c.l.b16 %v195
      %v491 = vunpack.c.h.b16 %v195
      %v492 = vunpack.c.l.b16 %v196
      %v493 = vunpack.c.h.b16 %v196
      %v494 = vunpack.c.l.b16 %v197
      %v495 = vunpack.c.h.b16 %v197
      %v496 = vunpack.c.l.b16 %v198
      %v497 = vunpack.c.h.b16 %v198
      %v498 = vunpack.c.l.b16 %v199
      %v499 = vunpack.c.h.b16 %v199
      %v500 = vunpack.c.l.b16 %v200
      %v501 = vunpack.c.h.b16 %v200
      %v502 = vunpack.c.l.b16 %v201
      %v503 = vunpack.c.h.b16 %v201
      %v504 = vunpack.c.l.b16 %v202
      %v505 = vunpack.c.h.b16 %v202
      %v506 = vunpack.c.l.b16 %v203
      %v507 = vunpack.c.h.b16 %v203
      %v508 = vpack.c.b16 %v492, %v476
      %v509 = vpack.c.b16 %v493, %v477
      %v510 = vpack.c.b16 %v494, %v478
      %v511 = vpack.c.b16 %v495, %v479
      %v512 = vpack.c.b16 %v496, %v480
      %v513 = vpack.c.b16 %v497, %v481
      %v514 = vpack.c.b16 %v498, %v482
      %v515 = vpack.c.b16 %v499, %v483
      %v516 = vpack.c.b16 %v500, %v484
      %v517 = vpack.c.b16 %v501, %v485
      %v518 = vpack.c.b16 %v502, %v486
      %v519 = vpack.c.b16 %v503, %v487
      %v520 = vpack.c.b16 %v504, %v488
      %v521 = vpack.c.b16 %v505, %v489
      %v522 = vpack.c.b16 %v506, %v490
      %v523 = vpack.c.b16 %v507, %v491
      %v796 = vunpack.c.l.b16 %v204
      %v797 = vunpack.c.h.b16 %v204
      %v798 = vunpack.c.l.b16 %v205
      %v799 = vunpack.c.h.b16 %v205
      %v800 = vunpack.c.l.b16 %v206
      %v801 = vunpack.c.h.b16 %v206
      %v802 = vunpack.c.l.b16 %v207
      %v803 = vunpack.c.h.b16 %v207
      %v804 = vunpack.c.l.b16 %v208
      %v805 = vunpack.c.h.b16 %v208
      %v806 = vunpack.c.l.b16 %v209
      %v807 = vunpack.c.h.b16 %v209
      %v808 = vunpack.c.l.b16 %v210
      %v809 = vunpack.c.h.b16 %v210
      %v810 = vunpack.c.l.b16 %v211
      %v811 = vunpack.c.h.b16 %v211
      %v812 = vunpack.c.l.b16 %v212
      %v813 = vunpack.c.h.b16 %v212
      %v814 = vunpack.c.l.b16 %v213
      %v815 = vunpack.c.h.b16 %v213
      %v816 = vunpack.c.l.b16 %v214
      %v817 = vunpack.c.h.b16 %v214
      %v818 = vunpack.c.l.b16 %v215
      %v819 = vunpack.c.h.b16 %v215
      %v820 = vunpack.c.l.b16 %v216
      %v821 = vunpack.c.h.b16 %v216
      %v822 = vunpack.c.l.b16 %v217
      %v823 = vunpack.c.h.b16 %v217
      %v824 = vunpack.c.l.b16 %v218
      %v825 = vunpack.c.h.b16 %v218
      %v826 = vunpack.c.l.b16 %v219
      %v827 = vunpack.c.h.b16 %v219
      %v828 = vunpack.c.l.b16 %v220
      %v829 = vunpack.c.h.b16 %v220
      %v830 = vunpack.c.l.b16 %v221
      %v831 = vunpack.c.h.b16 %v221
      %v832 = vunpack.c.l.b16 %v222
      %v833 = vunpack.c.h.b16 %v222
      %v834 = vunpack.c.l.b16 %v223
      %v835 = vunpack.c.h.b16 %v223
      %v836 = vunpack.c.l.b16 %v224
      %v837 = vunpack.c.h.b16 %v224
      %v838 = vunpack.c.l.b16 %v225
      %v839 = vunpack.c.h.b16 %v225
      %v840 = vunpack.c.l.b16 %v226
      %v841 = vunpack.c.h.b16 %v226
      %v842 = vunpack.c.l.b16 %v227
      %v843 = vunpack.c.h.b16 %v227
      %v844 = vunpack.c.l.b16 %v228
      %v845 = vunpack.c.h.b16 %v228
      %v846 = vunpack.c.l.b16 %v229
      %v847 = vunpack.c.h.b16 %v229
      %v848 = vunpack.c.l.b16 %v230
      %v849 = vunpack.c.h.b16 %v230
      %v850 = vunpack.c.l.b16 %v231
      %v851 = vunpack.c.h.b16 %v231
      %v852 = vunpack.c.l.b16 %v232
      %v853 = vunpack.c.h.b16 %v232
      %v854 = vunpack.c.l.b16 %v233
      %v855 = vunpack.c.h.b16 %v233
      %v856 = vunpack.c.l.b16 %v234
      %v857 = vunpack.c.h.b16 %v234
      %v858 = vunpack.c.l.b16 %v235
      %v859 = vunpack.c.h.b16 %v235
      %v860 = vunpack.c.l.b16 %v236
      %v861 = vunpack.c.h.b16 %v236
      %v862 = vunpack.c.l.b16 %v237
      %v863 = vunpack.c.h.b16 %v237
      %v864 = vunpack.c.l.b16 %v238
      %v865 = vunpack.c.h.b16 %v238
      %v866 = vunpack.c.l.b16 %v239
      %v867 = vunpack.c.h.b16 %v239
      %v868 = vunpack.c.l.b16 %v240
      %v869 = vunpack.c.h.b16 %v240
      %v870 = vunpack.c.l.b16 %v241
      %v871 = vunpack.c.h.b16 %v241
      %v872 = vunpack.c.l.b16 %v242
      %v873 = vunpack.c.h.b16 %v242
      %v874 = vunpack.c.l.b16 %v243
      %v875 = vunpack.c.h.b16 %v243
      %v876 = vunpack.c.l.b16 %v244
      %v877 = vunpack.c.h.b16 %v244
      %v878 = vunpack.c.l.b16 %v245
      %v879 = vunpack.c.h.b16 %v245
      %v880 = vunpack.c.l.b16 %v246
      %v881 = vunpack.c.h.b16 %v246
      %v882 = vunpack.c.l.b16 %v247
      %v883 = vunpack.c.h.b16 %v247
      %v884 = vunpack.c.l.b16 %v248
      %v885 = vunpack.c.h.b16 %v248
      %v886 = vunpack.c.l.b16 %v249
      %v887 = vunpack.c.h.b16 %v249
      %v888 = vunpack.c.l.b16 %v250
      %v889 = vunpack.c.h.b16 %v250
      %v890 = vunpack.c.l.b16 %v251
      %v891 = vunpack.c.h.b16 %v251
      %v892 = vunpack.c.l.b16 %v252
      %v893 = vunpack.c.h.b16 %v252
      %v894 = vunpack.c.l.b16 %v253
      %v895 = vunpack.c.h.b16 %v253
      %v896 = vunpack.c.l.b16 %v254
      %v897 = vunpack.c.h.b16 %v254
      %v898 = vunpack.c.l.b16 %v255
      %v899 = vunpack.c.h.b16 %v255
      %v900 = vunpack.c.l.b16 %v256
      %v901 = vunpack.c.h.b16 %v256
      %v902 = vunpack.c.l.b16 %v257
      %v903 = vunpack.c.h.b16 %v257
      %v904 = vunpack.c.l.b16 %v258
      %v905 = vunpack.c.h.b16 %v258
      %v906 = vunpack.c.l.b16 %v259
      %v907 = vunpack.c.h.b16 %v259
      %v908 = vunpack.c.l.b16 %v260
      %v909 = vunpack.c.h.b16 %v260
      %v910 = vunpack.c.l.b16 %v261
      %v911 = vunpack.c.h.b16 %v261
      %v912 = vunpack.c.l.b16 %v262
      %v913 = vunpack.c.h.b16 %v262
      %v914 = vunpack.c.l.b16 %v263
      %v915 = vunpack.c.h.b16 %v263
      %v916 = vunpack.c.l.b16 %v264
      %v917 = vunpack.c.h.b16 %v264
      %v918 = vunpack.c.l.b16 %v265
      %v919 = vunpack.c.h.b16 %v265
      %v920 = vunpack.c.l.b16 %v266
      %v921 = vunpack.c.h.b16 %v266
      %v922 = vunpack.c.l.b16 %v267
      %v923 = vunpack.c.h.b16 %v267
      %v924 = vunpack.c.l.b16 %v268
      %v925 = vunpack.c.h.b16 %v268
      %v926 = vunpack.c.l.b16 %v269
      %v927 = vunpack.c.h.b16 %v269
      %v928 = vunpack.c.l.b16 %v270
      %v929 = vunpack.c.h.b16 %v270
      %v930 = vunpack.c.l.b16 %v271
      %v931 = vunpack.c.h.b16 %v271
      %v932 = vunpack.c.l.b16 %v272
      %v933 = vunpack.c.h.b16 %v272
      %v934 = vunpack.c.l.b16 %v273
      %v935 = vunpack.c.h.b16 %v273
      %v936 = vunpack.c.l.b16 %v274
      %v937 = vunpack.c.h.b16 %v274
      %v938 = vunpack.c.l.b16 %v275
      %v939 = vunpack.c.h.b16 %v275
      %v940 = vunpack.c.l.b16 %v276
      %v941 = vunpack.c.h.b16 %v276
      %v942 = vunpack.c.l.b16 %v277
      %v943 = vunpack.c.h.b16 %v277
      %v944 = vunpack.c.l.b16 %v278
      %v945 = vunpack.c.h.b16 %v278
      %v946 = vunpack.c.l.b16 %v279
      %v947 = vunpack.c.h.b16 %v279
      %v948 = vunpack.c.l.b16 %v280
      %v949 = vunpack.c.h.b16 %v280
      %v950 = vunpack.c.l.b16 %v281
      %v951 = vunpack.c.h.b16 %v281
      %v952 = vunpack.c.l.b16 %v282
      %v953 = vunpack.c.h.b16 %v282
      %v954 = vunpack.c.l.b16 %v283
      %v955 = vunpack.c.h.b16 %v283
      %v956 = vunpack.c.l.b16 %v284
      %v957 = vunpack.c.h.b16 %v284
      %v958 = vunpack.c.l.b16 %v285
      %v959 = vunpack.c.h.b16 %v285
      %v960 = vunpack.c.l.b16 %v286
      %v961 = vunpack.c.h.b16 %v286
      %v962 = vunpack.c.l.b16 %v287
      %v963 = vunpack.c.h.b16 %v287
      %v964 = vunpack.c.l.b16 %v288
      %v965 = vunpack.c.h.b16 %v288
      %v966 = vunpack.c.l.b16 %v289
      %v967 = vunpack.c.h.b16 %v289
      %v968 = vunpack.c.l.b16 %v290
      %v969 = vunpack.c.h.b16 %v290
      %v970 = vunpack.c.l.b16 %v291
      %v971 = vunpack.c.h.b16 %v291
      %v972 = vunpack.c.l.b16 %v292
      %v973 = vunpack.c.h.b16 %v292
      %v974 = vunpack.c.l.b16 %v293
      %v975 = vunpack.c.h.b16 %v293
      %v976 = vunpack.c.l.b16 %v294
      %v977 = vunpack.c.h.b16 %v294
      %v978 = vunpack.c.l.b16 %v295
      %v979 = vunpack.c.h.b16 %v295
      %v980 = vunpack.c.l.b16 %v296
      %v981 = vunpack.c.h.b16 %v296
      %v982 = vunpack.c.l.b16 %v297
      %v983 = vunpack.c.h.b16 %v297
      %v984 = vunpack.c.l.b16 %v298
      %v985 = vunpack.c.h.b16 %v298
      %v986 = vunpack.c.l.b16 %v299
      %v987 = vunpack.c.h.b16 %v299
      %v988 = vunpack.c.l.b16 %v300
      %v989 = vunpack.c.h.b16 %v300
      %v990 = vunpack.c.l.b16 %v301
      %v991 = vunpack.c.h.b16 %v301
      %v992 = vunpack.c.l.b16 %v302
      %v993 = vunpack.c.h.b16 %v302
      %v994 = vunpack.c.l.b16 %v303
      %v995 = vunpack.c.h.b16 %v303
      %v996 = vunpack.c.l.b16 %v304
      %v997 = vunpack.c.h.b16 %v304
      %v998 = vunpack.c.l.b16 %v305
      %v999 = vunpack.c.h.b16 %v305
      %v1000 = vunpack.c.l.b16 %v306
      %v1001 = vunpack.c.h.b16 %v306
      %v1002 = vunpack.c.l.b16 %v307
      %v1003 = vunpack.c.h.b16 %v307
      %v1004 = vunpack.c.l.b16 %v308
      %v1005 = vunpack.c.h.b16 %v308
      %v1006 = vunpack.c.l.b16 %v309
      %v1007 = vunpack.c.h.b16 %v309
      %v1008 = vunpack.c.l.b16 %v310
      %v1009 = vunpack.c.h.b16 %v310
      %v1010 = vunpack.c.l.b16 %v311
      %v1011 = vunpack.c.h.b16 %v311
      %v1012 = vunpack.c.l.b16 %v312
      %v1013 = vunpack.c.h.b16 %v312
      %v1014 = vunpack.c.l.b16 %v313
      %v1015 = vunpack.c.h.b16 %v313
      %v1016 = vunpack.c.l.b16 %v314
      %v1017 = vunpack.c.h.b16 %v314
      %v1018 = vunpack.c.l.b16 %v315
      %v1019 = vunpack.c.h.b16 %v315
      %v1020 = vunpack.c.l.b16 %v316
      %v1021 = vunpack.c.h.b16 %v316
      %v1022 = vunpack.c.l.b16 %v317
      %v1023 = vunpack.c.h.b16 %v317
      %v1024 = vunpack.c.l.b16 %v318
      %v1025 = vunpack.c.h.b16 %v318
      %v1026 = vunpack.c.l.b16 %v319
      %v1027 = vunpack.c.h.b16 %v319
      %v1028 = vunpack.c.l.b16 %v320
      %v1029 = vunpack.c.h.b16 %v320
      %v1030 = vunpack.c.l.b16 %v321
      %v1031 = vunpack.c.h.b16 %v321
      %v1032 = vunpack.c.l.b16 %v322
      %v1033 = vunpack.c.h.b16 %v322
      %v1034 = vunpack.c.l.b16 %v323
      %v1035 = vunpack.c.h.b16 %v323
      %v1036 = vunpack.c.l.b16 %v324
      %v1037 = vunpack.c.h.b16 %v324
      %v1038 = vunpack.c.l.b16 %v325
      %v1039 = vunpack.c.h.b16 %v325
      %v1040 = vunpack.c.l.b16 %v326
      %v1041 = vunpack.c.h.b16 %v326
      %v1042 = vunpack.c.l.b16 %v327
      %v1043 = vunpack.c.h.b16 %v327
      %v1044 = vunpack.c.l.b16 %v328
      %v1045 = vunpack.c.h.b16 %v328
      %v1046 = vunpack.c.l.b16 %v329
      %v1047 = vunpack.c.h.b16 %v329
      %v1048 = vunpack.c.l.b16 %v330
      %v1049 = vunpack.c.h.b16 %v330
      %v1050 = vunpack.c.l.b16 %v331
      %v1051 = vunpack.c.h.b16 %v331
      %v1052 = vunpack.c.l.b16 %v332
      %v1053 = vunpack.c.h.b16 %v332
      %v1054 = vunpack.c.l.b16 %v333
      %v1055 = vunpack.c.h.b16 %v333
      %v1056 = vunpack.c.l.b16 %v334
      %v1057 = vunpack.c.h.b16 %v334
      %v1058 = vunpack.c.l.b16 %v335
      %v1059 = vunpack.c.h.b16 %v335
      %v1060 = vunpack.c.l.b16 %v336
      %v1061 = vunpack.c.h.b16 %v336
      %v1062 = vunpack.c.l.b16 %v337
      %v1063 = vunpack.c.h.b16 %v337
      %v1064 = vunpack.c.l.b16 %v338
      %v1065 = vunpack.c.h.b16 %v338
      %v1066 = vunpack.c.l.b16 %v339
      %v1067 = vunpack.c.h.b16 %v339
      %v1068 = vunpack.c.l.b16 %v340
      %v1069 = vunpack.c.h.b16 %v340
      %v1070 = vunpack.c.l.b16 %v341
      %v1071 = vunpack.c.h.b16 %v341
      %v1072 = vunpack.c.l.b16 %v342
      %v1073 = vunpack.c.h.b16 %v342
      %v1074 = vunpack.c.l.b16 %v343
      %v1075 = vunpack.c.h.b16 %v343
      %v1076 = vunpack.c.l.b16 %v344
      %v1077 = vunpack.c.h.b16 %v344
      %v1078 = vunpack.c.l.b16 %v345
      %v1079 = vunpack.c.h.b16 %v345
      %v1080 = vunpack.c.l.b16 %v346
      %v1081 = vunpack.c.h.b16 %v346
      %v1082 = vunpack.c.l.b16 %v347
      %v1083 = vunpack.c.h.b16 %v347
      %v1084 = vunpack.c.l.b16 %v348
      %v1085 = vunpack.c.h.b16 %v348
      %v1086 = vunpack.c.l.b16 %v349
      %v1087 = vunpack.c.h.b16 %v349
      %v1088 = vunpack.c.l.b16 %v350
      %v1089 = vunpack.c.h.b16 %v350
      %v1090 = vunpack.c.l.b16 %v351
      %v1091 = vunpack.c.h.b16 %v351
      %v1092 = vunpack.c.l.b16 %v352
      %v1093 = vunpack.c.h.b16 %v352
      %v1094 = vunpack.c.l.b16 %v353
      %v1095 = vunpack.c.h.b16 %v353
      %v1096 = vunpack.c.l.b16 %v354
      %v1097 = vunpack.c.h.b16 %v354
      %v1098 = vunpack.c.l.b16 %v355
      %v1099 = vunpack.c.h.b16 %v355
      %v1100 = vunpack.c.l.b16 %v356
      %v1101 = vunpack.c.h.b16 %v356
      %v1102 = vunpack.c.l.b16 %v357
      %v1103 = vunpack.c.h.b16 %v357
      %v1104 = vunpack.c.l.b16 %v358
      %v1105 = vunpack.c.h.b16 %v358
      %v1106 = vunpack.c.l.b16 %v359
      %v1107 = vunpack.c.h.b16 %v359
      %v1108 = vunpack.c.l.b16 %v360
      %v1109 = vunpack.c.h.b16 %v360
      %v1110 = vunpack.c.l.b16 %v361
      %v1111 = vunpack.c.h.b16 %v361
      %v1112 = vunpack.c.l.b16 %v362
      %v1113 = vunpack.c.h.b16 %v362
      %v1114 = vunpack.c.l.b16 %v363
      %v1115 = vunpack.c.h.b16 %v363
      %v1116 = vunpack.c.l.b16 %v364
      %v1117 = vunpack.c.h.b16 %v364
      %v1118 = vunpack.c.l.b16 %v365
      %v1119 = vunpack.c.h.b16 %v365
      %v1120 = vunpack.c.l.b16 %v366
      %v1121 = vunpack.c.h.b16 %v366
      %v1122 = vunpack.c.l.b16 %v367
      %v1123 = vunpack.c.h.b16 %v367
      %v1124 = vunpack.c.l.b16 %v368
      %v1125 = vunpack.c.h.b16 %v368
      %v1126 = vunpack.c.l.b16 %v369
      %v1127 = vunpack.c.h.b16 %v369
      %v1128 = vunpack.c.l.b16 %v370
      %v1129 = vunpack.c.h.b16 %v370
      %v1130 = vunpack.c.l.b16 %v371
      %v1131 = vunpack.c.h.b16 %v371
      %v1132 = vunpack.c.l.b16 %v372
      %v1133 = vunpack.c.h.b16 %v372
      %v1134 = vunpack.c.l.b16 %v373
      %v1135 = vunpack.c.h.b16 %v373
      %v1136 = vunpack.c.l.b16 %v374
      %v1137 = vunpack.c.h.b16 %v374
      %v1138 = vunpack.c.l.b16 %v375
      %v1139 = vunpack.c.h.b16 %v375
      %v1140 = vunpack.c.l.b16 %v376
      %v1141 = vunpack.c.h.b16 %v376
      %v1142 = vunpack.c.l.b16 %v377
      %v1143 = vunpack.c.h.b16 %v377
      %v1144 = vunpack.c.l.b16 %v378
      %v1145 = vunpack.c.h.b16 %v378
      %v1146 = vunpack.c.l.b16 %v379
      %v1147 = vunpack.c.h.b16 %v379
      %v1148 = vunpack.c.l.b16 %v380
      %v1149 = vunpack.c.h.b16 %v380
      %v1150 = vunpack.c.l.b16 %v381
      %v1151 = vunpack.c.h.b16 %v381
      %v1152 = vunpack.c.l.b16 %v382
      %v1153 = vunpack.c.h.b16 %v382
      %v1154 = vunpack.c.l.b16 %v383
      %v1155 = vunpack.c.h.b16 %v383
      %v1156 = vunpack.c.l.b16 %v384
      %v1157 = vunpack.c.h.b16 %v384
      %v1158 = vunpack.c.l.b16 %v385
      %v1159 = vunpack.c.h.b16 %v385
      %v1160 = vunpack.c.l.b16 %v386
      %v1161 = vunpack.c.h.b16 %v386
      %v1162 = vunpack.c.l.b16 %v387
      %v1163 = vunpack.c.h.b16 %v387
      %v1164 = vunpack.c.l.b16 %v388
      %v1165 = vunpack.c.h.b16 %v388
      %v1166 = vunpack.c.l.b16 %v389
      %v1167 = vunpack.c.h.b16 %v389
      %v1168 = vunpack.c.l.b16 %v390
      %v1169 = vunpack.c.h.b16 %v390
      %v1170 = vunpack.c.l.b16 %v391
      %v1171 = vunpack.c.h.b16 %v391
      %v1172 = vunpack.c.l.b16 %v392
      %v1173 = vunpack.c.h.b16 %v392
      %v1174 = vunpack.c.l.b16 %v393
      %v1175 = vunpack.c.h.b16 %v393
      %v1176 = vunpack.c.l.b16 %v394
      %v1177 = vunpack.c.h.b16 %v394
      %v1178 = vunpack.c.l.b16 %v395
      %v1179 = vunpack.c.h.b16 %v395
      %v1180 = vunpack.c.l.b16 %v396
      %v1181 = vunpack.c.h.b16 %v396
      %v1182 = vunpack.c.l.b16 %v397
      %v1183 = vunpack.c.h.b16 %v397
      %v1184 = vunpack.c.l.b16 %v398
      %v1185 = vunpack.c.h.b16 %v398
      %v1186 = vunpack.c.l.b16 %v399
      %v1187 = vunpack.c.h.b16 %v399
      %v1188 = vunpack.c.l.b16 %v400
      %v1189 = vunpack.c.h.b16 %v400
      %v1190 = vunpack.c.l.b16 %v401
      %v1191 = vunpack.c.h.b16 %v401
      %v1192 = vunpack.c.l.b16 %v402
      %v1193 = vunpack.c.h.b16 %v402
      %v1194 = vunpack.c.l.b16 %v403
      %v1195 = vunpack.c.h.b16 %v403
      %v1196 = vunpack.c.l.b16 %v404
      %v1197 = vunpack.c.h.b16 %v404
      %v1198 = vunpack.c.l.b16 %v405
      %v1199 = vunpack.c.h.b16 %v405
      %v1200 = vunpack.c.l.b16 %v406
      %v1201 = vunpack.c.h.b16 %v406
      %v1202 = vunpack.c.l.b16 %v407
      %v1203 = vunpack.c.h.b16 %v407
      %v1204 = vunpack.c.l.b16 %v408
      %v1205 = vunpack.c.h.b16 %v408
      %v1206 = vunpack.c.l.b16 %v409
      %v1207 = vunpack.c.h.b16 %v409
      %v1208 = vunpack.c.l.b16 %v410
      %v1209 = vunpack.c.h.b16 %v410
      %v1210 = vunpack.c.l.b16 %v411
      %v1211 = vunpack.c.h.b16 %v411
      %v1212 = vunpack.c.l.b16 %v412
      %v1213 = vunpack.c.h.b16 %v412
      %v1214 = vunpack.c.l.b16 %v413
      %v1215 = vunpack.c.h.b16 %v413
      %v1216 = vunpack.c.l.b16 %v414
      %v1217 = vunpack.c.h.b16 %v414
      %v1218 = vunpack.c.l.b16 %v415
      %v1219 = vunpack.c.h.b16 %v415
      %v1220 = vunpack.c.l.b16 %v416
      %v1221 = vunpack.c.h.b16 %v416
      %v1222 = vunpack.c.l.b16 %v417
      %v1223 = vunpack.c.h.b16 %v417
      %v1224 = vunpack.c.l.b16 %v418
      %v1225 = vunpack.c.h.b16 %v418
      %v1226 = vunpack.c.l.b16 %v419
      %v1227 = vunpack.c.h.b16 %v419
      %v1228 = vunpack.c.l.b16 %v420
      %v1229 = vunpack.c.h.b16 %v420
      %v1230 = vunpack.c.l.b16 %v421
      %v1231 = vunpack.c.h.b16 %v421
      %v1232 = vunpack.c.l.b16 %v422
      %v1233 = vunpack.c.h.b16 %v422
      %v1234 = vunpack.c.l.b16 %v423
      %v1235 = vunpack.c.h.b16 %v423
      %v1236 = vunpack.c.l.b16 %v424
      %v1237 = vunpack.c.h.b16 %v424
      %v1238 = vunpack.c.l.b16 %v425
      %v1239 = vunpack.c.h.b16 %v425
      %v1240 = vunpack.c.l.b16 %v426
      %v1241 = vunpack.c.h.b16 %v426
      %v1242 = vunpack.c.l.b16 %v427
      %v1243 = vunpack.c.h.b16 %v427
      %v1244 = vunpack.c.l.b16 %v428
      %v1245 = vunpack.c.h.b16 %v428
      %v1246 = vunpack.c.l.b16 %v429
      %v1247 = vunpack.c.h.b16 %v429
      %v1248 = vunpack.c.l.b16 %v430
      %v1249 = vunpack.c.h.b16 %v430
      %v1250 = vunpack.c.l.b16 %v431
      %v1251 = vunpack.c.h.b16 %v431
      %v1252 = vunpack.c.l.b16 %v432
      %v1253 = vunpack.c.h.b16 %v432
      %v1254 = vunpack.c.l.b16 %v433
      %v1255 = vunpack.c.h.b16 %v433
      %v1256 = vunpack.c.l.b16 %v434
      %v1257 = vunpack.c.h.b16 %v434
      %v1258 = vunpack.c.l.b16 %v435
      %v1259 = vunpack.c.h.b16 %v435
      %v1260 = vunpack.c.l.b16 %v436
      %v1261 = vunpack.c.h.b16 %v436
      %v1262 = vunpack.c.l.b16 %v437
      %v1263 = vunpack.c.h.b16 %v437
      %v1264 = vunpack.c.l.b16 %v438
      %v1265 = vunpack.c.h.b16 %v438
      %v1266 = vunpack.c.l.b16 %v439
      %v1267 = vunpack.c.h.b16 %v439
      %v1268 = vunpack.c.l.b16 %v440
      %v1269 = vunpack.c.h.b16 %v440
      %v1270 = vunpack.c.l.b16 %v441
      %v1271 = vunpack.c.h.b16 %v441
      %v1272 = vunpack.c.l.b16 %v442
      %v1273 = vunpack.c.h.b16 %v442
      %v1274 = vunpack.c.l.b16 %v443
      %v1275 = vunpack.c.h.b16 %v443
      %v1276 = vunpack.c.l.b16 %v444
      %v1277 = vunpack.c.h.b16 %v444
      %v1278 = vunpack.c.l.b16 %v445
      %v1279 = vunpack.c.h.b16 %v445
      %v1280 = vunpack.c.l.b16 %v446
      %v1281 = vunpack.c.h.b16 %v446
      %v1282 = vunpack.c.l.b16 %v447
      %v1283 = vunpack.c.h.b16 %v447
      %v1284 = vunpack.c.l.b16 %v448
      %v1285 = vunpack.c.h.b16 %v448
      %v1286 = vunpack.c.l.b16 %v449
      %v1287 = vunpack.c.h.b16 %v449
      %v1288 = vunpack.c.l.b16 %v450
      %v1289 = vunpack.c.h.b16 %v450
      %v1290 = vunpack.c.l.b16 %v451
      %v1291 = vunpack.c.h.b16 %v451
      %v1292 = vunpack.c.l.b16 %v452
      %v1293 = vunpack.c.h.b16 %v452
      %v1294 = vunpack.c.l.b16 %v453
      %v1295 = vunpack.c.h.b16 %v453
      %v1296 = vunpack.c.l.b16 %v454
      %v1297 = vunpack.c.h.b16 %v454
      %v1298 = vunpack.c.l.b16 %v455
      %v1299 = vunpack.c.h.b16 %v455
      %v1300 = vunpack.c.l.b16 %v456
      %v1301 = vunpack.c.h.b16 %v456
      %v1302 = vunpack.c.l.b16 %v457
      %v1303 = vunpack.c.h.b16 %v457
      %v1304 = vunpack.c.l.b16 %v458
      %v1305 = vunpack.c.h.b16 %v458
      %v1306 = vunpack.c.l.b16 %v459
      %v1307 = vunpack.c.h.b16 %v459
      %v1308 = vpack.c.b16 %v798, %v796
      %v1309 = vpack.c.b16 %v799, %v797
      %v1310 = vpack.c.b16 %v802, %v800
      %v1311 = vpack.c.b16 %v803, %v801
      %v1312 = vpack.c.b16 %v806, %v804
      %v1313 = vpack.c.b16 %v807, %v805
      %v1314 = vpack.c.b16 %v810, %v808
      %v1315 = vpack.c.b16 %v811, %v809
      %v1316 = vpack.c.b16 %v814, %v812
      %v1317 = vpack.c.b16 %v815, %v813
      %v1318 = vpack.c.b16 %v818, %v816
      %v1319 = vpack.c.b16 %v819, %v817
      %v1320 = vpack.c.b16 %v822, %v820
      %v1321 = vpack.c.b16 %v823, %v821
      %v1322 = vpack.c.b16 %v826, %v824
      %v1323 = vpack.c.b16 %v827, %v825
      %v1324 = vpack.c.b16 %v830, %v828
      %v1325 = vpack.c.b16 %v831, %v829
      %v1326 = vpack.c.b16 %v834, %v832
      %v1327 = vpack.c.b16 %v835, %v833
      %v1328 = vpack.c.b16 %v838, %v836
      %v1329 = vpack.c.b16 %v839, %v837
      %v1330 = vpack.c.b16 %v842, %v840
      %v1331 = vpack.c.b16 %v843, %v841
      %v1332 = vpack.c.b16 %v846, %v844
      %v1333 = vpack.c.b16 %v847, %v845
      %v1334 = vpack.c.b16 %v850, %v848
      %v1335 = vpack.c.b16 %v851, %v849
      %v1336 = vpack.c.b16 %v854, %v852
      %v1337 = vpack.c.b16 %v855, %v853
      %v1338 = vpack.c.b16 %v858, %v856
      %v1339 = vpack.c.b16 %v859, %v857
      %v1340 = vpack.c.b16 %v862, %v860
      %v1341 = vpack.c.b16 %v863, %v861
      %v1342 = vpack.c.b16 %v866, %v864
      %v1343 = vpack.c.b16 %v867, %v865
      %v1344 = vpack.c.b16 %v870, %v868
      %v1345 = vpack.c.b16 %v871, %v869
      %v1346 = vpack.c.b16 %v874, %v872
      %v1347 = vpack.c.b16 %v875, %v873
      %v1348 = vpack.c.b16 %v878, %v876
      %v1349 = vpack.c.b16 %v879, %v877
      %v1350 = vpack.c.b16 %v882, %v880
      %v1351 = vpack.c.b16 %v883, %v881
      %v1352 = vpack.c.b16 %v886, %v884
      %v1353 = vpack.c.b16 %v887, %v885
      %v1354 = vpack.c.b16 %v890, %v888
      %v1355 = vpack.c.b16 %v891, %v889
      %v1356 = vpack.c.b16 %v894, %v892
      %v1357 = vpack.c.b16 %v895, %v893
      %v1358 = vpack.c.b16 %v898, %v896
      %v1359 = vpack.c.b16 %v899, %v897
      %v1360 = vpack.c.b16 %v902, %v900
      %v1361 = vpack.c.b16 %v903, %v901
      %v1362 = vpack.c.b16 %v906, %v904
      %v1363 = vpack.c.b16 %v907, %v905
      %v1364 = vpack.c.b16 %v910, %v908
      %v1365 = vpack.c.b16 %v911, %v909
      %v1366 = vpack.c.b16 %v914, %v912
      %v1367 = vpack.c.b16 %v915, %v913
      %v1368 = vpack.c.b16 %v918, %v916
      %v1369 = vpack.c.b16 %v919, %v917
      %v1370 = vpack.c.b16 %v922, %v920
      %v1371 = vpack.c.b16 %v923, %v921
      %v1372 = vpack.c.b16 %v926, %v924
      %v1373 = vpack.c.b16 %v927, %v925
      %v1374 = vpack.c.b16 %v930, %v928
      %v1375 = vpack.c.b16 %v931, %v929
      %v1376 = vpack.c.b16 %v934, %v932
      %v1377 = vpack.c.b16 %v935, %v933
      %v1378 = vpack.c.b16 %v938, %v936
      %v1379 = vpack.c.b16 %v939, %v937
      %v1380 = vpack.c.b16 %v942, %v940
      %v1381 = vpack.c.b16 %v943, %v941
      %v1382 = vpack.c.b16 %v946, %v944
      %v1383 = vpack.c.b16 %v947, %v945
      %v1384 = vpack.c.b16 %v950, %v948
      %v1385 = vpack.c.b16 %v951, %v949
      %v1386 = vpack.c.b16 %v954, %v952
      %v1387 = vpack.c.b16 %v955, %v953
      %v1388 = vpack.c.b16 %v958, %v956
      %v1389 = vpack.c.b16 %v959, %v957
      %v1390 = vpack.c.b16 %v962, %v960
      %v1391 = vpack.c.b16 %v963, %v961
      %v1392 = vpack.c.b16 %v966, %v964
      %v1393 = vpack.c.b16 %v967, %v965
      %v1394 = vpack.c.b16 %v970, %v968
      %v1395 = vpack.c.b16 %v971, %v969
      %v1396 = vpack.c.b16 %v974, %v972
      %v1397 = vpack.c.b16 %v975, %v973
      %v1398 = vpack.c.b16 %v978, %v976
      %v1399 = vpack.c.b16 %v979, %v977
      %v1400 = vpack.c.b16 %v982, %v980
      %v1401 = vpack.c.b16 %v983, %v981
      %v1402 = vpack.c.b16 %v986, %v984
      %v1403 = vpack.c.b16 %v987, %v985
      %v1404 = vpack.c.b16 %v990, %v988
      %v1405 = vpack.c.b16 %v991, %v989
      %v1406 = vpack.c.b16 %v994, %v992
      %v1407 = vpack.c.b16 %v995, %v993
      %v1408 = vpack.c.b16 %v998, %v996
      %v1409 = vpack.c.b16 %v999, %v997
      %v1410 = vpack.c.b16 %v1002, %v1000
      %v1411 = vpack.c.b16 %v1003, %v1001
      %v1412 = vpack.c.b16 %v1006, %v1004
      %v1413 = vpack.c.b16 %v1007, %v1005
      %v1414 = vpack.c.b16 %v1010, %v1008
      %v1415 = vpack.c.b16 %v1011, %v1009
      %v1416 = vpack.c.b16 %v1014, %v1012
      %v1417 = vpack.c.b16 %v1015, %v1013
      %v1418 = vpack.c.b16 %v1018, %v1016
      %v1419 = vpack.c.b16 %v1019, %v1017
      %v1420 = vpack.c.b16 %v1022, %v1020
      %v1421 = vpack.c.b16 %v1023, %v1021
      %v1422 = vpack.c.b16 %v1026, %v1024
      %v1423 = vpack.c.b16 %v1027, %v1025
      %v1424 = vpack.c.b16 %v1030, %v1028
      %v1425 = vpack.c.b16 %v1031, %v1029
      %v1426 = vpack.c.b16 %v1034, %v1032
      %v1427 = vpack.c.b16 %v1035, %v1033
      %v1428 = vpack.c.b16 %v1038, %v1036
      %v1429 = vpack.c.b16 %v1039, %v1037
      %v1430 = vpack.c.b16 %v1042, %v1040
      %v1431 = vpack.c.b16 %v1043, %v1041
      %v1432 = vpack.c.b16 %v1046, %v1044
      %v1433 = vpack.c.b16 %v1047, %v1045
      %v1434 = vpack.c.b16 %v1050, %v1048
      %v1435 = vpack.c.b16 %v1051, %v1049
      %v1436 = vpack.c.b16 %v1054, %v1052
      %v1437 = vpack.c.b16 %v1055, %v1053
      %v1438 = vpack.c.b16 %v1058, %v1056
      %v1439 = vpack.c.b16 %v1059, %v1057
      %v1440 = vpack.c.b16 %v1062, %v1060
      %v1441 = vpack.c.b16 %v1063, %v1061
      %v1442 = vpack.c.b16 %v1066, %v1064
      %v1443 = vpack.c.b16 %v1067, %v1065
      %v1444 = vpack.c.b16 %v1070, %v1068
      %v1445 = vpack.c.b16 %v1071, %v1069
      %v1446 = vpack.c.b16 %v1074, %v1072
      %v1447 = vpack.c.b16 %v1075, %v1073
      %v1448 = vpack.c.b16 %v1078, %v1076
      %v1449 = vpack.c.b16 %v1079, %v1077
      %v1450 = vpack.c.b16 %v1082, %v1080
      %v1451 = vpack.c.b16 %v1083, %v1081
      %v1452 = vpack.c.b16 %v1086, %v1084
      %v1453 = vpack.c.b16 %v1087, %v1085
      %v1454 = vpack.c.b16 %v1090, %v1088
      %v1455 = vpack.c.b16 %v1091, %v1089
      %v1456 = vpack.c.b16 %v1094, %v1092
      %v1457 = vpack.c.b16 %v1095, %v1093
      %v1458 = vpack.c.b16 %v1098, %v1096
      %v1459 = vpack.c.b16 %v1099, %v1097
      %v1460 = vpack.c.b16 %v1102, %v1100
      %v1461 = vpack.c.b16 %v1103, %v1101
      %v1462 = vpack.c.b16 %v1106, %v1104
      %v1463 = vpack.c.b16 %v1107, %v1105
      %v1464 = vpack.c.b16 %v1110, %v1108
      %v1465 = vpack.c.b16 %v1111, %v1109
      %v1466 = vpack.c.b16 %v1114, %v1112
      %v1467 = vpack.c.b16 %v1115, %v1113
      %v1468 = vpack.c.b16 %v1118, %v1116
      %v1469 = vpack.c.b16 %v1119, %v1117
      %v1470 = vpack.c.b16 %v1122, %v1120
      %v1471 = vpack.c.b16 %v1123, %v1121
      %v1472 = vpack.c.b16 %v1126, %v1124
      %v1473 = vpack.c.b16 %v1127, %v1125
      %v1474 = vpack.c.b16 %v1130, %v1128
      %v1475 = vpack.c.b16 %v1131, %v1129
      %v1476 = vpack.c.b16 %v1134, %v1132
      %v1477 = vpack.c.b16 %v1135, %v1133
      %v1478 = vpack.c.b16 %v1138, %v1136
      %v1479 = vpack.c.b16 %v1139, %v1137
      %v1480 = vpack.c.b16 %v1142, %v1140
      %v1481 = vpack.c.b16 %v1143, %v1141
      %v1482 = vpack.c.b16 %v1146, %v1144
      %v1483 = vpack.c.b16 %v1147, %v1145
      %v1484 = vpack.c.b16 %v1150, %v1148
      %v1485 = vpack.c.b16 %v1151, %v1149
      %v1486 = vpack.c.b16 %v1154, %v1152
      %v1487 = vpack.c.b16 %v1155, %v1153
      %v1488 = vpack.c.b16 %v1158, %v1156
      %v1489 = vpack.c.b16 %v1159, %v1157
      %v1490 = vpack.c.b16 %v1162, %v1160
      %v1491 = vpack.c.b16 %v1163, %v1161
      %v1492 = vpack.c.b16 %v1166, %v1164
      %v1493 = vpack.c.b16 %v1167, %v1165
      %v1494 = vpack.c.b16 %v1170, %v1168
      %v1495 = vpack.c.b16 %v1171, %v1169
      %v1496 = vpack.c.b16 %v1174, %v1172
      %v1497 = vpack.c.b16 %v1175, %v1173
      %v1498 = vpack.c.b16 %v1178, %v1176
      %v1499 = vpack.c.b16 %v1179, %v1177
      %v1500 = vpack.c.b16 %v1182, %v1180
      %v1501 = vpack.c.b16 %v1183, %v1181
      %v1502 = vpack.c.b16 %v1186, %v1184
      %v1503 = vpack.c.b16 %v1187, %v1185
      %v1504 = vpack.c.b16 %v1190, %v1188
      %v1505 = vpack.c.b16 %v1191, %v1189
      %v1506 = vpack.c.b16 %v1194, %v1192
      %v1507 = vpack.c.b16 %v1195, %v1193
      %v1508 = vpack.c.b16 %v1198, %v1196
      %v1509 = vpack.c.b16 %v1199, %v1197
      %v1510 = vpack.c.b16 %v1202, %v1200
      %v1511 = vpack.c.b16 %v1203, %v1201
      %v1512 = vpack.c.b16 %v1206, %v1204
      %v1513 = vpack.c.b16 %v1207, %v1205
      %v1514 = vpack.c.b16 %v1210, %v1208
      %v1515 = vpack.c.b16 %v1211, %v1209
      %v1516 = vpack.c.b16 %v1214, %v1212
      %v1517 = vpack.c.b16 %v1215, %v1213
      %v1518 = vpack.c.b16 %v1218, %v1216
      %v1519 = vpack.c.b16 %v1219, %v1217
      %v1520 = vpack.c.b16 %v1222, %v1220
      %v1521 = vpack.c.b16 %v1223, %v1221
      %v1522 = vpack.c.b16 %v1226, %v1224
      %v1523 = vpack.c.b16 %v1227, %v1225
      %v1524 = vpack.c.b16 %v1230, %v1228
      %v1525 = vpack.c.b16 %v1231, %v1229
      %v1526 = vpack.c.b16 %v1234, %v1232
      %v1527 = vpack.c.b16 %v1235, %v1233
      %v1528 = vpack.c.b16 %v1238, %v1236
      %v1529 = vpack.c.b16 %v1239, %v1237
      %v1530 = vpack.c.b16 %v1242, %v1240
      %v1531 = vpack.c.b16 %v1243, %v1241
      %v1532 = vpack.c.b16 %v1246, %v1244
      %v1533 = vpack.c.b16 %v1247, %v1245
      %v1534 = vpack.c.b16 %v1250, %v1248
      %v1535 = vpack.c.b16 %v1251, %v1249
      %v1536 = vpack.c.b16 %v1254, %v1252
      %v1537 = vpack.c.b16 %v1255, %v1253
      %v1538 = vpack.c.b16 %v1258, %v1256
      %v1539 = vpack.c.b16 %v1259, %v1257
      %v1540 = vpack.c.b16 %v1262, %v1260
      %v1541 = vpack.c.b16 %v1263, %v1261
      %v1542 = vpack.c.b16 %v1266, %v1264
      %v1543 = vpack.c.b16 %v1267, %v1265
      %v1544 = vpack.c.b16 %v1270, %v1268
      %v1545 = vpack.c.b16 %v1271, %v1269
      %v1546 = vpack.c.b16 %v1274, %v1272
      %v1547 = vpack.c.b16 %v1275, %v1273
      %v1548 = vpack.c.b16 %v1278, %v1276
      %v1549 = vpack.c.b16 %v1279, %v1277
      %v1550 = vpack.c.b16 %v1282, %v1280
      %v1551 = vpack.c.b16 %v1283, %v1281
      %v1552 = vpack.c.b16 %v1286, %v1284
      %v1553 = vpack.c.b16 %v1287, %v1285
      %v1554 = vpack.c.b16 %v1290, %v1288
      %v1555 = vpack.c.b16 %v1291, %v1289
      %v1556 = vpack.c.b16 %v1294, %v1292
      %v1557 = vpack.c.b16 %v1295, %v1293
      %v1558 = vpack.c.b16 %v1298, %v1296
      %v1559 = vpack.c.b16 %v1299, %v1297
      %v1560 = vpack.c.b16 %v1302, %v1300
      %v1561 = vpack.c.b16 %v1303, %v1301
      %v1562 = vpack.c.b16 %v1306, %v1304
      %v1563 = vpack.c.b16 %v1307, %v1305
      %1820 = vmatpush.bf16.msra.mxu0 %v1322
      %1821 = vmatpush.bf16.msra.mxu0 %v1320
      %1822 = vmatpush.bf16.msra.mxu0 %v1318
      %1823 = vmatpush.bf16.msra.mxu0 %v1316
      %1824 = vmatpush.bf16.msra.mxu0 %v1314
      %1825 = vmatpush.bf16.msra.mxu0 %v1312
      %1826 = vmatpush.bf16.msra.mxu0 %v1310
      %1827 = vmatpush.bf16.msra.mxu0 %v1308
      %1828 = vmatmul.bf16.gmra.mxu0 %v508
      %v1829 = vpop.f32.mrf.mxu0
      %v1830 = vadd.f32 0.0, %v1829
      %v1831 = vpop.f32.mrf.mxu0
      %v1832 = vadd.f32 0.0, %v1831
      %1833 = vdwg.mxu0
      %1834 = vmatpush.bf16.msra.mxu0 %v1338
      %1835 = vmatpush.bf16.msra.mxu0 %v1336
      %1836 = vmatpush.bf16.msra.mxu0 %v1334
      %1837 = vmatpush.bf16.msra.mxu0 %v1332
      %1838 = vmatpush.bf16.msra.mxu0 %v1330
      %1839 = vmatpush.bf16.msra.mxu0 %v1328
      %1840 = vmatpush.bf16.msra.mxu0 %v1326
      %1841 = vmatpush.bf16.msra.mxu0 %v1324
      %1842 = vmatmul.bf16.gmra.mxu0 %v509
      %v1843 = vpop.f32.mrf.mxu0
      %v1844 = vadd.f32 %v1830, %v1843
      %v1845 = vpop.f32.mrf.mxu0
      %v1846 = vadd.f32 %v1832, %v1845
      %1847 = vdwg.mxu0
      %1848 = vmatpush.bf16.msra.mxu0 %v1354
      %1849 = vmatpush.bf16.msra.mxu0 %v1352
      %1850 = vmatpush.bf16.msra.mxu0 %v1350
      %1851 = vmatpush.bf16.msra.mxu0 %v1348
      %1852 = vmatpush.bf16.msra.mxu0 %v1346
      %1853 = vmatpush.bf16.msra.mxu0 %v1344
      %1854 = vmatpush.bf16.msra.mxu0 %v1342
      %1855 = vmatpush.bf16.msra.mxu0 %v1340
      %1856 = vmatmul.bf16.gmra.mxu0 %v510
      %v1857 = vpop.f32.mrf.mxu0
      %v1858 = vadd.f32 %v1844, %v1857
      %v1859 = vpop.f32.mrf.mxu0
      %v1860 = vadd.f32 %v1846, %v1859
      %1861 = vdwg.mxu0
      %1862 = vmatpush.bf16.msra.mxu0 %v1370
      %1863 = vmatpush.bf16.msra.mxu0 %v1368
      %1864 = vmatpush.bf16.msra.mxu0 %v1366
      %1865 = vmatpush.bf16.msra.mxu0 %v1364
      %1866 = vmatpush.bf16.msra.mxu0 %v1362
      %1867 = vmatpush.bf16.msra.mxu0 %v1360
      %1868 = vmatpush.bf16.msra.mxu0 %v1358
      %1869 = vmatpush.bf16.msra.mxu0 %v1356
      %1870 = vmatmul.bf16.gmra.mxu0 %v511
      %v1871 = vpop.f32.mrf.mxu0
      %v1872 = vadd.f32 %v1858, %v1871
      %v1873 = vpop.f32.mrf.mxu0
      %v1874 = vadd.f32 %v1860, %v1873
      %1875 = vdwg.mxu0
      %1876 = vmatpush.bf16.msra.mxu0 %v1386
      %1877 = vmatpush.bf16.msra.mxu0 %v1384
      %1878 = vmatpush.bf16.msra.mxu0 %v1382
      %1879 = vmatpush.bf16.msra.mxu0 %v1380
      %1880 = vmatpush.bf16.msra.mxu0 %v1378
      %1881 = vmatpush.bf16.msra.mxu0 %v1376
      %1882 = vmatpush.bf16.msra.mxu0 %v1374
      %1883 = vmatpush.bf16.msra.mxu0 %v1372
      %1884 = vmatmul.bf16.gmra.mxu0 %v512
      %v1885 = vpop.f32.mrf.mxu0
      %v1886 = vadd.f32 %v1872, %v1885
      %v1887 = vpop.f32.mrf.mxu0
      %v1888 = vadd.f32 %v1874, %v1887
      %1889 = vdwg.mxu0
      %1890 = vmatpush.bf16.msra.mxu0 %v1402
      %1891 = vmatpush.bf16.msra.mxu0 %v1400
      %1892 = vmatpush.bf16.msra.mxu0 %v1398
      %1893 = vmatpush.bf16.msra.mxu0 %v1396
      %1894 = vmatpush.bf16.msra.mxu0 %v1394
      %1895 = vmatpush.bf16.msra.mxu0 %v1392
      %1896 = vmatpush.bf16.msra.mxu0 %v1390
      %1897 = vmatpush.bf16.msra.mxu0 %v1388
      %1898 = vmatmul.bf16.gmra.mxu0 %v513
      %v1899 = vpop.f32.mrf.mxu0
      %v1900 = vadd.f32 %v1886, %v1899
      %v1901 = vpop.f32.mrf.mxu0
      %v1902 = vadd.f32 %v1888, %v1901
      %1903 = vdwg.mxu0
      %1904 = vmatpush.bf16.msra.mxu0 %v1418
      %1905 = vmatpush.bf16.msra.mxu0 %v1416
      %1906 = vmatpush.bf16.msra.mxu0 %v1414
      %1907 = vmatpush.bf16.msra.mxu0 %v1412
      %1908 = vmatpush.bf16.msra.mxu0 %v1410
      %1909 = vmatpush.bf16.msra.mxu0 %v1408
      %1910 = vmatpush.bf16.msra.mxu0 %v1406
      %1911 = vmatpush.bf16.msra.mxu0 %v1404
      %1912 = vmatmul.bf16.gmra.mxu0 %v514
      %v1913 = vpop.f32.mrf.mxu0
      %v1914 = vadd.f32 %v1900, %v1913
      %v1915 = vpop.f32.mrf.mxu0
      %v1916 = vadd.f32 %v1902, %v1915
      %1917 = vdwg.mxu0
      %1918 = vmatpush.bf16.msra.mxu0 %v1434
      %1919 = vmatpush.bf16.msra.mxu0 %v1432
      %1920 = vmatpush.bf16.msra.mxu0 %v1430
      %1921 = vmatpush.bf16.msra.mxu0 %v1428
      %1922 = vmatpush.bf16.msra.mxu0 %v1426
      %1923 = vmatpush.bf16.msra.mxu0 %v1424
      %1924 = vmatpush.bf16.msra.mxu0 %v1422
      %1925 = vmatpush.bf16.msra.mxu0 %v1420
      %1926 = vmatmul.bf16.gmra.mxu0 %v515
      %v1927 = vpop.f32.mrf.mxu0
      %v1928 = vadd.f32 %v1914, %v1927
      %v1929 = vpop.f32.mrf.mxu0
      %v1930 = vadd.f32 %v1916, %v1929
      %1931 = vdwg.mxu0
      %1932 = vmatpush.bf16.msra.mxu0 %v1450
      %1933 = vmatpush.bf16.msra.mxu0 %v1448
      %1934 = vmatpush.bf16.msra.mxu0 %v1446
      %1935 = vmatpush.bf16.msra.mxu0 %v1444
      %1936 = vmatpush.bf16.msra.mxu0 %v1442
      %1937 = vmatpush.bf16.msra.mxu0 %v1440
      %1938 = vmatpush.bf16.msra.mxu0 %v1438
      %1939 = vmatpush.bf16.msra.mxu0 %v1436
      %1940 = vmatmul.bf16.gmra.mxu0 %v516
      %v1941 = vpop.f32.mrf.mxu0
      %v1942 = vadd.f32 %v1928, %v1941
      %v1943 = vpop.f32.mrf.mxu0
      %v1944 = vadd.f32 %v1930, %v1943
      %1945 = vdwg.mxu0
      %1946 = vmatpush.bf16.msra.mxu0 %v1466
      %1947 = vmatpush.bf16.msra.mxu0 %v1464
      %1948 = vmatpush.bf16.msra.mxu0 %v1462
      %1949 = vmatpush.bf16.msra.mxu0 %v1460
      %1950 = vmatpush.bf16.msra.mxu0 %v1458
      %1951 = vmatpush.bf16.msra.mxu0 %v1456
      %1952 = vmatpush.bf16.msra.mxu0 %v1454
      %1953 = vmatpush.bf16.msra.mxu0 %v1452
      %1954 = vmatmul.bf16.gmra.mxu0 %v517
      %v1955 = vpop.f32.mrf.mxu0
      %v1956 = vadd.f32 %v1942, %v1955
      %v1957 = vpop.f32.mrf.mxu0
      %v1958 = vadd.f32 %v1944, %v1957
      %1959 = vdwg.mxu0
      %1960 = vmatpush.bf16.msra.mxu0 %v1482
      %1961 = vmatpush.bf16.msra.mxu0 %v1480
      %1962 = vmatpush.bf16.msra.mxu0 %v1478
      %1963 = vmatpush.bf16.msra.mxu0 %v1476
      %1964 = vmatpush.bf16.msra.mxu0 %v1474
      %1965 = vmatpush.bf16.msra.mxu0 %v1472
      %1966 = vmatpush.bf16.msra.mxu0 %v1470
      %1967 = vmatpush.bf16.msra.mxu0 %v1468
      %1968 = vmatmul.bf16.gmra.mxu0 %v518
      %v1969 = vpop.f32.mrf.mxu0
      %v1970 = vadd.f32 %v1956, %v1969
      %v1971 = vpop.f32.mrf.mxu0
      %v1972 = vadd.f32 %v1958, %v1971
      %1973 = vdwg.mxu0
      %1974 = vmatpush.bf16.msra.mxu0 %v1498
      %1975 = vmatpush.bf16.msra.mxu0 %v1496
      %1976 = vmatpush.bf16.msra.mxu0 %v1494
      %1977 = vmatpush.bf16.msra.mxu0 %v1492
      %1978 = vmatpush.bf16.msra.mxu0 %v1490
      %1979 = vmatpush.bf16.msra.mxu0 %v1488
      %1980 = vmatpush.bf16.msra.mxu0 %v1486
      %1981 = vmatpush.bf16.msra.mxu0 %v1484
      %1982 = vmatmul.bf16.gmra.mxu0 %v519
      %v1983 = vpop.f32.mrf.mxu0
      %v1984 = vadd.f32 %v1970, %v1983
      %v1985 = vpop.f32.mrf.mxu0
      %v1986 = vadd.f32 %v1972, %v1985
      %1987 = vdwg.mxu0
      %1988 = vmatpush.bf16.msra.mxu0 %v1514
      %1989 = vmatpush.bf16.msra.mxu0 %v1512
      %1990 = vmatpush.bf16.msra.mxu0 %v1510
      %1991 = vmatpush.bf16.msra.mxu0 %v1508
      %1992 = vmatpush.bf16.msra.mxu0 %v1506
      %1993 = vmatpush.bf16.msra.mxu0 %v1504
      %1994 = vmatpush.bf16.msra.mxu0 %v1502
      %1995 = vmatpush.bf16.msra.mxu0 %v1500
      %1996 = vmatmul.bf16.gmra.mxu0 %v520
      %v1997 = vpop.f32.mrf.mxu0
      %v1998 = vadd.f32 %v1984, %v1997
      %v1999 = vpop.f32.mrf.mxu0
      %v2000 = vadd.f32 %v1986, %v1999
      %2001 = vdwg.mxu0
      %2002 = vmatpush.bf16.msra.mxu0 %v1530
      %2003 = vmatpush.bf16.msra.mxu0 %v1528
      %2004 = vmatpush.bf16.msra.mxu0 %v1526
      %2005 = vmatpush.bf16.msra.mxu0 %v1524
      %2006 = vmatpush.bf16.msra.mxu0 %v1522
      %2007 = vmatpush.bf16.msra.mxu0 %v1520
      %2008 = vmatpush.bf16.msra.mxu0 %v1518
      %2009 = vmatpush.bf16.msra.mxu0 %v1516
      %2010 = vmatmul.bf16.gmra.mxu0 %v521
      %v2011 = vpop.f32.mrf.mxu0
      %v2012 = vadd.f32 %v1998, %v2011
      %v2013 = vpop.f32.mrf.mxu0
      %v2014 = vadd.f32 %v2000, %v2013
      %2015 = vdwg.mxu0
      %2016 = vmatpush.bf16.msra.mxu0 %v1546
      %2017 = vmatpush.bf16.msra.mxu0 %v1544
      %2018 = vmatpush.bf16.msra.mxu0 %v1542
      %2019 = vmatpush.bf16.msra.mxu0 %v1540
      %2020 = vmatpush.bf16.msra.mxu0 %v1538
      %2021 = vmatpush.bf16.msra.mxu0 %v1536
      %2022 = vmatpush.bf16.msra.mxu0 %v1534
      %2023 = vmatpush.bf16.msra.mxu0 %v1532
      %2024 = vmatmul.bf16.gmra.mxu0 %v522
      %v2025 = vpop.f32.mrf.mxu0
      %v2026 = vadd.f32 %v2012, %v2025
      %v2027 = vpop.f32.mrf.mxu0
      %v2028 = vadd.f32 %v2014, %v2027
      %2029 = vdwg.mxu0
      %2030 = vmatpush.bf16.msra.mxu0 %v1562
      %2031 = vmatpush.bf16.msra.mxu0 %v1560
      %2032 = vmatpush.bf16.msra.mxu0 %v1558
      %2033 = vmatpush.bf16.msra.mxu0 %v1556
      %2034 = vmatpush.bf16.msra.mxu0 %v1554
      %2035 = vmatpush.bf16.msra.mxu0 %v1552
      %2036 = vmatpush.bf16.msra.mxu0 %v1550
      %2037 = vmatpush.bf16.msra.mxu0 %v1548
      %2038 = vmatmul.bf16.gmra.mxu0 %v523
      %v2039 = vpop.f32.mrf.mxu0
      %v2040 = vadd.f32 %v2026, %v2039
      %v2041 = vpop.f32.mrf.mxu0
      %v2042 = vadd.f32 %v2028, %v2041
      %2043 = vdwg.mxu0
      %2044 = vmatpush.bf16.msra.mxu0 %v1323
      %2045 = vmatpush.bf16.msra.mxu0 %v1321
      %2046 = vmatpush.bf16.msra.mxu0 %v1319
      %2047 = vmatpush.bf16.msra.mxu0 %v1317
      %2048 = vmatpush.bf16.msra.mxu0 %v1315
      %2049 = vmatpush.bf16.msra.mxu0 %v1313
      %2050 = vmatpush.bf16.msra.mxu0 %v1311
      %2051 = vmatpush.bf16.msra.mxu0 %v1309
      %2052 = vmatmul.bf16.gmra.mxu0 %v508
      %v2053 = vpop.f32.mrf.mxu0
      %v2054 = vadd.f32 0.0, %v2053
      %v2055 = vpop.f32.mrf.mxu0
      %v2056 = vadd.f32 0.0, %v2055
      %2057 = vdwg.mxu0
      %2058 = vmatpush.bf16.msra.mxu0 %v1339
      %2059 = vmatpush.bf16.msra.mxu0 %v1337
      %2060 = vmatpush.bf16.msra.mxu0 %v1335
      %2061 = vmatpush.bf16.msra.mxu0 %v1333
      %2062 = vmatpush.bf16.msra.mxu0 %v1331
      %2063 = vmatpush.bf16.msra.mxu0 %v1329
      %2064 = vmatpush.bf16.msra.mxu0 %v1327
      %2065 = vmatpush.bf16.msra.mxu0 %v1325
      %2066 = vmatmul.bf16.gmra.mxu0 %v509
      %v2067 = vpop.f32.mrf.mxu0
      %v2068 = vadd.f32 %v2054, %v2067
      %v2069 = vpop.f32.mrf.mxu0
      %v2070 = vadd.f32 %v2056, %v2069
      %2071 = vdwg.mxu0
      %2072 = vmatpush.bf16.msra.mxu0 %v1355
      %2073 = vmatpush.bf16.msra.mxu0 %v1353
      %2074 = vmatpush.bf16.msra.mxu0 %v1351
      %2075 = vmatpush.bf16.msra.mxu0 %v1349
      %2076 = vmatpush.bf16.msra.mxu0 %v1347
      %2077 = vmatpush.bf16.msra.mxu0 %v1345
      %2078 = vmatpush.bf16.msra.mxu0 %v1343
      %2079 = vmatpush.bf16.msra.mxu0 %v1341
      %2080 = vmatmul.bf16.gmra.mxu0 %v510
      %v2081 = vpop.f32.mrf.mxu0
      %v2082 = vadd.f32 %v2068, %v2081
      %v2083 = vpop.f32.mrf.mxu0
      %v2084 = vadd.f32 %v2070, %v2083
      %2085 = vdwg.mxu0
      %2086 = vmatpush.bf16.msra.mxu0 %v1371
      %2087 = vmatpush.bf16.msra.mxu0 %v1369
      %2088 = vmatpush.bf16.msra.mxu0 %v1367
      %2089 = vmatpush.bf16.msra.mxu0 %v1365
      %2090 = vmatpush.bf16.msra.mxu0 %v1363
      %2091 = vmatpush.bf16.msra.mxu0 %v1361
      %2092 = vmatpush.bf16.msra.mxu0 %v1359
      %2093 = vmatpush.bf16.msra.mxu0 %v1357
      %2094 = vmatmul.bf16.gmra.mxu0 %v511
      %v2095 = vpop.f32.mrf.mxu0
      %v2096 = vadd.f32 %v2082, %v2095
      %v2097 = vpop.f32.mrf.mxu0
      %v2098 = vadd.f32 %v2084, %v2097
      %2099 = vdwg.mxu0
      %2100 = vmatpush.bf16.msra.mxu0 %v1387
      %2101 = vmatpush.bf16.msra.mxu0 %v1385
      %2102 = vmatpush.bf16.msra.mxu0 %v1383
      %2103 = vmatpush.bf16.msra.mxu0 %v1381
      %2104 = vmatpush.bf16.msra.mxu0 %v1379
      %2105 = vmatpush.bf16.msra.mxu0 %v1377
      %2106 = vmatpush.bf16.msra.mxu0 %v1375
      %2107 = vmatpush.bf16.msra.mxu0 %v1373
      %2108 = vmatmul.bf16.gmra.mxu0 %v512
      %v2109 = vpop.f32.mrf.mxu0
      %v2110 = vadd.f32 %v2096, %v2109
      %v2111 = vpop.f32.mrf.mxu0
      %v2112 = vadd.f32 %v2098, %v2111
      %2113 = vdwg.mxu0
      %2114 = vmatpush.bf16.msra.mxu0 %v1403
      %2115 = vmatpush.bf16.msra.mxu0 %v1401
      %2116 = vmatpush.bf16.msra.mxu0 %v1399
      %2117 = vmatpush.bf16.msra.mxu0 %v1397
      %2118 = vmatpush.bf16.msra.mxu0 %v1395
      %2119 = vmatpush.bf16.msra.mxu0 %v1393
      %2120 = vmatpush.bf16.msra.mxu0 %v1391
      %2121 = vmatpush.bf16.msra.mxu0 %v1389
      %2122 = vmatmul.bf16.gmra.mxu0 %v513
      %v2123 = vpop.f32.mrf.mxu0
      %v2124 = vadd.f32 %v2110, %v2123
      %v2125 = vpop.f32.mrf.mxu0
      %v2126 = vadd.f32 %v2112, %v2125
      %2127 = vdwg.mxu0
      %2128 = vmatpush.bf16.msra.mxu0 %v1419
      %2129 = vmatpush.bf16.msra.mxu0 %v1417
      %2130 = vmatpush.bf16.msra.mxu0 %v1415
      %2131 = vmatpush.bf16.msra.mxu0 %v1413
      %2132 = vmatpush.bf16.msra.mxu0 %v1411
      %2133 = vmatpush.bf16.msra.mxu0 %v1409
      %2134 = vmatpush.bf16.msra.mxu0 %v1407
      %2135 = vmatpush.bf16.msra.mxu0 %v1405
      %2136 = vmatmul.bf16.gmra.mxu0 %v514
      %v2137 = vpop.f32.mrf.mxu0
      %v2138 = vadd.f32 %v2124, %v2137
      %v2139 = vpop.f32.mrf.mxu0
      %v2140 = vadd.f32 %v2126, %v2139
      %2141 = vdwg.mxu0
      %2142 = vmatpush.bf16.msra.mxu0 %v1435
      %2143 = vmatpush.bf16.msra.mxu0 %v1433
      %2144 = vmatpush.bf16.msra.mxu0 %v1431
      %2145 = vmatpush.bf16.msra.mxu0 %v1429
      %2146 = vmatpush.bf16.msra.mxu0 %v1427
      %2147 = vmatpush.bf16.msra.mxu0 %v1425
      %2148 = vmatpush.bf16.msra.mxu0 %v1423
      %2149 = vmatpush.bf16.msra.mxu0 %v1421
      %2150 = vmatmul.bf16.gmra.mxu0 %v515
      %v2151 = vpop.f32.mrf.mxu0
      %v2152 = vadd.f32 %v2138, %v2151
      %v2153 = vpop.f32.mrf.mxu0
      %v2154 = vadd.f32 %v2140, %v2153
      %2155 = vdwg.mxu0
      %2156 = vmatpush.bf16.msra.mxu0 %v1451
      %2157 = vmatpush.bf16.msra.mxu0 %v1449
      %2158 = vmatpush.bf16.msra.mxu0 %v1447
      %2159 = vmatpush.bf16.msra.mxu0 %v1445
      %2160 = vmatpush.bf16.msra.mxu0 %v1443
      %2161 = vmatpush.bf16.msra.mxu0 %v1441
      %2162 = vmatpush.bf16.msra.mxu0 %v1439
      %2163 = vmatpush.bf16.msra.mxu0 %v1437
      %2164 = vmatmul.bf16.gmra.mxu0 %v516
      %v2165 = vpop.f32.mrf.mxu0
      %v2166 = vadd.f32 %v2152, %v2165
      %v2167 = vpop.f32.mrf.mxu0
      %v2168 = vadd.f32 %v2154, %v2167
      %2169 = vdwg.mxu0
      %2170 = vmatpush.bf16.msra.mxu0 %v1467
      %2171 = vmatpush.bf16.msra.mxu0 %v1465
      %2172 = vmatpush.bf16.msra.mxu0 %v1463
      %2173 = vmatpush.bf16.msra.mxu0 %v1461
      %2174 = vmatpush.bf16.msra.mxu0 %v1459
      %2175 = vmatpush.bf16.msra.mxu0 %v1457
      %2176 = vmatpush.bf16.msra.mxu0 %v1455
      %2177 = vmatpush.bf16.msra.mxu0 %v1453
      %2178 = vmatmul.bf16.gmra.mxu0 %v517
      %v2179 = vpop.f32.mrf.mxu0
      %v2180 = vadd.f32 %v2166, %v2179
      %v2181 = vpop.f32.mrf.mxu0
      %v2182 = vadd.f32 %v2168, %v2181
      %2183 = vdwg.mxu0
      %2184 = vmatpush.bf16.msra.mxu0 %v1483
      %2185 = vmatpush.bf16.msra.mxu0 %v1481
      %2186 = vmatpush.bf16.msra.mxu0 %v1479
      %2187 = vmatpush.bf16.msra.mxu0 %v1477
      %2188 = vmatpush.bf16.msra.mxu0 %v1475
      %2189 = vmatpush.bf16.msra.mxu0 %v1473
      %2190 = vmatpush.bf16.msra.mxu0 %v1471
      %2191 = vmatpush.bf16.msra.mxu0 %v1469
      %2192 = vmatmul.bf16.gmra.mxu0 %v518
      %v2193 = vpop.f32.mrf.mxu0
      %v2194 = vadd.f32 %v2180, %v2193
      %v2195 = vpop.f32.mrf.mxu0
      %v2196 = vadd.f32 %v2182, %v2195
      %2197 = vdwg.mxu0
      %2198 = vmatpush.bf16.msra.mxu0 %v1499
      %2199 = vmatpush.bf16.msra.mxu0 %v1497
      %2200 = vmatpush.bf16.msra.mxu0 %v1495
      %2201 = vmatpush.bf16.msra.mxu0 %v1493
      %2202 = vmatpush.bf16.msra.mxu0 %v1491
      %2203 = vmatpush.bf16.msra.mxu0 %v1489
      %2204 = vmatpush.bf16.msra.mxu0 %v1487
      %2205 = vmatpush.bf16.msra.mxu0 %v1485
      %2206 = vmatmul.bf16.gmra.mxu0 %v519
      %v2207 = vpop.f32.mrf.mxu0
      %v2208 = vadd.f32 %v2194, %v2207
      %v2209 = vpop.f32.mrf.mxu0
      %v2210 = vadd.f32 %v2196, %v2209
      %2211 = vdwg.mxu0
      %2212 = vmatpush.bf16.msra.mxu0 %v1515
      %2213 = vmatpush.bf16.msra.mxu0 %v1513
      %2214 = vmatpush.bf16.msra.mxu0 %v1511
      %2215 = vmatpush.bf16.msra.mxu0 %v1509
      %2216 = vmatpush.bf16.msra.mxu0 %v1507
      %2217 = vmatpush.bf16.msra.mxu0 %v1505
      %2218 = vmatpush.bf16.msra.mxu0 %v1503
      %2219 = vmatpush.bf16.msra.mxu0 %v1501
      %2220 = vmatmul.bf16.gmra.mxu0 %v520
      %v2221 = vpop.f32.mrf.mxu0
      %v2222 = vadd.f32 %v2208, %v2221
      %v2223 = vpop.f32.mrf.mxu0
      %v2224 = vadd.f32 %v2210, %v2223
      %2225 = vdwg.mxu0
      %2226 = vmatpush.bf16.msra.mxu0 %v1531
      %2227 = vmatpush.bf16.msra.mxu0 %v1529
      %2228 = vmatpush.bf16.msra.mxu0 %v1527
      %2229 = vmatpush.bf16.msra.mxu0 %v1525
      %2230 = vmatpush.bf16.msra.mxu0 %v1523
      %2231 = vmatpush.bf16.msra.mxu0 %v1521
      %2232 = vmatpush.bf16.msra.mxu0 %v1519
      %2233 = vmatpush.bf16.msra.mxu0 %v1517
      %2234 = vmatmul.bf16.gmra.mxu0 %v521
      %v2235 = vpop.f32.mrf.mxu0
      %v2236 = vadd.f32 %v2222, %v2235
      %v2237 = vpop.f32.mrf.mxu0
      %v2238 = vadd.f32 %v2224, %v2237
      %2239 = vdwg.mxu0
      %2240 = vmatpush.bf16.msra.mxu0 %v1547
      %2241 = vmatpush.bf16.msra.mxu0 %v1545
      %2242 = vmatpush.bf16.msra.mxu0 %v1543
      %2243 = vmatpush.bf16.msra.mxu0 %v1541
      %2244 = vmatpush.bf16.msra.mxu0 %v1539
      %2245 = vmatpush.bf16.msra.mxu0 %v1537
      %2246 = vmatpush.bf16.msra.mxu0 %v1535
      %2247 = vmatpush.bf16.msra.mxu0 %v1533
      %2248 = vmatmul.bf16.gmra.mxu0 %v522
      %v2249 = vpop.f32.mrf.mxu0
      %v2250 = vadd.f32 %v2236, %v2249
      %v2251 = vpop.f32.mrf.mxu0
      %v2252 = vadd.f32 %v2238, %v2251
      %2253 = vdwg.mxu0
      %2254 = vmatpush.bf16.msra.mxu0 %v1563
      %2255 = vmatpush.bf16.msra.mxu0 %v1561
      %2256 = vmatpush.bf16.msra.mxu0 %v1559
      %2257 = vmatpush.bf16.msra.mxu0 %v1557
      %2258 = vmatpush.bf16.msra.mxu0 %v1555
      %2259 = vmatpush.bf16.msra.mxu0 %v1553
      %2260 = vmatpush.bf16.msra.mxu0 %v1551
      %2261 = vmatpush.bf16.msra.mxu0 %v1549
      %2262 = vmatmul.bf16.gmra.mxu0 %v523
      %v2263 = vpop.f32.mrf.mxu0
      %v2264 = vadd.f32 %v2250, %v2263
      %v2265 = vpop.f32.mrf.mxu0
      %v2266 = vadd.f32 %v2252, %v2265
      %2267 = vdwg.mxu0
      %v2268 = vadd.f32 %v2040, %v2042
      %v2269 = vrot.slane %v2268, 4
      %v2270 = vadd.f32 %v2268, %v2269
      %v2271 = vrot.slane %v2270, 2
      %v2272 = vadd.f32 %v2270, %v2271
      %v2273 = vrot.slane %v2272, 1
      %v2274 = vadd.f32 %v2272, %v2273
      %v2275 = vadd.f32 %v2264, %v2266
      %v2276 = vrot.slane %v2275, 4
      %v2277 = vadd.f32 %v2275, %v2276
      %v2278 = vrot.slane %v2277, 2
      %v2279 = vadd.f32 %v2277, %v2278
      %v2280 = vrot.slane %v2279, 1
      %v2281 = vadd.f32 %v2279, %v2280
      %v2282 = vrcp.pop 16.0
      %v2283 = vmul.f32 16.0, %v2282
      %v2284 = vsub.f32 1.0, %v2283
      %v2285 = vmul.f32 %v2282, %v2284
      %v2286 = vadd.f32 %v2282, %v2285
      %vm2287 = vweird.f32 %v2282
      %v2288 = vsel %vm2287, %v2282, %v2286
      %v2289 = vmul.f32 %v2274, %v2288
      %v2290 = vmul.f32 %v2281, %v2288
      %v2291 = vmul.f32 %v2040, %v2040
      %v2292 = vmul.f32 %v2264, %v2264
      %v2293 = vmul.f32 %v2042, %v2042
      %v2294 = vmul.f32 %v2266, %v2266
      %v2295 = vadd.f32 %v2291, %v2293
      %v2296 = vrot.slane %v2295, 4
      %v2297 = vadd.f32 %v2295, %v2296
      %v2298 = vrot.slane %v2297, 2
      %v2299 = vadd.f32 %v2297, %v2298
      %v2300 = vrot.slane %v2299, 1
      %v2301 = vadd.f32 %v2299, %v2300
      %v2302 = vadd.f32 %v2292, %v2294
      %v2303 = vrot.slane %v2302, 4
      %v2304 = vadd.f32 %v2302, %v2303
      %v2305 = vrot.slane %v2304, 2
      %v2306 = vadd.f32 %v2304, %v2305
      %v2307 = vrot.slane %v2306, 1
      %v2308 = vadd.f32 %v2306, %v2307
      %v2309 = vmul.f32 %v2301, %v2288
      %v2310 = vmul.f32 %v2308, %v2288
      %v2311 = vmul.f32 %v2289, %v2289
      %v2312 = vmul.f32 %v2290, %v2290
      %v2313 = vsub.f32 %v2309, %v2311
      %v2314 = vsub.f32 %v2310, %v2312
      %v2315 = vmax.f32 %v2313, 0.0
      %v2316 = vmax.f32 %v2314, 0.0
      %v2317 = vsub.f32 %v2040, %v2289
      %v2318 = vsub.f32 %v2264, %v2290
      %v2319 = vsub.f32 %v2042, %v2289
      %v2320 = vsub.f32 %v2266, %v2290
      %v2321 = vadd.f32 %v2315, 1e-05
      %v2322 = vadd.f32 %v2316, 1e-05
      %v2323 = vrsqrt.pop %v2321
      %v2324 = vmul.f32 %v2323, %v2321
      %v2325 = vmul.f32 %v2324, %v2323
      %v2326 = vmul.f32 0.5, %v2325
      %v2327 = vsub.f32 1.5, %v2326
      %v2328 = vmul.f32 %v2323, %v2327
      %vm2329 = vweird.f32 %v2321
      %vm2330 = vweird.f32 %v2323
      %vm2331 = vmor %vm2329, %vm2330
      %v2332 = vsel %vm2331, %v2323, %v2328
      %v2333 = vrsqrt.pop %v2322
      %v2334 = vmul.f32 %v2333, %v2322
      %v2335 = vmul.f32 %v2334, %v2333
      %v2336 = vmul.f32 0.5, %v2335
      %v2337 = vsub.f32 1.5, %v2336
      %v2338 = vmul.f32 %v2333, %v2337
      %vm2339 = vweird.f32 %v2322
      %vm2340 = vweird.f32 %v2333
      %vm2341 = vmor %vm2339, %vm2340
      %v2342 = vsel %vm2341, %v2333, %v2338
      %v2343 = vmul.f32 %v2317, %v2332
      %v2344 = vmul.f32 %v2318, %v2342
      %v2345 = vmul.f32 %v2319, %v2332
      %v2346 = vmul.f32 %v2320, %v2342
      %vm2347 = vcmp.ge.f32.partialorder %v2343, 0.0
      %vm2348 = vcmp.ge.f32.partialorder %v2344, 0.0
      %vm2349 = vcmp.ge.f32.partialorder %v2345, 0.0
      %vm2350 = vcmp.ge.f32.partialorder %v2346, 0.0
      %v2351 = vmul.f32 %v2343, 0.2
      %v2352 = vmul.f32 %v2344, 0.2
      %v2353 = vmul.f32 %v2345, 0.2
      %v2354 = vmul.f32 %v2346, 0.2
      %v2355 = vsel %vm2347, %v2343, %v2351
      %v2356 = vsel %vm2348, %v2344, %v2352
      %v2357 = vsel %vm2349, %v2345, %v2353
      %v2358 = vsel %vm2350, %v2346, %v2354
      %v2359 = vpack.c.bf16 %v2356, %v2355
      %v2360 = vpack.c.bf16 %v2358, %v2357
      %2361 = vst [vmem:[%s186] sm:$0xff] %v2359
      %2362 = vst [vmem:[%s186 + $0x8] sm:$0xff] %v2360
      %s2363 = smul.u32 2, %s18
      %p2364 = scmp.lt.s32.totalorder %s17, 1
      %s2365 = scalar_select %p2364, %s17, 1
      %p2366 = scmp.lt.s32.totalorder %s2363, 1
      %s2367 = scalar_select %p2366, %s2363, 1
      %s2368 = smul.addr %s2367, 2
      %s2369 = smul.addr %s2365, 4
      %s2370 = sadd.s32 %s2368, %s2369
      %s2371 = smul.addr %s2370, 4
      %s2372 = scalar_lea.vmem %s2, %s2371
      // Predicated region
      $region29: #{discriminator.7} parent=27 // pred_check
        %p2373 = pneg %p94
      $region30: #{discriminator.7} parent=27 // pred_check_branch
        %2375 = sbr.rel (%p2373) target = $region32
      $region31: #{discriminator.7} parent=27 // pred_region
        %s2376 = smul.u32 2, %s18
      $region32: #{discriminator.7} parent=27 // pred_fallthru
        _
    $region28: #{discriminator.7} parent=5 // pred_fallthru
      _
    %p2377 = scmp.le.s32.totalorder 2, %s8
    // Predicated region
    $region33: #{discriminator.7} parent=5 // pred_check
      %p2378 = pneg %p2377
    $region34: #{discriminator.7} parent=5 // pred_check_branch
      %2380 = sbr.rel (%p2378) target = $region36
    $region35: #{discriminator.7} parent=5 // pred_region
      %s2381 = ssub.s32 %s8, 2
      // Predicated region
      $region37: #{discriminator.7} parent=35 // pred_check
        %p2382 = pneg %p100
      $region38: #{discriminator.7} parent=35 // pred_check_branch
        %2384 = sbr.rel (%p2382) target = $region40
      $region39: #{discriminator.7} parent=35 // pred_region
        %s2385 = smul.u32 2, %s20
        %p2386 = scmp.lt.s32.totalorder %s19, 1
        %s2387 = scalar_select %p2386, %s19, 1
        %p2388 = scmp.lt.s32.totalorder %s2385, 1
        %s2389 = scalar_select %p2388, %s2385, 1
        %s2390 = smul.addr %s2389, 2
        %s2391 = smul.addr %s2387, 4
        %s2392 = sadd.s32 %s2390, %s2391
        %s2393 = smul.addr %s2392, 4
        %s2394 = scalar_lea.vmem %s2, %s2393
      $region40: #{discriminator.7} parent=35 // pred_fallthru
        _
    $region36: #{discriminator.7} parent=5 // pred_fallthru
      _
  $region6: #{discriminator.7} parent=0 // loop_footer
    %s12 = sadd.s32 1, %s8
  $region7: #{discriminator.7} parent=0 // loop_footer_branch
    %7 = sbr.rel target = $region3
  $region8: #{discriminator.7} parent=0 // loop_exit
    _

// kernel: discriminator.9
$region0: #{discriminator.9}
  #allocation0 [shape = 'u32[]', space=smem, size = 0x4, offset = 0x4, fixed_abs, tag = 'smem constant byte address 0x4 - core index']
  #allocation1 [shape = 'u32[72,128]{1,0:T(1,128)}', space=vmem, size = 0x9000, scoped, tag = 'internal scratch']
  #allocation2 [shape = 'f32[1,1]{1,0:T(1,128)S(1)}', space=vmem, size = 0x200, scoped, tag = 'scoped memory for discriminator.9']
  %s0 = inlined_call_operand.vmem [shape: bf16[2,4,8192], index: 0, kind: input, shape index: {}]
  %s1 = inlined_call_operand.vmem [shape: f32[1,8192], index: 1, kind: input, shape index: {}]
  %s2 = inlined_call_operand.<no memory space> [shape: f32[1,1], index: 2, kind: input, shape index: {}]
  %s3 = inlined_call_operand.vmem [shape: f32[2,1,1], index: 3, kind: output, shape index: {}]
  %s4 = sld [smem:[#allocation0]]
  $region45: #{discriminator.9} parent=0
    _
  %s6 = ssub.s32 1, %s4
  %s7 = scalar_select 0, %s6, %s4
  %v8 = vstv %s2
  %9 = vst [vmem:[#allocation2] sm:$0x1] %v8
  loop: start=0, step=1, limit=4
  $region2: #{discriminator.9} parent=0 // loop_pre_header
    _
  $region3: #{discriminator.9} parent=0 // loop_header
    %s11 = sphi 0, %s15
    %p12 = scmp.ge.s32.totalorder %s11, 4
    %s21 = sphi 0, %s23
    %s24 = sphi 0, %s21
    %s25 = sphi 0, %s24
    %s41 = sphi 0, %s25
    %s45 = sphi 0, %s45
    %s47 = sphi 0, %s45
    %s48 = sphi 0, %s47
    %s62 = sphi 0, %s48
    %s66 = sphi 0, %s66
    %s68 = sphi 0, %s66
    %s69 = sphi 0, %s68
    %s83 = sphi 0, %s69
    %s89 = sphi 0, %s91
    %s92 = sphi 0, %s89
    %s93 = sphi 0, %s92
    %s109 = sphi 0, %s93
  $region4: #{discriminator.9} parent=0 // loop_header_branch
    %14 = sbr.rel (%p12) target = $region8
  $region5: #{discriminator.9} parent=0 // loop_body
    %s16 = ssub.s32 %s11, 1
    %s17 = ssub.s32 %s11, 2
    %s18 = sadd.s32 %s11, 1
    %s19 = ssub.s32 %s11, %s18
    %p20 = scmp.eq.s32.totalorder %s19, 0
    %s22 = sadd.s32 %s21, 1
    %s23 = scalar_select %p20, %s21, %s22
    %p26 = pneg %p20
    %p27 = scmp.eq.s32.totalorder %s11, 1
    %p28 = por %p26, %p27
    %p29 = scmp.ne.s32.totalorder %s21, %s24
    %p30 = scmp.eq.s32.totalorder %s11, 0
    %p31 = por %p29, %p30
    %p32 = scmp.ne.s32.totalorder %s21, %s24
    %p33 = scmp.eq.s32.totalorder %s16, 1
    %p34 = por %p32, %p33
    %p35 = scmp.ne.s32.totalorder %s24, %s25
    %p36 = scmp.eq.s32.totalorder %s16, 0
    %p37 = por %p35, %p36
    %p38 = scmp.ne.s32.totalorder %s24, %s25
    %p39 = scmp.eq.s32.totalorder %s17, 1
    %p40 = por %p38, %p39
    %p42 = scmp.ne.s32.totalorder %s25, %s41
    %p43 = scmp.eq.s32.totalorder %s17, 0
    %p44 = por %p42, %p43
    %s46 = sadd.s32 %s45, 1
    %p49 = scmp.eq.s32.totalorder %s11, 1
    %p50 = scmp.ne.s32.totalorder %s45, %s47
    %p51 = scmp.eq.s32.totalorder %s11, 0
    %p52 = por %p50, %p51
    %p53 = scmp.ne.s32.totalorder %s45, %s47
    %p54 = scmp.eq.s32.totalorder %s16, 1
    %p55 = por %p53, %p54
    %p56 = scmp.ne.s32.totalorder %s47, %s48
    %p57 = scmp.eq.s32.totalorder %s16, 0
    %p58 = por %p56, %p57
    %p59 = scmp.ne.s32.totalorder %s47, %s48
    %p60 = scmp.eq.s32.totalorder %s17, 1
    %p61 = por %p59, %p60
    %p63 = scmp.ne.s32.totalorder %s48, %s62
    %p64 = scmp.eq.s32.totalorder %s17, 0
    %p65 = por %p63, %p64
    %s67 = sadd.s32 %s66, 1
    %p70 = scmp.eq.s32.totalorder %s11, 1
    %p71 = scmp.ne.s32.totalorder %s66, %s68
    %p72 = scmp.eq.s32.totalorder %s11, 0
    %p73 = por %p71, %p72
    %p74 = scmp.ne.s32.totalorder %s66, %s68
    %p75 = scmp.eq.s32.totalorder %s16, 1
    %p76 = por %p74, %p75
    %p77 = scmp.ne.s32.totalorder %s68, %s69
    %p78 = scmp.eq.s32.totalorder %s16, 0
    %p79 = por %p77, %p78
    %p80 = scmp.ne.s32.totalorder %s68, %s69
    %p81 = scmp.eq.s32.totalorder %s17, 1
    %p82 = por %p80, %p81
    %p84 = scmp.ne.s32.totalorder %s69, %s83
    %p85 = scmp.eq.s32.totalorder %s17, 0
    %p86 = por %p84, %p85
    %s87 = ssub.s32 %s11, %s18
    %p88 = scmp.eq.s32.totalorder %s87, 0
    %s90 = sadd.s32 %s89, 1
    %s91 = scalar_select %p88, %s89, %s90
    %p94 = pneg %p88
    %p95 = scmp.eq.s32.totalorder %s11, 1
    %p96 = por %p94, %p95
    %p97 = scmp.ne.s32.totalorder %s89, %s92
    %p98 = scmp.eq.s32.totalorder %s11, 0
    %p99 = por %p97, %p98
    %p100 = scmp.ne.s32.totalorder %s89, %s92
    %p101 = scmp.eq.s32.totalorder %s16, 1
    %p102 = por %p100, %p101
    %p103 = scmp.ne.s32.totalorder %s92, %s93
    %p104 = scmp.eq.s32.totalorder %s16, 0
    %p105 = por %p103, %p104
    %p106 = scmp.ne.s32.totalorder %s92, %s93
    %p107 = scmp.eq.s32.totalorder %s17, 1
    %p108 = por %p106, %p107
    %p110 = scmp.ne.s32.totalorder %s93, %s109
    %p111 = scmp.eq.s32.totalorder %s17, 0
    %p112 = por %p110, %p111
    %p113 = scmp.le.s32.totalorder 1, %s11
    %p114 = scmp.lt.s32.totalorder %s11, 3
    %p115 = pnand %p113, %p114
    %p116 = pneg %p115
    // Predicated region
    $region9: #{discriminator.9} parent=5 // pred_check
      _
    $region10: #{discriminator.9} parent=5 // pred_check_branch
      %118 = sbr.rel (%p115) target = $region12
    $region11: #{discriminator.9} parent=5 // pred_region
      %s119 = ssub.s32 %s11, 1
      // Predicated region
      $region13: #{discriminator.9} parent=11 // pred_check
        %p120 = pneg %p58
      $region14: #{discriminator.9} parent=11 // pred_check_branch
        %122 = sbr.rel (%p120) target = $region16
      $region15: #{discriminator.9} parent=11 // pred_region
        _
      $region16: #{discriminator.9} parent=11 // pred_fallthru
        _
      // Predicated region
      $region17: #{discriminator.9} parent=11 // pred_check
        %p123 = pneg %p79
      $region18: #{discriminator.9} parent=11 // pred_check_branch
        %125 = sbr.rel (%p123) target = $region20
      $region19: #{discriminator.9} parent=11 // pred_region
        _
      $region20: #{discriminator.9} parent=11 // pred_fallthru
        _
    $region12: #{discriminator.9} parent=5 // pred_fallthru
      _
    %p126 = scmp.lt.s32.totalorder %s11, 2
    // Predicated region
    $region21: #{discriminator.9} parent=5 // pred_check
      %p127 = pneg %p126
    $region22: #{discriminator.9} parent=5 // pred_check_branch
      %129 = sbr.rel (%p127) target = $region24
    $region23: #{discriminator.9} parent=5 // pred_region
      // Predicated region
      $region25: #{discriminator.9} parent=23 // pred_check
        %p130 = pneg %p31
      $region26: #{discriminator.9} parent=23 // pred_check_branch
        %132 = sbr.rel (%p130) target = $region28
      $region27: #{discriminator.9} parent=23 // pred_region
        %p133 = scmp.lt.s32.totalorder %s11, 1
        %s134 = scalar_select %p133, %s11, 1
        %s135 = smul.addr %s134, 64
        %s136 = smul.addr %s135, 2
        %s137 = scalar_lea.vmem %s0, %s136
      $region28: #{discriminator.9} parent=23 // pred_fallthru
        _
    $region24: #{discriminator.9} parent=5 // pred_fallthru
      _
    %p138 = scmp.le.s32.totalorder 1, %s11
    %p139 = scmp.lt.s32.totalorder %s11, 3
    %p140 = pnand %p138, %p139
    %p141 = pneg %p140
    // Predicated region
    $region29: #{discriminator.9} parent=5 // pred_check
      _
    $region30: #{discriminator.9} parent=5 // pred_check_branch
      %143 = sbr.rel (%p140) target = $region32
    $region31: #{discriminator.9} parent=5 // pred_region
      %s144 = ssub.s32 %s11, 1
      %p145 = scmp.lt.s32.totalorder %s16, 1
      %s146 = scalar_select %p145, %s16, 1
      %s147 = smul.addr %s146, 64
      %s148 = smul.addr %s147, 2
      %s149 = scalar_lea.vmem %s0, %s148
      %p150 = pneg %p37
      %p151 = pneg %p34
      %p152 = pneg %p58
      %p153 = pneg %p55
      %p154 = pneg %p79
      %p155 = pneg %p76
      %p156 = pneg %p105
      %p157 = pneg %p102
      %p158 = scmp.lt.s32.totalorder %s16, 1
      %s159 = scalar_select %p158, %s16, 1
      %s160 = scalar_lea.vmem %s3, %s159
      %p161 = scmp.lt.s32.totalorder %s16, 1
      %s162 = scalar_select %p161, %s16, 1
      %s163 = smul.addr %s162, 64
      %s164 = smul.addr %s163, 2
      %s165 = scalar_lea.vmem %s0, %s164
      %p166 = scmp.lt.s32.totalorder %s16, 1
      %s167 = scalar_select %p166, %s16, 1
      %s168 = scalar_lea.vmem %s3, %s167
      %v169 = vld [vmem:[%s165] sm:$0xff]
      %v170 = vld [vmem:[%s165 + $0x8] sm:$0xff]
      %v171 = vld [vmem:[%s165 + $0x10] sm:$0xff]
      %v172 = vld [vmem:[%s165 + $0x18] sm:$0xff]
      %v173 = vld [vmem:[%s165 + $0x20] sm:$0xff]
      %v174 = vld [vmem:[%s165 + $0x28] sm:$0xff]
      %v175 = vld [vmem:[%s165 + $0x30] sm:$0xff]
      %v176 = vld [vmem:[%s165 + $0x38] sm:$0xff]
      %v177 = vld [vmem:[%s165 + $0x40] sm:$0xff]
      %v178 = vld [vmem:[%s165 + $0x48] sm:$0xff]
      %v179 = vld [vmem:[%s165 + $0x50] sm:$0xff]
      %v180 = vld [vmem:[%s165 + $0x58] sm:$0xff]
      %v181 = vld [vmem:[%s165 + $0x60] sm:$0xff]
      %v182 = vld [vmem:[%s165 + $0x68] sm:$0xff]
      %v183 = vld [vmem:[%s165 + $0x70] sm:$0xff]
      %v184 = vld [vmem:[%s165 + $0x78] sm:$0xff]
      %v185 = vunpack.c.l.bf16 %v169
      %v186 = vunpack.c.h.bf16 %v169
      %v187 = vunpack.c.l.bf16 %v170
      %v188 = vunpack.c.h.bf16 %v170
      %v189 = vunpack.c.l.bf16 %v171
      %v190 = vunpack.c.h.bf16 %v171
      %v191 = vunpack.c.l.bf16 %v172
      %v192 = vunpack.c.h.bf16 %v172
      %v193 = vunpack.c.l.bf16 %v173
      %v194 = vunpack.c.h.bf16 %v173
      %v195 = vunpack.c.l.bf16 %v174
      %v196 = vunpack.c.h.bf16 %v174
      %v197 = vunpack.c.l.bf16 %v175
      %v198 = vunpack.c.h.bf16 %v175
      %v199 = vunpack.c.l.bf16 %v176
      %v200 = vunpack.c.h.bf16 %v176
      %v201 = vunpack.c.l.bf16 %v177
      %v202 = vunpack.c.h.bf16 %v177
      %v203 = vunpack.c.l.bf16 %v178
      %v204 = vunpack.c.h.bf16 %v178
      %v205 = vunpack.c.l.bf16 %v179
      %v206 = vunpack.c.h.bf16 %v179
      %v207 = vunpack.c.l.bf16 %v180
      %v208 = vunpack.c.h.bf16 %v180
      %v209 = vunpack.c.l.bf16 %v181
      %v210 = vunpack.c.h.bf16 %v181
      %v211 = vunpack.c.l.bf16 %v182
      %v212 = vunpack.c.h.bf16 %v182
      %v213 = vunpack.c.l.bf16 %v183
      %v214 = vunpack.c.h.bf16 %v183
      %v215 = vunpack.c.l.bf16 %v184
      %v216 = vunpack.c.h.bf16 %v184
      %v217 = vld [vmem:[%s1] sm:$0xff]
      %v218 = vld [vmem:[%s1 + $0x8] sm:$0xff]
      %v219 = vld [vmem:[%s1 + $0x10] sm:$0xff]
      %v220 = vld [vmem:[%s1 + $0x18] sm:$0xff]
      %v221 = vld [vmem:[%s1 + $0x20] sm:$0xff]
      %v222 = vld [vmem:[%s1 + $0x28] sm:$0xff]
      %v223 = vld [vmem:[%s1 + $0x30] sm:$0xff]
      %v224 = vld [vmem:[%s1 + $0x38] sm:$0xff]
      %v233 = vperm.slane %v217, 0
      %v234 = vperm.slane %v217, 1
      %v235 = vperm.slane %v217, 2
      %v236 = vperm.slane %v217, 3
      %v237 = vperm.slane %v217, 4
      %v238 = vperm.slane %v217, 5
      %v239 = vperm.slane %v217, 6
      %v240 = vperm.slane %v217, 7
      %v241 = vperm.slane %v218, 0
      %v242 = vperm.slane %v218, 1
      %v243 = vperm.slane %v218, 2
      %v244 = vperm.slane %v218, 3
      %v245 = vperm.slane %v218, 4
      %v246 = vperm.slane %v218, 5
      %v247 = vperm.slane %v218, 6
      %v248 = vperm.slane %v218, 7
      %v249 = vperm.slane %v219, 0
      %v250 = vperm.slane %v219, 1
      %v251 = vperm.slane %v219, 2
      %v252 = vperm.slane %v219, 3
      %v253 = vperm.slane %v219, 4
      %v254 = vperm.slane %v219, 5
      %v255 = vperm.slane %v219, 6
      %v256 = vperm.slane %v219, 7
      %v257 = vperm.slane %v220, 0
      %v258 = vperm.slane %v220, 1
      %v259 = vperm.slane %v220, 2
      %v260 = vperm.slane %v220, 3
      %v261 = vperm.slane %v220, 4
      %v262 = vperm.slane %v220, 5
      %v263 = vperm.slane %v220, 6
      %v264 = vperm.slane %v220, 7
      %v265 = vperm.slane %v221, 0
      %v266 = vperm.slane %v221, 1
      %v267 = vperm.slane %v221, 2
      %v268 = vperm.slane %v221, 3
      %v269 = vperm.slane %v221, 4
      %v270 = vperm.slane %v221, 5
      %v271 = vperm.slane %v221, 6
      %v272 = vperm.slane %v221, 7
      %v273 = vperm.slane %v222, 0
      %v274 = vperm.slane %v222, 1
      %v275 = vperm.slane %v222, 2
      %v276 = vperm.slane %v222, 3
      %v277 = vperm.slane %v222, 4
      %v278 = vperm.slane %v222, 5
      %v279 = vperm.slane %v222, 6
      %v280 = vperm.slane %v222, 7
      %v281 = vperm.slane %v223, 0
      %v282 = vperm.slane %v223, 1
      %v283 = vperm.slane %v223, 2
      %v284 = vperm.slane %v223, 3
      %v285 = vperm.slane %v223, 4
      %v286 = vperm.slane %v223, 5
      %v287 = vperm.slane %v223, 6
      %v288 = vperm.slane %v223, 7
      %v289 = vperm.slane %v224, 0
      %v290 = vperm.slane %v224, 1
      %v291 = vperm.slane %v224, 2
      %v292 = vperm.slane %v224, 3
      %v293 = vperm.slane %v224, 4
      %v294 = vperm.slane %v224, 5
      %v295 = vperm.slane %v224, 6
      %v296 = vperm.slane %v224, 7
      %v297 = vrot.slane %v234, 4
      %v298 = vrot.slane %v236, 4
      %v299 = vrot.slane %v238, 4
      %v300 = vrot.slane %v240, 4
      %v301 = vrot.slane %v242, 4
      %v302 = vrot.slane %v244, 4
      %v303 = vrot.slane %v246, 4
      %v304 = vrot.slane %v248, 4
      %v305 = vrot.slane %v250, 4
      %v306 = vrot.slane %v252, 4
      %v307 = vrot.slane %v254, 4
      %v308 = vrot.slane %v256, 4
      %v309 = vrot.slane %v258, 4
      %v310 = vrot.slane %v260, 4
      %v311 = vrot.slane %v262, 4
      %v312 = vrot.slane %v264, 4
      %v313 = vrot.slane %v266, 4
      %v314 = vrot.slane %v268, 4
      %v315 = vrot.slane %v270, 4
      %v316 = vrot.slane %v272, 4
      %v317 = vrot.slane %v274, 4
      %v318 = vrot.slane %v276, 4
      %v319 = vrot.slane %v278, 4
      %v320 = vrot.slane %v280, 4
      %v321 = vrot.slane %v282, 4
      %v322 = vrot.slane %v284, 4
      %v323 = vrot.slane %v286, 4
      %v324 = vrot.slane %v288, 4
      %v325 = vrot.slane %v290, 4
      %v326 = vrot.slane %v292, 4
      %v327 = vrot.slane %v294, 4
      %v328 = vrot.slane %v296, 4
      %vm329 = vcmask 1043456
      %v330 = vsel %vm329, %v233, %v297
      %v331 = vsel %vm329, %v235, %v298
      %v332 = vsel %vm329, %v237, %v299
      %v333 = vsel %vm329, %v239, %v300
      %v334 = vsel %vm329, %v241, %v301
      %v335 = vsel %vm329, %v243, %v302
      %v336 = vsel %vm329, %v245, %v303
      %v337 = vsel %vm329, %v247, %v304
      %v338 = vsel %vm329, %v249, %v305
      %v339 = vsel %vm329, %v251, %v306
      %v340 = vsel %vm329, %v253, %v307
      %v341 = vsel %vm329, %v255, %v308
      %v342 = vsel %vm329, %v257, %v309
      %v343 = vsel %vm329, %v259, %v310
      %v344 = vsel %vm329, %v261, %v311
      %v345 = vsel %vm329, %v263, %v312
      %v346 = vsel %vm329, %v265, %v313
      %v347 = vsel %vm329, %v267, %v314
      %v348 = vsel %vm329, %v269, %v315
      %v349 = vsel %vm329, %v271, %v316
      %v350 = vsel %vm329, %v273, %v317
      %v351 = vsel %vm329, %v275, %v318
      %v352 = vsel %vm329, %v277, %v319
      %v353 = vsel %vm329, %v279, %v320
      %v354 = vsel %vm329, %v281, %v321
      %v355 = vsel %vm329, %v283, %v322
      %v356 = vsel %vm329, %v285, %v323
      %v357 = vsel %vm329, %v287, %v324
      %v358 = vsel %vm329, %v289, %v325
      %v359 = vsel %vm329, %v291, %v326
      %v360 = vsel %vm329, %v293, %v327
      %v361 = vsel %vm329, %v295, %v328
      %v394 = vmul.f32 %v185, %v330
      %v395 = vmul.f32 %v186, %v331
      %v396 = vmul.f32 %v187, %v332
      %v397 = vmul.f32 %v188, %v333
      %v398 = vmul.f32 %v189, %v334
      %v399 = vmul.f32 %v190, %v335
      %v400 = vmul.f32 %v191, %v336
      %v401 = vmul.f32 %v192, %v337
      %v402 = vmul.f32 %v193, %v338
      %v403 = vmul.f32 %v194, %v339
      %v404 = vmul.f32 %v195, %v340
      %v405 = vmul.f32 %v196, %v341
      %v406 = vmul.f32 %v197, %v342
      %v407 = vmul.f32 %v198, %v343
      %v408 = vmul.f32 %v199, %v344
      %v409 = vmul.f32 %v200, %v345
      %v410 = vmul.f32 %v201, %v346
      %v411 = vmul.f32 %v202, %v347
      %v412 = vmul.f32 %v203, %v348
      %v413 = vmul.f32 %v204, %v349
      %v414 = vmul.f32 %v205, %v350
      %v415 = vmul.f32 %v206, %v351
      %v416 = vmul.f32 %v207, %v352
      %v417 = vmul.f32 %v208, %v353
      %v418 = vmul.f32 %v209, %v354
      %v419 = vmul.f32 %v210, %v355
      %v420 = vmul.f32 %v211, %v356
      %v421 = vmul.f32 %v212, %v357
      %v422 = vmul.f32 %v213, %v358
      %v423 = vmul.f32 %v214, %v359
      %v424 = vmul.f32 %v215, %v360
      %v425 = vmul.f32 %v216, %v361
      %458 = vst [vmem:[#allocation1] ss:$2 sm:$0xff] %v394
      %s459 = scalar_lea.vmem [#allocation1], 16
      %460 = vst [vmem:[%s459] ss:$2 sm:$0xff] %v395
      %s461 = scalar_lea.vmem [#allocation1], 32
      %462 = vst [vmem:[%s461] ss:$2 sm:$0xff] %v396
      %s463 = scalar_lea.vmem [#allocation1], 48
      %464 = vst [vmem:[%s463] ss:$2 sm:$0xff] %v397
      %v465 = vld.sshfl [vmem:[#allocation1] sm:$0xff pattern:$0x75316420]
      %v466 = vld.sshfl [vmem:[#allocation1 + $0x8] sm:$0xff pattern:$0x75316420]
      %v467 = vld.sshfl [vmem:[#allocation1 + $0x10] sm:$0xff pattern:$0x75316420]
      %v468 = vld.sshfl [vmem:[#allocation1 + $0x18] sm:$0xff pattern:$0x75316420]
      %v469 = vld.sshfl [vmem:[#allocation1 + $0x20] sm:$0xff pattern:$0x75316420]
      %v470 = vld.sshfl [vmem:[#allocation1 + $0x28] sm:$0xff pattern:$0x75316420]
      %v471 = vld.sshfl [vmem:[#allocation1 + $0x30] sm:$0xff pattern:$0x75316420]
      %v472 = vld.sshfl [vmem:[#allocation1 + $0x38] sm:$0xff pattern:$0x75316420]
      %473 = vst [vmem:[#allocation1] ss:$2 sm:$0xff] %v398
      %474 = vst [vmem:[%s459] ss:$2 sm:$0xff] %v399
      %475 = vst [vmem:[%s461] ss:$2 sm:$0xff] %v400
      %476 = vst [vmem:[%s463] ss:$2 sm:$0xff] %v401
      %v477 = vld.sshfl [vmem:[#allocation1] sm:$0xff pattern:$0x75316420]
      %v478 = vld.sshfl [vmem:[#allocation1 + $0x8] sm:$0xff pattern:$0x75316420]
      %v479 = vld.sshfl [vmem:[#allocation1 + $0x10] sm:$0xff pattern:$0x75316420]
      %v480 = vld.sshfl [vmem:[#allocation1 + $0x18] sm:$0xff pattern:$0x75316420]
      %v481 = vld.sshfl [vmem:[#allocation1 + $0x20] sm:$0xff pattern:$0x75316420]
      %v482 = vld.sshfl [vmem:[#allocation1 + $0x28] sm:$0xff pattern:$0x75316420]
      %v483 = vld.sshfl [vmem:[#allocation1 + $0x30] sm:$0xff pattern:$0x75316420]
      %v484 = vld.sshfl [vmem:[#allocation1 + $0x38] sm:$0xff pattern:$0x75316420]
      %485 = vst [vmem:[#allocation1] ss:$2 sm:$0xff] %v402
      %486 = vst [vmem:[%s459] ss:$2 sm:$0xff] %v403
      %487 = vst [vmem:[%s461] ss:$2 sm:$0xff] %v404
      %488 = vst [vmem:[%s463] ss:$2 sm:$0xff] %v405
      %v489 = vld.sshfl [vmem:[#allocation1] sm:$0xff pattern:$0x75316420]
      %v490 = vld.sshfl [vmem:[#allocation1 + $0x8] sm:$0xff pattern:$0x75316420]
      %v491 = vld.sshfl [vmem:[#allocation1 + $0x10] sm:$0xff pattern:$0x75316420]
      %v492 = vld.sshfl [vmem:[#allocation1 + $0x18] sm:$0xff pattern:$0x75316420]
      %v493 = vld.sshfl [vmem:[#allocation1 + $0x20] sm:$0xff pattern:$0x75316420]
      %v494 = vld.sshfl [vmem:[#allocation1 + $0x28] sm:$0xff pattern:$0x75316420]
      %v495 = vld.sshfl [vmem:[#allocation1 + $0x30] sm:$0xff pattern:$0x75316420]
      %v496 = vld.sshfl [vmem:[#allocation1 + $0x38] sm:$0xff pattern:$0x75316420]
      %497 = vst [vmem:[#allocation1] ss:$2 sm:$0xff] %v406
      %498 = vst [vmem:[%s459] ss:$2 sm:$0xff] %v407
      %499 = vst [vmem:[%s461] ss:$2 sm:$0xff] %v408
      %500 = vst [vmem:[%s463] ss:$2 sm:$0xff] %v409
      %v501 = vld.sshfl [vmem:[#allocation1] sm:$0xff pattern:$0x75316420]
      %v502 = vld.sshfl [vmem:[#allocation1 + $0x8] sm:$0xff pattern:$0x75316420]
      %v503 = vld.sshfl [vmem:[#allocation1 + $0x10] sm:$0xff pattern:$0x75316420]
      %v504 = vld.sshfl [vmem:[#allocation1 + $0x18] sm:$0xff pattern:$0x75316420]
      %v505 = vld.sshfl [vmem:[#allocation1 + $0x20] sm:$0xff pattern:$0x75316420]
      %v506 = vld.sshfl [vmem:[#allocation1 + $0x28] sm:$0xff pattern:$0x75316420]
      %v507 = vld.sshfl [vmem:[#allocation1 + $0x30] sm:$0xff pattern:$0x75316420]
      %v508 = vld.sshfl [vmem:[#allocation1 + $0x38] sm:$0xff pattern:$0x75316420]
      %509 = vst [vmem:[#allocation1] ss:$2 sm:$0xff] %v410
      %510 = vst [vmem:[%s459] ss:$2 sm:$0xff] %v411
      %511 = vst [vmem:[%s461] ss:$2 sm:$0xff] %v412
      %512 = vst [vmem:[%s463] ss:$2 sm:$0xff] %v413
      %v513 = vld.sshfl [vmem:[#allocation1] sm:$0xff pattern:$0x75316420]
      %v514 = vld.sshfl [vmem:[#allocation1 + $0x8] sm:$0xff pattern:$0x75316420]
      %v515 = vld.sshfl [vmem:[#allocation1 + $0x10] sm:$0xff pattern:$0x75316420]
      %v516 = vld.sshfl [vmem:[#allocation1 + $0x18] sm:$0xff pattern:$0x75316420]
      %v517 = vld.sshfl [vmem:[#allocation1 + $0x20] sm:$0xff pattern:$0x75316420]
      %v518 = vld.sshfl [vmem:[#allocation1 + $0x28] sm:$0xff pattern:$0x75316420]
      %v519 = vld.sshfl [vmem:[#allocation1 + $0x30] sm:$0xff pattern:$0x75316420]
      %v520 = vld.sshfl [vmem:[#allocation1 + $0x38] sm:$0xff pattern:$0x75316420]
      %521 = vst [vmem:[#allocation1] ss:$2 sm:$0xff] %v414
      %522 = vst [vmem:[%s459] ss:$2 sm:$0xff] %v415
      %523 = vst [vmem:[%s461] ss:$2 sm:$0xff] %v416
      %524 = vst [vmem:[%s463] ss:$2 sm:$0xff] %v417
      %v525 = vld.sshfl [vmem:[#allocation1] sm:$0xff pattern:$0x75316420]
      %v526 = vld.sshfl [vmem:[#allocation1 + $0x8] sm:$0xff pattern:$0x75316420]
      %v527 = vld.sshfl [vmem:[#allocation1 + $0x10] sm:$0xff pattern:$0x75316420]
      %v528 = vld.sshfl [vmem:[#allocation1 + $0x18] sm:$0xff pattern:$0x75316420]
      %v529 = vld.sshfl [vmem:[#allocation1 + $0x20] sm:$0xff pattern:$0x75316420]
      %v530 = vld.sshfl [vmem:[#allocation1 + $0x28] sm:$0xff pattern:$0x75316420]
      %v531 = vld.sshfl [vmem:[#allocation1 + $0x30] sm:$0xff pattern:$0x75316420]
      %v532 = vld.sshfl [vmem:[#allocation1 + $0x38] sm:$0xff pattern:$0x75316420]
      %533 = vst [vmem:[#allocation1] ss:$2 sm:$0xff] %v418
      %534 = vst [vmem:[%s459] ss:$2 sm:$0xff] %v419
      %535 = vst [vmem:[%s461] ss:$2 sm:$0xff] %v420
      %536 = vst [vmem:[%s463] ss:$2 sm:$0xff] %v421
      %v537 = vld.sshfl [vmem:[#allocation1] sm:$0xff pattern:$0x75316420]
      %v538 = vld.sshfl [vmem:[#allocation1 + $0x8] sm:$0xff pattern:$0x75316420]
      %v539 = vld.sshfl [vmem:[#allocation1 + $0x10] sm:$0xff pattern:$0x75316420]
      %v540 = vld.sshfl [vmem:[#allocation1 + $0x18] sm:$0xff pattern:$0x75316420]
      %v541 = vld.sshfl [vmem:[#allocation1 + $0x20] sm:$0xff pattern:$0x75316420]
      %v542 = vld.sshfl [vmem:[#allocation1 + $0x28] sm:$0xff pattern:$0x75316420]
      %v543 = vld.sshfl [vmem:[#allocation1 + $0x30] sm:$0xff pattern:$0x75316420]
      %v544 = vld.sshfl [vmem:[#allocation1 + $0x38] sm:$0xff pattern:$0x75316420]
      %545 = vst [vmem:[#allocation1] ss:$2 sm:$0xff] %v422
      %546 = vst [vmem:[%s459] ss:$2 sm:$0xff] %v423
      %547 = vst [vmem:[%s461] ss:$2 sm:$0xff] %v424
      %548 = vst [vmem:[%s463] ss:$2 sm:$0xff] %v425
      %v549 = vld.sshfl [vmem:[#allocation1] sm:$0xff pattern:$0x75316420]
      %v550 = vld.sshfl [vmem:[#allocation1 + $0x8] sm:$0xff pattern:$0x75316420]
      %v551 = vld.sshfl [vmem:[#allocation1 + $0x10] sm:$0xff pattern:$0x75316420]
      %v552 = vld.sshfl [vmem:[#allocation1 + $0x18] sm:$0xff pattern:$0x75316420]
      %v553 = vld.sshfl [vmem:[#allocation1 + $0x20] sm:$0xff pattern:$0x75316420]
      %v554 = vld.sshfl [vmem:[#allocation1 + $0x28] sm:$0xff pattern:$0x75316420]
      %v555 = vld.sshfl [vmem:[#allocation1 + $0x30] sm:$0xff pattern:$0x75316420]
      %v556 = vld.sshfl [vmem:[#allocation1 + $0x38] sm:$0xff pattern:$0x75316420]
      %v621 = vsel %vm329, %v465, 0.0
      %v622 = vsel %vm329, %v466, 0.0
      %v623 = vadd.f32 %v621, %v622
      %v624 = vsel %vm329, %v467, 0.0
      %v625 = vadd.f32 %v623, %v624
      %v626 = vsel %vm329, %v468, 0.0
      %v627 = vadd.f32 %v625, %v626
      %v628 = vsel %vm329, %v469, 0.0
      %v629 = vadd.f32 %v627, %v628
      %v630 = vsel %vm329, %v470, 0.0
      %v631 = vadd.f32 %v629, %v630
      %v632 = vsel %vm329, %v471, 0.0
      %v633 = vadd.f32 %v631, %v632
      %v634 = vsel %vm329, %v472, 0.0
      %v635 = vadd.f32 %v633, %v634
      %v636 = vsel %vm329, %v477, 0.0
      %v637 = vadd.f32 %v635, %v636
      %v638 = vsel %vm329, %v478, 0.0
      %v639 = vadd.f32 %v637, %v638
      %v640 = vsel %vm329, %v479, 0.0
      %v641 = vadd.f32 %v639, %v640
      %v642 = vsel %vm329, %v480, 0.0
      %v643 = vadd.f32 %v641, %v642
      %v644 = vsel %vm329, %v481, 0.0
      %v645 = vadd.f32 %v643, %v644
      %v646 = vsel %vm329, %v482, 0.0
      %v647 = vadd.f32 %v645, %v646
      %v648 = vsel %vm329, %v483, 0.0
      %v649 = vadd.f32 %v647, %v648
      %v650 = vsel %vm329, %v484, 0.0
      %v651 = vadd.f32 %v649, %v650
      %v652 = vsel %vm329, %v489, 0.0
      %v653 = vadd.f32 %v651, %v652
      %v654 = vsel %vm329, %v490, 0.0
      %v655 = vadd.f32 %v653, %v654
      %v656 = vsel %vm329, %v491, 0.0
      %v657 = vadd.f32 %v655, %v656
      %v658 = vsel %vm329, %v492, 0.0
      %v659 = vadd.f32 %v657, %v658
      %v660 = vsel %vm329, %v493, 0.0
      %v661 = vadd.f32 %v659, %v660
      %v662 = vsel %vm329, %v494, 0.0
      %v663 = vadd.f32 %v661, %v662
      %v664 = vsel %vm329, %v495, 0.0
      %v665 = vadd.f32 %v663, %v664
      %v666 = vsel %vm329, %v496, 0.0
      %v667 = vadd.f32 %v665, %v666
      %v668 = vsel %vm329, %v501, 0.0
      %v669 = vadd.f32 %v667, %v668
      %v670 = vsel %vm329, %v502, 0.0
      %v671 = vadd.f32 %v669, %v670
      %v672 = vsel %vm329, %v503, 0.0
      %v673 = vadd.f32 %v671, %v672
      %v674 = vsel %vm329, %v504, 0.0
      %v675 = vadd.f32 %v673, %v674
      %v676 = vsel %vm329, %v505, 0.0
      %v677 = vadd.f32 %v675, %v676
      %v678 = vsel %vm329, %v506, 0.0
      %v679 = vadd.f32 %v677, %v678
      %v680 = vsel %vm329, %v507, 0.0
      %v681 = vadd.f32 %v679, %v680
      %v682 = vsel %vm329, %v508, 0.0
      %v683 = vadd.f32 %v681, %v682
      %v684 = vsel %vm329, %v513, 0.0
      %v685 = vadd.f32 %v683, %v684
      %v686 = vsel %vm329, %v514, 0.0
      %v687 = vadd.f32 %v685, %v686
      %v688 = vsel %vm329, %v515, 0.0
      %v689 = vadd.f32 %v687, %v688
      %v690 = vsel %vm329, %v516, 0.0
      %v691 = vadd.f32 %v689, %v690
      %v692 = vsel %vm329, %v517, 0.0
      %v693 = vadd.f32 %v691, %v692
      %v694 = vsel %vm329, %v518, 0.0
      %v695 = vadd.f32 %v693, %v694
      %v696 = vsel %vm329, %v519, 0.0
      %v697 = vadd.f32 %v695, %v696
      %v698 = vsel %vm329, %v520, 0.0
      %v699 = vadd.f32 %v697, %v698
      %v700 = vsel %vm329, %v525, 0.0
      %v701 = vadd.f32 %v699, %v700
      %v702 = vsel %vm329, %v526, 0.0
      %v703 = vadd.f32 %v701, %v702
      %v704 = vsel %vm329, %v527, 0.0
      %v705 = vadd.f32 %v703, %v704
      %v706 = vsel %vm329, %v528, 0.0
      %v707 = vadd.f32 %v705, %v706
      %v708 = vsel %vm329, %v529, 0.0
      %v709 = vadd.f32 %v707, %v708
      %v710 = vsel %vm329, %v530, 0.0
      %v711 = vadd.f32 %v709, %v710
      %v712 = vsel %vm329, %v531, 0.0
      %v713 = vadd.f32 %v711, %v712
      %v714 = vsel %vm329, %v532, 0.0
      %v715 = vadd.f32 %v713, %v714
      %v716 = vsel %vm329, %v537, 0.0
      %v717 = vadd.f32 %v715, %v716
      %v718 = vsel %vm329, %v538, 0.0
      %v719 = vadd.f32 %v717, %v718
      %v720 = vsel %vm329, %v539, 0.0
      %v721 = vadd.f32 %v719, %v720
      %v722 = vsel %vm329, %v540, 0.0
      %v723 = vadd.f32 %v721, %v722
      %v724 = vsel %vm329, %v541, 0.0
      %v725 = vadd.f32 %v723, %v724
      %v726 = vsel %vm329, %v542, 0.0
      %v727 = vadd.f32 %v725, %v726
      %v728 = vsel %vm329, %v543, 0.0
      %v729 = vadd.f32 %v727, %v728
      %v730 = vsel %vm329, %v544, 0.0
      %v731 = vadd.f32 %v729, %v730
      %v732 = vsel %vm329, %v549, 0.0
      %v733 = vadd.f32 %v731, %v732
      %v734 = vsel %vm329, %v550, 0.0
      %v735 = vadd.f32 %v733, %v734
      %v736 = vsel %vm329, %v551, 0.0
      %v737 = vadd.f32 %v735, %v736
      %v738 = vsel %vm329, %v552, 0.0
      %v739 = vadd.f32 %v737, %v738
      %v740 = vsel %vm329, %v553, 0.0
      %v741 = vadd.f32 %v739, %v740
      %v742 = vsel %vm329, %v554, 0.0
      %v743 = vadd.f32 %v741, %v742
      %v744 = vsel %vm329, %v555, 0.0
      %v745 = vadd.f32 %v743, %v744
      %v746 = vsel %vm329, %v556, 0.0
      %v747 = vadd.f32 %v745, %v746
      %748 = vadd.xlane.f32.xlu0 %v747
      %v749 = vpop.xlane.xlu0 %748
      %v750 = vld [vmem:[#allocation2] sm:$0x1]
      %v752 = vperm.slane %v750, 0
      %v754 = vadd.f32 %v749, %v752
      %vm755 = vcmask 3072
      %v756 = vsel %vm755, %v754, 0.0
      %757 = vadd.xlane.f32.xlu0 %v756
      %v758 = vpop.xlane.xlu0 %757
      %v759 = vrot.slane %v758, 4
      %v760 = vadd.f32 %v758, %v759
      %v761 = vrot.slane %v760, 2
      %v762 = vadd.f32 %v760, %v761
      %v763 = vrot.slane %v762, 1
      %v764 = vadd.f32 %v762, %v763
      %s765 = vtos %v764
      %v766 = vrcp.pop 4.0
      %v767 = vmul.f32 4.0, %v766
      %v768 = vsub.f32 1.0, %v767
      %v769 = vmul.f32 %v766, %v768
      %v770 = vadd.f32 %v766, %v769
      %vm771 = vweird.f32 %v766
      %v772 = vsel %vm771, %v766, %v770
      %s773 = vtos %v772
      %s774 = smul.f32 %s765, %s773
      %v775 = vstv %s774
      %vm776 = vcmask 0
      %777 = vst.msk [vmem:[%s168] sm:$0x1] %vm776, %v775
      %p778 = scmp.lt.s32.totalorder %s16, 1
      %s779 = scalar_select %p778, %s16, 1
      %s780 = scalar_lea.vmem %s3, %s779
      // Predicated region
      $region33: #{discriminator.9} parent=31 // pred_check
        %p781 = pneg %p102
      $region34: #{discriminator.9} parent=31 // pred_check_branch
        %783 = sbr.rel (%p781) target = $region36
      $region35: #{discriminator.9} parent=31 // pred_region
        _
      $region36: #{discriminator.9} parent=31 // pred_fallthru
        _
    $region32: #{discriminator.9} parent=5 // pred_fallthru
      _
    %p784 = scmp.le.s32.totalorder 2, %s11
    // Predicated region
    $region37: #{discriminator.9} parent=5 // pred_check
      %p785 = pneg %p784
    $region38: #{discriminator.9} parent=5 // pred_check_branch
      %787 = sbr.rel (%p785) target = $region40
    $region39: #{discriminator.9} parent=5 // pred_region
      %s788 = ssub.s32 %s11, 2
      // Predicated region
      $region41: #{discriminator.9} parent=39 // pred_check
        %p789 = pneg %p108
      $region42: #{discriminator.9} parent=39 // pred_check_branch
        %791 = sbr.rel (%p789) target = $region44
      $region43: #{discriminator.9} parent=39 // pred_region
        %p792 = scmp.lt.s32.totalorder %s17, 1
        %s793 = scalar_select %p792, %s17, 1
        %s794 = scalar_lea.vmem %s3, %s793
      $region44: #{discriminator.9} parent=39 // pred_fallthru
        _
    $region40: #{discriminator.9} parent=5 // pred_fallthru
      _
  $region6: #{discriminator.9} parent=0 // loop_footer
    %s15 = sadd.s32 1, %s11
  $region7: #{discriminator.9} parent=0 // loop_footer_branch
    %10 = sbr.rel target = $region3
  $region8: #{discriminator.9} parent=0 // loop_exit
    _

// kernel: discriminator.8
$region0: #{discriminator.8}
  #allocation0 [shape = 'u32[]', space=smem, size = 0x4, offset = 0x4, fixed_abs, tag = 'smem constant byte address 0x4 - core index']
  #allocation1 [shape = 'u32[72,128]{1,0:T(1,128)}', space=vmem, size = 0x9000, scoped, tag = 'internal scratch']
  %s0 = inlined_call_operand.vmem [shape: bf16[2,9,4096], index: 0, kind: input, shape index: {}]
  %s1 = inlined_call_operand.vmem [shape: bf16[4096,512], index: 1, kind: input, shape index: {}]
  %s2 = inlined_call_operand.vmem [shape: bf16[2,9,512], index: 2, kind: output, shape index: {}]
  %s3 = sld [smem:[#allocation0]]
  $region41: #{discriminator.8} parent=0
    _
  %s5 = ssub.s32 1, %s3
  %s6 = scalar_select 0, %s5, %s3
  loop: start=0, step=1, limit=4
  $region2: #{discriminator.8} parent=0 // loop_pre_header
    _
  $region3: #{discriminator.8} parent=0 // loop_header
    %s8 = sphi 0, %s12
    %p9 = scmp.ge.s32.totalorder %s8, 4
    %s15 = sphi 0, %s27
    %s16 = sphi 0, %s23
    %s17 = sphi 0, %s15
    %s18 = sphi 0, %s16
    %s19 = sphi 0, %s17
    %s20 = sphi 0, %s18
    %s32 = sphi 0, %s34
    %s35 = sphi 0, %s32
    %s36 = sphi 0, %s35
    %s52 = sphi 0, %s36
    %s56 = sphi 0, %s56
    %s58 = sphi 0, %s56
    %s59 = sphi 0, %s58
    %s73 = sphi 0, %s59
    %s81 = sphi 0, %s83
    %s84 = sphi 0, %s81
    %s85 = sphi 0, %s84
    %s101 = sphi 0, %s85
  $region4: #{discriminator.8} parent=0 // loop_header_branch
    %11 = sbr.rel (%p9) target = $region8
  $region5: #{discriminator.8} parent=0 // loop_body
    %s13 = ssub.s32 %s8, 1
    %s14 = ssub.s32 %s8, 2
    %s21 = sadd.s32 1, %s16
    %p22 = scmp.ge.s32.totalorder %s21, 1
    %s23 = scalar_select %p22, 0, %s21
    %s24 = sadd.s32 1, %s15
    %s25 = scalar_select %p22, %s24, %s15
    %p26 = scmp.ge.s32.totalorder %s25, 2
    %s27 = scalar_select %p26, 0, %s25
    %s28 = ssub.s32 %s15, %s27
    %s29 = ssub.s32 %s16, %s23
    %s30 = sor.u32 %s28, %s29
    %p31 = scmp.eq.s32.totalorder %s30, 0
    %s33 = sadd.s32 %s32, 1
    %s34 = scalar_select %p31, %s32, %s33
    %p37 = pneg %p31
    %p38 = scmp.eq.s32.totalorder %s8, 1
    %p39 = por %p37, %p38
    %p40 = scmp.ne.s32.totalorder %s32, %s35
    %p41 = scmp.eq.s32.totalorder %s8, 0
    %p42 = por %p40, %p41
    %p43 = scmp.ne.s32.totalorder %s32, %s35
    %p44 = scmp.eq.s32.totalorder %s13, 1
    %p45 = por %p43, %p44
    %p46 = scmp.ne.s32.totalorder %s35, %s36
    %p47 = scmp.eq.s32.totalorder %s13, 0
    %p48 = por %p46, %p47
    %p49 = scmp.ne.s32.totalorder %s35, %s36
    %p50 = scmp.eq.s32.totalorder %s14, 1
    %p51 = por %p49, %p50
    %p53 = scmp.ne.s32.totalorder %s36, %s52
    %p54 = scmp.eq.s32.totalorder %s14, 0
    %p55 = por %p53, %p54
    %s57 = sadd.s32 %s56, 1
    %p60 = scmp.eq.s32.totalorder %s8, 1
    %p61 = scmp.ne.s32.totalorder %s56, %s58
    %p62 = scmp.eq.s32.totalorder %s8, 0
    %p63 = por %p61, %p62
    %p64 = scmp.ne.s32.totalorder %s56, %s58
    %p65 = scmp.eq.s32.totalorder %s13, 1
    %p66 = por %p64, %p65
    %p67 = scmp.ne.s32.totalorder %s58, %s59
    %p68 = scmp.eq.s32.totalorder %s13, 0
    %p69 = por %p67, %p68
    %p70 = scmp.ne.s32.totalorder %s58, %s59
    %p71 = scmp.eq.s32.totalorder %s14, 1
    %p72 = por %p70, %p71
    %p74 = scmp.ne.s32.totalorder %s59, %s73
    %p75 = scmp.eq.s32.totalorder %s14, 0
    %p76 = por %p74, %p75
    %s77 = ssub.s32 %s15, %s27
    %s78 = ssub.s32 %s16, %s23
    %s79 = sor.u32 %s77, %s78
    %p80 = scmp.eq.s32.totalorder %s79, 0
    %s82 = sadd.s32 %s81, 1
    %s83 = scalar_select %p80, %s81, %s82
    %p86 = pneg %p80
    %p87 = scmp.eq.s32.totalorder %s8, 1
    %p88 = por %p86, %p87
    %p89 = scmp.ne.s32.totalorder %s81, %s84
    %p90 = scmp.eq.s32.totalorder %s8, 0
    %p91 = por %p89, %p90
    %p92 = scmp.ne.s32.totalorder %s81, %s84
    %p93 = scmp.eq.s32.totalorder %s13, 1
    %p94 = por %p92, %p93
    %p95 = scmp.ne.s32.totalorder %s84, %s85
    %p96 = scmp.eq.s32.totalorder %s13, 0
    %p97 = por %p95, %p96
    %p98 = scmp.ne.s32.totalorder %s84, %s85
    %p99 = scmp.eq.s32.totalorder %s14, 1
    %p100 = por %p98, %p99
    %p102 = scmp.ne.s32.totalorder %s85, %s101
    %p103 = scmp.eq.s32.totalorder %s14, 0
    %p104 = por %p102, %p103
    %p105 = scmp.le.s32.totalorder 1, %s8
    %p106 = scmp.lt.s32.totalorder %s8, 3
    %p107 = pnand %p105, %p106
    %p108 = pneg %p107
    // Predicated region
    $region9: #{discriminator.8} parent=5 // pred_check
      _
    $region10: #{discriminator.8} parent=5 // pred_check_branch
      %110 = sbr.rel (%p107) target = $region12
    $region11: #{discriminator.8} parent=5 // pred_region
      %s111 = ssub.s32 %s8, 1
      // Predicated region
      $region13: #{discriminator.8} parent=11 // pred_check
        %p112 = pneg %p69
      $region14: #{discriminator.8} parent=11 // pred_check_branch
        %114 = sbr.rel (%p112) target = $region16
      $region15: #{discriminator.8} parent=11 // pred_region
        _
      $region16: #{discriminator.8} parent=11 // pred_fallthru
        _
    $region12: #{discriminator.8} parent=5 // pred_fallthru
      _
    %p115 = scmp.lt.s32.totalorder %s8, 2
    // Predicated region
    $region17: #{discriminator.8} parent=5 // pred_check
      %p116 = pneg %p115
    $region18: #{discriminator.8} parent=5 // pred_check_branch
      %118 = sbr.rel (%p116) target = $region20
    $region19: #{discriminator.8} parent=5 // pred_region
      // Predicated region
      $region21: #{discriminator.8} parent=19 // pred_check
        %p119 = pneg %p42
      $region22: #{discriminator.8} parent=19 // pred_check_branch
        %121 = sbr.rel (%p119) target = $region24
      $region23: #{discriminator.8} parent=19 // pred_region
        %s122 = smul.u32 2, %s16
        %p123 = scmp.lt.s32.totalorder %s15, 1
        %s124 = scalar_select %p123, %s15, 1
        %p125 = scmp.lt.s32.totalorder %s122, 1
        %s126 = scalar_select %p125, %s122, 1
        %s127 = smul.addr %s126, 32
        %s128 = smul.addr %s124, 64
        %s129 = sadd.s32 %s127, %s128
        %s130 = smul.addr %s129, 4
        %s131 = scalar_lea.vmem %s0, %s130
        %s132 = smul.u32 2, %s16
      $region24: #{discriminator.8} parent=19 // pred_fallthru
        _
    $region20: #{discriminator.8} parent=5 // pred_fallthru
      _
    %p133 = scmp.le.s32.totalorder 1, %s8
    %p134 = scmp.lt.s32.totalorder %s8, 3
    %p135 = pnand %p133, %p134
    %p136 = pneg %p135
    // Predicated region
    $region25: #{discriminator.8} parent=5 // pred_check
      _
    $region26: #{discriminator.8} parent=5 // pred_check_branch
      %138 = sbr.rel (%p135) target = $region28
    $region27: #{discriminator.8} parent=5 // pred_region
      %s139 = ssub.s32 %s8, 1
      %s140 = smul.u32 2, %s18
      %p141 = scmp.lt.s32.totalorder %s17, 1
      %s142 = scalar_select %p141, %s17, 1
      %p143 = scmp.lt.s32.totalorder %s140, 1
      %s144 = scalar_select %p143, %s140, 1
      %s145 = smul.addr %s144, 32
      %s146 = smul.addr %s142, 64
      %s147 = sadd.s32 %s145, %s146
      %s148 = smul.addr %s147, 4
      %s149 = scalar_lea.vmem %s0, %s148
      %p150 = pneg %p48
      %p151 = pneg %p45
      %p152 = pneg %p69
      %p153 = pneg %p66
      %p154 = pneg %p97
      %p155 = pneg %p94
      %s156 = smul.u32 2, %s18
      %p157 = scmp.lt.s32.totalorder %s17, 1
      %s158 = scalar_select %p157, %s17, 1
      %p159 = scmp.lt.s32.totalorder %s156, 1
      %s160 = scalar_select %p159, %s156, 1
      %s161 = smul.addr %s160, 4
      %s162 = smul.addr %s158, 8
      %s163 = sadd.s32 %s161, %s162
      %s164 = smul.addr %s163, 4
      %s165 = scalar_lea.vmem %s2, %s164
      %s166 = smul.u32 2, %s18
      %p167 = scmp.lt.s32.totalorder %s17, 1
      %s168 = scalar_select %p167, %s17, 1
      %p169 = scmp.lt.s32.totalorder %s166, 1
      %s170 = scalar_select %p169, %s166, 1
      %s171 = smul.addr %s170, 32
      %s172 = smul.addr %s168, 64
      %s173 = sadd.s32 %s171, %s172
      %s174 = smul.addr %s173, 4
      %s175 = scalar_lea.vmem %s0, %s174
      %s176 = smul.u32 2, %s18
      %s177 = smul.u32 2, %s18
      %p178 = scmp.lt.s32.totalorder %s17, 1
      %s179 = scalar_select %p178, %s17, 1
      %p180 = scmp.lt.s32.totalorder %s177, 1
      %s181 = scalar_select %p180, %s177, 1
      %s182 = smul.addr %s181, 4
      %s183 = smul.addr %s179, 8
      %s184 = sadd.s32 %s182, %s183
      %s185 = smul.addr %s184, 4
      %s186 = scalar_lea.vmem %s2, %s185
      %s187 = smul.u32 2, %s18
      %v188 = vld [vmem:[%s175] sm:$0xff]
      %v189 = vld [vmem:[%s175 + $0x8] sm:$0xff]
      %v190 = vld [vmem:[%s175 + $0x10] sm:$0xff]
      %v191 = vld [vmem:[%s175 + $0x18] sm:$0xff]
      %v192 = vld [vmem:[%s175 + $0x20] sm:$0xff]
      %v193 = vld [vmem:[%s175 + $0x28] sm:$0xff]
      %v194 = vld [vmem:[%s175 + $0x30] sm:$0xff]
      %v195 = vld [vmem:[%s175 + $0x38] sm:$0xff]
      %v196 = vld [vmem:[%s175 + $0x40] sm:$0xff]
      %v197 = vld [vmem:[%s175 + $0x48] sm:$0xff]
      %v198 = vld [vmem:[%s175 + $0x50] sm:$0xff]
      %v199 = vld [vmem:[%s175 + $0x58] sm:$0xff]
      %v200 = vld [vmem:[%s175 + $0x60] sm:$0xff]
      %v201 = vld [vmem:[%s175 + $0x68] sm:$0xff]
      %v202 = vld [vmem:[%s175 + $0x70] sm:$0xff]
      %v203 = vld [vmem:[%s175 + $0x78] sm:$0xff]
      %v204 = vld [vmem:[%s175 + $0x80] sm:$0x11]
      %v205 = vld [vmem:[%s175 + $0x88] sm:$0x11]
      %v206 = vld [vmem:[%s175 + $0x90] sm:$0x11]
      %v207 = vld [vmem:[%s175 + $0x98] sm:$0x11]
      %v208 = vld [vmem:[%s175 + $0xa0] sm:$0x11]
      %v209 = vld [vmem:[%s175 + $0xa8] sm:$0x11]
      %v210 = vld [vmem:[%s175 + $0xb0] sm:$0x11]
      %v211 = vld [vmem:[%s175 + $0xb8] sm:$0x11]
      %v212 = vld [vmem:[%s175 + $0xc0] sm:$0x11]
      %v213 = vld [vmem:[%s175 + $0xc8] sm:$0x11]
      %v214 = vld [vmem:[%s175 + $0xd0] sm:$0x11]
      %v215 = vld [vmem:[%s175 + $0xd8] sm:$0x11]
      %v216 = vld [vmem:[%s175 + $0xe0] sm:$0x11]
      %v217 = vld [vmem:[%s175 + $0xe8] sm:$0x11]
      %v218 = vld [vmem:[%s175 + $0xf0] sm:$0x11]
      %v219 = vld [vmem:[%s175 + $0xf8] sm:$0x11]
      %v220 = vld [vmem:[%s1] sm:$0xff]
      %v221 = vld [vmem:[%s1 + $0x8] sm:$0xff]
      %v222 = vld [vmem:[%s1 + $0x10] sm:$0xff]
      %v223 = vld [vmem:[%s1 + $0x18] sm:$0xff]
      %v224 = vld [vmem:[%s1 + $0x20] sm:$0xff]
      %v225 = vld [vmem:[%s1 + $0x28] sm:$0xff]
      %v226 = vld [vmem:[%s1 + $0x30] sm:$0xff]
      %v227 = vld [vmem:[%s1 + $0x38] sm:$0xff]
      %v228 = vld [vmem:[%s1 + $0x40] sm:$0xff]
      %v229 = vld [vmem:[%s1 + $0x48] sm:$0xff]
      %v230 = vld [vmem:[%s1 + $0x50] sm:$0xff]
      %v231 = vld [vmem:[%s1 + $0x58] sm:$0xff]
      %v232 = vld [vmem:[%s1 + $0x60] sm:$0xff]
      %v233 = vld [vmem:[%s1 + $0x68] sm:$0xff]
      %v234 = vld [vmem:[%s1 + $0x70] sm:$0xff]
      %v235 = vld [vmem:[%s1 + $0x78] sm:$0xff]
      %v236 = vld [vmem:[%s1 + $0x80] sm:$0xff]
      %v237 = vld [vmem:[%s1 + $0x88] sm:$0xff]
      %v238 = vld [vmem:[%s1 + $0x90] sm:$0xff]
      %v239 = vld [vmem:[%s1 + $0x98] sm:$0xff]
      %v240 = vld [vmem:[%s1 + $0xa0] sm:$0xff]
      %v241 = vld [vmem:[%s1 + $0xa8] sm:$0xff]
      %v242 = vld [vmem:[%s1 + $0xb0] sm:$0xff]
      %v243 = vld [vmem:[%s1 + $0xb8] sm:$0xff]
      %v244 = vld [vmem:[%s1 + $0xc0] sm:$0xff]
      %v245 = vld [vmem:[%s1 + $0xc8] sm:$0xff]
      %v246 = vld [vmem:[%s1 + $0xd0] sm:$0xff]
      %v247 = vld [vmem:[%s1 + $0xd8] sm:$0xff]
      %v248 = vld [vmem:[%s1 + $0xe0] sm:$0xff]
      %v249 = vld [vmem:[%s1 + $0xe8] sm:$0xff]
      %v250 = vld [vmem:[%s1 + $0xf0] sm:$0xff]
      %v251 = vld [vmem:[%s1 + $0xf8] sm:$0xff]
      %v252 = vld [vmem:[%s1 + $0x100] sm:$0xff]
      %v253 = vld [vmem:[%s1 + $0x108] sm:$0xff]
      %v254 = vld [vmem:[%s1 + $0x110] sm:$0xff]
      %v255 = vld [vmem:[%s1 + $0x118] sm:$0xff]
      %v256 = vld [vmem:[%s1 + $0x120] sm:$0xff]
      %v257 = vld [vmem:[%s1 + $0x128] sm:$0xff]
      %v258 = vld [vmem:[%s1 + $0x130] sm:$0xff]
      %v259 = vld [vmem:[%s1 + $0x138] sm:$0xff]
      %v260 = vld [vmem:[%s1 + $0x140] sm:$0xff]
      %v261 = vld [vmem:[%s1 + $0x148] sm:$0xff]
      %v262 = vld [vmem:[%s1 + $0x150] sm:$0xff]
      %v263 = vld [vmem:[%s1 + $0x158] sm:$0xff]
      %v264 = vld [vmem:[%s1 + $0x160] sm:$0xff]
      %v265 = vld [vmem:[%s1 + $0x168] sm:$0xff]
      %v266 = vld [vmem:[%s1 + $0x170] sm:$0xff]
      %v267 = vld [vmem:[%s1 + $0x178] sm:$0xff]
      %v268 = vld [vmem:[%s1 + $0x180] sm:$0xff]
      %v269 = vld [vmem:[%s1 + $0x188] sm:$0xff]
      %v270 = vld [vmem:[%s1 + $0x190] sm:$0xff]
      %v271 = vld [vmem:[%s1 + $0x198] sm:$0xff]
      %v272 = vld [vmem:[%s1 + $0x1a0] sm:$0xff]
      %v273 = vld [vmem:[%s1 + $0x1a8] sm:$0xff]
      %v274 = vld [vmem:[%s1 + $0x1b0] sm:$0xff]
      %v275 = vld [vmem:[%s1 + $0x1b8] sm:$0xff]
      %v276 = vld [vmem:[%s1 + $0x1c0] sm:$0xff]
      %v277 = vld [vmem:[%s1 + $0x1c8] sm:$0xff]
      %v278 = vld [vmem:[%s1 + $0x1d0] sm:$0xff]
      %v279 = vld [vmem:[%s1 + $0x1d8] sm:$0xff]
      %v280 = vld [vmem:[%s1 + $0x1e0] sm:$0xff]
      %v281 = vld [vmem:[%s1 + $0x1e8] sm:$0xff]
      %v282 = vld [vmem:[%s1 + $0x1f0] sm:$0xff]
      %v283 = vld [vmem:[%s1 + $0x1f8] sm:$0xff]
      %v284 = vld [vmem:[%s1 + $0x200] sm:$0xff]
      %v285 = vld [vmem:[%s1 + $0x208] sm:$0xff]
      %v286 = vld [vmem:[%s1 + $0x210] sm:$0xff]
      %v287 = vld [vmem:[%s1 + $0x218] sm:$0xff]
      %v288 = vld [vmem:[%s1 + $0x220] sm:$0xff]
      %v289 = vld [vmem:[%s1 + $0x228] sm:$0xff]
      %v290 = vld [vmem:[%s1 + $0x230] sm:$0xff]
      %v291 = vld [vmem:[%s1 + $0x238] sm:$0xff]
      %v292 = vld [vmem:[%s1 + $0x240] sm:$0xff]
      %v293 = vld [vmem:[%s1 + $0x248] sm:$0xff]
      %v294 = vld [vmem:[%s1 + $0x250] sm:$0xff]
      %v295 = vld [vmem:[%s1 + $0x258] sm:$0xff]
      %v296 = vld [vmem:[%s1 + $0x260] sm:$0xff]
      %v297 = vld [vmem:[%s1 + $0x268] sm:$0xff]
      %v298 = vld [vmem:[%s1 + $0x270] sm:$0xff]
      %v299 = vld [vmem:[%s1 + $0x278] sm:$0xff]
      %v300 = vld [vmem:[%s1 + $0x280] sm:$0xff]
      %v301 = vld [vmem:[%s1 + $0x288] sm:$0xff]
      %v302 = vld [vmem:[%s1 + $0x290] sm:$0xff]
      %v303 = vld [vmem:[%s1 + $0x298] sm:$0xff]
      %v304 = vld [vmem:[%s1 + $0x2a0] sm:$0xff]
      %v305 = vld [vmem:[%s1 + $0x2a8] sm:$0xff]
      %v306 = vld [vmem:[%s1 + $0x2b0] sm:$0xff]
      %v307 = vld [vmem:[%s1 + $0x2b8] sm:$0xff]
      %v308 = vld [vmem:[%s1 + $0x2c0] sm:$0xff]
      %v309 = vld [vmem:[%s1 + $0x2c8] sm:$0xff]
      %v310 = vld [vmem:[%s1 + $0x2d0] sm:$0xff]
      %v311 = vld [vmem:[%s1 + $0x2d8] sm:$0xff]
      %v312 = vld [vmem:[%s1 + $0x2e0] sm:$0xff]
      %v313 = vld [vmem:[%s1 + $0x2e8] sm:$0xff]
      %v314 = vld [vmem:[%s1 + $0x2f0] sm:$0xff]
      %v315 = vld [vmem:[%s1 + $0x2f8] sm:$0xff]
      %v316 = vld [vmem:[%s1 + $0x300] sm:$0xff]
      %v317 = vld [vmem:[%s1 + $0x308] sm:$0xff]
      %v318 = vld [vmem:[%s1 + $0x310] sm:$0xff]
      %v319 = vld [vmem:[%s1 + $0x318] sm:$0xff]
      %v320 = vld [vmem:[%s1 + $0x320] sm:$0xff]
      %v321 = vld [vmem:[%s1 + $0x328] sm:$0xff]
      %v322 = vld [vmem:[%s1 + $0x330] sm:$0xff]
      %v323 = vld [vmem:[%s1 + $0x338] sm:$0xff]
      %v324 = vld [vmem:[%s1 + $0x340] sm:$0xff]
      %v325 = vld [vmem:[%s1 + $0x348] sm:$0xff]
      %v326 = vld [vmem:[%s1 + $0x350] sm:$0xff]
      %v327 = vld [vmem:[%s1 + $0x358] sm:$0xff]
      %v328 = vld [vmem:[%s1 + $0x360] sm:$0xff]
      %v329 = vld [vmem:[%s1 + $0x368] sm:$0xff]
      %v330 = vld [vmem:[%s1 + $0x370] sm:$0xff]
      %v331 = vld [vmem:[%s1 + $0x378] sm:$0xff]
      %v332 = vld [vmem:[%s1 + $0x380] sm:$0xff]
      %v333 = vld [vmem:[%s1 + $0x388] sm:$0xff]
      %v334 = vld [vmem:[%s1 + $0x390] sm:$0xff]
      %v335 = vld [vmem:[%s1 + $0x398] sm:$0xff]
      %v336 = vld [vmem:[%s1 + $0x3a0] sm:$0xff]
      %v337 = vld [vmem:[%s1 + $0x3a8] sm:$0xff]
      %v338 = vld [vmem:[%s1 + $0x3b0] sm:$0xff]
      %v339 = vld [vmem:[%s1 + $0x3b8] sm:$0xff]
      %v340 = vld [vmem:[%s1 + $0x3c0] sm:$0xff]
      %v341 = vld [vmem:[%s1 + $0x3c8] sm:$0xff]
      %v342 = vld [vmem:[%s1 + $0x3d0] sm:$0xff]
      %v343 = vld [vmem:[%s1 + $0x3d8] sm:$0xff]
      %v344 = vld [vmem:[%s1 + $0x3e0] sm:$0xff]
      %v345 = vld [vmem:[%s1 + $0x3e8] sm:$0xff]
      %v346 = vld [vmem:[%s1 + $0x3f0] sm:$0xff]
      %v347 = vld [vmem:[%s1 + $0x3f8] sm:$0xff]
      %v348 = vld [vmem:[%s1 + $0x400] sm:$0xff]
      %v349 = vld [vmem:[%s1 + $0x408] sm:$0xff]
      %v350 = vld [vmem:[%s1 + $0x410] sm:$0xff]
      %v351 = vld [vmem:[%s1 + $0x418] sm:$0xff]
      %v352 = vld [vmem:[%s1 + $0x420] sm:$0xff]
      %v353 = vld [vmem:[%s1 + $0x428] sm:$0xff]
      %v354 = vld [vmem:[%s1 + $0x430] sm:$0xff]
      %v355 = vld [vmem:[%s1 + $0x438] sm:$0xff]
      %v356 = vld [vmem:[%s1 + $0x440] sm:$0xff]
      %v357 = vld [vmem:[%s1 + $0x448] sm:$0xff]
      %v358 = vld [vmem:[%s1 + $0x450] sm:$0xff]
      %v359 = vld [vmem:[%s1 + $0x458] sm:$0xff]
      %v360 = vld [vmem:[%s1 + $0x460] sm:$0xff]
      %v361 = vld [vmem:[%s1 + $0x468] sm:$0xff]
      %v362 = vld [vmem:[%s1 + $0x470] sm:$0xff]
      %v363 = vld [vmem:[%s1 + $0x478] sm:$0xff]
      %v364 = vld [vmem:[%s1 + $0x480] sm:$0xff]
      %v365 = vld [vmem:[%s1 + $0x488] sm:$0xff]
      %v366 = vld [vmem:[%s1 + $0x490] sm:$0xff]
      %v367 = vld [vmem:[%s1 + $0x498] sm:$0xff]
      %v368 = vld [vmem:[%s1 + $0x4a0] sm:$0xff]
      %v369 = vld [vmem:[%s1 + $0x4a8] sm:$0xff]
      %v370 = vld [vmem:[%s1 + $0x4b0] sm:$0xff]
      %v371 = vld [vmem:[%s1 + $0x4b8] sm:$0xff]
      %v372 = vld [vmem:[%s1 + $0x4c0] sm:$0xff]
      %v373 = vld [vmem:[%s1 + $0x4c8] sm:$0xff]
      %v374 = vld [vmem:[%s1 + $0x4d0] sm:$0xff]
      %v375 = vld [vmem:[%s1 + $0x4d8] sm:$0xff]
      %v376 = vld [vmem:[%s1 + $0x4e0] sm:$0xff]
      %v377 = vld [vmem:[%s1 + $0x4e8] sm:$0xff]
      %v378 = vld [vmem:[%s1 + $0x4f0] sm:$0xff]
      %v379 = vld [vmem:[%s1 + $0x4f8] sm:$0xff]
      %v380 = vld [vmem:[%s1 + $0x500] sm:$0xff]
      %v381 = vld [vmem:[%s1 + $0x508] sm:$0xff]
      %v382 = vld [vmem:[%s1 + $0x510] sm:$0xff]
      %v383 = vld [vmem:[%s1 + $0x518] sm:$0xff]
      %v384 = vld [vmem:[%s1 + $0x520] sm:$0xff]
      %v385 = vld [vmem:[%s1 + $0x528] sm:$0xff]
      %v386 = vld [vmem:[%s1 + $0x530] sm:$0xff]
      %v387 = vld [vmem:[%s1 + $0x538] sm:$0xff]
      %v388 = vld [vmem:[%s1 + $0x540] sm:$0xff]
      %v389 = vld [vmem:[%s1 + $0x548] sm:$0xff]
      %v390 = vld [vmem:[%s1 + $0x550] sm:$0xff]
      %v391 = vld [vmem:[%s1 + $0x558] sm:$0xff]
      %v392 = vld [vmem:[%s1 + $0x560] sm:$0xff]
      %v393 = vld [vmem:[%s1 + $0x568] sm:$0xff]
      %v394 = vld [vmem:[%s1 + $0x570] sm:$0xff]
      %v395 = vld [vmem:[%s1 + $0x578] sm:$0xff]
      %v396 = vld [vmem:[%s1 + $0x580] sm:$0xff]
      %v397 = vld [vmem:[%s1 + $0x588] sm:$0xff]
      %v398 = vld [vmem:[%s1 + $0x590] sm:$0xff]
      %v399 = vld [vmem:[%s1 + $0x598] sm:$0xff]
      %v400 = vld [vmem:[%s1 + $0x5a0] sm:$0xff]
      %v401 = vld [vmem:[%s1 + $0x5a8] sm:$0xff]
      %v402 = vld [vmem:[%s1 + $0x5b0] sm:$0xff]
      %v403 = vld [vmem:[%s1 + $0x5b8] sm:$0xff]
      %v404 = vld [vmem:[%s1 + $0x5c0] sm:$0xff]
      %v405 = vld [vmem:[%s1 + $0x5c8] sm:$0xff]
      %v406 = vld [vmem:[%s1 + $0x5d0] sm:$0xff]
      %v407 = vld [vmem:[%s1 + $0x5d8] sm:$0xff]
      %v408 = vld [vmem:[%s1 + $0x5e0] sm:$0xff]
      %v409 = vld [vmem:[%s1 + $0x5e8] sm:$0xff]
      %v410 = vld [vmem:[%s1 + $0x5f0] sm:$0xff]
      %v411 = vld [vmem:[%s1 + $0x5f8] sm:$0xff]
      %v412 = vld [vmem:[%s1 + $0x600] sm:$0xff]
      %v413 = vld [vmem:[%s1 + $0x608] sm:$0xff]
      %v414 = vld [vmem:[%s1 + $0x610] sm:$0xff]
      %v415 = vld [vmem:[%s1 + $0x618] sm:$0xff]
      %v416 = vld [vmem:[%s1 + $0x620] sm:$0xff]
      %v417 = vld [vmem:[%s1 + $0x628] sm:$0xff]
      %v418 = vld [vmem:[%s1 + $0x630] sm:$0xff]
      %v419 = vld [vmem:[%s1 + $0x638] sm:$0xff]
      %v420 = vld [vmem:[%s1 + $0x640] sm:$0xff]
      %v421 = vld [vmem:[%s1 + $0x648] sm:$0xff]
      %v422 = vld [vmem:[%s1 + $0x650] sm:$0xff]
      %v423 = vld [vmem:[%s1 + $0x658] sm:$0xff]
      %v424 = vld [vmem:[%s1 + $0x660] sm:$0xff]
      %v425 = vld [vmem:[%s1 + $0x668] sm:$0xff]
      %v426 = vld [vmem:[%s1 + $0x670] sm:$0xff]
      %v427 = vld [vmem:[%s1 + $0x678] sm:$0xff]
      %v428 = vld [vmem:[%s1 + $0x680] sm:$0xff]
      %v429 = vld [vmem:[%s1 + $0x688] sm:$0xff]
      %v430 = vld [vmem:[%s1 + $0x690] sm:$0xff]
      %v431 = vld [vmem:[%s1 + $0x698] sm:$0xff]
      %v432 = vld [vmem:[%s1 + $0x6a0] sm:$0xff]
      %v433 = vld [vmem:[%s1 + $0x6a8] sm:$0xff]
      %v434 = vld [vmem:[%s1 + $0x6b0] sm:$0xff]
      %v435 = vld [vmem:[%s1 + $0x6b8] sm:$0xff]
      %v436 = vld [vmem:[%s1 + $0x6c0] sm:$0xff]
      %v437 = vld [vmem:[%s1 + $0x6c8] sm:$0xff]
      %v438 = vld [vmem:[%s1 + $0x6d0] sm:$0xff]
      %v439 = vld [vmem:[%s1 + $0x6d8] sm:$0xff]
      %v440 = vld [vmem:[%s1 + $0x6e0] sm:$0xff]
      %v441 = vld [vmem:[%s1 + $0x6e8] sm:$0xff]
      %v442 = vld [vmem:[%s1 + $0x6f0] sm:$0xff]
      %v443 = vld [vmem:[%s1 + $0x6f8] sm:$0xff]
      %v444 = vld [vmem:[%s1 + $0x700] sm:$0xff]
      %v445 = vld [vmem:[%s1 + $0x708] sm:$0xff]
      %v446 = vld [vmem:[%s1 + $0x710] sm:$0xff]
      %v447 = vld [vmem:[%s1 + $0x718] sm:$0xff]
      %v448 = vld [vmem:[%s1 + $0x720] sm:$0xff]
      %v449 = vld [vmem:[%s1 + $0x728] sm:$0xff]
      %v450 = vld [vmem:[%s1 + $0x730] sm:$0xff]
      %v451 = vld [vmem:[%s1 + $0x738] sm:$0xff]
      %v452 = vld [vmem:[%s1 + $0x740] sm:$0xff]
      %v453 = vld [vmem:[%s1 + $0x748] sm:$0xff]
      %v454 = vld [vmem:[%s1 + $0x750] sm:$0xff]
      %v455 = vld [vmem:[%s1 + $0x758] sm:$0xff]
      %v456 = vld [vmem:[%s1 + $0x760] sm:$0xff]
      %v457 = vld [vmem:[%s1 + $0x768] sm:$0xff]
      %v458 = vld [vmem:[%s1 + $0x770] sm:$0xff]
      %v459 = vld [vmem:[%s1 + $0x778] sm:$0xff]
      %v460 = vld [vmem:[%s1 + $0x780] sm:$0xff]
      %v461 = vld [vmem:[%s1 + $0x788] sm:$0xff]
      %v462 = vld [vmem:[%s1 + $0x790] sm:$0xff]
      %v463 = vld [vmem:[%s1 + $0x798] sm:$0xff]
      %v464 = vld [vmem:[%s1 + $0x7a0] sm:$0xff]
      %v465 = vld [vmem:[%s1 + $0x7a8] sm:$0xff]
      %v466 = vld [vmem:[%s1 + $0x7b0] sm:$0xff]
      %v467 = vld [vmem:[%s1 + $0x7b8] sm:$0xff]
      %v468 = vld [vmem:[%s1 + $0x7c0] sm:$0xff]
      %v469 = vld [vmem:[%s1 + $0x7c8] sm:$0xff]
      %v470 = vld [vmem:[%s1 + $0x7d0] sm:$0xff]
      %v471 = vld [vmem:[%s1 + $0x7d8] sm:$0xff]
      %v472 = vld [vmem:[%s1 + $0x7e0] sm:$0xff]
      %v473 = vld [vmem:[%s1 + $0x7e8] sm:$0xff]
      %v474 = vld [vmem:[%s1 + $0x7f0] sm:$0xff]
      %v475 = vld [vmem:[%s1 + $0x7f8] sm:$0xff]
      %v476 = vld [vmem:[%s1 + $0x800] sm:$0xff]
      %v477 = vld [vmem:[%s1 + $0x808] sm:$0xff]
      %v478 = vld [vmem:[%s1 + $0x810] sm:$0xff]
      %v479 = vld [vmem:[%s1 + $0x818] sm:$0xff]
      %v480 = vld [vmem:[%s1 + $0x820] sm:$0xff]
      %v481 = vld [vmem:[%s1 + $0x828] sm:$0xff]
      %v482 = vld [vmem:[%s1 + $0x830] sm:$0xff]
      %v483 = vld [vmem:[%s1 + $0x838] sm:$0xff]
      %v484 = vld [vmem:[%s1 + $0x840] sm:$0xff]
      %v485 = vld [vmem:[%s1 + $0x848] sm:$0xff]
      %v486 = vld [vmem:[%s1 + $0x850] sm:$0xff]
      %v487 = vld [vmem:[%s1 + $0x858] sm:$0xff]
      %v488 = vld [vmem:[%s1 + $0x860] sm:$0xff]
      %v489 = vld [vmem:[%s1 + $0x868] sm:$0xff]
      %v490 = vld [vmem:[%s1 + $0x870] sm:$0xff]
      %v491 = vld [vmem:[%s1 + $0x878] sm:$0xff]
      %v492 = vld [vmem:[%s1 + $0x880] sm:$0xff]
      %v493 = vld [vmem:[%s1 + $0x888] sm:$0xff]
      %v494 = vld [vmem:[%s1 + $0x890] sm:$0xff]
      %v495 = vld [vmem:[%s1 + $0x898] sm:$0xff]
      %v496 = vld [vmem:[%s1 + $0x8a0] sm:$0xff]
      %v497 = vld [vmem:[%s1 + $0x8a8] sm:$0xff]
      %v498 = vld [vmem:[%s1 + $0x8b0] sm:$0xff]
      %v499 = vld [vmem:[%s1 + $0x8b8] sm:$0xff]
      %v500 = vld [vmem:[%s1 + $0x8c0] sm:$0xff]
      %v501 = vld [vmem:[%s1 + $0x8c8] sm:$0xff]
      %v502 = vld [vmem:[%s1 + $0x8d0] sm:$0xff]
      %v503 = vld [vmem:[%s1 + $0x8d8] sm:$0xff]
      %v504 = vld [vmem:[%s1 + $0x8e0] sm:$0xff]
      %v505 = vld [vmem:[%s1 + $0x8e8] sm:$0xff]
      %v506 = vld [vmem:[%s1 + $0x8f0] sm:$0xff]
      %v507 = vld [vmem:[%s1 + $0x8f8] sm:$0xff]
      %v508 = vld [vmem:[%s1 + $0x900] sm:$0xff]
      %v509 = vld [vmem:[%s1 + $0x908] sm:$0xff]
      %v510 = vld [vmem:[%s1 + $0x910] sm:$0xff]
      %v511 = vld [vmem:[%s1 + $0x918] sm:$0xff]
      %v512 = vld [vmem:[%s1 + $0x920] sm:$0xff]
      %v513 = vld [vmem:[%s1 + $0x928] sm:$0xff]
      %v514 = vld [vmem:[%s1 + $0x930] sm:$0xff]
      %v515 = vld [vmem:[%s1 + $0x938] sm:$0xff]
      %v516 = vld [vmem:[%s1 + $0x940] sm:$0xff]
      %v517 = vld [vmem:[%s1 + $0x948] sm:$0xff]
      %v518 = vld [vmem:[%s1 + $0x950] sm:$0xff]
      %v519 = vld [vmem:[%s1 + $0x958] sm:$0xff]
      %v520 = vld [vmem:[%s1 + $0x960] sm:$0xff]
      %v521 = vld [vmem:[%s1 + $0x968] sm:$0xff]
      %v522 = vld [vmem:[%s1 + $0x970] sm:$0xff]
      %v523 = vld [vmem:[%s1 + $0x978] sm:$0xff]
      %v524 = vld [vmem:[%s1 + $0x980] sm:$0xff]
      %v525 = vld [vmem:[%s1 + $0x988] sm:$0xff]
      %v526 = vld [vmem:[%s1 + $0x990] sm:$0xff]
      %v527 = vld [vmem:[%s1 + $0x998] sm:$0xff]
      %v528 = vld [vmem:[%s1 + $0x9a0] sm:$0xff]
      %v529 = vld [vmem:[%s1 + $0x9a8] sm:$0xff]
      %v530 = vld [vmem:[%s1 + $0x9b0] sm:$0xff]
      %v531 = vld [vmem:[%s1 + $0x9b8] sm:$0xff]
      %v532 = vld [vmem:[%s1 + $0x9c0] sm:$0xff]
      %v533 = vld [vmem:[%s1 + $0x9c8] sm:$0xff]
      %v534 = vld [vmem:[%s1 + $0x9d0] sm:$0xff]
      %v535 = vld [vmem:[%s1 + $0x9d8] sm:$0xff]
      %v536 = vld [vmem:[%s1 + $0x9e0] sm:$0xff]
      %v537 = vld [vmem:[%s1 + $0x9e8] sm:$0xff]
      %v538 = vld [vmem:[%s1 + $0x9f0] sm:$0xff]
      %v539 = vld [vmem:[%s1 + $0x9f8] sm:$0xff]
      %v540 = vld [vmem:[%s1 + $0xa00] sm:$0xff]
      %v541 = vld [vmem:[%s1 + $0xa08] sm:$0xff]
      %v542 = vld [vmem:[%s1 + $0xa10] sm:$0xff]
      %v543 = vld [vmem:[%s1 + $0xa18] sm:$0xff]
      %v544 = vld [vmem:[%s1 + $0xa20] sm:$0xff]
      %v545 = vld [vmem:[%s1 + $0xa28] sm:$0xff]
      %v546 = vld [vmem:[%s1 + $0xa30] sm:$0xff]
      %v547 = vld [vmem:[%s1 + $0xa38] sm:$0xff]
      %v548 = vld [vmem:[%s1 + $0xa40] sm:$0xff]
      %v549 = vld [vmem:[%s1 + $0xa48] sm:$0xff]
      %v550 = vld [vmem:[%s1 + $0xa50] sm:$0xff]
      %v551 = vld [vmem:[%s1 + $0xa58] sm:$0xff]
      %v552 = vld [vmem:[%s1 + $0xa60] sm:$0xff]
      %v553 = vld [vmem:[%s1 + $0xa68] sm:$0xff]
      %v554 = vld [vmem:[%s1 + $0xa70] sm:$0xff]
      %v555 = vld [vmem:[%s1 + $0xa78] sm:$0xff]
      %v556 = vld [vmem:[%s1 + $0xa80] sm:$0xff]
      %v557 = vld [vmem:[%s1 + $0xa88] sm:$0xff]
      %v558 = vld [vmem:[%s1 + $0xa90] sm:$0xff]
      %v559 = vld [vmem:[%s1 + $0xa98] sm:$0xff]
      %v560 = vld [vmem:[%s1 + $0xaa0] sm:$0xff]
      %v561 = vld [vmem:[%s1 + $0xaa8] sm:$0xff]
      %v562 = vld [vmem:[%s1 + $0xab0] sm:$0xff]
      %v563 = vld [vmem:[%s1 + $0xab8] sm:$0xff]
      %v564 = vld [vmem:[%s1 + $0xac0] sm:$0xff]
      %v565 = vld [vmem:[%s1 + $0xac8] sm:$0xff]
      %v566 = vld [vmem:[%s1 + $0xad0] sm:$0xff]
      %v567 = vld [vmem:[%s1 + $0xad8] sm:$0xff]
      %v568 = vld [vmem:[%s1 + $0xae0] sm:$0xff]
      %v569 = vld [vmem:[%s1 + $0xae8] sm:$0xff]
      %v570 = vld [vmem:[%s1 + $0xaf0] sm:$0xff]
      %v571 = vld [vmem:[%s1 + $0xaf8] sm:$0xff]
      %v572 = vld [vmem:[%s1 + $0xb00] sm:$0xff]
      %v573 = vld [vmem:[%s1 + $0xb08] sm:$0xff]
      %v574 = vld [vmem:[%s1 + $0xb10] sm:$0xff]
      %v575 = vld [vmem:[%s1 + $0xb18] sm:$0xff]
      %v576 = vld [vmem:[%s1 + $0xb20] sm:$0xff]
      %v577 = vld [vmem:[%s1 + $0xb28] sm:$0xff]
      %v578 = vld [vmem:[%s1 + $0xb30] sm:$0xff]
      %v579 = vld [vmem:[%s1 + $0xb38] sm:$0xff]
      %v580 = vld [vmem:[%s1 + $0xb40] sm:$0xff]
      %v581 = vld [vmem:[%s1 + $0xb48] sm:$0xff]
      %v582 = vld [vmem:[%s1 + $0xb50] sm:$0xff]
      %v583 = vld [vmem:[%s1 + $0xb58] sm:$0xff]
      %v584 = vld [vmem:[%s1 + $0xb60] sm:$0xff]
      %v585 = vld [vmem:[%s1 + $0xb68] sm:$0xff]
      %v586 = vld [vmem:[%s1 + $0xb70] sm:$0xff]
      %v587 = vld [vmem:[%s1 + $0xb78] sm:$0xff]
      %v588 = vld [vmem:[%s1 + $0xb80] sm:$0xff]
      %v589 = vld [vmem:[%s1 + $0xb88] sm:$0xff]
      %v590 = vld [vmem:[%s1 + $0xb90] sm:$0xff]
      %v591 = vld [vmem:[%s1 + $0xb98] sm:$0xff]
      %v592 = vld [vmem:[%s1 + $0xba0] sm:$0xff]
      %v593 = vld [vmem:[%s1 + $0xba8] sm:$0xff]
      %v594 = vld [vmem:[%s1 + $0xbb0] sm:$0xff]
      %v595 = vld [vmem:[%s1 + $0xbb8] sm:$0xff]
      %v596 = vld [vmem:[%s1 + $0xbc0] sm:$0xff]
      %v597 = vld [vmem:[%s1 + $0xbc8] sm:$0xff]
      %v598 = vld [vmem:[%s1 + $0xbd0] sm:$0xff]
      %v599 = vld [vmem:[%s1 + $0xbd8] sm:$0xff]
      %v600 = vld [vmem:[%s1 + $0xbe0] sm:$0xff]
      %v601 = vld [vmem:[%s1 + $0xbe8] sm:$0xff]
      %v602 = vld [vmem:[%s1 + $0xbf0] sm:$0xff]
      %v603 = vld [vmem:[%s1 + $0xbf8] sm:$0xff]
      %v604 = vld [vmem:[%s1 + $0xc00] sm:$0xff]
      %v605 = vld [vmem:[%s1 + $0xc08] sm:$0xff]
      %v606 = vld [vmem:[%s1 + $0xc10] sm:$0xff]
      %v607 = vld [vmem:[%s1 + $0xc18] sm:$0xff]
      %v608 = vld [vmem:[%s1 + $0xc20] sm:$0xff]
      %v609 = vld [vmem:[%s1 + $0xc28] sm:$0xff]
      %v610 = vld [vmem:[%s1 + $0xc30] sm:$0xff]
      %v611 = vld [vmem:[%s1 + $0xc38] sm:$0xff]
      %v612 = vld [vmem:[%s1 + $0xc40] sm:$0xff]
      %v613 = vld [vmem:[%s1 + $0xc48] sm:$0xff]
      %v614 = vld [vmem:[%s1 + $0xc50] sm:$0xff]
      %v615 = vld [vmem:[%s1 + $0xc58] sm:$0xff]
      %v616 = vld [vmem:[%s1 + $0xc60] sm:$0xff]
      %v617 = vld [vmem:[%s1 + $0xc68] sm:$0xff]
      %v618 = vld [vmem:[%s1 + $0xc70] sm:$0xff]
      %v619 = vld [vmem:[%s1 + $0xc78] sm:$0xff]
      %v620 = vld [vmem:[%s1 + $0xc80] sm:$0xff]
      %v621 = vld [vmem:[%s1 + $0xc88] sm:$0xff]
      %v622 = vld [vmem:[%s1 + $0xc90] sm:$0xff]
      %v623 = vld [vmem:[%s1 + $0xc98] sm:$0xff]
      %v624 = vld [vmem:[%s1 + $0xca0] sm:$0xff]
      %v625 = vld [vmem:[%s1 + $0xca8] sm:$0xff]
      %v626 = vld [vmem:[%s1 + $0xcb0] sm:$0xff]
      %v627 = vld [vmem:[%s1 + $0xcb8] sm:$0xff]
      %v628 = vld [vmem:[%s1 + $0xcc0] sm:$0xff]
      %v629 = vld [vmem:[%s1 + $0xcc8] sm:$0xff]
      %v630 = vld [vmem:[%s1 + $0xcd0] sm:$0xff]
      %v631 = vld [vmem:[%s1 + $0xcd8] sm:$0xff]
      %v632 = vld [vmem:[%s1 + $0xce0] sm:$0xff]
      %v633 = vld [vmem:[%s1 + $0xce8] sm:$0xff]
      %v634 = vld [vmem:[%s1 + $0xcf0] sm:$0xff]
      %v635 = vld [vmem:[%s1 + $0xcf8] sm:$0xff]
      %v636 = vld [vmem:[%s1 + $0xd00] sm:$0xff]
      %v637 = vld [vmem:[%s1 + $0xd08] sm:$0xff]
      %v638 = vld [vmem:[%s1 + $0xd10] sm:$0xff]
      %v639 = vld [vmem:[%s1 + $0xd18] sm:$0xff]
      %v640 = vld [vmem:[%s1 + $0xd20] sm:$0xff]
      %v641 = vld [vmem:[%s1 + $0xd28] sm:$0xff]
      %v642 = vld [vmem:[%s1 + $0xd30] sm:$0xff]
      %v643 = vld [vmem:[%s1 + $0xd38] sm:$0xff]
      %v644 = vld [vmem:[%s1 + $0xd40] sm:$0xff]
      %v645 = vld [vmem:[%s1 + $0xd48] sm:$0xff]
      %v646 = vld [vmem:[%s1 + $0xd50] sm:$0xff]
      %v647 = vld [vmem:[%s1 + $0xd58] sm:$0xff]
      %v648 = vld [vmem:[%s1 + $0xd60] sm:$0xff]
      %v649 = vld [vmem:[%s1 + $0xd68] sm:$0xff]
      %v650 = vld [vmem:[%s1 + $0xd70] sm:$0xff]
      %v651 = vld [vmem:[%s1 + $0xd78] sm:$0xff]
      %v652 = vld [vmem:[%s1 + $0xd80] sm:$0xff]
      %v653 = vld [vmem:[%s1 + $0xd88] sm:$0xff]
      %v654 = vld [vmem:[%s1 + $0xd90] sm:$0xff]
      %v655 = vld [vmem:[%s1 + $0xd98] sm:$0xff]
      %v656 = vld [vmem:[%s1 + $0xda0] sm:$0xff]
      %v657 = vld [vmem:[%s1 + $0xda8] sm:$0xff]
      %v658 = vld [vmem:[%s1 + $0xdb0] sm:$0xff]
      %v659 = vld [vmem:[%s1 + $0xdb8] sm:$0xff]
      %v660 = vld [vmem:[%s1 + $0xdc0] sm:$0xff]
      %v661 = vld [vmem:[%s1 + $0xdc8] sm:$0xff]
      %v662 = vld [vmem:[%s1 + $0xdd0] sm:$0xff]
      %v663 = vld [vmem:[%s1 + $0xdd8] sm:$0xff]
      %v664 = vld [vmem:[%s1 + $0xde0] sm:$0xff]
      %v665 = vld [vmem:[%s1 + $0xde8] sm:$0xff]
      %v666 = vld [vmem:[%s1 + $0xdf0] sm:$0xff]
      %v667 = vld [vmem:[%s1 + $0xdf8] sm:$0xff]
      %v668 = vld [vmem:[%s1 + $0xe00] sm:$0xff]
      %v669 = vld [vmem:[%s1 + $0xe08] sm:$0xff]
      %v670 = vld [vmem:[%s1 + $0xe10] sm:$0xff]
      %v671 = vld [vmem:[%s1 + $0xe18] sm:$0xff]
      %v672 = vld [vmem:[%s1 + $0xe20] sm:$0xff]
      %v673 = vld [vmem:[%s1 + $0xe28] sm:$0xff]
      %v674 = vld [vmem:[%s1 + $0xe30] sm:$0xff]
      %v675 = vld [vmem:[%s1 + $0xe38] sm:$0xff]
      %v676 = vld [vmem:[%s1 + $0xe40] sm:$0xff]
      %v677 = vld [vmem:[%s1 + $0xe48] sm:$0xff]
      %v678 = vld [vmem:[%s1 + $0xe50] sm:$0xff]
      %v679 = vld [vmem:[%s1 + $0xe58] sm:$0xff]
      %v680 = vld [vmem:[%s1 + $0xe60] sm:$0xff]
      %v681 = vld [vmem:[%s1 + $0xe68] sm:$0xff]
      %v682 = vld [vmem:[%s1 + $0xe70] sm:$0xff]
      %v683 = vld [vmem:[%s1 + $0xe78] sm:$0xff]
      %v684 = vld [vmem:[%s1 + $0xe80] sm:$0xff]
      %v685 = vld [vmem:[%s1 + $0xe88] sm:$0xff]
      %v686 = vld [vmem:[%s1 + $0xe90] sm:$0xff]
      %v687 = vld [vmem:[%s1 + $0xe98] sm:$0xff]
      %v688 = vld [vmem:[%s1 + $0xea0] sm:$0xff]
      %v689 = vld [vmem:[%s1 + $0xea8] sm:$0xff]
      %v690 = vld [vmem:[%s1 + $0xeb0] sm:$0xff]
      %v691 = vld [vmem:[%s1 + $0xeb8] sm:$0xff]
      %v692 = vld [vmem:[%s1 + $0xec0] sm:$0xff]
      %v693 = vld [vmem:[%s1 + $0xec8] sm:$0xff]
      %v694 = vld [vmem:[%s1 + $0xed0] sm:$0xff]
      %v695 = vld [vmem:[%s1 + $0xed8] sm:$0xff]
      %v696 = vld [vmem:[%s1 + $0xee0] sm:$0xff]
      %v697 = vld [vmem:[%s1 + $0xee8] sm:$0xff]
      %v698 = vld [vmem:[%s1 + $0xef0] sm:$0xff]
      %v699 = vld [vmem:[%s1 + $0xef8] sm:$0xff]
      %v700 = vld [vmem:[%s1 + $0xf00] sm:$0xff]
      %v701 = vld [vmem:[%s1 + $0xf08] sm:$0xff]
      %v702 = vld [vmem:[%s1 + $0xf10] sm:$0xff]
      %v703 = vld [vmem:[%s1 + $0xf18] sm:$0xff]
      %v704 = vld [vmem:[%s1 + $0xf20] sm:$0xff]
      %v705 = vld [vmem:[%s1 + $0xf28] sm:$0xff]
      %v706 = vld [vmem:[%s1 + $0xf30] sm:$0xff]
      %v707 = vld [vmem:[%s1 + $0xf38] sm:$0xff]
      %v708 = vld [vmem:[%s1 + $0xf40] sm:$0xff]
      %v709 = vld [vmem:[%s1 + $0xf48] sm:$0xff]
      %v710 = vld [vmem:[%s1 + $0xf50] sm:$0xff]
      %v711 = vld [vmem:[%s1 + $0xf58] sm:$0xff]
      %v712 = vld [vmem:[%s1 + $0xf60] sm:$0xff]
      %v713 = vld [vmem:[%s1 + $0xf68] sm:$0xff]
      %v714 = vld [vmem:[%s1 + $0xf70] sm:$0xff]
      %v715 = vld [vmem:[%s1 + $0xf78] sm:$0xff]
      %v716 = vld [vmem:[%s1 + $0xf80] sm:$0xff]
      %v717 = vld [vmem:[%s1 + $0xf88] sm:$0xff]
      %v718 = vld [vmem:[%s1 + $0xf90] sm:$0xff]
      %v719 = vld [vmem:[%s1 + $0xf98] sm:$0xff]
      %v720 = vld [vmem:[%s1 + $0xfa0] sm:$0xff]
      %v721 = vld [vmem:[%s1 + $0xfa8] sm:$0xff]
      %v722 = vld [vmem:[%s1 + $0xfb0] sm:$0xff]
      %v723 = vld [vmem:[%s1 + $0xfb8] sm:$0xff]
      %v724 = vld [vmem:[%s1 + $0xfc0] sm:$0xff]
      %v725 = vld [vmem:[%s1 + $0xfc8] sm:$0xff]
      %v726 = vld [vmem:[%s1 + $0xfd0] sm:$0xff]
      %v727 = vld [vmem:[%s1 + $0xfd8] sm:$0xff]
      %v728 = vld [vmem:[%s1 + $0xfe0] sm:$0xff]
      %v729 = vld [vmem:[%s1 + $0xfe8] sm:$0xff]
      %v730 = vld [vmem:[%s1 + $0xff0] sm:$0xff]
      %v731 = vld [vmem:[%s1 + $0xff8] sm:$0xff]
      %v732 = vld [vmem:[%s1 + $0x1000] sm:$0xff]
      %v733 = vld [vmem:[%s1 + $0x1008] sm:$0xff]
      %v734 = vld [vmem:[%s1 + $0x1010] sm:$0xff]
      %v735 = vld [vmem:[%s1 + $0x1018] sm:$0xff]
      %v736 = vld [vmem:[%s1 + $0x1020] sm:$0xff]
      %v737 = vld [vmem:[%s1 + $0x1028] sm:$0xff]
      %v738 = vld [vmem:[%s1 + $0x1030] sm:$0xff]
      %v739 = vld [vmem:[%s1 + $0x1038] sm:$0xff]
      %v740 = vld [vmem:[%s1 + $0x1040] sm:$0xff]
      %v741 = vld [vmem:[%s1 + $0x1048] sm:$0xff]
      %v742 = vld [vmem:[%s1 + $0x1050] sm:$0xff]
      %v743 = vld [vmem:[%s1 + $0x1058] sm:$0xff]
      %v744 = vld [vmem:[%s1 + $0x1060] sm:$0xff]
      %v745 = vld [vmem:[%s1 + $0x1068] sm:$0xff]
      %v746 = vld [vmem:[%s1 + $0x1070] sm:$0xff]
      %v747 = vld [vmem:[%s1 + $0x1078] sm:$0xff]
      %v748 = vld [vmem:[%s1 + $0x1080] sm:$0xff]
      %v749 = vld [vmem:[%s1 + $0x1088] sm:$0xff]
      %v750 = vld [vmem:[%s1 + $0x1090] sm:$0xff]
      %v751 = vld [vmem:[%s1 + $0x1098] sm:$0xff]
      %v752 = vld [vmem:[%s1 + $0x10a0] sm:$0xff]
      %v753 = vld [vmem:[%s1 + $0x10a8] sm:$0xff]
      %v754 = vld [vmem:[%s1 + $0x10b0] sm:$0xff]
      %v755 = vld [vmem:[%s1 + $0x10b8] sm:$0xff]
      %v756 = vld [vmem:[%s1 + $0x10c0] sm:$0xff]
      %v757 = vld [vmem:[%s1 + $0x10c8] sm:$0xff]
      %v758 = vld [vmem:[%s1 + $0x10d0] sm:$0xff]
      %v759 = vld [vmem:[%s1 + $0x10d8] sm:$0xff]
      %v760 = vld [vmem:[%s1 + $0x10e0] sm:$0xff]
      %v761 = vld [vmem:[%s1 + $0x10e8] sm:$0xff]
      %v762 = vld [vmem:[%s1 + $0x10f0] sm:$0xff]
      %v763 = vld [vmem:[%s1 + $0x10f8] sm:$0xff]
      %v764 = vld [vmem:[%s1 + $0x1100] sm:$0xff]
      %v765 = vld [vmem:[%s1 + $0x1108] sm:$0xff]
      %v766 = vld [vmem:[%s1 + $0x1110] sm:$0xff]
      %v767 = vld [vmem:[%s1 + $0x1118] sm:$0xff]
      %v768 = vld [vmem:[%s1 + $0x1120] sm:$0xff]
      %v769 = vld [vmem:[%s1 + $0x1128] sm:$0xff]
      %v770 = vld [vmem:[%s1 + $0x1130] sm:$0xff]
      %v771 = vld [vmem:[%s1 + $0x1138] sm:$0xff]
      %v772 = vld [vmem:[%s1 + $0x1140] sm:$0xff]
      %v773 = vld [vmem:[%s1 + $0x1148] sm:$0xff]
      %v774 = vld [vmem:[%s1 + $0x1150] sm:$0xff]
      %v775 = vld [vmem:[%s1 + $0x1158] sm:$0xff]
      %v776 = vld [vmem:[%s1 + $0x1160] sm:$0xff]
      %v777 = vld [vmem:[%s1 + $0x1168] sm:$0xff]
      %v778 = vld [vmem:[%s1 + $0x1170] sm:$0xff]
      %v779 = vld [vmem:[%s1 + $0x1178] sm:$0xff]
      %v780 = vld [vmem:[%s1 + $0x1180] sm:$0xff]
      %v781 = vld [vmem:[%s1 + $0x1188] sm:$0xff]
      %v782 = vld [vmem:[%s1 + $0x1190] sm:$0xff]
      %v783 = vld [vmem:[%s1 + $0x1198] sm:$0xff]
      %v784 = vld [vmem:[%s1 + $0x11a0] sm:$0xff]
      %v785 = vld [vmem:[%s1 + $0x11a8] sm:$0xff]
      %v786 = vld [vmem:[%s1 + $0x11b0] sm:$0xff]
      %v787 = vld [vmem:[%s1 + $0x11b8] sm:$0xff]
      %v788 = vld [vmem:[%s1 + $0x11c0] sm:$0xff]
      %v789 = vld [vmem:[%s1 + $0x11c8] sm:$0xff]
      %v790 = vld [vmem:[%s1 + $0x11d0] sm:$0xff]
      %v791 = vld [vmem:[%s1 + $0x11d8] sm:$0xff]
      %v792 = vld [vmem:[%s1 + $0x11e0] sm:$0xff]
      %v793 = vld [vmem:[%s1 + $0x11e8] sm:$0xff]
      %v794 = vld [vmem:[%s1 + $0x11f0] sm:$0xff]
      %v795 = vld [vmem:[%s1 + $0x11f8] sm:$0xff]
      %v796 = vld [vmem:[%s1 + $0x1200] sm:$0xff]
      %v797 = vld [vmem:[%s1 + $0x1208] sm:$0xff]
      %v798 = vld [vmem:[%s1 + $0x1210] sm:$0xff]
      %v799 = vld [vmem:[%s1 + $0x1218] sm:$0xff]
      %v800 = vld [vmem:[%s1 + $0x1220] sm:$0xff]
      %v801 = vld [vmem:[%s1 + $0x1228] sm:$0xff]
      %v802 = vld [vmem:[%s1 + $0x1230] sm:$0xff]
      %v803 = vld [vmem:[%s1 + $0x1238] sm:$0xff]
      %v804 = vld [vmem:[%s1 + $0x1240] sm:$0xff]
      %v805 = vld [vmem:[%s1 + $0x1248] sm:$0xff]
      %v806 = vld [vmem:[%s1 + $0x1250] sm:$0xff]
      %v807 = vld [vmem:[%s1 + $0x1258] sm:$0xff]
      %v808 = vld [vmem:[%s1 + $0x1260] sm:$0xff]
      %v809 = vld [vmem:[%s1 + $0x1268] sm:$0xff]
      %v810 = vld [vmem:[%s1 + $0x1270] sm:$0xff]
      %v811 = vld [vmem:[%s1 + $0x1278] sm:$0xff]
      %v812 = vld [vmem:[%s1 + $0x1280] sm:$0xff]
      %v813 = vld [vmem:[%s1 + $0x1288] sm:$0xff]
      %v814 = vld [vmem:[%s1 + $0x1290] sm:$0xff]
      %v815 = vld [vmem:[%s1 + $0x1298] sm:$0xff]
      %v816 = vld [vmem:[%s1 + $0x12a0] sm:$0xff]
      %v817 = vld [vmem:[%s1 + $0x12a8] sm:$0xff]
      %v818 = vld [vmem:[%s1 + $0x12b0] sm:$0xff]
      %v819 = vld [vmem:[%s1 + $0x12b8] sm:$0xff]
      %v820 = vld [vmem:[%s1 + $0x12c0] sm:$0xff]
      %v821 = vld [vmem:[%s1 + $0x12c8] sm:$0xff]
      %v822 = vld [vmem:[%s1 + $0x12d0] sm:$0xff]
      %v823 = vld [vmem:[%s1 + $0x12d8] sm:$0xff]
      %v824 = vld [vmem:[%s1 + $0x12e0] sm:$0xff]
      %v825 = vld [vmem:[%s1 + $0x12e8] sm:$0xff]
      %v826 = vld [vmem:[%s1 + $0x12f0] sm:$0xff]
      %v827 = vld [vmem:[%s1 + $0x12f8] sm:$0xff]
      %v828 = vld [vmem:[%s1 + $0x1300] sm:$0xff]
      %v829 = vld [vmem:[%s1 + $0x1308] sm:$0xff]
      %v830 = vld [vmem:[%s1 + $0x1310] sm:$0xff]
      %v831 = vld [vmem:[%s1 + $0x1318] sm:$0xff]
      %v832 = vld [vmem:[%s1 + $0x1320] sm:$0xff]
      %v833 = vld [vmem:[%s1 + $0x1328] sm:$0xff]
      %v834 = vld [vmem:[%s1 + $0x1330] sm:$0xff]
      %v835 = vld [vmem:[%s1 + $0x1338] sm:$0xff]
      %v836 = vld [vmem:[%s1 + $0x1340] sm:$0xff]
      %v837 = vld [vmem:[%s1 + $0x1348] sm:$0xff]
      %v838 = vld [vmem:[%s1 + $0x1350] sm:$0xff]
      %v839 = vld [vmem:[%s1 + $0x1358] sm:$0xff]
      %v840 = vld [vmem:[%s1 + $0x1360] sm:$0xff]
      %v841 = vld [vmem:[%s1 + $0x1368] sm:$0xff]
      %v842 = vld [vmem:[%s1 + $0x1370] sm:$0xff]
      %v843 = vld [vmem:[%s1 + $0x1378] sm:$0xff]
      %v844 = vld [vmem:[%s1 + $0x1380] sm:$0xff]
      %v845 = vld [vmem:[%s1 + $0x1388] sm:$0xff]
      %v846 = vld [vmem:[%s1 + $0x1390] sm:$0xff]
      %v847 = vld [vmem:[%s1 + $0x1398] sm:$0xff]
      %v848 = vld [vmem:[%s1 + $0x13a0] sm:$0xff]
      %v849 = vld [vmem:[%s1 + $0x13a8] sm:$0xff]
      %v850 = vld [vmem:[%s1 + $0x13b0] sm:$0xff]
      %v851 = vld [vmem:[%s1 + $0x13b8] sm:$0xff]
      %v852 = vld [vmem:[%s1 + $0x13c0] sm:$0xff]
      %v853 = vld [vmem:[%s1 + $0x13c8] sm:$0xff]
      %v854 = vld [vmem:[%s1 + $0x13d0] sm:$0xff]
      %v855 = vld [vmem:[%s1 + $0x13d8] sm:$0xff]
      %v856 = vld [vmem:[%s1 + $0x13e0] sm:$0xff]
      %v857 = vld [vmem:[%s1 + $0x13e8] sm:$0xff]
      %v858 = vld [vmem:[%s1 + $0x13f0] sm:$0xff]
      %v859 = vld [vmem:[%s1 + $0x13f8] sm:$0xff]
      %v860 = vld [vmem:[%s1 + $0x1400] sm:$0xff]
      %v861 = vld [vmem:[%s1 + $0x1408] sm:$0xff]
      %v862 = vld [vmem:[%s1 + $0x1410] sm:$0xff]
      %v863 = vld [vmem:[%s1 + $0x1418] sm:$0xff]
      %v864 = vld [vmem:[%s1 + $0x1420] sm:$0xff]
      %v865 = vld [vmem:[%s1 + $0x1428] sm:$0xff]
      %v866 = vld [vmem:[%s1 + $0x1430] sm:$0xff]
      %v867 = vld [vmem:[%s1 + $0x1438] sm:$0xff]
      %v868 = vld [vmem:[%s1 + $0x1440] sm:$0xff]
      %v869 = vld [vmem:[%s1 + $0x1448] sm:$0xff]
      %v870 = vld [vmem:[%s1 + $0x1450] sm:$0xff]
      %v871 = vld [vmem:[%s1 + $0x1458] sm:$0xff]
      %v872 = vld [vmem:[%s1 + $0x1460] sm:$0xff]
      %v873 = vld [vmem:[%s1 + $0x1468] sm:$0xff]
      %v874 = vld [vmem:[%s1 + $0x1470] sm:$0xff]
      %v875 = vld [vmem:[%s1 + $0x1478] sm:$0xff]
      %v876 = vld [vmem:[%s1 + $0x1480] sm:$0xff]
      %v877 = vld [vmem:[%s1 + $0x1488] sm:$0xff]
      %v878 = vld [vmem:[%s1 + $0x1490] sm:$0xff]
      %v879 = vld [vmem:[%s1 + $0x1498] sm:$0xff]
      %v880 = vld [vmem:[%s1 + $0x14a0] sm:$0xff]
      %v881 = vld [vmem:[%s1 + $0x14a8] sm:$0xff]
      %v882 = vld [vmem:[%s1 + $0x14b0] sm:$0xff]
      %v883 = vld [vmem:[%s1 + $0x14b8] sm:$0xff]
      %v884 = vld [vmem:[%s1 + $0x14c0] sm:$0xff]
      %v885 = vld [vmem:[%s1 + $0x14c8] sm:$0xff]
      %v886 = vld [vmem:[%s1 + $0x14d0] sm:$0xff]
      %v887 = vld [vmem:[%s1 + $0x14d8] sm:$0xff]
      %v888 = vld [vmem:[%s1 + $0x14e0] sm:$0xff]
      %v889 = vld [vmem:[%s1 + $0x14e8] sm:$0xff]
      %v890 = vld [vmem:[%s1 + $0x14f0] sm:$0xff]
      %v891 = vld [vmem:[%s1 + $0x14f8] sm:$0xff]
      %v892 = vld [vmem:[%s1 + $0x1500] sm:$0xff]
      %v893 = vld [vmem:[%s1 + $0x1508] sm:$0xff]
      %v894 = vld [vmem:[%s1 + $0x1510] sm:$0xff]
      %v895 = vld [vmem:[%s1 + $0x1518] sm:$0xff]
      %v896 = vld [vmem:[%s1 + $0x1520] sm:$0xff]
      %v897 = vld [vmem:[%s1 + $0x1528] sm:$0xff]
      %v898 = vld [vmem:[%s1 + $0x1530] sm:$0xff]
      %v899 = vld [vmem:[%s1 + $0x1538] sm:$0xff]
      %v900 = vld [vmem:[%s1 + $0x1540] sm:$0xff]
      %v901 = vld [vmem:[%s1 + $0x1548] sm:$0xff]
      %v902 = vld [vmem:[%s1 + $0x1550] sm:$0xff]
      %v903 = vld [vmem:[%s1 + $0x1558] sm:$0xff]
      %v904 = vld [vmem:[%s1 + $0x1560] sm:$0xff]
      %v905 = vld [vmem:[%s1 + $0x1568] sm:$0xff]
      %v906 = vld [vmem:[%s1 + $0x1570] sm:$0xff]
      %v907 = vld [vmem:[%s1 + $0x1578] sm:$0xff]
      %v908 = vld [vmem:[%s1 + $0x1580] sm:$0xff]
      %v909 = vld [vmem:[%s1 + $0x1588] sm:$0xff]
      %v910 = vld [vmem:[%s1 + $0x1590] sm:$0xff]
      %v911 = vld [vmem:[%s1 + $0x1598] sm:$0xff]
      %v912 = vld [vmem:[%s1 + $0x15a0] sm:$0xff]
      %v913 = vld [vmem:[%s1 + $0x15a8] sm:$0xff]
      %v914 = vld [vmem:[%s1 + $0x15b0] sm:$0xff]
      %v915 = vld [vmem:[%s1 + $0x15b8] sm:$0xff]
      %v916 = vld [vmem:[%s1 + $0x15c0] sm:$0xff]
      %v917 = vld [vmem:[%s1 + $0x15c8] sm:$0xff]
      %v918 = vld [vmem:[%s1 + $0x15d0] sm:$0xff]
      %v919 = vld [vmem:[%s1 + $0x15d8] sm:$0xff]
      %v920 = vld [vmem:[%s1 + $0x15e0] sm:$0xff]
      %v921 = vld [vmem:[%s1 + $0x15e8] sm:$0xff]
      %v922 = vld [vmem:[%s1 + $0x15f0] sm:$0xff]
      %v923 = vld [vmem:[%s1 + $0x15f8] sm:$0xff]
      %v924 = vld [vmem:[%s1 + $0x1600] sm:$0xff]
      %v925 = vld [vmem:[%s1 + $0x1608] sm:$0xff]
      %v926 = vld [vmem:[%s1 + $0x1610] sm:$0xff]
      %v927 = vld [vmem:[%s1 + $0x1618] sm:$0xff]
      %v928 = vld [vmem:[%s1 + $0x1620] sm:$0xff]
      %v929 = vld [vmem:[%s1 + $0x1628] sm:$0xff]
      %v930 = vld [vmem:[%s1 + $0x1630] sm:$0xff]
      %v931 = vld [vmem:[%s1 + $0x1638] sm:$0xff]
      %v932 = vld [vmem:[%s1 + $0x1640] sm:$0xff]
      %v933 = vld [vmem:[%s1 + $0x1648] sm:$0xff]
      %v934 = vld [vmem:[%s1 + $0x1650] sm:$0xff]
      %v935 = vld [vmem:[%s1 + $0x1658] sm:$0xff]
      %v936 = vld [vmem:[%s1 + $0x1660] sm:$0xff]
      %v937 = vld [vmem:[%s1 + $0x1668] sm:$0xff]
      %v938 = vld [vmem:[%s1 + $0x1670] sm:$0xff]
      %v939 = vld [vmem:[%s1 + $0x1678] sm:$0xff]
      %v940 = vld [vmem:[%s1 + $0x1680] sm:$0xff]
      %v941 = vld [vmem:[%s1 + $0x1688] sm:$0xff]
      %v942 = vld [vmem:[%s1 + $0x1690] sm:$0xff]
      %v943 = vld [vmem:[%s1 + $0x1698] sm:$0xff]
      %v944 = vld [vmem:[%s1 + $0x16a0] sm:$0xff]
      %v945 = vld [vmem:[%s1 + $0x16a8] sm:$0xff]
      %v946 = vld [vmem:[%s1 + $0x16b0] sm:$0xff]
      %v947 = vld [vmem:[%s1 + $0x16b8] sm:$0xff]
      %v948 = vld [vmem:[%s1 + $0x16c0] sm:$0xff]
      %v949 = vld [vmem:[%s1 + $0x16c8] sm:$0xff]
      %v950 = vld [vmem:[%s1 + $0x16d0] sm:$0xff]
      %v951 = vld [vmem:[%s1 + $0x16d8] sm:$0xff]
      %v952 = vld [vmem:[%s1 + $0x16e0] sm:$0xff]
      %v953 = vld [vmem:[%s1 + $0x16e8] sm:$0xff]
      %v954 = vld [vmem:[%s1 + $0x16f0] sm:$0xff]
      %v955 = vld [vmem:[%s1 + $0x16f8] sm:$0xff]
      %v956 = vld [vmem:[%s1 + $0x1700] sm:$0xff]
      %v957 = vld [vmem:[%s1 + $0x1708] sm:$0xff]
      %v958 = vld [vmem:[%s1 + $0x1710] sm:$0xff]
      %v959 = vld [vmem:[%s1 + $0x1718] sm:$0xff]
      %v960 = vld [vmem:[%s1 + $0x1720] sm:$0xff]
      %v961 = vld [vmem:[%s1 + $0x1728] sm:$0xff]
      %v962 = vld [vmem:[%s1 + $0x1730] sm:$0xff]
      %v963 = vld [vmem:[%s1 + $0x1738] sm:$0xff]
      %v964 = vld [vmem:[%s1 + $0x1740] sm:$0xff]
      %v965 = vld [vmem:[%s1 + $0x1748] sm:$0xff]
      %v966 = vld [vmem:[%s1 + $0x1750] sm:$0xff]
      %v967 = vld [vmem:[%s1 + $0x1758] sm:$0xff]
      %v968 = vld [vmem:[%s1 + $0x1760] sm:$0xff]
      %v969 = vld [vmem:[%s1 + $0x1768] sm:$0xff]
      %v970 = vld [vmem:[%s1 + $0x1770] sm:$0xff]
      %v971 = vld [vmem:[%s1 + $0x1778] sm:$0xff]
      %v972 = vld [vmem:[%s1 + $0x1780] sm:$0xff]
      %v973 = vld [vmem:[%s1 + $0x1788] sm:$0xff]
      %v974 = vld [vmem:[%s1 + $0x1790] sm:$0xff]
      %v975 = vld [vmem:[%s1 + $0x1798] sm:$0xff]
      %v976 = vld [vmem:[%s1 + $0x17a0] sm:$0xff]
      %v977 = vld [vmem:[%s1 + $0x17a8] sm:$0xff]
      %v978 = vld [vmem:[%s1 + $0x17b0] sm:$0xff]
      %v979 = vld [vmem:[%s1 + $0x17b8] sm:$0xff]
      %v980 = vld [vmem:[%s1 + $0x17c0] sm:$0xff]
      %v981 = vld [vmem:[%s1 + $0x17c8] sm:$0xff]
      %v982 = vld [vmem:[%s1 + $0x17d0] sm:$0xff]
      %v983 = vld [vmem:[%s1 + $0x17d8] sm:$0xff]
      %v984 = vld [vmem:[%s1 + $0x17e0] sm:$0xff]
      %v985 = vld [vmem:[%s1 + $0x17e8] sm:$0xff]
      %v986 = vld [vmem:[%s1 + $0x17f0] sm:$0xff]
      %v987 = vld [vmem:[%s1 + $0x17f8] sm:$0xff]
      %v988 = vld [vmem:[%s1 + $0x1800] sm:$0xff]
      %v989 = vld [vmem:[%s1 + $0x1808] sm:$0xff]
      %v990 = vld [vmem:[%s1 + $0x1810] sm:$0xff]
      %v991 = vld [vmem:[%s1 + $0x1818] sm:$0xff]
      %v992 = vld [vmem:[%s1 + $0x1820] sm:$0xff]
      %v993 = vld [vmem:[%s1 + $0x1828] sm:$0xff]
      %v994 = vld [vmem:[%s1 + $0x1830] sm:$0xff]
      %v995 = vld [vmem:[%s1 + $0x1838] sm:$0xff]
      %v996 = vld [vmem:[%s1 + $0x1840] sm:$0xff]
      %v997 = vld [vmem:[%s1 + $0x1848] sm:$0xff]
      %v998 = vld [vmem:[%s1 + $0x1850] sm:$0xff]
      %v999 = vld [vmem:[%s1 + $0x1858] sm:$0xff]
      %v1000 = vld [vmem:[%s1 + $0x1860] sm:$0xff]
      %v1001 = vld [vmem:[%s1 + $0x1868] sm:$0xff]
      %v1002 = vld [vmem:[%s1 + $0x1870] sm:$0xff]
      %v1003 = vld [vmem:[%s1 + $0x1878] sm:$0xff]
      %v1004 = vld [vmem:[%s1 + $0x1880] sm:$0xff]
      %v1005 = vld [vmem:[%s1 + $0x1888] sm:$0xff]
      %v1006 = vld [vmem:[%s1 + $0x1890] sm:$0xff]
      %v1007 = vld [vmem:[%s1 + $0x1898] sm:$0xff]
      %v1008 = vld [vmem:[%s1 + $0x18a0] sm:$0xff]
      %v1009 = vld [vmem:[%s1 + $0x18a8] sm:$0xff]
      %v1010 = vld [vmem:[%s1 + $0x18b0] sm:$0xff]
      %v1011 = vld [vmem:[%s1 + $0x18b8] sm:$0xff]
      %v1012 = vld [vmem:[%s1 + $0x18c0] sm:$0xff]
      %v1013 = vld [vmem:[%s1 + $0x18c8] sm:$0xff]
      %v1014 = vld [vmem:[%s1 + $0x18d0] sm:$0xff]
      %v1015 = vld [vmem:[%s1 + $0x18d8] sm:$0xff]
      %v1016 = vld [vmem:[%s1 + $0x18e0] sm:$0xff]
      %v1017 = vld [vmem:[%s1 + $0x18e8] sm:$0xff]
      %v1018 = vld [vmem:[%s1 + $0x18f0] sm:$0xff]
      %v1019 = vld [vmem:[%s1 + $0x18f8] sm:$0xff]
      %v1020 = vld [vmem:[%s1 + $0x1900] sm:$0xff]
      %v1021 = vld [vmem:[%s1 + $0x1908] sm:$0xff]
      %v1022 = vld [vmem:[%s1 + $0x1910] sm:$0xff]
      %v1023 = vld [vmem:[%s1 + $0x1918] sm:$0xff]
      %v1024 = vld [vmem:[%s1 + $0x1920] sm:$0xff]
      %v1025 = vld [vmem:[%s1 + $0x1928] sm:$0xff]
      %v1026 = vld [vmem:[%s1 + $0x1930] sm:$0xff]
      %v1027 = vld [vmem:[%s1 + $0x1938] sm:$0xff]
      %v1028 = vld [vmem:[%s1 + $0x1940] sm:$0xff]
      %v1029 = vld [vmem:[%s1 + $0x1948] sm:$0xff]
      %v1030 = vld [vmem:[%s1 + $0x1950] sm:$0xff]
      %v1031 = vld [vmem:[%s1 + $0x1958] sm:$0xff]
      %v1032 = vld [vmem:[%s1 + $0x1960] sm:$0xff]
      %v1033 = vld [vmem:[%s1 + $0x1968] sm:$0xff]
      %v1034 = vld [vmem:[%s1 + $0x1970] sm:$0xff]
      %v1035 = vld [vmem:[%s1 + $0x1978] sm:$0xff]
      %v1036 = vld [vmem:[%s1 + $0x1980] sm:$0xff]
      %v1037 = vld [vmem:[%s1 + $0x1988] sm:$0xff]
      %v1038 = vld [vmem:[%s1 + $0x1990] sm:$0xff]
      %v1039 = vld [vmem:[%s1 + $0x1998] sm:$0xff]
      %v1040 = vld [vmem:[%s1 + $0x19a0] sm:$0xff]
      %v1041 = vld [vmem:[%s1 + $0x19a8] sm:$0xff]
      %v1042 = vld [vmem:[%s1 + $0x19b0] sm:$0xff]
      %v1043 = vld [vmem:[%s1 + $0x19b8] sm:$0xff]
      %v1044 = vld [vmem:[%s1 + $0x19c0] sm:$0xff]
      %v1045 = vld [vmem:[%s1 + $0x19c8] sm:$0xff]
      %v1046 = vld [vmem:[%s1 + $0x19d0] sm:$0xff]
      %v1047 = vld [vmem:[%s1 + $0x19d8] sm:$0xff]
      %v1048 = vld [vmem:[%s1 + $0x19e0] sm:$0xff]
      %v1049 = vld [vmem:[%s1 + $0x19e8] sm:$0xff]
      %v1050 = vld [vmem:[%s1 + $0x19f0] sm:$0xff]
      %v1051 = vld [vmem:[%s1 + $0x19f8] sm:$0xff]
      %v1052 = vld [vmem:[%s1 + $0x1a00] sm:$0xff]
      %v1053 = vld [vmem:[%s1 + $0x1a08] sm:$0xff]
      %v1054 = vld [vmem:[%s1 + $0x1a10] sm:$0xff]
      %v1055 = vld [vmem:[%s1 + $0x1a18] sm:$0xff]
      %v1056 = vld [vmem:[%s1 + $0x1a20] sm:$0xff]
      %v1057 = vld [vmem:[%s1 + $0x1a28] sm:$0xff]
      %v1058 = vld [vmem:[%s1 + $0x1a30] sm:$0xff]
      %v1059 = vld [vmem:[%s1 + $0x1a38] sm:$0xff]
      %v1060 = vld [vmem:[%s1 + $0x1a40] sm:$0xff]
      %v1061 = vld [vmem:[%s1 + $0x1a48] sm:$0xff]
      %v1062 = vld [vmem:[%s1 + $0x1a50] sm:$0xff]
      %v1063 = vld [vmem:[%s1 + $0x1a58] sm:$0xff]
      %v1064 = vld [vmem:[%s1 + $0x1a60] sm:$0xff]
      %v1065 = vld [vmem:[%s1 + $0x1a68] sm:$0xff]
      %v1066 = vld [vmem:[%s1 + $0x1a70] sm:$0xff]
      %v1067 = vld [vmem:[%s1 + $0x1a78] sm:$0xff]
      %v1068 = vld [vmem:[%s1 + $0x1a80] sm:$0xff]
      %v1069 = vld [vmem:[%s1 + $0x1a88] sm:$0xff]
      %v1070 = vld [vmem:[%s1 + $0x1a90] sm:$0xff]
      %v1071 = vld [vmem:[%s1 + $0x1a98] sm:$0xff]
      %v1072 = vld [vmem:[%s1 + $0x1aa0] sm:$0xff]
      %v1073 = vld [vmem:[%s1 + $0x1aa8] sm:$0xff]
      %v1074 = vld [vmem:[%s1 + $0x1ab0] sm:$0xff]
      %v1075 = vld [vmem:[%s1 + $0x1ab8] sm:$0xff]
      %v1076 = vld [vmem:[%s1 + $0x1ac0] sm:$0xff]
      %v1077 = vld [vmem:[%s1 + $0x1ac8] sm:$0xff]
      %v1078 = vld [vmem:[%s1 + $0x1ad0] sm:$0xff]
      %v1079 = vld [vmem:[%s1 + $0x1ad8] sm:$0xff]
      %v1080 = vld [vmem:[%s1 + $0x1ae0] sm:$0xff]
      %v1081 = vld [vmem:[%s1 + $0x1ae8] sm:$0xff]
      %v1082 = vld [vmem:[%s1 + $0x1af0] sm:$0xff]
      %v1083 = vld [vmem:[%s1 + $0x1af8] sm:$0xff]
      %v1084 = vld [vmem:[%s1 + $0x1b00] sm:$0xff]
      %v1085 = vld [vmem:[%s1 + $0x1b08] sm:$0xff]
      %v1086 = vld [vmem:[%s1 + $0x1b10] sm:$0xff]
      %v1087 = vld [vmem:[%s1 + $0x1b18] sm:$0xff]
      %v1088 = vld [vmem:[%s1 + $0x1b20] sm:$0xff]
      %v1089 = vld [vmem:[%s1 + $0x1b28] sm:$0xff]
      %v1090 = vld [vmem:[%s1 + $0x1b30] sm:$0xff]
      %v1091 = vld [vmem:[%s1 + $0x1b38] sm:$0xff]
      %v1092 = vld [vmem:[%s1 + $0x1b40] sm:$0xff]
      %v1093 = vld [vmem:[%s1 + $0x1b48] sm:$0xff]
      %v1094 = vld [vmem:[%s1 + $0x1b50] sm:$0xff]
      %v1095 = vld [vmem:[%s1 + $0x1b58] sm:$0xff]
      %v1096 = vld [vmem:[%s1 + $0x1b60] sm:$0xff]
      %v1097 = vld [vmem:[%s1 + $0x1b68] sm:$0xff]
      %v1098 = vld [vmem:[%s1 + $0x1b70] sm:$0xff]
      %v1099 = vld [vmem:[%s1 + $0x1b78] sm:$0xff]
      %v1100 = vld [vmem:[%s1 + $0x1b80] sm:$0xff]
      %v1101 = vld [vmem:[%s1 + $0x1b88] sm:$0xff]
      %v1102 = vld [vmem:[%s1 + $0x1b90] sm:$0xff]
      %v1103 = vld [vmem:[%s1 + $0x1b98] sm:$0xff]
      %v1104 = vld [vmem:[%s1 + $0x1ba0] sm:$0xff]
      %v1105 = vld [vmem:[%s1 + $0x1ba8] sm:$0xff]
      %v1106 = vld [vmem:[%s1 + $0x1bb0] sm:$0xff]
      %v1107 = vld [vmem:[%s1 + $0x1bb8] sm:$0xff]
      %v1108 = vld [vmem:[%s1 + $0x1bc0] sm:$0xff]
      %v1109 = vld [vmem:[%s1 + $0x1bc8] sm:$0xff]
      %v1110 = vld [vmem:[%s1 + $0x1bd0] sm:$0xff]
      %v1111 = vld [vmem:[%s1 + $0x1bd8] sm:$0xff]
      %v1112 = vld [vmem:[%s1 + $0x1be0] sm:$0xff]
      %v1113 = vld [vmem:[%s1 + $0x1be8] sm:$0xff]
      %v1114 = vld [vmem:[%s1 + $0x1bf0] sm:$0xff]
      %v1115 = vld [vmem:[%s1 + $0x1bf8] sm:$0xff]
      %v1116 = vld [vmem:[%s1 + $0x1c00] sm:$0xff]
      %v1117 = vld [vmem:[%s1 + $0x1c08] sm:$0xff]
      %v1118 = vld [vmem:[%s1 + $0x1c10] sm:$0xff]
      %v1119 = vld [vmem:[%s1 + $0x1c18] sm:$0xff]
      %v1120 = vld [vmem:[%s1 + $0x1c20] sm:$0xff]
      %v1121 = vld [vmem:[%s1 + $0x1c28] sm:$0xff]
      %v1122 = vld [vmem:[%s1 + $0x1c30] sm:$0xff]
      %v1123 = vld [vmem:[%s1 + $0x1c38] sm:$0xff]
      %v1124 = vld [vmem:[%s1 + $0x1c40] sm:$0xff]
      %v1125 = vld [vmem:[%s1 + $0x1c48] sm:$0xff]
      %v1126 = vld [vmem:[%s1 + $0x1c50] sm:$0xff]
      %v1127 = vld [vmem:[%s1 + $0x1c58] sm:$0xff]
      %v1128 = vld [vmem:[%s1 + $0x1c60] sm:$0xff]
      %v1129 = vld [vmem:[%s1 + $0x1c68] sm:$0xff]
      %v1130 = vld [vmem:[%s1 + $0x1c70] sm:$0xff]
      %v1131 = vld [vmem:[%s1 + $0x1c78] sm:$0xff]
      %v1132 = vld [vmem:[%s1 + $0x1c80] sm:$0xff]
      %v1133 = vld [vmem:[%s1 + $0x1c88] sm:$0xff]
      %v1134 = vld [vmem:[%s1 + $0x1c90] sm:$0xff]
      %v1135 = vld [vmem:[%s1 + $0x1c98] sm:$0xff]
      %v1136 = vld [vmem:[%s1 + $0x1ca0] sm:$0xff]
      %v1137 = vld [vmem:[%s1 + $0x1ca8] sm:$0xff]
      %v1138 = vld [vmem:[%s1 + $0x1cb0] sm:$0xff]
      %v1139 = vld [vmem:[%s1 + $0x1cb8] sm:$0xff]
      %v1140 = vld [vmem:[%s1 + $0x1cc0] sm:$0xff]
      %v1141 = vld [vmem:[%s1 + $0x1cc8] sm:$0xff]
      %v1142 = vld [vmem:[%s1 + $0x1cd0] sm:$0xff]
      %v1143 = vld [vmem:[%s1 + $0x1cd8] sm:$0xff]
      %v1144 = vld [vmem:[%s1 + $0x1ce0] sm:$0xff]
      %v1145 = vld [vmem:[%s1 + $0x1ce8] sm:$0xff]
      %v1146 = vld [vmem:[%s1 + $0x1cf0] sm:$0xff]
      %v1147 = vld [vmem:[%s1 + $0x1cf8] sm:$0xff]
      %v1148 = vld [vmem:[%s1 + $0x1d00] sm:$0xff]
      %v1149 = vld [vmem:[%s1 + $0x1d08] sm:$0xff]
      %v1150 = vld [vmem:[%s1 + $0x1d10] sm:$0xff]
      %v1151 = vld [vmem:[%s1 + $0x1d18] sm:$0xff]
      %v1152 = vld [vmem:[%s1 + $0x1d20] sm:$0xff]
      %v1153 = vld [vmem:[%s1 + $0x1d28] sm:$0xff]
      %v1154 = vld [vmem:[%s1 + $0x1d30] sm:$0xff]
      %v1155 = vld [vmem:[%s1 + $0x1d38] sm:$0xff]
      %v1156 = vld [vmem:[%s1 + $0x1d40] sm:$0xff]
      %v1157 = vld [vmem:[%s1 + $0x1d48] sm:$0xff]
      %v1158 = vld [vmem:[%s1 + $0x1d50] sm:$0xff]
      %v1159 = vld [vmem:[%s1 + $0x1d58] sm:$0xff]
      %v1160 = vld [vmem:[%s1 + $0x1d60] sm:$0xff]
      %v1161 = vld [vmem:[%s1 + $0x1d68] sm:$0xff]
      %v1162 = vld [vmem:[%s1 + $0x1d70] sm:$0xff]
      %v1163 = vld [vmem:[%s1 + $0x1d78] sm:$0xff]
      %v1164 = vld [vmem:[%s1 + $0x1d80] sm:$0xff]
      %v1165 = vld [vmem:[%s1 + $0x1d88] sm:$0xff]
      %v1166 = vld [vmem:[%s1 + $0x1d90] sm:$0xff]
      %v1167 = vld [vmem:[%s1 + $0x1d98] sm:$0xff]
      %v1168 = vld [vmem:[%s1 + $0x1da0] sm:$0xff]
      %v1169 = vld [vmem:[%s1 + $0x1da8] sm:$0xff]
      %v1170 = vld [vmem:[%s1 + $0x1db0] sm:$0xff]
      %v1171 = vld [vmem:[%s1 + $0x1db8] sm:$0xff]
      %v1172 = vld [vmem:[%s1 + $0x1dc0] sm:$0xff]
      %v1173 = vld [vmem:[%s1 + $0x1dc8] sm:$0xff]
      %v1174 = vld [vmem:[%s1 + $0x1dd0] sm:$0xff]
      %v1175 = vld [vmem:[%s1 + $0x1dd8] sm:$0xff]
      %v1176 = vld [vmem:[%s1 + $0x1de0] sm:$0xff]
      %v1177 = vld [vmem:[%s1 + $0x1de8] sm:$0xff]
      %v1178 = vld [vmem:[%s1 + $0x1df0] sm:$0xff]
      %v1179 = vld [vmem:[%s1 + $0x1df8] sm:$0xff]
      %v1180 = vld [vmem:[%s1 + $0x1e00] sm:$0xff]
      %v1181 = vld [vmem:[%s1 + $0x1e08] sm:$0xff]
      %v1182 = vld [vmem:[%s1 + $0x1e10] sm:$0xff]
      %v1183 = vld [vmem:[%s1 + $0x1e18] sm:$0xff]
      %v1184 = vld [vmem:[%s1 + $0x1e20] sm:$0xff]
      %v1185 = vld [vmem:[%s1 + $0x1e28] sm:$0xff]
      %v1186 = vld [vmem:[%s1 + $0x1e30] sm:$0xff]
      %v1187 = vld [vmem:[%s1 + $0x1e38] sm:$0xff]
      %v1188 = vld [vmem:[%s1 + $0x1e40] sm:$0xff]
      %v1189 = vld [vmem:[%s1 + $0x1e48] sm:$0xff]
      %v1190 = vld [vmem:[%s1 + $0x1e50] sm:$0xff]
      %v1191 = vld [vmem:[%s1 + $0x1e58] sm:$0xff]
      %v1192 = vld [vmem:[%s1 + $0x1e60] sm:$0xff]
      %v1193 = vld [vmem:[%s1 + $0x1e68] sm:$0xff]
      %v1194 = vld [vmem:[%s1 + $0x1e70] sm:$0xff]
      %v1195 = vld [vmem:[%s1 + $0x1e78] sm:$0xff]
      %v1196 = vld [vmem:[%s1 + $0x1e80] sm:$0xff]
      %v1197 = vld [vmem:[%s1 + $0x1e88] sm:$0xff]
      %v1198 = vld [vmem:[%s1 + $0x1e90] sm:$0xff]
      %v1199 = vld [vmem:[%s1 + $0x1e98] sm:$0xff]
      %v1200 = vld [vmem:[%s1 + $0x1ea0] sm:$0xff]
      %v1201 = vld [vmem:[%s1 + $0x1ea8] sm:$0xff]
      %v1202 = vld [vmem:[%s1 + $0x1eb0] sm:$0xff]
      %v1203 = vld [vmem:[%s1 + $0x1eb8] sm:$0xff]
      %v1204 = vld [vmem:[%s1 + $0x1ec0] sm:$0xff]
      %v1205 = vld [vmem:[%s1 + $0x1ec8] sm:$0xff]
      %v1206 = vld [vmem:[%s1 + $0x1ed0] sm:$0xff]
      %v1207 = vld [vmem:[%s1 + $0x1ed8] sm:$0xff]
      %v1208 = vld [vmem:[%s1 + $0x1ee0] sm:$0xff]
      %v1209 = vld [vmem:[%s1 + $0x1ee8] sm:$0xff]
      %v1210 = vld [vmem:[%s1 + $0x1ef0] sm:$0xff]
      %v1211 = vld [vmem:[%s1 + $0x1ef8] sm:$0xff]
      %v1212 = vld [vmem:[%s1 + $0x1f00] sm:$0xff]
      %v1213 = vld [vmem:[%s1 + $0x1f08] sm:$0xff]
      %v1214 = vld [vmem:[%s1 + $0x1f10] sm:$0xff]
      %v1215 = vld [vmem:[%s1 + $0x1f18] sm:$0xff]
      %v1216 = vld [vmem:[%s1 + $0x1f20] sm:$0xff]
      %v1217 = vld [vmem:[%s1 + $0x1f28] sm:$0xff]
      %v1218 = vld [vmem:[%s1 + $0x1f30] sm:$0xff]
      %v1219 = vld [vmem:[%s1 + $0x1f38] sm:$0xff]
      %v1220 = vld [vmem:[%s1 + $0x1f40] sm:$0xff]
      %v1221 = vld [vmem:[%s1 + $0x1f48] sm:$0xff]
      %v1222 = vld [vmem:[%s1 + $0x1f50] sm:$0xff]
      %v1223 = vld [vmem:[%s1 + $0x1f58] sm:$0xff]
      %v1224 = vld [vmem:[%s1 + $0x1f60] sm:$0xff]
      %v1225 = vld [vmem:[%s1 + $0x1f68] sm:$0xff]
      %v1226 = vld [vmem:[%s1 + $0x1f70] sm:$0xff]
      %v1227 = vld [vmem:[%s1 + $0x1f78] sm:$0xff]
      %v1228 = vld [vmem:[%s1 + $0x1f80] sm:$0xff]
      %v1229 = vld [vmem:[%s1 + $0x1f88] sm:$0xff]
      %v1230 = vld [vmem:[%s1 + $0x1f90] sm:$0xff]
      %v1231 = vld [vmem:[%s1 + $0x1f98] sm:$0xff]
      %v1232 = vld [vmem:[%s1 + $0x1fa0] sm:$0xff]
      %v1233 = vld [vmem:[%s1 + $0x1fa8] sm:$0xff]
      %v1234 = vld [vmem:[%s1 + $0x1fb0] sm:$0xff]
      %v1235 = vld [vmem:[%s1 + $0x1fb8] sm:$0xff]
      %v1236 = vld [vmem:[%s1 + $0x1fc0] sm:$0xff]
      %v1237 = vld [vmem:[%s1 + $0x1fc8] sm:$0xff]
      %v1238 = vld [vmem:[%s1 + $0x1fd0] sm:$0xff]
      %v1239 = vld [vmem:[%s1 + $0x1fd8] sm:$0xff]
      %v1240 = vld [vmem:[%s1 + $0x1fe0] sm:$0xff]
      %v1241 = vld [vmem:[%s1 + $0x1fe8] sm:$0xff]
      %v1242 = vld [vmem:[%s1 + $0x1ff0] sm:$0xff]
      %v1243 = vld [vmem:[%s1 + $0x1ff8] sm:$0xff]
      %v1276 = vunpack.c.l.b16 %v188
      %v1277 = vunpack.c.h.b16 %v188
      %v1278 = vunpack.c.l.b16 %v189
      %v1279 = vunpack.c.h.b16 %v189
      %v1280 = vunpack.c.l.b16 %v190
      %v1281 = vunpack.c.h.b16 %v190
      %v1282 = vunpack.c.l.b16 %v191
      %v1283 = vunpack.c.h.b16 %v191
      %v1284 = vunpack.c.l.b16 %v192
      %v1285 = vunpack.c.h.b16 %v192
      %v1286 = vunpack.c.l.b16 %v193
      %v1287 = vunpack.c.h.b16 %v193
      %v1288 = vunpack.c.l.b16 %v194
      %v1289 = vunpack.c.h.b16 %v194
      %v1290 = vunpack.c.l.b16 %v195
      %v1291 = vunpack.c.h.b16 %v195
      %v1292 = vunpack.c.l.b16 %v196
      %v1293 = vunpack.c.h.b16 %v196
      %v1294 = vunpack.c.l.b16 %v197
      %v1295 = vunpack.c.h.b16 %v197
      %v1296 = vunpack.c.l.b16 %v198
      %v1297 = vunpack.c.h.b16 %v198
      %v1298 = vunpack.c.l.b16 %v199
      %v1299 = vunpack.c.h.b16 %v199
      %v1300 = vunpack.c.l.b16 %v200
      %v1301 = vunpack.c.h.b16 %v200
      %v1302 = vunpack.c.l.b16 %v201
      %v1303 = vunpack.c.h.b16 %v201
      %v1304 = vunpack.c.l.b16 %v202
      %v1305 = vunpack.c.h.b16 %v202
      %v1306 = vunpack.c.l.b16 %v203
      %v1307 = vunpack.c.h.b16 %v203
      %v1308 = vunpack.c.l.b16 %v204
      %v1309 = vunpack.c.h.b16 %v204
      %v1310 = vunpack.c.l.b16 %v205
      %v1311 = vunpack.c.h.b16 %v205
      %v1312 = vunpack.c.l.b16 %v206
      %v1313 = vunpack.c.h.b16 %v206
      %v1314 = vunpack.c.l.b16 %v207
      %v1315 = vunpack.c.h.b16 %v207
      %v1316 = vunpack.c.l.b16 %v208
      %v1317 = vunpack.c.h.b16 %v208
      %v1318 = vunpack.c.l.b16 %v209
      %v1319 = vunpack.c.h.b16 %v209
      %v1320 = vunpack.c.l.b16 %v210
      %v1321 = vunpack.c.h.b16 %v210
      %v1322 = vunpack.c.l.b16 %v211
      %v1323 = vunpack.c.h.b16 %v211
      %v1324 = vunpack.c.l.b16 %v212
      %v1325 = vunpack.c.h.b16 %v212
      %v1326 = vunpack.c.l.b16 %v213
      %v1327 = vunpack.c.h.b16 %v213
      %v1328 = vunpack.c.l.b16 %v214
      %v1329 = vunpack.c.h.b16 %v214
      %v1330 = vunpack.c.l.b16 %v215
      %v1331 = vunpack.c.h.b16 %v215
      %v1332 = vunpack.c.l.b16 %v216
      %v1333 = vunpack.c.h.b16 %v216
      %v1334 = vunpack.c.l.b16 %v217
      %v1335 = vunpack.c.h.b16 %v217
      %v1336 = vunpack.c.l.b16 %v218
      %v1337 = vunpack.c.h.b16 %v218
      %v1338 = vunpack.c.l.b16 %v219
      %v1339 = vunpack.c.h.b16 %v219
      %v1340 = vpack.c.b16 %v1308, %v1276
      %v1341 = vpack.c.b16 %v1309, %v1277
      %v1342 = vpack.c.b16 %v1310, %v1278
      %v1343 = vpack.c.b16 %v1311, %v1279
      %v1344 = vpack.c.b16 %v1312, %v1280
      %v1345 = vpack.c.b16 %v1313, %v1281
      %v1346 = vpack.c.b16 %v1314, %v1282
      %v1347 = vpack.c.b16 %v1315, %v1283
      %v1348 = vpack.c.b16 %v1316, %v1284
      %v1349 = vpack.c.b16 %v1317, %v1285
      %v1350 = vpack.c.b16 %v1318, %v1286
      %v1351 = vpack.c.b16 %v1319, %v1287
      %v1352 = vpack.c.b16 %v1320, %v1288
      %v1353 = vpack.c.b16 %v1321, %v1289
      %v1354 = vpack.c.b16 %v1322, %v1290
      %v1355 = vpack.c.b16 %v1323, %v1291
      %v1356 = vpack.c.b16 %v1324, %v1292
      %v1357 = vpack.c.b16 %v1325, %v1293
      %v1358 = vpack.c.b16 %v1326, %v1294
      %v1359 = vpack.c.b16 %v1327, %v1295
      %v1360 = vpack.c.b16 %v1328, %v1296
      %v1361 = vpack.c.b16 %v1329, %v1297
      %v1362 = vpack.c.b16 %v1330, %v1298
      %v1363 = vpack.c.b16 %v1331, %v1299
      %v1364 = vpack.c.b16 %v1332, %v1300
      %v1365 = vpack.c.b16 %v1333, %v1301
      %v1366 = vpack.c.b16 %v1334, %v1302
      %v1367 = vpack.c.b16 %v1335, %v1303
      %v1368 = vpack.c.b16 %v1336, %v1304
      %v1369 = vpack.c.b16 %v1337, %v1305
      %v1370 = vpack.c.b16 %v1338, %v1306
      %v1371 = vpack.c.b16 %v1339, %v1307
      %v2428 = vunpack.c.l.b16 %v220
      %v2429 = vunpack.c.h.b16 %v220
      %v2430 = vunpack.c.l.b16 %v221
      %v2431 = vunpack.c.h.b16 %v221
      %v2432 = vunpack.c.l.b16 %v222
      %v2433 = vunpack.c.h.b16 %v222
      %v2434 = vunpack.c.l.b16 %v223
      %v2435 = vunpack.c.h.b16 %v223
      %v2436 = vunpack.c.l.b16 %v224
      %v2437 = vunpack.c.h.b16 %v224
      %v2438 = vunpack.c.l.b16 %v225
      %v2439 = vunpack.c.h.b16 %v225
      %v2440 = vunpack.c.l.b16 %v226
      %v2441 = vunpack.c.h.b16 %v226
      %v2442 = vunpack.c.l.b16 %v227
      %v2443 = vunpack.c.h.b16 %v227
      %v2444 = vunpack.c.l.b16 %v228
      %v2445 = vunpack.c.h.b16 %v228
      %v2446 = vunpack.c.l.b16 %v229
      %v2447 = vunpack.c.h.b16 %v229
      %v2448 = vunpack.c.l.b16 %v230
      %v2449 = vunpack.c.h.b16 %v230
      %v2450 = vunpack.c.l.b16 %v231
      %v2451 = vunpack.c.h.b16 %v231
      %v2452 = vunpack.c.l.b16 %v232
      %v2453 = vunpack.c.h.b16 %v232
      %v2454 = vunpack.c.l.b16 %v233
      %v2455 = vunpack.c.h.b16 %v233
      %v2456 = vunpack.c.l.b16 %v234
      %v2457 = vunpack.c.h.b16 %v234
      %v2458 = vunpack.c.l.b16 %v235
      %v2459 = vunpack.c.h.b16 %v235
      %v2460 = vunpack.c.l.b16 %v236
      %v2461 = vunpack.c.h.b16 %v236
      %v2462 = vunpack.c.l.b16 %v237
      %v2463 = vunpack.c.h.b16 %v237
      %v2464 = vunpack.c.l.b16 %v238
      %v2465 = vunpack.c.h.b16 %v238
      %v2466 = vunpack.c.l.b16 %v239
      %v2467 = vunpack.c.h.b16 %v239
      %v2468 = vunpack.c.l.b16 %v240
      %v2469 = vunpack.c.h.b16 %v240
      %v2470 = vunpack.c.l.b16 %v241
      %v2471 = vunpack.c.h.b16 %v241
      %v2472 = vunpack.c.l.b16 %v242
      %v2473 = vunpack.c.h.b16 %v242
      %v2474 = vunpack.c.l.b16 %v243
      %v2475 = vunpack.c.h.b16 %v243
      %v2476 = vunpack.c.l.b16 %v244
      %v2477 = vunpack.c.h.b16 %v244
      %v2478 = vunpack.c.l.b16 %v245
      %v2479 = vunpack.c.h.b16 %v245
      %v2480 = vunpack.c.l.b16 %v246
      %v2481 = vunpack.c.h.b16 %v246
      %v2482 = vunpack.c.l.b16 %v247
      %v2483 = vunpack.c.h.b16 %v247
      %v2484 = vunpack.c.l.b16 %v248
      %v2485 = vunpack.c.h.b16 %v248
      %v2486 = vunpack.c.l.b16 %v249
      %v2487 = vunpack.c.h.b16 %v249
      %v2488 = vunpack.c.l.b16 %v250
      %v2489 = vunpack.c.h.b16 %v250
      %v2490 = vunpack.c.l.b16 %v251
      %v2491 = vunpack.c.h.b16 %v251
      %v2492 = vunpack.c.l.b16 %v252
      %v2493 = vunpack.c.h.b16 %v252
      %v2494 = vunpack.c.l.b16 %v253
      %v2495 = vunpack.c.h.b16 %v253
      %v2496 = vunpack.c.l.b16 %v254
      %v2497 = vunpack.c.h.b16 %v254
      %v2498 = vunpack.c.l.b16 %v255
      %v2499 = vunpack.c.h.b16 %v255
      %v2500 = vunpack.c.l.b16 %v256
      %v2501 = vunpack.c.h.b16 %v256
      %v2502 = vunpack.c.l.b16 %v257
      %v2503 = vunpack.c.h.b16 %v257
      %v2504 = vunpack.c.l.b16 %v258
      %v2505 = vunpack.c.h.b16 %v258
      %v2506 = vunpack.c.l.b16 %v259
      %v2507 = vunpack.c.h.b16 %v259
      %v2508 = vunpack.c.l.b16 %v260
      %v2509 = vunpack.c.h.b16 %v260
      %v2510 = vunpack.c.l.b16 %v261
      %v2511 = vunpack.c.h.b16 %v261
      %v2512 = vunpack.c.l.b16 %v262
      %v2513 = vunpack.c.h.b16 %v262
      %v2514 = vunpack.c.l.b16 %v263
      %v2515 = vunpack.c.h.b16 %v263
      %v2516 = vunpack.c.l.b16 %v264
      %v2517 = vunpack.c.h.b16 %v264
      %v2518 = vunpack.c.l.b16 %v265
      %v2519 = vunpack.c.h.b16 %v265
      %v2520 = vunpack.c.l.b16 %v266
      %v2521 = vunpack.c.h.b16 %v266
      %v2522 = vunpack.c.l.b16 %v267
      %v2523 = vunpack.c.h.b16 %v267
      %v2524 = vunpack.c.l.b16 %v268
      %v2525 = vunpack.c.h.b16 %v268
      %v2526 = vunpack.c.l.b16 %v269
      %v2527 = vunpack.c.h.b16 %v269
      %v2528 = vunpack.c.l.b16 %v270
      %v2529 = vunpack.c.h.b16 %v270
      %v2530 = vunpack.c.l.b16 %v271
      %v2531 = vunpack.c.h.b16 %v271
      %v2532 = vunpack.c.l.b16 %v272
      %v2533 = vunpack.c.h.b16 %v272
      %v2534 = vunpack.c.l.b16 %v273
      %v2535 = vunpack.c.h.b16 %v273
      %v2536 = vunpack.c.l.b16 %v274
      %v2537 = vunpack.c.h.b16 %v274
      %v2538 = vunpack.c.l.b16 %v275
      %v2539 = vunpack.c.h.b16 %v275
      %v2540 = vunpack.c.l.b16 %v276
      %v2541 = vunpack.c.h.b16 %v276
      %v2542 = vunpack.c.l.b16 %v277
      %v2543 = vunpack.c.h.b16 %v277
      %v2544 = vunpack.c.l.b16 %v278
      %v2545 = vunpack.c.h.b16 %v278
      %v2546 = vunpack.c.l.b16 %v279
      %v2547 = vunpack.c.h.b16 %v279
      %v2548 = vunpack.c.l.b16 %v280
      %v2549 = vunpack.c.h.b16 %v280
      %v2550 = vunpack.c.l.b16 %v281
      %v2551 = vunpack.c.h.b16 %v281
      %v2552 = vunpack.c.l.b16 %v282
      %v2553 = vunpack.c.h.b16 %v282
      %v2554 = vunpack.c.l.b16 %v283
      %v2555 = vunpack.c.h.b16 %v283
      %v2556 = vunpack.c.l.b16 %v284
      %v2557 = vunpack.c.h.b16 %v284
      %v2558 = vunpack.c.l.b16 %v285
      %v2559 = vunpack.c.h.b16 %v285
      %v2560 = vunpack.c.l.b16 %v286
      %v2561 = vunpack.c.h.b16 %v286
      %v2562 = vunpack.c.l.b16 %v287
      %v2563 = vunpack.c.h.b16 %v287
      %v2564 = vunpack.c.l.b16 %v288
      %v2565 = vunpack.c.h.b16 %v288
      %v2566 = vunpack.c.l.b16 %v289
      %v2567 = vunpack.c.h.b16 %v289
      %v2568 = vunpack.c.l.b16 %v290
      %v2569 = vunpack.c.h.b16 %v290
      %v2570 = vunpack.c.l.b16 %v291
      %v2571 = vunpack.c.h.b16 %v291
      %v2572 = vunpack.c.l.b16 %v292
      %v2573 = vunpack.c.h.b16 %v292
      %v2574 = vunpack.c.l.b16 %v293
      %v2575 = vunpack.c.h.b16 %v293
      %v2576 = vunpack.c.l.b16 %v294
      %v2577 = vunpack.c.h.b16 %v294
      %v2578 = vunpack.c.l.b16 %v295
      %v2579 = vunpack.c.h.b16 %v295
      %v2580 = vunpack.c.l.b16 %v296
      %v2581 = vunpack.c.h.b16 %v296
      %v2582 = vunpack.c.l.b16 %v297
      %v2583 = vunpack.c.h.b16 %v297
      %v2584 = vunpack.c.l.b16 %v298
      %v2585 = vunpack.c.h.b16 %v298
      %v2586 = vunpack.c.l.b16 %v299
      %v2587 = vunpack.c.h.b16 %v299
      %v2588 = vunpack.c.l.b16 %v300
      %v2589 = vunpack.c.h.b16 %v300
      %v2590 = vunpack.c.l.b16 %v301
      %v2591 = vunpack.c.h.b16 %v301
      %v2592 = vunpack.c.l.b16 %v302
      %v2593 = vunpack.c.h.b16 %v302
      %v2594 = vunpack.c.l.b16 %v303
      %v2595 = vunpack.c.h.b16 %v303
      %v2596 = vunpack.c.l.b16 %v304
      %v2597 = vunpack.c.h.b16 %v304
      %v2598 = vunpack.c.l.b16 %v305
      %v2599 = vunpack.c.h.b16 %v305
      %v2600 = vunpack.c.l.b16 %v306
      %v2601 = vunpack.c.h.b16 %v306
      %v2602 = vunpack.c.l.b16 %v307
      %v2603 = vunpack.c.h.b16 %v307
      %v2604 = vunpack.c.l.b16 %v308
      %v2605 = vunpack.c.h.b16 %v308
      %v2606 = vunpack.c.l.b16 %v309
      %v2607 = vunpack.c.h.b16 %v309
      %v2608 = vunpack.c.l.b16 %v310
      %v2609 = vunpack.c.h.b16 %v310
      %v2610 = vunpack.c.l.b16 %v311
      %v2611 = vunpack.c.h.b16 %v311
      %v2612 = vunpack.c.l.b16 %v312
      %v2613 = vunpack.c.h.b16 %v312
      %v2614 = vunpack.c.l.b16 %v313
      %v2615 = vunpack.c.h.b16 %v313
      %v2616 = vunpack.c.l.b16 %v314
      %v2617 = vunpack.c.h.b16 %v314
      %v2618 = vunpack.c.l.b16 %v315
      %v2619 = vunpack.c.h.b16 %v315
      %v2620 = vunpack.c.l.b16 %v316
      %v2621 = vunpack.c.h.b16 %v316
      %v2622 = vunpack.c.l.b16 %v317
      %v2623 = vunpack.c.h.b16 %v317
      %v2624 = vunpack.c.l.b16 %v318
      %v2625 = vunpack.c.h.b16 %v318
      %v2626 = vunpack.c.l.b16 %v319
      %v2627 = vunpack.c.h.b16 %v319
      %v2628 = vunpack.c.l.b16 %v320
      %v2629 = vunpack.c.h.b16 %v320
      %v2630 = vunpack.c.l.b16 %v321
      %v2631 = vunpack.c.h.b16 %v321
      %v2632 = vunpack.c.l.b16 %v322
      %v2633 = vunpack.c.h.b16 %v322
      %v2634 = vunpack.c.l.b16 %v323
      %v2635 = vunpack.c.h.b16 %v323
      %v2636 = vunpack.c.l.b16 %v324
      %v2637 = vunpack.c.h.b16 %v324
      %v2638 = vunpack.c.l.b16 %v325
      %v2639 = vunpack.c.h.b16 %v325
      %v2640 = vunpack.c.l.b16 %v326
      %v2641 = vunpack.c.h.b16 %v326
      %v2642 = vunpack.c.l.b16 %v327
      %v2643 = vunpack.c.h.b16 %v327
      %v2644 = vunpack.c.l.b16 %v328
      %v2645 = vunpack.c.h.b16 %v328
      %v2646 = vunpack.c.l.b16 %v329
      %v2647 = vunpack.c.h.b16 %v329
      %v2648 = vunpack.c.l.b16 %v330
      %v2649 = vunpack.c.h.b16 %v330
      %v2650 = vunpack.c.l.b16 %v331
      %v2651 = vunpack.c.h.b16 %v331
      %v2652 = vunpack.c.l.b16 %v332
      %v2653 = vunpack.c.h.b16 %v332
      %v2654 = vunpack.c.l.b16 %v333
      %v2655 = vunpack.c.h.b16 %v333
      %v2656 = vunpack.c.l.b16 %v334
      %v2657 = vunpack.c.h.b16 %v334
      %v2658 = vunpack.c.l.b16 %v335
      %v2659 = vunpack.c.h.b16 %v335
      %v2660 = vunpack.c.l.b16 %v336
      %v2661 = vunpack.c.h.b16 %v336
      %v2662 = vunpack.c.l.b16 %v337
      %v2663 = vunpack.c.h.b16 %v337
      %v2664 = vunpack.c.l.b16 %v338
      %v2665 = vunpack.c.h.b16 %v338
      %v2666 = vunpack.c.l.b16 %v339
      %v2667 = vunpack.c.h.b16 %v339
      %v2668 = vunpack.c.l.b16 %v340
      %v2669 = vunpack.c.h.b16 %v340
      %v2670 = vunpack.c.l.b16 %v341
      %v2671 = vunpack.c.h.b16 %v341
      %v2672 = vunpack.c.l.b16 %v342
      %v2673 = vunpack.c.h.b16 %v342
      %v2674 = vunpack.c.l.b16 %v343
      %v2675 = vunpack.c.h.b16 %v343
      %v2676 = vunpack.c.l.b16 %v344
      %v2677 = vunpack.c.h.b16 %v344
      %v2678 = vunpack.c.l.b16 %v345
      %v2679 = vunpack.c.h.b16 %v345
      %v2680 = vunpack.c.l.b16 %v346
      %v2681 = vunpack.c.h.b16 %v346
      %v2682 = vunpack.c.l.b16 %v347
      %v2683 = vunpack.c.h.b16 %v347
      %v2684 = vunpack.c.l.b16 %v348
      %v2685 = vunpack.c.h.b16 %v348
      %v2686 = vunpack.c.l.b16 %v349
      %v2687 = vunpack.c.h.b16 %v349
      %v2688 = vunpack.c.l.b16 %v350
      %v2689 = vunpack.c.h.b16 %v350
      %v2690 = vunpack.c.l.b16 %v351
      %v2691 = vunpack.c.h.b16 %v351
      %v2692 = vunpack.c.l.b16 %v352
      %v2693 = vunpack.c.h.b16 %v352
      %v2694 = vunpack.c.l.b16 %v353
      %v2695 = vunpack.c.h.b16 %v353
      %v2696 = vunpack.c.l.b16 %v354
      %v2697 = vunpack.c.h.b16 %v354
      %v2698 = vunpack.c.l.b16 %v355
      %v2699 = vunpack.c.h.b16 %v355
      %v2700 = vunpack.c.l.b16 %v356
      %v2701 = vunpack.c.h.b16 %v356
      %v2702 = vunpack.c.l.b16 %v357
      %v2703 = vunpack.c.h.b16 %v357
      %v2704 = vunpack.c.l.b16 %v358
      %v2705 = vunpack.c.h.b16 %v358
      %v2706 = vunpack.c.l.b16 %v359
      %v2707 = vunpack.c.h.b16 %v359
      %v2708 = vunpack.c.l.b16 %v360
      %v2709 = vunpack.c.h.b16 %v360
      %v2710 = vunpack.c.l.b16 %v361
      %v2711 = vunpack.c.h.b16 %v361
      %v2712 = vunpack.c.l.b16 %v362
      %v2713 = vunpack.c.h.b16 %v362
      %v2714 = vunpack.c.l.b16 %v363
      %v2715 = vunpack.c.h.b16 %v363
      %v2716 = vunpack.c.l.b16 %v364
      %v2717 = vunpack.c.h.b16 %v364
      %v2718 = vunpack.c.l.b16 %v365
      %v2719 = vunpack.c.h.b16 %v365
      %v2720 = vunpack.c.l.b16 %v366
      %v2721 = vunpack.c.h.b16 %v366
      %v2722 = vunpack.c.l.b16 %v367
      %v2723 = vunpack.c.h.b16 %v367
      %v2724 = vunpack.c.l.b16 %v368
      %v2725 = vunpack.c.h.b16 %v368
      %v2726 = vunpack.c.l.b16 %v369
      %v2727 = vunpack.c.h.b16 %v369
      %v2728 = vunpack.c.l.b16 %v370
      %v2729 = vunpack.c.h.b16 %v370
      %v2730 = vunpack.c.l.b16 %v371
      %v2731 = vunpack.c.h.b16 %v371
      %v2732 = vunpack.c.l.b16 %v372
      %v2733 = vunpack.c.h.b16 %v372
      %v2734 = vunpack.c.l.b16 %v373
      %v2735 = vunpack.c.h.b16 %v373
      %v2736 = vunpack.c.l.b16 %v374
      %v2737 = vunpack.c.h.b16 %v374
      %v2738 = vunpack.c.l.b16 %v375
      %v2739 = vunpack.c.h.b16 %v375
      %v2740 = vunpack.c.l.b16 %v376
      %v2741 = vunpack.c.h.b16 %v376
      %v2742 = vunpack.c.l.b16 %v377
      %v2743 = vunpack.c.h.b16 %v377
      %v2744 = vunpack.c.l.b16 %v378
      %v2745 = vunpack.c.h.b16 %v378
      %v2746 = vunpack.c.l.b16 %v379
      %v2747 = vunpack.c.h.b16 %v379
      %v2748 = vunpack.c.l.b16 %v380
      %v2749 = vunpack.c.h.b16 %v380
      %v2750 = vunpack.c.l.b16 %v381
      %v2751 = vunpack.c.h.b16 %v381
      %v2752 = vunpack.c.l.b16 %v382
      %v2753 = vunpack.c.h.b16 %v382
      %v2754 = vunpack.c.l.b16 %v383
      %v2755 = vunpack.c.h.b16 %v383
      %v2756 = vunpack.c.l.b16 %v384
      %v2757 = vunpack.c.h.b16 %v384
      %v2758 = vunpack.c.l.b16 %v385
      %v2759 = vunpack.c.h.b16 %v385
      %v2760 = vunpack.c.l.b16 %v386
      %v2761 = vunpack.c.h.b16 %v386
      %v2762 = vunpack.c.l.b16 %v387
      %v2763 = vunpack.c.h.b16 %v387
      %v2764 = vunpack.c.l.b16 %v388
      %v2765 = vunpack.c.h.b16 %v388
      %v2766 = vunpack.c.l.b16 %v389
      %v2767 = vunpack.c.h.b16 %v389
      %v2768 = vunpack.c.l.b16 %v390
      %v2769 = vunpack.c.h.b16 %v390
      %v2770 = vunpack.c.l.b16 %v391
      %v2771 = vunpack.c.h.b16 %v391
      %v2772 = vunpack.c.l.b16 %v392
      %v2773 = vunpack.c.h.b16 %v392
      %v2774 = vunpack.c.l.b16 %v393
      %v2775 = vunpack.c.h.b16 %v393
      %v2776 = vunpack.c.l.b16 %v394
      %v2777 = vunpack.c.h.b16 %v394
      %v2778 = vunpack.c.l.b16 %v395
      %v2779 = vunpack.c.h.b16 %v395
      %v2780 = vunpack.c.l.b16 %v396
      %v2781 = vunpack.c.h.b16 %v396
      %v2782 = vunpack.c.l.b16 %v397
      %v2783 = vunpack.c.h.b16 %v397
      %v2784 = vunpack.c.l.b16 %v398
      %v2785 = vunpack.c.h.b16 %v398
      %v2786 = vunpack.c.l.b16 %v399
      %v2787 = vunpack.c.h.b16 %v399
      %v2788 = vunpack.c.l.b16 %v400
      %v2789 = vunpack.c.h.b16 %v400
      %v2790 = vunpack.c.l.b16 %v401
      %v2791 = vunpack.c.h.b16 %v401
      %v2792 = vunpack.c.l.b16 %v402
      %v2793 = vunpack.c.h.b16 %v402
      %v2794 = vunpack.c.l.b16 %v403
      %v2795 = vunpack.c.h.b16 %v403
      %v2796 = vunpack.c.l.b16 %v404
      %v2797 = vunpack.c.h.b16 %v404
      %v2798 = vunpack.c.l.b16 %v405
      %v2799 = vunpack.c.h.b16 %v405
      %v2800 = vunpack.c.l.b16 %v406
      %v2801 = vunpack.c.h.b16 %v406
      %v2802 = vunpack.c.l.b16 %v407
      %v2803 = vunpack.c.h.b16 %v407
      %v2804 = vunpack.c.l.b16 %v408
      %v2805 = vunpack.c.h.b16 %v408
      %v2806 = vunpack.c.l.b16 %v409
      %v2807 = vunpack.c.h.b16 %v409
      %v2808 = vunpack.c.l.b16 %v410
      %v2809 = vunpack.c.h.b16 %v410
      %v2810 = vunpack.c.l.b16 %v411
      %v2811 = vunpack.c.h.b16 %v411
      %v2812 = vunpack.c.l.b16 %v412
      %v2813 = vunpack.c.h.b16 %v412
      %v2814 = vunpack.c.l.b16 %v413
      %v2815 = vunpack.c.h.b16 %v413
      %v2816 = vunpack.c.l.b16 %v414
      %v2817 = vunpack.c.h.b16 %v414
      %v2818 = vunpack.c.l.b16 %v415
      %v2819 = vunpack.c.h.b16 %v415
      %v2820 = vunpack.c.l.b16 %v416
      %v2821 = vunpack.c.h.b16 %v416
      %v2822 = vunpack.c.l.b16 %v417
      %v2823 = vunpack.c.h.b16 %v417
      %v2824 = vunpack.c.l.b16 %v418
      %v2825 = vunpack.c.h.b16 %v418
      %v2826 = vunpack.c.l.b16 %v419
      %v2827 = vunpack.c.h.b16 %v419
      %v2828 = vunpack.c.l.b16 %v420
      %v2829 = vunpack.c.h.b16 %v420
      %v2830 = vunpack.c.l.b16 %v421
      %v2831 = vunpack.c.h.b16 %v421
      %v2832 = vunpack.c.l.b16 %v422
      %v2833 = vunpack.c.h.b16 %v422
      %v2834 = vunpack.c.l.b16 %v423
      %v2835 = vunpack.c.h.b16 %v423
      %v2836 = vunpack.c.l.b16 %v424
      %v2837 = vunpack.c.h.b16 %v424
      %v2838 = vunpack.c.l.b16 %v425
      %v2839 = vunpack.c.h.b16 %v425
      %v2840 = vunpack.c.l.b16 %v426
      %v2841 = vunpack.c.h.b16 %v426
      %v2842 = vunpack.c.l.b16 %v427
      %v2843 = vunpack.c.h.b16 %v427
      %v2844 = vunpack.c.l.b16 %v428
      %v2845 = vunpack.c.h.b16 %v428
      %v2846 = vunpack.c.l.b16 %v429
      %v2847 = vunpack.c.h.b16 %v429
      %v2848 = vunpack.c.l.b16 %v430
      %v2849 = vunpack.c.h.b16 %v430
      %v2850 = vunpack.c.l.b16 %v431
      %v2851 = vunpack.c.h.b16 %v431
      %v2852 = vunpack.c.l.b16 %v432
      %v2853 = vunpack.c.h.b16 %v432
      %v2854 = vunpack.c.l.b16 %v433
      %v2855 = vunpack.c.h.b16 %v433
      %v2856 = vunpack.c.l.b16 %v434
      %v2857 = vunpack.c.h.b16 %v434
      %v2858 = vunpack.c.l.b16 %v435
      %v2859 = vunpack.c.h.b16 %v435
      %v2860 = vunpack.c.l.b16 %v436
      %v2861 = vunpack.c.h.b16 %v436
      %v2862 = vunpack.c.l.b16 %v437
      %v2863 = vunpack.c.h.b16 %v437
      %v2864 = vunpack.c.l.b16 %v438
      %v2865 = vunpack.c.h.b16 %v438
      %v2866 = vunpack.c.l.b16 %v439
      %v2867 = vunpack.c.h.b16 %v439
      %v2868 = vunpack.c.l.b16 %v440
      %v2869 = vunpack.c.h.b16 %v440
      %v2870 = vunpack.c.l.b16 %v441
      %v2871 = vunpack.c.h.b16 %v441
      %v2872 = vunpack.c.l.b16 %v442
      %v2873 = vunpack.c.h.b16 %v442
      %v2874 = vunpack.c.l.b16 %v443
      %v2875 = vunpack.c.h.b16 %v443
      %v2876 = vunpack.c.l.b16 %v444
      %v2877 = vunpack.c.h.b16 %v444
      %v2878 = vunpack.c.l.b16 %v445
      %v2879 = vunpack.c.h.b16 %v445
      %v2880 = vunpack.c.l.b16 %v446
      %v2881 = vunpack.c.h.b16 %v446
      %v2882 = vunpack.c.l.b16 %v447
      %v2883 = vunpack.c.h.b16 %v447
      %v2884 = vunpack.c.l.b16 %v448
      %v2885 = vunpack.c.h.b16 %v448
      %v2886 = vunpack.c.l.b16 %v449
      %v2887 = vunpack.c.h.b16 %v449
      %v2888 = vunpack.c.l.b16 %v450
      %v2889 = vunpack.c.h.b16 %v450
      %v2890 = vunpack.c.l.b16 %v451
      %v2891 = vunpack.c.h.b16 %v451
      %v2892 = vunpack.c.l.b16 %v452
      %v2893 = vunpack.c.h.b16 %v452
      %v2894 = vunpack.c.l.b16 %v453
      %v2895 = vunpack.c.h.b16 %v453
      %v2896 = vunpack.c.l.b16 %v454
      %v2897 = vunpack.c.h.b16 %v454
      %v2898 = vunpack.c.l.b16 %v455
      %v2899 = vunpack.c.h.b16 %v455
      %v2900 = vunpack.c.l.b16 %v456
      %v2901 = vunpack.c.h.b16 %v456
      %v2902 = vunpack.c.l.b16 %v457
      %v2903 = vunpack.c.h.b16 %v457
      %v2904 = vunpack.c.l.b16 %v458
      %v2905 = vunpack.c.h.b16 %v458
      %v2906 = vunpack.c.l.b16 %v459
      %v2907 = vunpack.c.h.b16 %v459
      %v2908 = vunpack.c.l.b16 %v460
      %v2909 = vunpack.c.h.b16 %v460
      %v2910 = vunpack.c.l.b16 %v461
      %v2911 = vunpack.c.h.b16 %v461
      %v2912 = vunpack.c.l.b16 %v462
      %v2913 = vunpack.c.h.b16 %v462
      %v2914 = vunpack.c.l.b16 %v463
      %v2915 = vunpack.c.h.b16 %v463
      %v2916 = vunpack.c.l.b16 %v464
      %v2917 = vunpack.c.h.b16 %v464
      %v2918 = vunpack.c.l.b16 %v465
      %v2919 = vunpack.c.h.b16 %v465
      %v2920 = vunpack.c.l.b16 %v466
      %v2921 = vunpack.c.h.b16 %v466
      %v2922 = vunpack.c.l.b16 %v467
      %v2923 = vunpack.c.h.b16 %v467
      %v2924 = vunpack.c.l.b16 %v468
      %v2925 = vunpack.c.h.b16 %v468
      %v2926 = vunpack.c.l.b16 %v469
      %v2927 = vunpack.c.h.b16 %v469
      %v2928 = vunpack.c.l.b16 %v470
      %v2929 = vunpack.c.h.b16 %v470
      %v2930 = vunpack.c.l.b16 %v471
      %v2931 = vunpack.c.h.b16 %v471
      %v2932 = vunpack.c.l.b16 %v472
      %v2933 = vunpack.c.h.b16 %v472
      %v2934 = vunpack.c.l.b16 %v473
      %v2935 = vunpack.c.h.b16 %v473
      %v2936 = vunpack.c.l.b16 %v474
      %v2937 = vunpack.c.h.b16 %v474
      %v2938 = vunpack.c.l.b16 %v475
      %v2939 = vunpack.c.h.b16 %v475
      %v2940 = vunpack.c.l.b16 %v476
      %v2941 = vunpack.c.h.b16 %v476
      %v2942 = vunpack.c.l.b16 %v477
      %v2943 = vunpack.c.h.b16 %v477
      %v2944 = vunpack.c.l.b16 %v478
      %v2945 = vunpack.c.h.b16 %v478
      %v2946 = vunpack.c.l.b16 %v479
      %v2947 = vunpack.c.h.b16 %v479
      %v2948 = vunpack.c.l.b16 %v480
      %v2949 = vunpack.c.h.b16 %v480
      %v2950 = vunpack.c.l.b16 %v481
      %v2951 = vunpack.c.h.b16 %v481
      %v2952 = vunpack.c.l.b16 %v482
      %v2953 = vunpack.c.h.b16 %v482
      %v2954 = vunpack.c.l.b16 %v483
      %v2955 = vunpack.c.h.b16 %v483
      %v2956 = vunpack.c.l.b16 %v484
      %v2957 = vunpack.c.h.b16 %v484
      %v2958 = vunpack.c.l.b16 %v485
      %v2959 = vunpack.c.h.b16 %v485
      %v2960 = vunpack.c.l.b16 %v486
      %v2961 = vunpack.c.h.b16 %v486
      %v2962 = vunpack.c.l.b16 %v487
      %v2963 = vunpack.c.h.b16 %v487
      %v2964 = vunpack.c.l.b16 %v488
      %v2965 = vunpack.c.h.b16 %v488
      %v2966 = vunpack.c.l.b16 %v489
      %v2967 = vunpack.c.h.b16 %v489
      %v2968 = vunpack.c.l.b16 %v490
      %v2969 = vunpack.c.h.b16 %v490
      %v2970 = vunpack.c.l.b16 %v491
      %v2971 = vunpack.c.h.b16 %v491
      %v2972 = vunpack.c.l.b16 %v492
      %v2973 = vunpack.c.h.b16 %v492
      %v2974 = vunpack.c.l.b16 %v493
      %v2975 = vunpack.c.h.b16 %v493
      %v2976 = vunpack.c.l.b16 %v494
      %v2977 = vunpack.c.h.b16 %v494
      %v2978 = vunpack.c.l.b16 %v495
      %v2979 = vunpack.c.h.b16 %v495
      %v2980 = vunpack.c.l.b16 %v496
      %v2981 = vunpack.c.h.b16 %v496
      %v2982 = vunpack.c.l.b16 %v497
      %v2983 = vunpack.c.h.b16 %v497
      %v2984 = vunpack.c.l.b16 %v498
      %v2985 = vunpack.c.h.b16 %v498
      %v2986 = vunpack.c.l.b16 %v499
      %v2987 = vunpack.c.h.b16 %v499
      %v2988 = vunpack.c.l.b16 %v500
      %v2989 = vunpack.c.h.b16 %v500
      %v2990 = vunpack.c.l.b16 %v501
      %v2991 = vunpack.c.h.b16 %v501
      %v2992 = vunpack.c.l.b16 %v502
      %v2993 = vunpack.c.h.b16 %v502
      %v2994 = vunpack.c.l.b16 %v503
      %v2995 = vunpack.c.h.b16 %v503
      %v2996 = vunpack.c.l.b16 %v504
      %v2997 = vunpack.c.h.b16 %v504
      %v2998 = vunpack.c.l.b16 %v505
      %v2999 = vunpack.c.h.b16 %v505
      %v3000 = vunpack.c.l.b16 %v506
      %v3001 = vunpack.c.h.b16 %v506
      %v3002 = vunpack.c.l.b16 %v507
      %v3003 = vunpack.c.h.b16 %v507
      %v3004 = vunpack.c.l.b16 %v508
      %v3005 = vunpack.c.h.b16 %v508
      %v3006 = vunpack.c.l.b16 %v509
      %v3007 = vunpack.c.h.b16 %v509
      %v3008 = vunpack.c.l.b16 %v510
      %v3009 = vunpack.c.h.b16 %v510
      %v3010 = vunpack.c.l.b16 %v511
      %v3011 = vunpack.c.h.b16 %v511
      %v3012 = vunpack.c.l.b16 %v512
      %v3013 = vunpack.c.h.b16 %v512
      %v3014 = vunpack.c.l.b16 %v513
      %v3015 = vunpack.c.h.b16 %v513
      %v3016 = vunpack.c.l.b16 %v514
      %v3017 = vunpack.c.h.b16 %v514
      %v3018 = vunpack.c.l.b16 %v515
      %v3019 = vunpack.c.h.b16 %v515
      %v3020 = vunpack.c.l.b16 %v516
      %v3021 = vunpack.c.h.b16 %v516
      %v3022 = vunpack.c.l.b16 %v517
      %v3023 = vunpack.c.h.b16 %v517
      %v3024 = vunpack.c.l.b16 %v518
      %v3025 = vunpack.c.h.b16 %v518
      %v3026 = vunpack.c.l.b16 %v519
      %v3027 = vunpack.c.h.b16 %v519
      %v3028 = vunpack.c.l.b16 %v520
      %v3029 = vunpack.c.h.b16 %v520
      %v3030 = vunpack.c.l.b16 %v521
      %v3031 = vunpack.c.h.b16 %v521
      %v3032 = vunpack.c.l.b16 %v522
      %v3033 = vunpack.c.h.b16 %v522
      %v3034 = vunpack.c.l.b16 %v523
      %v3035 = vunpack.c.h.b16 %v523
      %v3036 = vunpack.c.l.b16 %v524
      %v3037 = vunpack.c.h.b16 %v524
      %v3038 = vunpack.c.l.b16 %v525
      %v3039 = vunpack.c.h.b16 %v525
      %v3040 = vunpack.c.l.b16 %v526
      %v3041 = vunpack.c.h.b16 %v526
      %v3042 = vunpack.c.l.b16 %v527
      %v3043 = vunpack.c.h.b16 %v527
      %v3044 = vunpack.c.l.b16 %v528
      %v3045 = vunpack.c.h.b16 %v528
      %v3046 = vunpack.c.l.b16 %v529
      %v3047 = vunpack.c.h.b16 %v529
      %v3048 = vunpack.c.l.b16 %v530
      %v3049 = vunpack.c.h.b16 %v530
      %v3050 = vunpack.c.l.b16 %v531
      %v3051 = vunpack.c.h.b16 %v531
      %v3052 = vunpack.c.l.b16 %v532
      %v3053 = vunpack.c.h.b16 %v532
      %v3054 = vunpack.c.l.b16 %v533
      %v3055 = vunpack.c.h.b16 %v533
      %v3056 = vunpack.c.l.b16 %v534
      %v3057 = vunpack.c.h.b16 %v534
      %v3058 = vunpack.c.l.b16 %v535
      %v3059 = vunpack.c.h.b16 %v535
      %v3060 = vunpack.c.l.b16 %v536
      %v3061 = vunpack.c.h.b16 %v536
      %v3062 = vunpack.c.l.b16 %v537
      %v3063 = vunpack.c.h.b16 %v537
      %v3064 = vunpack.c.l.b16 %v538
      %v3065 = vunpack.c.h.b16 %v538
      %v3066 = vunpack.c.l.b16 %v539
      %v3067 = vunpack.c.h.b16 %v539
      %v3068 = vunpack.c.l.b16 %v540
      %v3069 = vunpack.c.h.b16 %v540
      %v3070 = vunpack.c.l.b16 %v541
      %v3071 = vunpack.c.h.b16 %v541
      %v3072 = vunpack.c.l.b16 %v542
      %v3073 = vunpack.c.h.b16 %v542
      %v3074 = vunpack.c.l.b16 %v543
      %v3075 = vunpack.c.h.b16 %v543
      %v3076 = vunpack.c.l.b16 %v544
      %v3077 = vunpack.c.h.b16 %v544
      %v3078 = vunpack.c.l.b16 %v545
      %v3079 = vunpack.c.h.b16 %v545
      %v3080 = vunpack.c.l.b16 %v546
      %v3081 = vunpack.c.h.b16 %v546
      %v3082 = vunpack.c.l.b16 %v547
      %v3083 = vunpack.c.h.b16 %v547
      %v3084 = vunpack.c.l.b16 %v548
      %v3085 = vunpack.c.h.b16 %v548
      %v3086 = vunpack.c.l.b16 %v549
      %v3087 = vunpack.c.h.b16 %v549
      %v3088 = vunpack.c.l.b16 %v550
      %v3089 = vunpack.c.h.b16 %v550
      %v3090 = vunpack.c.l.b16 %v551
      %v3091 = vunpack.c.h.b16 %v551
      %v3092 = vunpack.c.l.b16 %v552
      %v3093 = vunpack.c.h.b16 %v552
      %v3094 = vunpack.c.l.b16 %v553
      %v3095 = vunpack.c.h.b16 %v553
      %v3096 = vunpack.c.l.b16 %v554
      %v3097 = vunpack.c.h.b16 %v554
      %v3098 = vunpack.c.l.b16 %v555
      %v3099 = vunpack.c.h.b16 %v555
      %v3100 = vunpack.c.l.b16 %v556
      %v3101 = vunpack.c.h.b16 %v556
      %v3102 = vunpack.c.l.b16 %v557
      %v3103 = vunpack.c.h.b16 %v557
      %v3104 = vunpack.c.l.b16 %v558
      %v3105 = vunpack.c.h.b16 %v558
      %v3106 = vunpack.c.l.b16 %v559
      %v3107 = vunpack.c.h.b16 %v559
      %v3108 = vunpack.c.l.b16 %v560
      %v3109 = vunpack.c.h.b16 %v560
      %v3110 = vunpack.c.l.b16 %v561
      %v3111 = vunpack.c.h.b16 %v561
      %v3112 = vunpack.c.l.b16 %v562
      %v3113 = vunpack.c.h.b16 %v562
      %v3114 = vunpack.c.l.b16 %v563
      %v3115 = vunpack.c.h.b16 %v563
      %v3116 = vunpack.c.l.b16 %v564
      %v3117 = vunpack.c.h.b16 %v564
      %v3118 = vunpack.c.l.b16 %v565
      %v3119 = vunpack.c.h.b16 %v565
      %v3120 = vunpack.c.l.b16 %v566
      %v3121 = vunpack.c.h.b16 %v566
      %v3122 = vunpack.c.l.b16 %v567
      %v3123 = vunpack.c.h.b16 %v567
      %v3124 = vunpack.c.l.b16 %v568
      %v3125 = vunpack.c.h.b16 %v568
      %v3126 = vunpack.c.l.b16 %v569
      %v3127 = vunpack.c.h.b16 %v569
      %v3128 = vunpack.c.l.b16 %v570
      %v3129 = vunpack.c.h.b16 %v570
      %v3130 = vunpack.c.l.b16 %v571
      %v3131 = vunpack.c.h.b16 %v571
      %v3132 = vunpack.c.l.b16 %v572
      %v3133 = vunpack.c.h.b16 %v572
      %v3134 = vunpack.c.l.b16 %v573
      %v3135 = vunpack.c.h.b16 %v573
      %v3136 = vunpack.c.l.b16 %v574
      %v3137 = vunpack.c.h.b16 %v574
      %v3138 = vunpack.c.l.b16 %v575
      %v3139 = vunpack.c.h.b16 %v575
      %v3140 = vunpack.c.l.b16 %v576
      %v3141 = vunpack.c.h.b16 %v576
      %v3142 = vunpack.c.l.b16 %v577
      %v3143 = vunpack.c.h.b16 %v577
      %v3144 = vunpack.c.l.b16 %v578
      %v3145 = vunpack.c.h.b16 %v578
      %v3146 = vunpack.c.l.b16 %v579
      %v3147 = vunpack.c.h.b16 %v579
      %v3148 = vunpack.c.l.b16 %v580
      %v3149 = vunpack.c.h.b16 %v580
      %v3150 = vunpack.c.l.b16 %v581
      %v3151 = vunpack.c.h.b16 %v581
      %v3152 = vunpack.c.l.b16 %v582
      %v3153 = vunpack.c.h.b16 %v582
      %v3154 = vunpack.c.l.b16 %v583
      %v3155 = vunpack.c.h.b16 %v583
      %v3156 = vunpack.c.l.b16 %v584
      %v3157 = vunpack.c.h.b16 %v584
      %v3158 = vunpack.c.l.b16 %v585
      %v3159 = vunpack.c.h.b16 %v585
      %v3160 = vunpack.c.l.b16 %v586
      %v3161 = vunpack.c.h.b16 %v586
      %v3162 = vunpack.c.l.b16 %v587
      %v3163 = vunpack.c.h.b16 %v587
      %v3164 = vunpack.c.l.b16 %v588
      %v3165 = vunpack.c.h.b16 %v588
      %v3166 = vunpack.c.l.b16 %v589
      %v3167 = vunpack.c.h.b16 %v589
      %v3168 = vunpack.c.l.b16 %v590
      %v3169 = vunpack.c.h.b16 %v590
      %v3170 = vunpack.c.l.b16 %v591
      %v3171 = vunpack.c.h.b16 %v591
      %v3172 = vunpack.c.l.b16 %v592
      %v3173 = vunpack.c.h.b16 %v592
      %v3174 = vunpack.c.l.b16 %v593
      %v3175 = vunpack.c.h.b16 %v593
      %v3176 = vunpack.c.l.b16 %v594
      %v3177 = vunpack.c.h.b16 %v594
      %v3178 = vunpack.c.l.b16 %v595
      %v3179 = vunpack.c.h.b16 %v595
      %v3180 = vunpack.c.l.b16 %v596
      %v3181 = vunpack.c.h.b16 %v596
      %v3182 = vunpack.c.l.b16 %v597
      %v3183 = vunpack.c.h.b16 %v597
      %v3184 = vunpack.c.l.b16 %v598
      %v3185 = vunpack.c.h.b16 %v598
      %v3186 = vunpack.c.l.b16 %v599
      %v3187 = vunpack.c.h.b16 %v599
      %v3188 = vunpack.c.l.b16 %v600
      %v3189 = vunpack.c.h.b16 %v600
      %v3190 = vunpack.c.l.b16 %v601
      %v3191 = vunpack.c.h.b16 %v601
      %v3192 = vunpack.c.l.b16 %v602
      %v3193 = vunpack.c.h.b16 %v602
      %v3194 = vunpack.c.l.b16 %v603
      %v3195 = vunpack.c.h.b16 %v603
      %v3196 = vunpack.c.l.b16 %v604
      %v3197 = vunpack.c.h.b16 %v604
      %v3198 = vunpack.c.l.b16 %v605
      %v3199 = vunpack.c.h.b16 %v605
      %v3200 = vunpack.c.l.b16 %v606
      %v3201 = vunpack.c.h.b16 %v606
      %v3202 = vunpack.c.l.b16 %v607
      %v3203 = vunpack.c.h.b16 %v607
      %v3204 = vunpack.c.l.b16 %v608
      %v3205 = vunpack.c.h.b16 %v608
      %v3206 = vunpack.c.l.b16 %v609
      %v3207 = vunpack.c.h.b16 %v609
      %v3208 = vunpack.c.l.b16 %v610
      %v3209 = vunpack.c.h.b16 %v610
      %v3210 = vunpack.c.l.b16 %v611
      %v3211 = vunpack.c.h.b16 %v611
      %v3212 = vunpack.c.l.b16 %v612
      %v3213 = vunpack.c.h.b16 %v612
      %v3214 = vunpack.c.l.b16 %v613
      %v3215 = vunpack.c.h.b16 %v613
      %v3216 = vunpack.c.l.b16 %v614
      %v3217 = vunpack.c.h.b16 %v614
      %v3218 = vunpack.c.l.b16 %v615
      %v3219 = vunpack.c.h.b16 %v615
      %v3220 = vunpack.c.l.b16 %v616
      %v3221 = vunpack.c.h.b16 %v616
      %v3222 = vunpack.c.l.b16 %v617
      %v3223 = vunpack.c.h.b16 %v617
      %v3224 = vunpack.c.l.b16 %v618
      %v3225 = vunpack.c.h.b16 %v618
      %v3226 = vunpack.c.l.b16 %v619
      %v3227 = vunpack.c.h.b16 %v619
      %v3228 = vunpack.c.l.b16 %v620
      %v3229 = vunpack.c.h.b16 %v620
      %v3230 = vunpack.c.l.b16 %v621
      %v3231 = vunpack.c.h.b16 %v621
      %v3232 = vunpack.c.l.b16 %v622
      %v3233 = vunpack.c.h.b16 %v622
      %v3234 = vunpack.c.l.b16 %v623
      %v3235 = vunpack.c.h.b16 %v623
      %v3236 = vunpack.c.l.b16 %v624
      %v3237 = vunpack.c.h.b16 %v624
      %v3238 = vunpack.c.l.b16 %v625
      %v3239 = vunpack.c.h.b16 %v625
      %v3240 = vunpack.c.l.b16 %v626
      %v3241 = vunpack.c.h.b16 %v626
      %v3242 = vunpack.c.l.b16 %v627
      %v3243 = vunpack.c.h.b16 %v627
      %v3244 = vunpack.c.l.b16 %v628
      %v3245 = vunpack.c.h.b16 %v628
      %v3246 = vunpack.c.l.b16 %v629
      %v3247 = vunpack.c.h.b16 %v629
      %v3248 = vunpack.c.l.b16 %v630
      %v3249 = vunpack.c.h.b16 %v630
      %v3250 = vunpack.c.l.b16 %v631
      %v3251 = vunpack.c.h.b16 %v631
      %v3252 = vunpack.c.l.b16 %v632
      %v3253 = vunpack.c.h.b16 %v632
      %v3254 = vunpack.c.l.b16 %v633
      %v3255 = vunpack.c.h.b16 %v633
      %v3256 = vunpack.c.l.b16 %v634
      %v3257 = vunpack.c.h.b16 %v634
      %v3258 = vunpack.c.l.b16 %v635
      %v3259 = vunpack.c.h.b16 %v635
      %v3260 = vunpack.c.l.b16 %v636
      %v3261 = vunpack.c.h.b16 %v636
      %v3262 = vunpack.c.l.b16 %v637
      %v3263 = vunpack.c.h.b16 %v637
      %v3264 = vunpack.c.l.b16 %v638
      %v3265 = vunpack.c.h.b16 %v638
      %v3266 = vunpack.c.l.b16 %v639
      %v3267 = vunpack.c.h.b16 %v639
      %v3268 = vunpack.c.l.b16 %v640
      %v3269 = vunpack.c.h.b16 %v640
      %v3270 = vunpack.c.l.b16 %v641
      %v3271 = vunpack.c.h.b16 %v641
      %v3272 = vunpack.c.l.b16 %v642
      %v3273 = vunpack.c.h.b16 %v642
      %v3274 = vunpack.c.l.b16 %v643
      %v3275 = vunpack.c.h.b16 %v643
      %v3276 = vunpack.c.l.b16 %v644
      %v3277 = vunpack.c.h.b16 %v644
      %v3278 = vunpack.c.l.b16 %v645
      %v3279 = vunpack.c.h.b16 %v645
      %v3280 = vunpack.c.l.b16 %v646
      %v3281 = vunpack.c.h.b16 %v646
      %v3282 = vunpack.c.l.b16 %v647
      %v3283 = vunpack.c.h.b16 %v647
      %v3284 = vunpack.c.l.b16 %v648
      %v3285 = vunpack.c.h.b16 %v648
      %v3286 = vunpack.c.l.b16 %v649
      %v3287 = vunpack.c.h.b16 %v649
      %v3288 = vunpack.c.l.b16 %v650
      %v3289 = vunpack.c.h.b16 %v650
      %v3290 = vunpack.c.l.b16 %v651
      %v3291 = vunpack.c.h.b16 %v651
      %v3292 = vunpack.c.l.b16 %v652
      %v3293 = vunpack.c.h.b16 %v652
      %v3294 = vunpack.c.l.b16 %v653
      %v3295 = vunpack.c.h.b16 %v653
      %v3296 = vunpack.c.l.b16 %v654
      %v3297 = vunpack.c.h.b16 %v654
      %v3298 = vunpack.c.l.b16 %v655
      %v3299 = vunpack.c.h.b16 %v655
      %v3300 = vunpack.c.l.b16 %v656
      %v3301 = vunpack.c.h.b16 %v656
      %v3302 = vunpack.c.l.b16 %v657
      %v3303 = vunpack.c.h.b16 %v657
      %v3304 = vunpack.c.l.b16 %v658
      %v3305 = vunpack.c.h.b16 %v658
      %v3306 = vunpack.c.l.b16 %v659
      %v3307 = vunpack.c.h.b16 %v659
      %v3308 = vunpack.c.l.b16 %v660
      %v3309 = vunpack.c.h.b16 %v660
      %v3310 = vunpack.c.l.b16 %v661
      %v3311 = vunpack.c.h.b16 %v661
      %v3312 = vunpack.c.l.b16 %v662
      %v3313 = vunpack.c.h.b16 %v662
      %v3314 = vunpack.c.l.b16 %v663
      %v3315 = vunpack.c.h.b16 %v663
      %v3316 = vunpack.c.l.b16 %v664
      %v3317 = vunpack.c.h.b16 %v664
      %v3318 = vunpack.c.l.b16 %v665
      %v3319 = vunpack.c.h.b16 %v665
      %v3320 = vunpack.c.l.b16 %v666
      %v3321 = vunpack.c.h.b16 %v666
      %v3322 = vunpack.c.l.b16 %v667
      %v3323 = vunpack.c.h.b16 %v667
      %v3324 = vunpack.c.l.b16 %v668
      %v3325 = vunpack.c.h.b16 %v668
      %v3326 = vunpack.c.l.b16 %v669
      %v3327 = vunpack.c.h.b16 %v669
      %v3328 = vunpack.c.l.b16 %v670
      %v3329 = vunpack.c.h.b16 %v670
      %v3330 = vunpack.c.l.b16 %v671
      %v3331 = vunpack.c.h.b16 %v671
      %v3332 = vunpack.c.l.b16 %v672
      %v3333 = vunpack.c.h.b16 %v672
      %v3334 = vunpack.c.l.b16 %v673
      %v3335 = vunpack.c.h.b16 %v673
      %v3336 = vunpack.c.l.b16 %v674
      %v3337 = vunpack.c.h.b16 %v674
      %v3338 = vunpack.c.l.b16 %v675
      %v3339 = vunpack.c.h.b16 %v675
      %v3340 = vunpack.c.l.b16 %v676
      %v3341 = vunpack.c.h.b16 %v676
      %v3342 = vunpack.c.l.b16 %v677
      %v3343 = vunpack.c.h.b16 %v677
      %v3344 = vunpack.c.l.b16 %v678
      %v3345 = vunpack.c.h.b16 %v678
      %v3346 = vunpack.c.l.b16 %v679
      %v3347 = vunpack.c.h.b16 %v679
      %v3348 = vunpack.c.l.b16 %v680
      %v3349 = vunpack.c.h.b16 %v680
      %v3350 = vunpack.c.l.b16 %v681
      %v3351 = vunpack.c.h.b16 %v681
      %v3352 = vunpack.c.l.b16 %v682
      %v3353 = vunpack.c.h.b16 %v682
      %v3354 = vunpack.c.l.b16 %v683
      %v3355 = vunpack.c.h.b16 %v683
      %v3356 = vunpack.c.l.b16 %v684
      %v3357 = vunpack.c.h.b16 %v684
      %v3358 = vunpack.c.l.b16 %v685
      %v3359 = vunpack.c.h.b16 %v685
      %v3360 = vunpack.c.l.b16 %v686
      %v3361 = vunpack.c.h.b16 %v686
      %v3362 = vunpack.c.l.b16 %v687
      %v3363 = vunpack.c.h.b16 %v687
      %v3364 = vunpack.c.l.b16 %v688
      %v3365 = vunpack.c.h.b16 %v688
      %v3366 = vunpack.c.l.b16 %v689
      %v3367 = vunpack.c.h.b16 %v689
      %v3368 = vunpack.c.l.b16 %v690
      %v3369 = vunpack.c.h.b16 %v690
      %v3370 = vunpack.c.l.b16 %v691
      %v3371 = vunpack.c.h.b16 %v691
      %v3372 = vunpack.c.l.b16 %v692
      %v3373 = vunpack.c.h.b16 %v692
      %v3374 = vunpack.c.l.b16 %v693
      %v3375 = vunpack.c.h.b16 %v693
      %v3376 = vunpack.c.l.b16 %v694
      %v3377 = vunpack.c.h.b16 %v694
      %v3378 = vunpack.c.l.b16 %v695
      %v3379 = vunpack.c.h.b16 %v695
      %v3380 = vunpack.c.l.b16 %v696
      %v3381 = vunpack.c.h.b16 %v696
      %v3382 = vunpack.c.l.b16 %v697
      %v3383 = vunpack.c.h.b16 %v697
      %v3384 = vunpack.c.l.b16 %v698
      %v3385 = vunpack.c.h.b16 %v698
      %v3386 = vunpack.c.l.b16 %v699
      %v3387 = vunpack.c.h.b16 %v699
      %v3388 = vunpack.c.l.b16 %v700
      %v3389 = vunpack.c.h.b16 %v700
      %v3390 = vunpack.c.l.b16 %v701
      %v3391 = vunpack.c.h.b16 %v701
      %v3392 = vunpack.c.l.b16 %v702
      %v3393 = vunpack.c.h.b16 %v702
      %v3394 = vunpack.c.l.b16 %v703
      %v3395 = vunpack.c.h.b16 %v703
      %v3396 = vunpack.c.l.b16 %v704
      %v3397 = vunpack.c.h.b16 %v704
      %v3398 = vunpack.c.l.b16 %v705
      %v3399 = vunpack.c.h.b16 %v705
      %v3400 = vunpack.c.l.b16 %v706
      %v3401 = vunpack.c.h.b16 %v706
      %v3402 = vunpack.c.l.b16 %v707
      %v3403 = vunpack.c.h.b16 %v707
      %v3404 = vunpack.c.l.b16 %v708
      %v3405 = vunpack.c.h.b16 %v708
      %v3406 = vunpack.c.l.b16 %v709
      %v3407 = vunpack.c.h.b16 %v709
      %v3408 = vunpack.c.l.b16 %v710
      %v3409 = vunpack.c.h.b16 %v710
      %v3410 = vunpack.c.l.b16 %v711
      %v3411 = vunpack.c.h.b16 %v711
      %v3412 = vunpack.c.l.b16 %v712
      %v3413 = vunpack.c.h.b16 %v712
      %v3414 = vunpack.c.l.b16 %v713
      %v3415 = vunpack.c.h.b16 %v713
      %v3416 = vunpack.c.l.b16 %v714
      %v3417 = vunpack.c.h.b16 %v714
      %v3418 = vunpack.c.l.b16 %v715
      %v3419 = vunpack.c.h.b16 %v715
      %v3420 = vunpack.c.l.b16 %v716
      %v3421 = vunpack.c.h.b16 %v716
      %v3422 = vunpack.c.l.b16 %v717
      %v3423 = vunpack.c.h.b16 %v717
      %v3424 = vunpack.c.l.b16 %v718
      %v3425 = vunpack.c.h.b16 %v718
      %v3426 = vunpack.c.l.b16 %v719
      %v3427 = vunpack.c.h.b16 %v719
      %v3428 = vunpack.c.l.b16 %v720
      %v3429 = vunpack.c.h.b16 %v720
      %v3430 = vunpack.c.l.b16 %v721
      %v3431 = vunpack.c.h.b16 %v721
      %v3432 = vunpack.c.l.b16 %v722
      %v3433 = vunpack.c.h.b16 %v722
      %v3434 = vunpack.c.l.b16 %v723
      %v3435 = vunpack.c.h.b16 %v723
      %v3436 = vunpack.c.l.b16 %v724
      %v3437 = vunpack.c.h.b16 %v724
      %v3438 = vunpack.c.l.b16 %v725
      %v3439 = vunpack.c.h.b16 %v725
      %v3440 = vunpack.c.l.b16 %v726
      %v3441 = vunpack.c.h.b16 %v726
      %v3442 = vunpack.c.l.b16 %v727
      %v3443 = vunpack.c.h.b16 %v727
      %v3444 = vunpack.c.l.b16 %v728
      %v3445 = vunpack.c.h.b16 %v728
      %v3446 = vunpack.c.l.b16 %v729
      %v3447 = vunpack.c.h.b16 %v729
      %v3448 = vunpack.c.l.b16 %v730
      %v3449 = vunpack.c.h.b16 %v730
      %v3450 = vunpack.c.l.b16 %v731
      %v3451 = vunpack.c.h.b16 %v731
      %v3452 = vunpack.c.l.b16 %v732
      %v3453 = vunpack.c.h.b16 %v732
      %v3454 = vunpack.c.l.b16 %v733
      %v3455 = vunpack.c.h.b16 %v733
      %v3456 = vunpack.c.l.b16 %v734
      %v3457 = vunpack.c.h.b16 %v734
      %v3458 = vunpack.c.l.b16 %v735
      %v3459 = vunpack.c.h.b16 %v735
      %v3460 = vunpack.c.l.b16 %v736
      %v3461 = vunpack.c.h.b16 %v736
      %v3462 = vunpack.c.l.b16 %v737
      %v3463 = vunpack.c.h.b16 %v737
      %v3464 = vunpack.c.l.b16 %v738
      %v3465 = vunpack.c.h.b16 %v738
      %v3466 = vunpack.c.l.b16 %v739
      %v3467 = vunpack.c.h.b16 %v739
      %v3468 = vunpack.c.l.b16 %v740
      %v3469 = vunpack.c.h.b16 %v740
      %v3470 = vunpack.c.l.b16 %v741
      %v3471 = vunpack.c.h.b16 %v741
      %v3472 = vunpack.c.l.b16 %v742
      %v3473 = vunpack.c.h.b16 %v742
      %v3474 = vunpack.c.l.b16 %v743
      %v3475 = vunpack.c.h.b16 %v743
      %v3476 = vunpack.c.l.b16 %v744
      %v3477 = vunpack.c.h.b16 %v744
      %v3478 = vunpack.c.l.b16 %v745
      %v3479 = vunpack.c.h.b16 %v745
      %v3480 = vunpack.c.l.b16 %v746
      %v3481 = vunpack.c.h.b16 %v746
      %v3482 = vunpack.c.l.b16 %v747
      %v3483 = vunpack.c.h.b16 %v747
      %v3484 = vunpack.c.l.b16 %v748
      %v3485 = vunpack.c.h.b16 %v748
      %v3486 = vunpack.c.l.b16 %v749
      %v3487 = vunpack.c.h.b16 %v749
      %v3488 = vunpack.c.l.b16 %v750
      %v3489 = vunpack.c.h.b16 %v750
      %v3490 = vunpack.c.l.b16 %v751
      %v3491 = vunpack.c.h.b16 %v751
      %v3492 = vunpack.c.l.b16 %v752
      %v3493 = vunpack.c.h.b16 %v752
      %v3494 = vunpack.c.l.b16 %v753
      %v3495 = vunpack.c.h.b16 %v753
      %v3496 = vunpack.c.l.b16 %v754
      %v3497 = vunpack.c.h.b16 %v754
      %v3498 = vunpack.c.l.b16 %v755
      %v3499 = vunpack.c.h.b16 %v755
      %v3500 = vunpack.c.l.b16 %v756
      %v3501 = vunpack.c.h.b16 %v756
      %v3502 = vunpack.c.l.b16 %v757
      %v3503 = vunpack.c.h.b16 %v757
      %v3504 = vunpack.c.l.b16 %v758
      %v3505 = vunpack.c.h.b16 %v758
      %v3506 = vunpack.c.l.b16 %v759
      %v3507 = vunpack.c.h.b16 %v759
      %v3508 = vunpack.c.l.b16 %v760
      %v3509 = vunpack.c.h.b16 %v760
      %v3510 = vunpack.c.l.b16 %v761
      %v3511 = vunpack.c.h.b16 %v761
      %v3512 = vunpack.c.l.b16 %v762
      %v3513 = vunpack.c.h.b16 %v762
      %v3514 = vunpack.c.l.b16 %v763
      %v3515 = vunpack.c.h.b16 %v763
      %v3516 = vunpack.c.l.b16 %v764
      %v3517 = vunpack.c.h.b16 %v764
      %v3518 = vunpack.c.l.b16 %v765
      %v3519 = vunpack.c.h.b16 %v765
      %v3520 = vunpack.c.l.b16 %v766
      %v3521 = vunpack.c.h.b16 %v766
      %v3522 = vunpack.c.l.b16 %v767
      %v3523 = vunpack.c.h.b16 %v767
      %v3524 = vunpack.c.l.b16 %v768
      %v3525 = vunpack.c.h.b16 %v768
      %v3526 = vunpack.c.l.b16 %v769
      %v3527 = vunpack.c.h.b16 %v769
      %v3528 = vunpack.c.l.b16 %v770
      %v3529 = vunpack.c.h.b16 %v770
      %v3530 = vunpack.c.l.b16 %v771
      %v3531 = vunpack.c.h.b16 %v771
      %v3532 = vunpack.c.l.b16 %v772
      %v3533 = vunpack.c.h.b16 %v772
      %v3534 = vunpack.c.l.b16 %v773
      %v3535 = vunpack.c.h.b16 %v773
      %v3536 = vunpack.c.l.b16 %v774
      %v3537 = vunpack.c.h.b16 %v774
      %v3538 = vunpack.c.l.b16 %v775
      %v3539 = vunpack.c.h.b16 %v775
      %v3540 = vunpack.c.l.b16 %v776
      %v3541 = vunpack.c.h.b16 %v776
      %v3542 = vunpack.c.l.b16 %v777
      %v3543 = vunpack.c.h.b16 %v777
      %v3544 = vunpack.c.l.b16 %v778
      %v3545 = vunpack.c.h.b16 %v778
      %v3546 = vunpack.c.l.b16 %v779
      %v3547 = vunpack.c.h.b16 %v779
      %v3548 = vunpack.c.l.b16 %v780
      %v3549 = vunpack.c.h.b16 %v780
      %v3550 = vunpack.c.l.b16 %v781
      %v3551 = vunpack.c.h.b16 %v781
      %v3552 = vunpack.c.l.b16 %v782
      %v3553 = vunpack.c.h.b16 %v782
      %v3554 = vunpack.c.l.b16 %v783
      %v3555 = vunpack.c.h.b16 %v783
      %v3556 = vunpack.c.l.b16 %v784
      %v3557 = vunpack.c.h.b16 %v784
      %v3558 = vunpack.c.l.b16 %v785
      %v3559 = vunpack.c.h.b16 %v785
      %v3560 = vunpack.c.l.b16 %v786
      %v3561 = vunpack.c.h.b16 %v786
      %v3562 = vunpack.c.l.b16 %v787
      %v3563 = vunpack.c.h.b16 %v787
      %v3564 = vunpack.c.l.b16 %v788
      %v3565 = vunpack.c.h.b16 %v788
      %v3566 = vunpack.c.l.b16 %v789
      %v3567 = vunpack.c.h.b16 %v789
      %v3568 = vunpack.c.l.b16 %v790
      %v3569 = vunpack.c.h.b16 %v790
      %v3570 = vunpack.c.l.b16 %v791
      %v3571 = vunpack.c.h.b16 %v791
      %v3572 = vunpack.c.l.b16 %v792
      %v3573 = vunpack.c.h.b16 %v792
      %v3574 = vunpack.c.l.b16 %v793
      %v3575 = vunpack.c.h.b16 %v793
      %v3576 = vunpack.c.l.b16 %v794
      %v3577 = vunpack.c.h.b16 %v794
      %v3578 = vunpack.c.l.b16 %v795
      %v3579 = vunpack.c.h.b16 %v795
      %v3580 = vunpack.c.l.b16 %v796
      %v3581 = vunpack.c.h.b16 %v796
      %v3582 = vunpack.c.l.b16 %v797
      %v3583 = vunpack.c.h.b16 %v797
      %v3584 = vunpack.c.l.b16 %v798
      %v3585 = vunpack.c.h.b16 %v798
      %v3586 = vunpack.c.l.b16 %v799
      %v3587 = vunpack.c.h.b16 %v799
      %v3588 = vunpack.c.l.b16 %v800
      %v3589 = vunpack.c.h.b16 %v800
      %v3590 = vunpack.c.l.b16 %v801
      %v3591 = vunpack.c.h.b16 %v801
      %v3592 = vunpack.c.l.b16 %v802
      %v3593 = vunpack.c.h.b16 %v802
      %v3594 = vunpack.c.l.b16 %v803
      %v3595 = vunpack.c.h.b16 %v803
      %v3596 = vunpack.c.l.b16 %v804
      %v3597 = vunpack.c.h.b16 %v804
      %v3598 = vunpack.c.l.b16 %v805
      %v3599 = vunpack.c.h.b16 %v805
      %v3600 = vunpack.c.l.b16 %v806
      %v3601 = vunpack.c.h.b16 %v806
      %v3602 = vunpack.c.l.b16 %v807
      %v3603 = vunpack.c.h.b16 %v807
      %v3604 = vunpack.c.l.b16 %v808
      %v3605 = vunpack.c.h.b16 %v808
      %v3606 = vunpack.c.l.b16 %v809
      %v3607 = vunpack.c.h.b16 %v809
      %v3608 = vunpack.c.l.b16 %v810
      %v3609 = vunpack.c.h.b16 %v810
      %v3610 = vunpack.c.l.b16 %v811
      %v3611 = vunpack.c.h.b16 %v811
      %v3612 = vunpack.c.l.b16 %v812
      %v3613 = vunpack.c.h.b16 %v812
      %v3614 = vunpack.c.l.b16 %v813
      %v3615 = vunpack.c.h.b16 %v813
      %v3616 = vunpack.c.l.b16 %v814
      %v3617 = vunpack.c.h.b16 %v814
      %v3618 = vunpack.c.l.b16 %v815
      %v3619 = vunpack.c.h.b16 %v815
      %v3620 = vunpack.c.l.b16 %v816
      %v3621 = vunpack.c.h.b16 %v816
      %v3622 = vunpack.c.l.b16 %v817
      %v3623 = vunpack.c.h.b16 %v817
      %v3624 = vunpack.c.l.b16 %v818
      %v3625 = vunpack.c.h.b16 %v818
      %v3626 = vunpack.c.l.b16 %v819
      %v3627 = vunpack.c.h.b16 %v819
      %v3628 = vunpack.c.l.b16 %v820
      %v3629 = vunpack.c.h.b16 %v820
      %v3630 = vunpack.c.l.b16 %v821
      %v3631 = vunpack.c.h.b16 %v821
      %v3632 = vunpack.c.l.b16 %v822
      %v3633 = vunpack.c.h.b16 %v822
      %v3634 = vunpack.c.l.b16 %v823
      %v3635 = vunpack.c.h.b16 %v823
      %v3636 = vunpack.c.l.b16 %v824
      %v3637 = vunpack.c.h.b16 %v824
      %v3638 = vunpack.c.l.b16 %v825
      %v3639 = vunpack.c.h.b16 %v825
      %v3640 = vunpack.c.l.b16 %v826
      %v3641 = vunpack.c.h.b16 %v826
      %v3642 = vunpack.c.l.b16 %v827
      %v3643 = vunpack.c.h.b16 %v827
      %v3644 = vunpack.c.l.b16 %v828
      %v3645 = vunpack.c.h.b16 %v828
      %v3646 = vunpack.c.l.b16 %v829
      %v3647 = vunpack.c.h.b16 %v829
      %v3648 = vunpack.c.l.b16 %v830
      %v3649 = vunpack.c.h.b16 %v830
      %v3650 = vunpack.c.l.b16 %v831
      %v3651 = vunpack.c.h.b16 %v831
      %v3652 = vunpack.c.l.b16 %v832
      %v3653 = vunpack.c.h.b16 %v832
      %v3654 = vunpack.c.l.b16 %v833
      %v3655 = vunpack.c.h.b16 %v833
      %v3656 = vunpack.c.l.b16 %v834
      %v3657 = vunpack.c.h.b16 %v834
      %v3658 = vunpack.c.l.b16 %v835
      %v3659 = vunpack.c.h.b16 %v835
      %v3660 = vunpack.c.l.b16 %v836
      %v3661 = vunpack.c.h.b16 %v836
      %v3662 = vunpack.c.l.b16 %v837
      %v3663 = vunpack.c.h.b16 %v837
      %v3664 = vunpack.c.l.b16 %v838
      %v3665 = vunpack.c.h.b16 %v838
      %v3666 = vunpack.c.l.b16 %v839
      %v3667 = vunpack.c.h.b16 %v839
      %v3668 = vunpack.c.l.b16 %v840
      %v3669 = vunpack.c.h.b16 %v840
      %v3670 = vunpack.c.l.b16 %v841
      %v3671 = vunpack.c.h.b16 %v841
      %v3672 = vunpack.c.l.b16 %v842
      %v3673 = vunpack.c.h.b16 %v842
      %v3674 = vunpack.c.l.b16 %v843
      %v3675 = vunpack.c.h.b16 %v843
      %v3676 = vunpack.c.l.b16 %v844
      %v3677 = vunpack.c.h.b16 %v844
      %v3678 = vunpack.c.l.b16 %v845
      %v3679 = vunpack.c.h.b16 %v845
      %v3680 = vunpack.c.l.b16 %v846
      %v3681 = vunpack.c.h.b16 %v846
      %v3682 = vunpack.c.l.b16 %v847
      %v3683 = vunpack.c.h.b16 %v847
      %v3684 = vunpack.c.l.b16 %v848
      %v3685 = vunpack.c.h.b16 %v848
      %v3686 = vunpack.c.l.b16 %v849
      %v3687 = vunpack.c.h.b16 %v849
      %v3688 = vunpack.c.l.b16 %v850
      %v3689 = vunpack.c.h.b16 %v850
      %v3690 = vunpack.c.l.b16 %v851
      %v3691 = vunpack.c.h.b16 %v851
      %v3692 = vunpack.c.l.b16 %v852
      %v3693 = vunpack.c.h.b16 %v852
      %v3694 = vunpack.c.l.b16 %v853
      %v3695 = vunpack.c.h.b16 %v853
      %v3696 = vunpack.c.l.b16 %v854
      %v3697 = vunpack.c.h.b16 %v854
      %v3698 = vunpack.c.l.b16 %v855
      %v3699 = vunpack.c.h.b16 %v855
      %v3700 = vunpack.c.l.b16 %v856
      %v3701 = vunpack.c.h.b16 %v856
      %v3702 = vunpack.c.l.b16 %v857
      %v3703 = vunpack.c.h.b16 %v857
      %v3704 = vunpack.c.l.b16 %v858
      %v3705 = vunpack.c.h.b16 %v858
      %v3706 = vunpack.c.l.b16 %v859
      %v3707 = vunpack.c.h.b16 %v859
      %v3708 = vunpack.c.l.b16 %v860
      %v3709 = vunpack.c.h.b16 %v860
      %v3710 = vunpack.c.l.b16 %v861
      %v3711 = vunpack.c.h.b16 %v861
      %v3712 = vunpack.c.l.b16 %v862
      %v3713 = vunpack.c.h.b16 %v862
      %v3714 = vunpack.c.l.b16 %v863
      %v3715 = vunpack.c.h.b16 %v863
      %v3716 = vunpack.c.l.b16 %v864
      %v3717 = vunpack.c.h.b16 %v864
      %v3718 = vunpack.c.l.b16 %v865
      %v3719 = vunpack.c.h.b16 %v865
      %v3720 = vunpack.c.l.b16 %v866
      %v3721 = vunpack.c.h.b16 %v866
      %v3722 = vunpack.c.l.b16 %v867
      %v3723 = vunpack.c.h.b16 %v867
      %v3724 = vunpack.c.l.b16 %v868
      %v3725 = vunpack.c.h.b16 %v868
      %v3726 = vunpack.c.l.b16 %v869
      %v3727 = vunpack.c.h.b16 %v869
      %v3728 = vunpack.c.l.b16 %v870
      %v3729 = vunpack.c.h.b16 %v870
      %v3730 = vunpack.c.l.b16 %v871
      %v3731 = vunpack.c.h.b16 %v871
      %v3732 = vunpack.c.l.b16 %v872
      %v3733 = vunpack.c.h.b16 %v872
      %v3734 = vunpack.c.l.b16 %v873
      %v3735 = vunpack.c.h.b16 %v873
      %v3736 = vunpack.c.l.b16 %v874
      %v3737 = vunpack.c.h.b16 %v874
      %v3738 = vunpack.c.l.b16 %v875
      %v3739 = vunpack.c.h.b16 %v875
      %v3740 = vunpack.c.l.b16 %v876
      %v3741 = vunpack.c.h.b16 %v876
      %v3742 = vunpack.c.l.b16 %v877
      %v3743 = vunpack.c.h.b16 %v877
      %v3744 = vunpack.c.l.b16 %v878
      %v3745 = vunpack.c.h.b16 %v878
      %v3746 = vunpack.c.l.b16 %v879
      %v3747 = vunpack.c.h.b16 %v879
      %v3748 = vunpack.c.l.b16 %v880
      %v3749 = vunpack.c.h.b16 %v880
      %v3750 = vunpack.c.l.b16 %v881
      %v3751 = vunpack.c.h.b16 %v881
      %v3752 = vunpack.c.l.b16 %v882
      %v3753 = vunpack.c.h.b16 %v882
      %v3754 = vunpack.c.l.b16 %v883
      %v3755 = vunpack.c.h.b16 %v883
      %v3756 = vunpack.c.l.b16 %v884
      %v3757 = vunpack.c.h.b16 %v884
      %v3758 = vunpack.c.l.b16 %v885
      %v3759 = vunpack.c.h.b16 %v885
      %v3760 = vunpack.c.l.b16 %v886
      %v3761 = vunpack.c.h.b16 %v886
      %v3762 = vunpack.c.l.b16 %v887
      %v3763 = vunpack.c.h.b16 %v887
      %v3764 = vunpack.c.l.b16 %v888
      %v3765 = vunpack.c.h.b16 %v888
      %v3766 = vunpack.c.l.b16 %v889
      %v3767 = vunpack.c.h.b16 %v889
      %v3768 = vunpack.c.l.b16 %v890
      %v3769 = vunpack.c.h.b16 %v890
      %v3770 = vunpack.c.l.b16 %v891
      %v3771 = vunpack.c.h.b16 %v891
      %v3772 = vunpack.c.l.b16 %v892
      %v3773 = vunpack.c.h.b16 %v892
      %v3774 = vunpack.c.l.b16 %v893
      %v3775 = vunpack.c.h.b16 %v893
      %v3776 = vunpack.c.l.b16 %v894
      %v3777 = vunpack.c.h.b16 %v894
      %v3778 = vunpack.c.l.b16 %v895
      %v3779 = vunpack.c.h.b16 %v895
      %v3780 = vunpack.c.l.b16 %v896
      %v3781 = vunpack.c.h.b16 %v896
      %v3782 = vunpack.c.l.b16 %v897
      %v3783 = vunpack.c.h.b16 %v897
      %v3784 = vunpack.c.l.b16 %v898
      %v3785 = vunpack.c.h.b16 %v898
      %v3786 = vunpack.c.l.b16 %v899
      %v3787 = vunpack.c.h.b16 %v899
      %v3788 = vunpack.c.l.b16 %v900
      %v3789 = vunpack.c.h.b16 %v900
      %v3790 = vunpack.c.l.b16 %v901
      %v3791 = vunpack.c.h.b16 %v901
      %v3792 = vunpack.c.l.b16 %v902
      %v3793 = vunpack.c.h.b16 %v902
      %v3794 = vunpack.c.l.b16 %v903
      %v3795 = vunpack.c.h.b16 %v903
      %v3796 = vunpack.c.l.b16 %v904
      %v3797 = vunpack.c.h.b16 %v904
      %v3798 = vunpack.c.l.b16 %v905
      %v3799 = vunpack.c.h.b16 %v905
      %v3800 = vunpack.c.l.b16 %v906
      %v3801 = vunpack.c.h.b16 %v906
      %v3802 = vunpack.c.l.b16 %v907
      %v3803 = vunpack.c.h.b16 %v907
      %v3804 = vunpack.c.l.b16 %v908
      %v3805 = vunpack.c.h.b16 %v908
      %v3806 = vunpack.c.l.b16 %v909
      %v3807 = vunpack.c.h.b16 %v909
      %v3808 = vunpack.c.l.b16 %v910
      %v3809 = vunpack.c.h.b16 %v910
      %v3810 = vunpack.c.l.b16 %v911
      %v3811 = vunpack.c.h.b16 %v911
      %v3812 = vunpack.c.l.b16 %v912
      %v3813 = vunpack.c.h.b16 %v912
      %v3814 = vunpack.c.l.b16 %v913
      %v3815 = vunpack.c.h.b16 %v913
      %v3816 = vunpack.c.l.b16 %v914
      %v3817 = vunpack.c.h.b16 %v914
      %v3818 = vunpack.c.l.b16 %v915
      %v3819 = vunpack.c.h.b16 %v915
      %v3820 = vunpack.c.l.b16 %v916
      %v3821 = vunpack.c.h.b16 %v916
      %v3822 = vunpack.c.l.b16 %v917
      %v3823 = vunpack.c.h.b16 %v917
      %v3824 = vunpack.c.l.b16 %v918
      %v3825 = vunpack.c.h.b16 %v918
      %v3826 = vunpack.c.l.b16 %v919
      %v3827 = vunpack.c.h.b16 %v919
      %v3828 = vunpack.c.l.b16 %v920
      %v3829 = vunpack.c.h.b16 %v920
      %v3830 = vunpack.c.l.b16 %v921
      %v3831 = vunpack.c.h.b16 %v921
      %v3832 = vunpack.c.l.b16 %v922
      %v3833 = vunpack.c.h.b16 %v922
      %v3834 = vunpack.c.l.b16 %v923
      %v3835 = vunpack.c.h.b16 %v923
      %v3836 = vunpack.c.l.b16 %v924
      %v3837 = vunpack.c.h.b16 %v924
      %v3838 = vunpack.c.l.b16 %v925
      %v3839 = vunpack.c.h.b16 %v925
      %v3840 = vunpack.c.l.b16 %v926
      %v3841 = vunpack.c.h.b16 %v926
      %v3842 = vunpack.c.l.b16 %v927
      %v3843 = vunpack.c.h.b16 %v927
      %v3844 = vunpack.c.l.b16 %v928
      %v3845 = vunpack.c.h.b16 %v928
      %v3846 = vunpack.c.l.b16 %v929
      %v3847 = vunpack.c.h.b16 %v929
      %v3848 = vunpack.c.l.b16 %v930
      %v3849 = vunpack.c.h.b16 %v930
      %v3850 = vunpack.c.l.b16 %v931
      %v3851 = vunpack.c.h.b16 %v931
      %v3852 = vunpack.c.l.b16 %v932
      %v3853 = vunpack.c.h.b16 %v932
      %v3854 = vunpack.c.l.b16 %v933
      %v3855 = vunpack.c.h.b16 %v933
      %v3856 = vunpack.c.l.b16 %v934
      %v3857 = vunpack.c.h.b16 %v934
      %v3858 = vunpack.c.l.b16 %v935
      %v3859 = vunpack.c.h.b16 %v935
      %v3860 = vunpack.c.l.b16 %v936
      %v3861 = vunpack.c.h.b16 %v936
      %v3862 = vunpack.c.l.b16 %v937
      %v3863 = vunpack.c.h.b16 %v937
      %v3864 = vunpack.c.l.b16 %v938
      %v3865 = vunpack.c.h.b16 %v938
      %v3866 = vunpack.c.l.b16 %v939
      %v3867 = vunpack.c.h.b16 %v939
      %v3868 = vunpack.c.l.b16 %v940
      %v3869 = vunpack.c.h.b16 %v940
      %v3870 = vunpack.c.l.b16 %v941
      %v3871 = vunpack.c.h.b16 %v941
      %v3872 = vunpack.c.l.b16 %v942
      %v3873 = vunpack.c.h.b16 %v942
      %v3874 = vunpack.c.l.b16 %v943
      %v3875 = vunpack.c.h.b16 %v943
      %v3876 = vunpack.c.l.b16 %v944
      %v3877 = vunpack.c.h.b16 %v944
      %v3878 = vunpack.c.l.b16 %v945
      %v3879 = vunpack.c.h.b16 %v945
      %v3880 = vunpack.c.l.b16 %v946
      %v3881 = vunpack.c.h.b16 %v946
      %v3882 = vunpack.c.l.b16 %v947
      %v3883 = vunpack.c.h.b16 %v947
      %v3884 = vunpack.c.l.b16 %v948
      %v3885 = vunpack.c.h.b16 %v948
      %v3886 = vunpack.c.l.b16 %v949
      %v3887 = vunpack.c.h.b16 %v949
      %v3888 = vunpack.c.l.b16 %v950
      %v3889 = vunpack.c.h.b16 %v950
      %v3890 = vunpack.c.l.b16 %v951
      %v3891 = vunpack.c.h.b16 %v951
      %v3892 = vunpack.c.l.b16 %v952
      %v3893 = vunpack.c.h.b16 %v952
      %v3894 = vunpack.c.l.b16 %v953
      %v3895 = vunpack.c.h.b16 %v953
      %v3896 = vunpack.c.l.b16 %v954
      %v3897 = vunpack.c.h.b16 %v954
      %v3898 = vunpack.c.l.b16 %v955
      %v3899 = vunpack.c.h.b16 %v955
      %v3900 = vunpack.c.l.b16 %v956
      %v3901 = vunpack.c.h.b16 %v956
      %v3902 = vunpack.c.l.b16 %v957
      %v3903 = vunpack.c.h.b16 %v957
      %v3904 = vunpack.c.l.b16 %v958
      %v3905 = vunpack.c.h.b16 %v958
      %v3906 = vunpack.c.l.b16 %v959
      %v3907 = vunpack.c.h.b16 %v959
      %v3908 = vunpack.c.l.b16 %v960
      %v3909 = vunpack.c.h.b16 %v960
      %v3910 = vunpack.c.l.b16 %v961
      %v3911 = vunpack.c.h.b16 %v961
      %v3912 = vunpack.c.l.b16 %v962
      %v3913 = vunpack.c.h.b16 %v962
      %v3914 = vunpack.c.l.b16 %v963
      %v3915 = vunpack.c.h.b16 %v963
      %v3916 = vunpack.c.l.b16 %v964
      %v3917 = vunpack.c.h.b16 %v964
      %v3918 = vunpack.c.l.b16 %v965
      %v3919 = vunpack.c.h.b16 %v965
      %v3920 = vunpack.c.l.b16 %v966
      %v3921 = vunpack.c.h.b16 %v966
      %v3922 = vunpack.c.l.b16 %v967
      %v3923 = vunpack.c.h.b16 %v967
      %v3924 = vunpack.c.l.b16 %v968
      %v3925 = vunpack.c.h.b16 %v968
      %v3926 = vunpack.c.l.b16 %v969
      %v3927 = vunpack.c.h.b16 %v969
      %v3928 = vunpack.c.l.b16 %v970
      %v3929 = vunpack.c.h.b16 %v970
      %v3930 = vunpack.c.l.b16 %v971
      %v3931 = vunpack.c.h.b16 %v971
      %v3932 = vunpack.c.l.b16 %v972
      %v3933 = vunpack.c.h.b16 %v972
      %v3934 = vunpack.c.l.b16 %v973
      %v3935 = vunpack.c.h.b16 %v973
      %v3936 = vunpack.c.l.b16 %v974
      %v3937 = vunpack.c.h.b16 %v974
      %v3938 = vunpack.c.l.b16 %v975
      %v3939 = vunpack.c.h.b16 %v975
      %v3940 = vunpack.c.l.b16 %v976
      %v3941 = vunpack.c.h.b16 %v976
      %v3942 = vunpack.c.l.b16 %v977
      %v3943 = vunpack.c.h.b16 %v977
      %v3944 = vunpack.c.l.b16 %v978
      %v3945 = vunpack.c.h.b16 %v978
      %v3946 = vunpack.c.l.b16 %v979
      %v3947 = vunpack.c.h.b16 %v979
      %v3948 = vunpack.c.l.b16 %v980
      %v3949 = vunpack.c.h.b16 %v980
      %v3950 = vunpack.c.l.b16 %v981
      %v3951 = vunpack.c.h.b16 %v981
      %v3952 = vunpack.c.l.b16 %v982
      %v3953 = vunpack.c.h.b16 %v982
      %v3954 = vunpack.c.l.b16 %v983
      %v3955 = vunpack.c.h.b16 %v983
      %v3956 = vunpack.c.l.b16 %v984
      %v3957 = vunpack.c.h.b16 %v984
      %v3958 = vunpack.c.l.b16 %v985
      %v3959 = vunpack.c.h.b16 %v985
      %v3960 = vunpack.c.l.b16 %v986
      %v3961 = vunpack.c.h.b16 %v986
      %v3962 = vunpack.c.l.b16 %v987
      %v3963 = vunpack.c.h.b16 %v987
      %v3964 = vunpack.c.l.b16 %v988
      %v3965 = vunpack.c.h.b16 %v988
      %v3966 = vunpack.c.l.b16 %v989
      %v3967 = vunpack.c.h.b16 %v989
      %v3968 = vunpack.c.l.b16 %v990
      %v3969 = vunpack.c.h.b16 %v990
      %v3970 = vunpack.c.l.b16 %v991
      %v3971 = vunpack.c.h.b16 %v991
      %v3972 = vunpack.c.l.b16 %v992
      %v3973 = vunpack.c.h.b16 %v992
      %v3974 = vunpack.c.l.b16 %v993
      %v3975 = vunpack.c.h.b16 %v993
      %v3976 = vunpack.c.l.b16 %v994
      %v3977 = vunpack.c.h.b16 %v994
      %v3978 = vunpack.c.l.b16 %v995
      %v3979 = vunpack.c.h.b16 %v995
      %v3980 = vunpack.c.l.b16 %v996
      %v3981 = vunpack.c.h.b16 %v996
      %v3982 = vunpack.c.l.b16 %v997
      %v3983 = vunpack.c.h.b16 %v997
      %v3984 = vunpack.c.l.b16 %v998
      %v3985 = vunpack.c.h.b16 %v998
      %v3986 = vunpack.c.l.b16 %v999
      %v3987 = vunpack.c.h.b16 %v999
      %v3988 = vunpack.c.l.b16 %v1000
      %v3989 = vunpack.c.h.b16 %v1000
      %v3990 = vunpack.c.l.b16 %v1001
      %v3991 = vunpack.c.h.b16 %v1001
      %v3992 = vunpack.c.l.b16 %v1002
      %v3993 = vunpack.c.h.b16 %v1002
      %v3994 = vunpack.c.l.b16 %v1003
      %v3995 = vunpack.c.h.b16 %v1003
      %v3996 = vunpack.c.l.b16 %v1004
      %v3997 = vunpack.c.h.b16 %v1004
      %v3998 = vunpack.c.l.b16 %v1005
      %v3999 = vunpack.c.h.b16 %v1005
      %v4000 = vunpack.c.l.b16 %v1006
      %v4001 = vunpack.c.h.b16 %v1006
      %v4002 = vunpack.c.l.b16 %v1007
      %v4003 = vunpack.c.h.b16 %v1007
      %v4004 = vunpack.c.l.b16 %v1008
      %v4005 = vunpack.c.h.b16 %v1008
      %v4006 = vunpack.c.l.b16 %v1009
      %v4007 = vunpack.c.h.b16 %v1009
      %v4008 = vunpack.c.l.b16 %v1010
      %v4009 = vunpack.c.h.b16 %v1010
      %v4010 = vunpack.c.l.b16 %v1011
      %v4011 = vunpack.c.h.b16 %v1011
      %v4012 = vunpack.c.l.b16 %v1012
      %v4013 = vunpack.c.h.b16 %v1012
      %v4014 = vunpack.c.l.b16 %v1013
      %v4015 = vunpack.c.h.b16 %v1013
      %v4016 = vunpack.c.l.b16 %v1014
      %v4017 = vunpack.c.h.b16 %v1014
      %v4018 = vunpack.c.l.b16 %v1015
      %v4019 = vunpack.c.h.b16 %v1015
      %v4020 = vunpack.c.l.b16 %v1016
      %v4021 = vunpack.c.h.b16 %v1016
      %v4022 = vunpack.c.l.b16 %v1017
      %v4023 = vunpack.c.h.b16 %v1017
      %v4024 = vunpack.c.l.b16 %v1018
      %v4025 = vunpack.c.h.b16 %v1018
      %v4026 = vunpack.c.l.b16 %v1019
      %v4027 = vunpack.c.h.b16 %v1019
      %v4028 = vunpack.c.l.b16 %v1020
      %v4029 = vunpack.c.h.b16 %v1020
      %v4030 = vunpack.c.l.b16 %v1021
      %v4031 = vunpack.c.h.b16 %v1021
      %v4032 = vunpack.c.l.b16 %v1022
      %v4033 = vunpack.c.h.b16 %v1022
      %v4034 = vunpack.c.l.b16 %v1023
      %v4035 = vunpack.c.h.b16 %v1023
      %v4036 = vunpack.c.l.b16 %v1024
      %v4037 = vunpack.c.h.b16 %v1024
      %v4038 = vunpack.c.l.b16 %v1025
      %v4039 = vunpack.c.h.b16 %v1025
      %v4040 = vunpack.c.l.b16 %v1026
      %v4041 = vunpack.c.h.b16 %v1026
      %v4042 = vunpack.c.l.b16 %v1027
      %v4043 = vunpack.c.h.b16 %v1027
      %v4044 = vunpack.c.l.b16 %v1028
      %v4045 = vunpack.c.h.b16 %v1028
      %v4046 = vunpack.c.l.b16 %v1029
      %v4047 = vunpack.c.h.b16 %v1029
      %v4048 = vunpack.c.l.b16 %v1030
      %v4049 = vunpack.c.h.b16 %v1030
      %v4050 = vunpack.c.l.b16 %v1031
      %v4051 = vunpack.c.h.b16 %v1031
      %v4052 = vunpack.c.l.b16 %v1032
      %v4053 = vunpack.c.h.b16 %v1032
      %v4054 = vunpack.c.l.b16 %v1033
      %v4055 = vunpack.c.h.b16 %v1033
      %v4056 = vunpack.c.l.b16 %v1034
      %v4057 = vunpack.c.h.b16 %v1034
      %v4058 = vunpack.c.l.b16 %v1035
      %v4059 = vunpack.c.h.b16 %v1035
      %v4060 = vunpack.c.l.b16 %v1036
      %v4061 = vunpack.c.h.b16 %v1036
      %v4062 = vunpack.c.l.b16 %v1037
      %v4063 = vunpack.c.h.b16 %v1037
      %v4064 = vunpack.c.l.b16 %v1038
      %v4065 = vunpack.c.h.b16 %v1038
      %v4066 = vunpack.c.l.b16 %v1039
      %v4067 = vunpack.c.h.b16 %v1039
      %v4068 = vunpack.c.l.b16 %v1040
      %v4069 = vunpack.c.h.b16 %v1040
      %v4070 = vunpack.c.l.b16 %v1041
      %v4071 = vunpack.c.h.b16 %v1041
      %v4072 = vunpack.c.l.b16 %v1042
      %v4073 = vunpack.c.h.b16 %v1042
      %v4074 = vunpack.c.l.b16 %v1043
      %v4075 = vunpack.c.h.b16 %v1043
      %v4076 = vunpack.c.l.b16 %v1044
      %v4077 = vunpack.c.h.b16 %v1044
      %v4078 = vunpack.c.l.b16 %v1045
      %v4079 = vunpack.c.h.b16 %v1045
      %v4080 = vunpack.c.l.b16 %v1046
      %v4081 = vunpack.c.h.b16 %v1046
      %v4082 = vunpack.c.l.b16 %v1047
      %v4083 = vunpack.c.h.b16 %v1047
      %v4084 = vunpack.c.l.b16 %v1048
      %v4085 = vunpack.c.h.b16 %v1048
      %v4086 = vunpack.c.l.b16 %v1049
      %v4087 = vunpack.c.h.b16 %v1049
      %v4088 = vunpack.c.l.b16 %v1050
      %v4089 = vunpack.c.h.b16 %v1050
      %v4090 = vunpack.c.l.b16 %v1051
      %v4091 = vunpack.c.h.b16 %v1051
      %v4092 = vunpack.c.l.b16 %v1052
      %v4093 = vunpack.c.h.b16 %v1052
      %v4094 = vunpack.c.l.b16 %v1053
      %v4095 = vunpack.c.h.b16 %v1053
      %v4096 = vunpack.c.l.b16 %v1054
      %v4097 = vunpack.c.h.b16 %v1054
      %v4098 = vunpack.c.l.b16 %v1055
      %v4099 = vunpack.c.h.b16 %v1055
      %v4100 = vunpack.c.l.b16 %v1056
      %v4101 = vunpack.c.h.b16 %v1056
      %v4102 = vunpack.c.l.b16 %v1057
      %v4103 = vunpack.c.h.b16 %v1057
      %v4104 = vunpack.c.l.b16 %v1058
      %v4105 = vunpack.c.h.b16 %v1058
      %v4106 = vunpack.c.l.b16 %v1059
      %v4107 = vunpack.c.h.b16 %v1059
      %v4108 = vunpack.c.l.b16 %v1060
      %v4109 = vunpack.c.h.b16 %v1060
      %v4110 = vunpack.c.l.b16 %v1061
      %v4111 = vunpack.c.h.b16 %v1061
      %v4112 = vunpack.c.l.b16 %v1062
      %v4113 = vunpack.c.h.b16 %v1062
      %v4114 = vunpack.c.l.b16 %v1063
      %v4115 = vunpack.c.h.b16 %v1063
      %v4116 = vunpack.c.l.b16 %v1064
      %v4117 = vunpack.c.h.b16 %v1064
      %v4118 = vunpack.c.l.b16 %v1065
      %v4119 = vunpack.c.h.b16 %v1065
      %v4120 = vunpack.c.l.b16 %v1066
      %v4121 = vunpack.c.h.b16 %v1066
      %v4122 = vunpack.c.l.b16 %v1067
      %v4123 = vunpack.c.h.b16 %v1067
      %v4124 = vunpack.c.l.b16 %v1068
      %v4125 = vunpack.c.h.b16 %v1068
      %v4126 = vunpack.c.l.b16 %v1069
      %v4127 = vunpack.c.h.b16 %v1069
      %v4128 = vunpack.c.l.b16 %v1070
      %v4129 = vunpack.c.h.b16 %v1070
      %v4130 = vunpack.c.l.b16 %v1071
      %v4131 = vunpack.c.h.b16 %v1071
      %v4132 = vunpack.c.l.b16 %v1072
      %v4133 = vunpack.c.h.b16 %v1072
      %v4134 = vunpack.c.l.b16 %v1073
      %v4135 = vunpack.c.h.b16 %v1073
      %v4136 = vunpack.c.l.b16 %v1074
      %v4137 = vunpack.c.h.b16 %v1074
      %v4138 = vunpack.c.l.b16 %v1075
      %v4139 = vunpack.c.h.b16 %v1075
      %v4140 = vunpack.c.l.b16 %v1076
      %v4141 = vunpack.c.h.b16 %v1076
      %v4142 = vunpack.c.l.b16 %v1077
      %v4143 = vunpack.c.h.b16 %v1077
      %v4144 = vunpack.c.l.b16 %v1078
      %v4145 = vunpack.c.h.b16 %v1078
      %v4146 = vunpack.c.l.b16 %v1079
      %v4147 = vunpack.c.h.b16 %v1079
      %v4148 = vunpack.c.l.b16 %v1080
      %v4149 = vunpack.c.h.b16 %v1080
      %v4150 = vunpack.c.l.b16 %v1081
      %v4151 = vunpack.c.h.b16 %v1081
      %v4152 = vunpack.c.l.b16 %v1082
      %v4153 = vunpack.c.h.b16 %v1082
      %v4154 = vunpack.c.l.b16 %v1083
      %v4155 = vunpack.c.h.b16 %v1083
      %v4156 = vunpack.c.l.b16 %v1084
      %v4157 = vunpack.c.h.b16 %v1084
      %v4158 = vunpack.c.l.b16 %v1085
      %v4159 = vunpack.c.h.b16 %v1085
      %v4160 = vunpack.c.l.b16 %v1086
      %v4161 = vunpack.c.h.b16 %v1086
      %v4162 = vunpack.c.l.b16 %v1087
      %v4163 = vunpack.c.h.b16 %v1087
      %v4164 = vunpack.c.l.b16 %v1088
      %v4165 = vunpack.c.h.b16 %v1088
      %v4166 = vunpack.c.l.b16 %v1089
      %v4167 = vunpack.c.h.b16 %v1089
      %v4168 = vunpack.c.l.b16 %v1090
      %v4169 = vunpack.c.h.b16 %v1090
      %v4170 = vunpack.c.l.b16 %v1091
      %v4171 = vunpack.c.h.b16 %v1091
      %v4172 = vunpack.c.l.b16 %v1092
      %v4173 = vunpack.c.h.b16 %v1092
      %v4174 = vunpack.c.l.b16 %v1093
      %v4175 = vunpack.c.h.b16 %v1093
      %v4176 = vunpack.c.l.b16 %v1094
      %v4177 = vunpack.c.h.b16 %v1094
      %v4178 = vunpack.c.l.b16 %v1095
      %v4179 = vunpack.c.h.b16 %v1095
      %v4180 = vunpack.c.l.b16 %v1096
      %v4181 = vunpack.c.h.b16 %v1096
      %v4182 = vunpack.c.l.b16 %v1097
      %v4183 = vunpack.c.h.b16 %v1097
      %v4184 = vunpack.c.l.b16 %v1098
      %v4185 = vunpack.c.h.b16 %v1098
      %v4186 = vunpack.c.l.b16 %v1099
      %v4187 = vunpack.c.h.b16 %v1099
      %v4188 = vunpack.c.l.b16 %v1100
      %v4189 = vunpack.c.h.b16 %v1100
      %v4190 = vunpack.c.l.b16 %v1101
      %v4191 = vunpack.c.h.b16 %v1101
      %v4192 = vunpack.c.l.b16 %v1102
      %v4193 = vunpack.c.h.b16 %v1102
      %v4194 = vunpack.c.l.b16 %v1103
      %v4195 = vunpack.c.h.b16 %v1103
      %v4196 = vunpack.c.l.b16 %v1104
      %v4197 = vunpack.c.h.b16 %v1104
      %v4198 = vunpack.c.l.b16 %v1105
      %v4199 = vunpack.c.h.b16 %v1105
      %v4200 = vunpack.c.l.b16 %v1106
      %v4201 = vunpack.c.h.b16 %v1106
      %v4202 = vunpack.c.l.b16 %v1107
      %v4203 = vunpack.c.h.b16 %v1107
      %v4204 = vunpack.c.l.b16 %v1108
      %v4205 = vunpack.c.h.b16 %v1108
      %v4206 = vunpack.c.l.b16 %v1109
      %v4207 = vunpack.c.h.b16 %v1109
      %v4208 = vunpack.c.l.b16 %v1110
      %v4209 = vunpack.c.h.b16 %v1110
      %v4210 = vunpack.c.l.b16 %v1111
      %v4211 = vunpack.c.h.b16 %v1111
      %v4212 = vunpack.c.l.b16 %v1112
      %v4213 = vunpack.c.h.b16 %v1112
      %v4214 = vunpack.c.l.b16 %v1113
      %v4215 = vunpack.c.h.b16 %v1113
      %v4216 = vunpack.c.l.b16 %v1114
      %v4217 = vunpack.c.h.b16 %v1114
      %v4218 = vunpack.c.l.b16 %v1115
      %v4219 = vunpack.c.h.b16 %v1115
      %v4220 = vunpack.c.l.b16 %v1116
      %v4221 = vunpack.c.h.b16 %v1116
      %v4222 = vunpack.c.l.b16 %v1117
      %v4223 = vunpack.c.h.b16 %v1117
      %v4224 = vunpack.c.l.b16 %v1118
      %v4225 = vunpack.c.h.b16 %v1118
      %v4226 = vunpack.c.l.b16 %v1119
      %v4227 = vunpack.c.h.b16 %v1119
      %v4228 = vunpack.c.l.b16 %v1120
      %v4229 = vunpack.c.h.b16 %v1120
      %v4230 = vunpack.c.l.b16 %v1121
      %v4231 = vunpack.c.h.b16 %v1121
      %v4232 = vunpack.c.l.b16 %v1122
      %v4233 = vunpack.c.h.b16 %v1122
      %v4234 = vunpack.c.l.b16 %v1123
      %v4235 = vunpack.c.h.b16 %v1123
      %v4236 = vunpack.c.l.b16 %v1124
      %v4237 = vunpack.c.h.b16 %v1124
      %v4238 = vunpack.c.l.b16 %v1125
      %v4239 = vunpack.c.h.b16 %v1125
      %v4240 = vunpack.c.l.b16 %v1126
      %v4241 = vunpack.c.h.b16 %v1126
      %v4242 = vunpack.c.l.b16 %v1127
      %v4243 = vunpack.c.h.b16 %v1127
      %v4244 = vunpack.c.l.b16 %v1128
      %v4245 = vunpack.c.h.b16 %v1128
      %v4246 = vunpack.c.l.b16 %v1129
      %v4247 = vunpack.c.h.b16 %v1129
      %v4248 = vunpack.c.l.b16 %v1130
      %v4249 = vunpack.c.h.b16 %v1130
      %v4250 = vunpack.c.l.b16 %v1131
      %v4251 = vunpack.c.h.b16 %v1131
      %v4252 = vunpack.c.l.b16 %v1132
      %v4253 = vunpack.c.h.b16 %v1132
      %v4254 = vunpack.c.l.b16 %v1133
      %v4255 = vunpack.c.h.b16 %v1133
      %v4256 = vunpack.c.l.b16 %v1134
      %v4257 = vunpack.c.h.b16 %v1134
      %v4258 = vunpack.c.l.b16 %v1135
      %v4259 = vunpack.c.h.b16 %v1135
      %v4260 = vunpack.c.l.b16 %v1136
      %v4261 = vunpack.c.h.b16 %v1136
      %v4262 = vunpack.c.l.b16 %v1137
      %v4263 = vunpack.c.h.b16 %v1137
      %v4264 = vunpack.c.l.b16 %v1138
      %v4265 = vunpack.c.h.b16 %v1138
      %v4266 = vunpack.c.l.b16 %v1139
      %v4267 = vunpack.c.h.b16 %v1139
      %v4268 = vunpack.c.l.b16 %v1140
      %v4269 = vunpack.c.h.b16 %v1140
      %v4270 = vunpack.c.l.b16 %v1141
      %v4271 = vunpack.c.h.b16 %v1141
      %v4272 = vunpack.c.l.b16 %v1142
      %v4273 = vunpack.c.h.b16 %v1142
      %v4274 = vunpack.c.l.b16 %v1143
      %v4275 = vunpack.c.h.b16 %v1143
      %v4276 = vunpack.c.l.b16 %v1144
      %v4277 = vunpack.c.h.b16 %v1144
      %v4278 = vunpack.c.l.b16 %v1145
      %v4279 = vunpack.c.h.b16 %v1145
      %v4280 = vunpack.c.l.b16 %v1146
      %v4281 = vunpack.c.h.b16 %v1146
      %v4282 = vunpack.c.l.b16 %v1147
      %v4283 = vunpack.c.h.b16 %v1147
      %v4284 = vunpack.c.l.b16 %v1148
      %v4285 = vunpack.c.h.b16 %v1148
      %v4286 = vunpack.c.l.b16 %v1149
      %v4287 = vunpack.c.h.b16 %v1149
      %v4288 = vunpack.c.l.b16 %v1150
      %v4289 = vunpack.c.h.b16 %v1150
      %v4290 = vunpack.c.l.b16 %v1151
      %v4291 = vunpack.c.h.b16 %v1151
      %v4292 = vunpack.c.l.b16 %v1152
      %v4293 = vunpack.c.h.b16 %v1152
      %v4294 = vunpack.c.l.b16 %v1153
      %v4295 = vunpack.c.h.b16 %v1153
      %v4296 = vunpack.c.l.b16 %v1154
      %v4297 = vunpack.c.h.b16 %v1154
      %v4298 = vunpack.c.l.b16 %v1155
      %v4299 = vunpack.c.h.b16 %v1155
      %v4300 = vunpack.c.l.b16 %v1156
      %v4301 = vunpack.c.h.b16 %v1156
      %v4302 = vunpack.c.l.b16 %v1157
      %v4303 = vunpack.c.h.b16 %v1157
      %v4304 = vunpack.c.l.b16 %v1158
      %v4305 = vunpack.c.h.b16 %v1158
      %v4306 = vunpack.c.l.b16 %v1159
      %v4307 = vunpack.c.h.b16 %v1159
      %v4308 = vunpack.c.l.b16 %v1160
      %v4309 = vunpack.c.h.b16 %v1160
      %v4310 = vunpack.c.l.b16 %v1161
      %v4311 = vunpack.c.h.b16 %v1161
      %v4312 = vunpack.c.l.b16 %v1162
      %v4313 = vunpack.c.h.b16 %v1162
      %v4314 = vunpack.c.l.b16 %v1163
      %v4315 = vunpack.c.h.b16 %v1163
      %v4316 = vunpack.c.l.b16 %v1164
      %v4317 = vunpack.c.h.b16 %v1164
      %v4318 = vunpack.c.l.b16 %v1165
      %v4319 = vunpack.c.h.b16 %v1165
      %v4320 = vunpack.c.l.b16 %v1166
      %v4321 = vunpack.c.h.b16 %v1166
      %v4322 = vunpack.c.l.b16 %v1167
      %v4323 = vunpack.c.h.b16 %v1167
      %v4324 = vunpack.c.l.b16 %v1168
      %v4325 = vunpack.c.h.b16 %v1168
      %v4326 = vunpack.c.l.b16 %v1169
      %v4327 = vunpack.c.h.b16 %v1169
      %v4328 = vunpack.c.l.b16 %v1170
      %v4329 = vunpack.c.h.b16 %v1170
      %v4330 = vunpack.c.l.b16 %v1171
      %v4331 = vunpack.c.h.b16 %v1171
      %v4332 = vunpack.c.l.b16 %v1172
      %v4333 = vunpack.c.h.b16 %v1172
      %v4334 = vunpack.c.l.b16 %v1173
      %v4335 = vunpack.c.h.b16 %v1173
      %v4336 = vunpack.c.l.b16 %v1174
      %v4337 = vunpack.c.h.b16 %v1174
      %v4338 = vunpack.c.l.b16 %v1175
      %v4339 = vunpack.c.h.b16 %v1175
      %v4340 = vunpack.c.l.b16 %v1176
      %v4341 = vunpack.c.h.b16 %v1176
      %v4342 = vunpack.c.l.b16 %v1177
      %v4343 = vunpack.c.h.b16 %v1177
      %v4344 = vunpack.c.l.b16 %v1178
      %v4345 = vunpack.c.h.b16 %v1178
      %v4346 = vunpack.c.l.b16 %v1179
      %v4347 = vunpack.c.h.b16 %v1179
      %v4348 = vunpack.c.l.b16 %v1180
      %v4349 = vunpack.c.h.b16 %v1180
      %v4350 = vunpack.c.l.b16 %v1181
      %v4351 = vunpack.c.h.b16 %v1181
      %v4352 = vunpack.c.l.b16 %v1182
      %v4353 = vunpack.c.h.b16 %v1182
      %v4354 = vunpack.c.l.b16 %v1183
      %v4355 = vunpack.c.h.b16 %v1183
      %v4356 = vunpack.c.l.b16 %v1184
      %v4357 = vunpack.c.h.b16 %v1184
      %v4358 = vunpack.c.l.b16 %v1185
      %v4359 = vunpack.c.h.b16 %v1185
      %v4360 = vunpack.c.l.b16 %v1186
      %v4361 = vunpack.c.h.b16 %v1186
      %v4362 = vunpack.c.l.b16 %v1187
      %v4363 = vunpack.c.h.b16 %v1187
      %v4364 = vunpack.c.l.b16 %v1188
      %v4365 = vunpack.c.h.b16 %v1188
      %v4366 = vunpack.c.l.b16 %v1189
      %v4367 = vunpack.c.h.b16 %v1189
      %v4368 = vunpack.c.l.b16 %v1190
      %v4369 = vunpack.c.h.b16 %v1190
      %v4370 = vunpack.c.l.b16 %v1191
      %v4371 = vunpack.c.h.b16 %v1191
      %v4372 = vunpack.c.l.b16 %v1192
      %v4373 = vunpack.c.h.b16 %v1192
      %v4374 = vunpack.c.l.b16 %v1193
      %v4375 = vunpack.c.h.b16 %v1193
      %v4376 = vunpack.c.l.b16 %v1194
      %v4377 = vunpack.c.h.b16 %v1194
      %v4378 = vunpack.c.l.b16 %v1195
      %v4379 = vunpack.c.h.b16 %v1195
      %v4380 = vunpack.c.l.b16 %v1196
      %v4381 = vunpack.c.h.b16 %v1196
      %v4382 = vunpack.c.l.b16 %v1197
      %v4383 = vunpack.c.h.b16 %v1197
      %v4384 = vunpack.c.l.b16 %v1198
      %v4385 = vunpack.c.h.b16 %v1198
      %v4386 = vunpack.c.l.b16 %v1199
      %v4387 = vunpack.c.h.b16 %v1199
      %v4388 = vunpack.c.l.b16 %v1200
      %v4389 = vunpack.c.h.b16 %v1200
      %v4390 = vunpack.c.l.b16 %v1201
      %v4391 = vunpack.c.h.b16 %v1201
      %v4392 = vunpack.c.l.b16 %v1202
      %v4393 = vunpack.c.h.b16 %v1202
      %v4394 = vunpack.c.l.b16 %v1203
      %v4395 = vunpack.c.h.b16 %v1203
      %v4396 = vunpack.c.l.b16 %v1204
      %v4397 = vunpack.c.h.b16 %v1204
      %v4398 = vunpack.c.l.b16 %v1205
      %v4399 = vunpack.c.h.b16 %v1205
      %v4400 = vunpack.c.l.b16 %v1206
      %v4401 = vunpack.c.h.b16 %v1206
      %v4402 = vunpack.c.l.b16 %v1207
      %v4403 = vunpack.c.h.b16 %v1207
      %v4404 = vunpack.c.l.b16 %v1208
      %v4405 = vunpack.c.h.b16 %v1208
      %v4406 = vunpack.c.l.b16 %v1209
      %v4407 = vunpack.c.h.b16 %v1209
      %v4408 = vunpack.c.l.b16 %v1210
      %v4409 = vunpack.c.h.b16 %v1210
      %v4410 = vunpack.c.l.b16 %v1211
      %v4411 = vunpack.c.h.b16 %v1211
      %v4412 = vunpack.c.l.b16 %v1212
      %v4413 = vunpack.c.h.b16 %v1212
      %v4414 = vunpack.c.l.b16 %v1213
      %v4415 = vunpack.c.h.b16 %v1213
      %v4416 = vunpack.c.l.b16 %v1214
      %v4417 = vunpack.c.h.b16 %v1214
      %v4418 = vunpack.c.l.b16 %v1215
      %v4419 = vunpack.c.h.b16 %v1215
      %v4420 = vunpack.c.l.b16 %v1216
      %v4421 = vunpack.c.h.b16 %v1216
      %v4422 = vunpack.c.l.b16 %v1217
      %v4423 = vunpack.c.h.b16 %v1217
      %v4424 = vunpack.c.l.b16 %v1218
      %v4425 = vunpack.c.h.b16 %v1218
      %v4426 = vunpack.c.l.b16 %v1219
      %v4427 = vunpack.c.h.b16 %v1219
      %v4428 = vunpack.c.l.b16 %v1220
      %v4429 = vunpack.c.h.b16 %v1220
      %v4430 = vunpack.c.l.b16 %v1221
      %v4431 = vunpack.c.h.b16 %v1221
      %v4432 = vunpack.c.l.b16 %v1222
      %v4433 = vunpack.c.h.b16 %v1222
      %v4434 = vunpack.c.l.b16 %v1223
      %v4435 = vunpack.c.h.b16 %v1223
      %v4436 = vunpack.c.l.b16 %v1224
      %v4437 = vunpack.c.h.b16 %v1224
      %v4438 = vunpack.c.l.b16 %v1225
      %v4439 = vunpack.c.h.b16 %v1225
      %v4440 = vunpack.c.l.b16 %v1226
      %v4441 = vunpack.c.h.b16 %v1226
      %v4442 = vunpack.c.l.b16 %v1227
      %v4443 = vunpack.c.h.b16 %v1227
      %v4444 = vunpack.c.l.b16 %v1228
      %v4445 = vunpack.c.h.b16 %v1228
      %v4446 = vunpack.c.l.b16 %v1229
      %v4447 = vunpack.c.h.b16 %v1229
      %v4448 = vunpack.c.l.b16 %v1230
      %v4449 = vunpack.c.h.b16 %v1230
      %v4450 = vunpack.c.l.b16 %v1231
      %v4451 = vunpack.c.h.b16 %v1231
      %v4452 = vunpack.c.l.b16 %v1232
      %v4453 = vunpack.c.h.b16 %v1232
      %v4454 = vunpack.c.l.b16 %v1233
      %v4455 = vunpack.c.h.b16 %v1233
      %v4456 = vunpack.c.l.b16 %v1234
      %v4457 = vunpack.c.h.b16 %v1234
      %v4458 = vunpack.c.l.b16 %v1235
      %v4459 = vunpack.c.h.b16 %v1235
      %v4460 = vunpack.c.l.b16 %v1236
      %v4461 = vunpack.c.h.b16 %v1236
      %v4462 = vunpack.c.l.b16 %v1237
      %v4463 = vunpack.c.h.b16 %v1237
      %v4464 = vunpack.c.l.b16 %v1238
      %v4465 = vunpack.c.h.b16 %v1238
      %v4466 = vunpack.c.l.b16 %v1239
      %v4467 = vunpack.c.h.b16 %v1239
      %v4468 = vunpack.c.l.b16 %v1240
      %v4469 = vunpack.c.h.b16 %v1240
      %v4470 = vunpack.c.l.b16 %v1241
      %v4471 = vunpack.c.h.b16 %v1241
      %v4472 = vunpack.c.l.b16 %v1242
      %v4473 = vunpack.c.h.b16 %v1242
      %v4474 = vunpack.c.l.b16 %v1243
      %v4475 = vunpack.c.h.b16 %v1243
      %v4476 = vpack.c.b16 %v2432, %v2428
      %v4477 = vpack.c.b16 %v2433, %v2429
      %v4478 = vpack.c.b16 %v2434, %v2430
      %v4479 = vpack.c.b16 %v2435, %v2431
      %v4480 = vpack.c.b16 %v2440, %v2436
      %v4481 = vpack.c.b16 %v2441, %v2437
      %v4482 = vpack.c.b16 %v2442, %v2438
      %v4483 = vpack.c.b16 %v2443, %v2439
      %v4484 = vpack.c.b16 %v2448, %v2444
      %v4485 = vpack.c.b16 %v2449, %v2445
      %v4486 = vpack.c.b16 %v2450, %v2446
      %v4487 = vpack.c.b16 %v2451, %v2447
      %v4488 = vpack.c.b16 %v2456, %v2452
      %v4489 = vpack.c.b16 %v2457, %v2453
      %v4490 = vpack.c.b16 %v2458, %v2454
      %v4491 = vpack.c.b16 %v2459, %v2455
      %v4492 = vpack.c.b16 %v2464, %v2460
      %v4493 = vpack.c.b16 %v2465, %v2461
      %v4494 = vpack.c.b16 %v2466, %v2462
      %v4495 = vpack.c.b16 %v2467, %v2463
      %v4496 = vpack.c.b16 %v2472, %v2468
      %v4497 = vpack.c.b16 %v2473, %v2469
      %v4498 = vpack.c.b16 %v2474, %v2470
      %v4499 = vpack.c.b16 %v2475, %v2471
      %v4500 = vpack.c.b16 %v2480, %v2476
      %v4501 = vpack.c.b16 %v2481, %v2477
      %v4502 = vpack.c.b16 %v2482, %v2478
      %v4503 = vpack.c.b16 %v2483, %v2479
      %v4504 = vpack.c.b16 %v2488, %v2484
      %v4505 = vpack.c.b16 %v2489, %v2485
      %v4506 = vpack.c.b16 %v2490, %v2486
      %v4507 = vpack.c.b16 %v2491, %v2487
      %v4508 = vpack.c.b16 %v2496, %v2492
      %v4509 = vpack.c.b16 %v2497, %v2493
      %v4510 = vpack.c.b16 %v2498, %v2494
      %v4511 = vpack.c.b16 %v2499, %v2495
      %v4512 = vpack.c.b16 %v2504, %v2500
      %v4513 = vpack.c.b16 %v2505, %v2501
      %v4514 = vpack.c.b16 %v2506, %v2502
      %v4515 = vpack.c.b16 %v2507, %v2503
      %v4516 = vpack.c.b16 %v2512, %v2508
      %v4517 = vpack.c.b16 %v2513, %v2509
      %v4518 = vpack.c.b16 %v2514, %v2510
      %v4519 = vpack.c.b16 %v2515, %v2511
      %v4520 = vpack.c.b16 %v2520, %v2516
      %v4521 = vpack.c.b16 %v2521, %v2517
      %v4522 = vpack.c.b16 %v2522, %v2518
      %v4523 = vpack.c.b16 %v2523, %v2519
      %v4524 = vpack.c.b16 %v2528, %v2524
      %v4525 = vpack.c.b16 %v2529, %v2525
      %v4526 = vpack.c.b16 %v2530, %v2526
      %v4527 = vpack.c.b16 %v2531, %v2527
      %v4528 = vpack.c.b16 %v2536, %v2532
      %v4529 = vpack.c.b16 %v2537, %v2533
      %v4530 = vpack.c.b16 %v2538, %v2534
      %v4531 = vpack.c.b16 %v2539, %v2535
      %v4532 = vpack.c.b16 %v2544, %v2540
      %v4533 = vpack.c.b16 %v2545, %v2541
      %v4534 = vpack.c.b16 %v2546, %v2542
      %v4535 = vpack.c.b16 %v2547, %v2543
      %v4536 = vpack.c.b16 %v2552, %v2548
      %v4537 = vpack.c.b16 %v2553, %v2549
      %v4538 = vpack.c.b16 %v2554, %v2550
      %v4539 = vpack.c.b16 %v2555, %v2551
      %v4540 = vpack.c.b16 %v2560, %v2556
      %v4541 = vpack.c.b16 %v2561, %v2557
      %v4542 = vpack.c.b16 %v2562, %v2558
      %v4543 = vpack.c.b16 %v2563, %v2559
      %v4544 = vpack.c.b16 %v2568, %v2564
      %v4545 = vpack.c.b16 %v2569, %v2565
      %v4546 = vpack.c.b16 %v2570, %v2566
      %v4547 = vpack.c.b16 %v2571, %v2567
      %v4548 = vpack.c.b16 %v2576, %v2572
      %v4549 = vpack.c.b16 %v2577, %v2573
      %v4550 = vpack.c.b16 %v2578, %v2574
      %v4551 = vpack.c.b16 %v2579, %v2575
      %v4552 = vpack.c.b16 %v2584, %v2580
      %v4553 = vpack.c.b16 %v2585, %v2581
      %v4554 = vpack.c.b16 %v2586, %v2582
      %v4555 = vpack.c.b16 %v2587, %v2583
      %v4556 = vpack.c.b16 %v2592, %v2588
      %v4557 = vpack.c.b16 %v2593, %v2589
      %v4558 = vpack.c.b16 %v2594, %v2590
      %v4559 = vpack.c.b16 %v2595, %v2591
      %v4560 = vpack.c.b16 %v2600, %v2596
      %v4561 = vpack.c.b16 %v2601, %v2597
      %v4562 = vpack.c.b16 %v2602, %v2598
      %v4563 = vpack.c.b16 %v2603, %v2599
      %v4564 = vpack.c.b16 %v2608, %v2604
      %v4565 = vpack.c.b16 %v2609, %v2605
      %v4566 = vpack.c.b16 %v2610, %v2606
      %v4567 = vpack.c.b16 %v2611, %v2607
      %v4568 = vpack.c.b16 %v2616, %v2612
      %v4569 = vpack.c.b16 %v2617, %v2613
      %v4570 = vpack.c.b16 %v2618, %v2614
      %v4571 = vpack.c.b16 %v2619, %v2615
      %v4572 = vpack.c.b16 %v2624, %v2620
      %v4573 = vpack.c.b16 %v2625, %v2621
      %v4574 = vpack.c.b16 %v2626, %v2622
      %v4575 = vpack.c.b16 %v2627, %v2623
      %v4576 = vpack.c.b16 %v2632, %v2628
      %v4577 = vpack.c.b16 %v2633, %v2629
      %v4578 = vpack.c.b16 %v2634, %v2630
      %v4579 = vpack.c.b16 %v2635, %v2631
      %v4580 = vpack.c.b16 %v2640, %v2636
      %v4581 = vpack.c.b16 %v2641, %v2637
      %v4582 = vpack.c.b16 %v2642, %v2638
      %v4583 = vpack.c.b16 %v2643, %v2639
      %v4584 = vpack.c.b16 %v2648, %v2644
      %v4585 = vpack.c.b16 %v2649, %v2645
      %v4586 = vpack.c.b16 %v2650, %v2646
      %v4587 = vpack.c.b16 %v2651, %v2647
      %v4588 = vpack.c.b16 %v2656, %v2652
      %v4589 = vpack.c.b16 %v2657, %v2653
      %v4590 = vpack.c.b16 %v2658, %v2654
      %v4591 = vpack.c.b16 %v2659, %v2655
      %v4592 = vpack.c.b16 %v2664, %v2660
      %v4593 = vpack.c.b16 %v2665, %v2661
      %v4594 = vpack.c.b16 %v2666, %v2662
      %v4595 = vpack.c.b16 %v2667, %v2663
      %v4596 = vpack.c.b16 %v2672, %v2668
      %v4597 = vpack.c.b16 %v2673, %v2669
      %v4598 = vpack.c.b16 %v2674, %v2670
      %v4599 = vpack.c.b16 %v2675, %v2671
      %v4600 = vpack.c.b16 %v2680, %v2676
      %v4601 = vpack.c.b16 %v2681, %v2677
      %v4602 = vpack.c.b16 %v2682, %v2678
      %v4603 = vpack.c.b16 %v2683, %v2679
      %v4604 = vpack.c.b16 %v2688, %v2684
      %v4605 = vpack.c.b16 %v2689, %v2685
      %v4606 = vpack.c.b16 %v2690, %v2686
      %v4607 = vpack.c.b16 %v2691, %v2687
      %v4608 = vpack.c.b16 %v2696, %v2692
      %v4609 = vpack.c.b16 %v2697, %v2693
      %v4610 = vpack.c.b16 %v2698, %v2694
      %v4611 = vpack.c.b16 %v2699, %v2695
      %v4612 = vpack.c.b16 %v2704, %v2700
      %v4613 = vpack.c.b16 %v2705, %v2701
      %v4614 = vpack.c.b16 %v2706, %v2702
      %v4615 = vpack.c.b16 %v2707, %v2703
      %v4616 = vpack.c.b16 %v2712, %v2708
      %v4617 = vpack.c.b16 %v2713, %v2709
      %v4618 = vpack.c.b16 %v2714, %v2710
      %v4619 = vpack.c.b16 %v2715, %v2711
      %v4620 = vpack.c.b16 %v2720, %v2716
      %v4621 = vpack.c.b16 %v2721, %v2717
      %v4622 = vpack.c.b16 %v2722, %v2718
      %v4623 = vpack.c.b16 %v2723, %v2719
      %v4624 = vpack.c.b16 %v2728, %v2724
      %v4625 = vpack.c.b16 %v2729, %v2725
      %v4626 = vpack.c.b16 %v2730, %v2726
      %v4627 = vpack.c.b16 %v2731, %v2727
      %v4628 = vpack.c.b16 %v2736, %v2732
      %v4629 = vpack.c.b16 %v2737, %v2733
      %v4630 = vpack.c.b16 %v2738, %v2734
      %v4631 = vpack.c.b16 %v2739, %v2735
      %v4632 = vpack.c.b16 %v2744, %v2740
      %v4633 = vpack.c.b16 %v2745, %v2741
      %v4634 = vpack.c.b16 %v2746, %v2742
      %v4635 = vpack.c.b16 %v2747, %v2743
      %v4636 = vpack.c.b16 %v2752, %v2748
      %v4637 = vpack.c.b16 %v2753, %v2749
      %v4638 = vpack.c.b16 %v2754, %v2750
      %v4639 = vpack.c.b16 %v2755, %v2751
      %v4640 = vpack.c.b16 %v2760, %v2756
      %v4641 = vpack.c.b16 %v2761, %v2757
      %v4642 = vpack.c.b16 %v2762, %v2758
      %v4643 = vpack.c.b16 %v2763, %v2759
      %v4644 = vpack.c.b16 %v2768, %v2764
      %v4645 = vpack.c.b16 %v2769, %v2765
      %v4646 = vpack.c.b16 %v2770, %v2766
      %v4647 = vpack.c.b16 %v2771, %v2767
      %v4648 = vpack.c.b16 %v2776, %v2772
      %v4649 = vpack.c.b16 %v2777, %v2773
      %v4650 = vpack.c.b16 %v2778, %v2774
      %v4651 = vpack.c.b16 %v2779, %v2775
      %v4652 = vpack.c.b16 %v2784, %v2780
      %v4653 = vpack.c.b16 %v2785, %v2781
      %v4654 = vpack.c.b16 %v2786, %v2782
      %v4655 = vpack.c.b16 %v2787, %v2783
      %v4656 = vpack.c.b16 %v2792, %v2788
      %v4657 = vpack.c.b16 %v2793, %v2789
      %v4658 = vpack.c.b16 %v2794, %v2790
      %v4659 = vpack.c.b16 %v2795, %v2791
      %v4660 = vpack.c.b16 %v2800, %v2796
      %v4661 = vpack.c.b16 %v2801, %v2797
      %v4662 = vpack.c.b16 %v2802, %v2798
      %v4663 = vpack.c.b16 %v2803, %v2799
      %v4664 = vpack.c.b16 %v2808, %v2804
      %v4665 = vpack.c.b16 %v2809, %v2805
      %v4666 = vpack.c.b16 %v2810, %v2806
      %v4667 = vpack.c.b16 %v2811, %v2807
      %v4668 = vpack.c.b16 %v2816, %v2812
      %v4669 = vpack.c.b16 %v2817, %v2813
      %v4670 = vpack.c.b16 %v2818, %v2814
      %v4671 = vpack.c.b16 %v2819, %v2815
      %v4672 = vpack.c.b16 %v2824, %v2820
      %v4673 = vpack.c.b16 %v2825, %v2821
      %v4674 = vpack.c.b16 %v2826, %v2822
      %v4675 = vpack.c.b16 %v2827, %v2823
      %v4676 = vpack.c.b16 %v2832, %v2828
      %v4677 = vpack.c.b16 %v2833, %v2829
      %v4678 = vpack.c.b16 %v2834, %v2830
      %v4679 = vpack.c.b16 %v2835, %v2831
      %v4680 = vpack.c.b16 %v2840, %v2836
      %v4681 = vpack.c.b16 %v2841, %v2837
      %v4682 = vpack.c.b16 %v2842, %v2838
      %v4683 = vpack.c.b16 %v2843, %v2839
      %v4684 = vpack.c.b16 %v2848, %v2844
      %v4685 = vpack.c.b16 %v2849, %v2845
      %v4686 = vpack.c.b16 %v2850, %v2846
      %v4687 = vpack.c.b16 %v2851, %v2847
      %v4688 = vpack.c.b16 %v2856, %v2852
      %v4689 = vpack.c.b16 %v2857, %v2853
      %v4690 = vpack.c.b16 %v2858, %v2854
      %v4691 = vpack.c.b16 %v2859, %v2855
      %v4692 = vpack.c.b16 %v2864, %v2860
      %v4693 = vpack.c.b16 %v2865, %v2861
      %v4694 = vpack.c.b16 %v2866, %v2862
      %v4695 = vpack.c.b16 %v2867, %v2863
      %v4696 = vpack.c.b16 %v2872, %v2868
      %v4697 = vpack.c.b16 %v2873, %v2869
      %v4698 = vpack.c.b16 %v2874, %v2870
      %v4699 = vpack.c.b16 %v2875, %v2871
      %v4700 = vpack.c.b16 %v2880, %v2876
      %v4701 = vpack.c.b16 %v2881, %v2877
      %v4702 = vpack.c.b16 %v2882, %v2878
      %v4703 = vpack.c.b16 %v2883, %v2879
      %v4704 = vpack.c.b16 %v2888, %v2884
      %v4705 = vpack.c.b16 %v2889, %v2885
      %v4706 = vpack.c.b16 %v2890, %v2886
      %v4707 = vpack.c.b16 %v2891, %v2887
      %v4708 = vpack.c.b16 %v2896, %v2892
      %v4709 = vpack.c.b16 %v2897, %v2893
      %v4710 = vpack.c.b16 %v2898, %v2894
      %v4711 = vpack.c.b16 %v2899, %v2895
      %v4712 = vpack.c.b16 %v2904, %v2900
      %v4713 = vpack.c.b16 %v2905, %v2901
      %v4714 = vpack.c.b16 %v2906, %v2902
      %v4715 = vpack.c.b16 %v2907, %v2903
      %v4716 = vpack.c.b16 %v2912, %v2908
      %v4717 = vpack.c.b16 %v2913, %v2909
      %v4718 = vpack.c.b16 %v2914, %v2910
      %v4719 = vpack.c.b16 %v2915, %v2911
      %v4720 = vpack.c.b16 %v2920, %v2916
      %v4721 = vpack.c.b16 %v2921, %v2917
      %v4722 = vpack.c.b16 %v2922, %v2918
      %v4723 = vpack.c.b16 %v2923, %v2919
      %v4724 = vpack.c.b16 %v2928, %v2924
      %v4725 = vpack.c.b16 %v2929, %v2925
      %v4726 = vpack.c.b16 %v2930, %v2926
      %v4727 = vpack.c.b16 %v2931, %v2927
      %v4728 = vpack.c.b16 %v2936, %v2932
      %v4729 = vpack.c.b16 %v2937, %v2933
      %v4730 = vpack.c.b16 %v2938, %v2934
      %v4731 = vpack.c.b16 %v2939, %v2935
      %v4732 = vpack.c.b16 %v2944, %v2940
      %v4733 = vpack.c.b16 %v2945, %v2941
      %v4734 = vpack.c.b16 %v2946, %v2942
      %v4735 = vpack.c.b16 %v2947, %v2943
      %v4736 = vpack.c.b16 %v2952, %v2948
      %v4737 = vpack.c.b16 %v2953, %v2949
      %v4738 = vpack.c.b16 %v2954, %v2950
      %v4739 = vpack.c.b16 %v2955, %v2951
      %v4740 = vpack.c.b16 %v2960, %v2956
      %v4741 = vpack.c.b16 %v2961, %v2957
      %v4742 = vpack.c.b16 %v2962, %v2958
      %v4743 = vpack.c.b16 %v2963, %v2959
      %v4744 = vpack.c.b16 %v2968, %v2964
      %v4745 = vpack.c.b16 %v2969, %v2965
      %v4746 = vpack.c.b16 %v2970, %v2966
      %v4747 = vpack.c.b16 %v2971, %v2967
      %v4748 = vpack.c.b16 %v2976, %v2972
      %v4749 = vpack.c.b16 %v2977, %v2973
      %v4750 = vpack.c.b16 %v2978, %v2974
      %v4751 = vpack.c.b16 %v2979, %v2975
      %v4752 = vpack.c.b16 %v2984, %v2980
      %v4753 = vpack.c.b16 %v2985, %v2981
      %v4754 = vpack.c.b16 %v2986, %v2982
      %v4755 = vpack.c.b16 %v2987, %v2983
      %v4756 = vpack.c.b16 %v2992, %v2988
      %v4757 = vpack.c.b16 %v2993, %v2989
      %v4758 = vpack.c.b16 %v2994, %v2990
      %v4759 = vpack.c.b16 %v2995, %v2991
      %v4760 = vpack.c.b16 %v3000, %v2996
      %v4761 = vpack.c.b16 %v3001, %v2997
      %v4762 = vpack.c.b16 %v3002, %v2998
      %v4763 = vpack.c.b16 %v3003, %v2999
      %v4764 = vpack.c.b16 %v3008, %v3004
      %v4765 = vpack.c.b16 %v3009, %v3005
      %v4766 = vpack.c.b16 %v3010, %v3006
      %v4767 = vpack.c.b16 %v3011, %v3007
      %v4768 = vpack.c.b16 %v3016, %v3012
      %v4769 = vpack.c.b16 %v3017, %v3013
      %v4770 = vpack.c.b16 %v3018, %v3014
      %v4771 = vpack.c.b16 %v3019, %v3015
      %v4772 = vpack.c.b16 %v3024, %v3020
      %v4773 = vpack.c.b16 %v3025, %v3021
      %v4774 = vpack.c.b16 %v3026, %v3022
      %v4775 = vpack.c.b16 %v3027, %v3023
      %v4776 = vpack.c.b16 %v3032, %v3028
      %v4777 = vpack.c.b16 %v3033, %v3029
      %v4778 = vpack.c.b16 %v3034, %v3030
      %v4779 = vpack.c.b16 %v3035, %v3031
      %v4780 = vpack.c.b16 %v3040, %v3036
      %v4781 = vpack.c.b16 %v3041, %v3037
      %v4782 = vpack.c.b16 %v3042, %v3038
      %v4783 = vpack.c.b16 %v3043, %v3039
      %v4784 = vpack.c.b16 %v3048, %v3044
      %v4785 = vpack.c.b16 %v3049, %v3045
      %v4786 = vpack.c.b16 %v3050, %v3046
      %v4787 = vpack.c.b16 %v3051, %v3047
      %v4788 = vpack.c.b16 %v3056, %v3052
      %v4789 = vpack.c.b16 %v3057, %v3053
      %v4790 = vpack.c.b16 %v3058, %v3054
      %v4791 = vpack.c.b16 %v3059, %v3055
      %v4792 = vpack.c.b16 %v3064, %v3060
      %v4793 = vpack.c.b16 %v3065, %v3061
      %v4794 = vpack.c.b16 %v3066, %v3062
      %v4795 = vpack.c.b16 %v3067, %v3063
      %v4796 = vpack.c.b16 %v3072, %v3068
      %v4797 = vpack.c.b16 %v3073, %v3069
      %v4798 = vpack.c.b16 %v3074, %v3070
      %v4799 = vpack.c.b16 %v3075, %v3071
      %v4800 = vpack.c.b16 %v3080, %v3076
      %v4801 = vpack.c.b16 %v3081, %v3077
      %v4802 = vpack.c.b16 %v3082, %v3078
      %v4803 = vpack.c.b16 %v3083, %v3079
      %v4804 = vpack.c.b16 %v3088, %v3084
      %v4805 = vpack.c.b16 %v3089, %v3085
      %v4806 = vpack.c.b16 %v3090, %v3086
      %v4807 = vpack.c.b16 %v3091, %v3087
      %v4808 = vpack.c.b16 %v3096, %v3092
      %v4809 = vpack.c.b16 %v3097, %v3093
      %v4810 = vpack.c.b16 %v3098, %v3094
      %v4811 = vpack.c.b16 %v3099, %v3095
      %v4812 = vpack.c.b16 %v3104, %v3100
      %v4813 = vpack.c.b16 %v3105, %v3101
      %v4814 = vpack.c.b16 %v3106, %v3102
      %v4815 = vpack.c.b16 %v3107, %v3103
      %v4816 = vpack.c.b16 %v3112, %v3108
      %v4817 = vpack.c.b16 %v3113, %v3109
      %v4818 = vpack.c.b16 %v3114, %v3110
      %v4819 = vpack.c.b16 %v3115, %v3111
      %v4820 = vpack.c.b16 %v3120, %v3116
      %v4821 = vpack.c.b16 %v3121, %v3117
      %v4822 = vpack.c.b16 %v3122, %v3118
      %v4823 = vpack.c.b16 %v3123, %v3119
      %v4824 = vpack.c.b16 %v3128, %v3124
      %v4825 = vpack.c.b16 %v3129, %v3125
      %v4826 = vpack.c.b16 %v3130, %v3126
      %v4827 = vpack.c.b16 %v3131, %v3127
      %v4828 = vpack.c.b16 %v3136, %v3132
      %v4829 = vpack.c.b16 %v3137, %v3133
      %v4830 = vpack.c.b16 %v3138, %v3134
      %v4831 = vpack.c.b16 %v3139, %v3135
      %v4832 = vpack.c.b16 %v3144, %v3140
      %v4833 = vpack.c.b16 %v3145, %v3141
      %v4834 = vpack.c.b16 %v3146, %v3142
      %v4835 = vpack.c.b16 %v3147, %v3143
      %v4836 = vpack.c.b16 %v3152, %v3148
      %v4837 = vpack.c.b16 %v3153, %v3149
      %v4838 = vpack.c.b16 %v3154, %v3150
      %v4839 = vpack.c.b16 %v3155, %v3151
      %v4840 = vpack.c.b16 %v3160, %v3156
      %v4841 = vpack.c.b16 %v3161, %v3157
      %v4842 = vpack.c.b16 %v3162, %v3158
      %v4843 = vpack.c.b16 %v3163, %v3159
      %v4844 = vpack.c.b16 %v3168, %v3164
      %v4845 = vpack.c.b16 %v3169, %v3165
      %v4846 = vpack.c.b16 %v3170, %v3166
      %v4847 = vpack.c.b16 %v3171, %v3167
      %v4848 = vpack.c.b16 %v3176, %v3172
      %v4849 = vpack.c.b16 %v3177, %v3173
      %v4850 = vpack.c.b16 %v3178, %v3174
      %v4851 = vpack.c.b16 %v3179, %v3175
      %v4852 = vpack.c.b16 %v3184, %v3180
      %v4853 = vpack.c.b16 %v3185, %v3181
      %v4854 = vpack.c.b16 %v3186, %v3182
      %v4855 = vpack.c.b16 %v3187, %v3183
      %v4856 = vpack.c.b16 %v3192, %v3188
      %v4857 = vpack.c.b16 %v3193, %v3189
      %v4858 = vpack.c.b16 %v3194, %v3190
      %v4859 = vpack.c.b16 %v3195, %v3191
      %v4860 = vpack.c.b16 %v3200, %v3196
      %v4861 = vpack.c.b16 %v3201, %v3197
      %v4862 = vpack.c.b16 %v3202, %v3198
      %v4863 = vpack.c.b16 %v3203, %v3199
      %v4864 = vpack.c.b16 %v3208, %v3204
      %v4865 = vpack.c.b16 %v3209, %v3205
      %v4866 = vpack.c.b16 %v3210, %v3206
      %v4867 = vpack.c.b16 %v3211, %v3207
      %v4868 = vpack.c.b16 %v3216, %v3212
      %v4869 = vpack.c.b16 %v3217, %v3213
      %v4870 = vpack.c.b16 %v3218, %v3214
      %v4871 = vpack.c.b16 %v3219, %v3215
      %v4872 = vpack.c.b16 %v3224, %v3220
      %v4873 = vpack.c.b16 %v3225, %v3221
      %v4874 = vpack.c.b16 %v3226, %v3222
      %v4875 = vpack.c.b16 %v3227, %v3223
      %v4876 = vpack.c.b16 %v3232, %v3228
      %v4877 = vpack.c.b16 %v3233, %v3229
      %v4878 = vpack.c.b16 %v3234, %v3230
      %v4879 = vpack.c.b16 %v3235, %v3231
      %v4880 = vpack.c.b16 %v3240, %v3236
      %v4881 = vpack.c.b16 %v3241, %v3237
      %v4882 = vpack.c.b16 %v3242, %v3238
      %v4883 = vpack.c.b16 %v3243, %v3239
      %v4884 = vpack.c.b16 %v3248, %v3244
      %v4885 = vpack.c.b16 %v3249, %v3245
      %v4886 = vpack.c.b16 %v3250, %v3246
      %v4887 = vpack.c.b16 %v3251, %v3247
      %v4888 = vpack.c.b16 %v3256, %v3252
      %v4889 = vpack.c.b16 %v3257, %v3253
      %v4890 = vpack.c.b16 %v3258, %v3254
      %v4891 = vpack.c.b16 %v3259, %v3255
      %v4892 = vpack.c.b16 %v3264, %v3260
      %v4893 = vpack.c.b16 %v3265, %v3261
      %v4894 = vpack.c.b16 %v3266, %v3262
      %v4895 = vpack.c.b16 %v3267, %v3263
      %v4896 = vpack.c.b16 %v3272, %v3268
      %v4897 = vpack.c.b16 %v3273, %v3269
      %v4898 = vpack.c.b16 %v3274, %v3270
      %v4899 = vpack.c.b16 %v3275, %v3271
      %v4900 = vpack.c.b16 %v3280, %v3276
      %v4901 = vpack.c.b16 %v3281, %v3277
      %v4902 = vpack.c.b16 %v3282, %v3278
      %v4903 = vpack.c.b16 %v3283, %v3279
      %v4904 = vpack.c.b16 %v3288, %v3284
      %v4905 = vpack.c.b16 %v3289, %v3285
      %v4906 = vpack.c.b16 %v3290, %v3286
      %v4907 = vpack.c.b16 %v3291, %v3287
      %v4908 = vpack.c.b16 %v3296, %v3292
      %v4909 = vpack.c.b16 %v3297, %v3293
      %v4910 = vpack.c.b16 %v3298, %v3294
      %v4911 = vpack.c.b16 %v3299, %v3295
      %v4912 = vpack.c.b16 %v3304, %v3300
      %v4913 = vpack.c.b16 %v3305, %v3301
      %v4914 = vpack.c.b16 %v3306, %v3302
      %v4915 = vpack.c.b16 %v3307, %v3303
      %v4916 = vpack.c.b16 %v3312, %v3308
      %v4917 = vpack.c.b16 %v3313, %v3309
      %v4918 = vpack.c.b16 %v3314, %v3310
      %v4919 = vpack.c.b16 %v3315, %v3311
      %v4920 = vpack.c.b16 %v3320, %v3316
      %v4921 = vpack.c.b16 %v3321, %v3317
      %v4922 = vpack.c.b16 %v3322, %v3318
      %v4923 = vpack.c.b16 %v3323, %v3319
      %v4924 = vpack.c.b16 %v3328, %v3324
      %v4925 = vpack.c.b16 %v3329, %v3325
      %v4926 = vpack.c.b16 %v3330, %v3326
      %v4927 = vpack.c.b16 %v3331, %v3327
      %v4928 = vpack.c.b16 %v3336, %v3332
      %v4929 = vpack.c.b16 %v3337, %v3333
      %v4930 = vpack.c.b16 %v3338, %v3334
      %v4931 = vpack.c.b16 %v3339, %v3335
      %v4932 = vpack.c.b16 %v3344, %v3340
      %v4933 = vpack.c.b16 %v3345, %v3341
      %v4934 = vpack.c.b16 %v3346, %v3342
      %v4935 = vpack.c.b16 %v3347, %v3343
      %v4936 = vpack.c.b16 %v3352, %v3348
      %v4937 = vpack.c.b16 %v3353, %v3349
      %v4938 = vpack.c.b16 %v3354, %v3350
      %v4939 = vpack.c.b16 %v3355, %v3351
      %v4940 = vpack.c.b16 %v3360, %v3356
      %v4941 = vpack.c.b16 %v3361, %v3357
      %v4942 = vpack.c.b16 %v3362, %v3358
      %v4943 = vpack.c.b16 %v3363, %v3359
      %v4944 = vpack.c.b16 %v3368, %v3364
      %v4945 = vpack.c.b16 %v3369, %v3365
      %v4946 = vpack.c.b16 %v3370, %v3366
      %v4947 = vpack.c.b16 %v3371, %v3367
      %v4948 = vpack.c.b16 %v3376, %v3372
      %v4949 = vpack.c.b16 %v3377, %v3373
      %v4950 = vpack.c.b16 %v3378, %v3374
      %v4951 = vpack.c.b16 %v3379, %v3375
      %v4952 = vpack.c.b16 %v3384, %v3380
      %v4953 = vpack.c.b16 %v3385, %v3381
      %v4954 = vpack.c.b16 %v3386, %v3382
      %v4955 = vpack.c.b16 %v3387, %v3383
      %v4956 = vpack.c.b16 %v3392, %v3388
      %v4957 = vpack.c.b16 %v3393, %v3389
      %v4958 = vpack.c.b16 %v3394, %v3390
      %v4959 = vpack.c.b16 %v3395, %v3391
      %v4960 = vpack.c.b16 %v3400, %v3396
      %v4961 = vpack.c.b16 %v3401, %v3397
      %v4962 = vpack.c.b16 %v3402, %v3398
      %v4963 = vpack.c.b16 %v3403, %v3399
      %v4964 = vpack.c.b16 %v3408, %v3404
      %v4965 = vpack.c.b16 %v3409, %v3405
      %v4966 = vpack.c.b16 %v3410, %v3406
      %v4967 = vpack.c.b16 %v3411, %v3407
      %v4968 = vpack.c.b16 %v3416, %v3412
      %v4969 = vpack.c.b16 %v3417, %v3413
      %v4970 = vpack.c.b16 %v3418, %v3414
      %v4971 = vpack.c.b16 %v3419, %v3415
      %v4972 = vpack.c.b16 %v3424, %v3420
      %v4973 = vpack.c.b16 %v3425, %v3421
      %v4974 = vpack.c.b16 %v3426, %v3422
      %v4975 = vpack.c.b16 %v3427, %v3423
      %v4976 = vpack.c.b16 %v3432, %v3428
      %v4977 = vpack.c.b16 %v3433, %v3429
      %v4978 = vpack.c.b16 %v3434, %v3430
      %v4979 = vpack.c.b16 %v3435, %v3431
      %v4980 = vpack.c.b16 %v3440, %v3436
      %v4981 = vpack.c.b16 %v3441, %v3437
      %v4982 = vpack.c.b16 %v3442, %v3438
      %v4983 = vpack.c.b16 %v3443, %v3439
      %v4984 = vpack.c.b16 %v3448, %v3444
      %v4985 = vpack.c.b16 %v3449, %v3445
      %v4986 = vpack.c.b16 %v3450, %v3446
      %v4987 = vpack.c.b16 %v3451, %v3447
      %v4988 = vpack.c.b16 %v3456, %v3452
      %v4989 = vpack.c.b16 %v3457, %v3453
      %v4990 = vpack.c.b16 %v3458, %v3454
      %v4991 = vpack.c.b16 %v3459, %v3455
      %v4992 = vpack.c.b16 %v3464, %v3460
      %v4993 = vpack.c.b16 %v3465, %v3461
      %v4994 = vpack.c.b16 %v3466, %v3462
      %v4995 = vpack.c.b16 %v3467, %v3463
      %v4996 = vpack.c.b16 %v3472, %v3468
      %v4997 = vpack.c.b16 %v3473, %v3469
      %v4998 = vpack.c.b16 %v3474, %v3470
      %v4999 = vpack.c.b16 %v3475, %v3471
      %v5000 = vpack.c.b16 %v3480, %v3476
      %v5001 = vpack.c.b16 %v3481, %v3477
      %v5002 = vpack.c.b16 %v3482, %v3478
      %v5003 = vpack.c.b16 %v3483, %v3479
      %v5004 = vpack.c.b16 %v3488, %v3484
      %v5005 = vpack.c.b16 %v3489, %v3485
      %v5006 = vpack.c.b16 %v3490, %v3486
      %v5007 = vpack.c.b16 %v3491, %v3487
      %v5008 = vpack.c.b16 %v3496, %v3492
      %v5009 = vpack.c.b16 %v3497, %v3493
      %v5010 = vpack.c.b16 %v3498, %v3494
      %v5011 = vpack.c.b16 %v3499, %v3495
      %v5012 = vpack.c.b16 %v3504, %v3500
      %v5013 = vpack.c.b16 %v3505, %v3501
      %v5014 = vpack.c.b16 %v3506, %v3502
      %v5015 = vpack.c.b16 %v3507, %v3503
      %v5016 = vpack.c.b16 %v3512, %v3508
      %v5017 = vpack.c.b16 %v3513, %v3509
      %v5018 = vpack.c.b16 %v3514, %v3510
      %v5019 = vpack.c.b16 %v3515, %v3511
      %v5020 = vpack.c.b16 %v3520, %v3516
      %v5021 = vpack.c.b16 %v3521, %v3517
      %v5022 = vpack.c.b16 %v3522, %v3518
      %v5023 = vpack.c.b16 %v3523, %v3519
      %v5024 = vpack.c.b16 %v3528, %v3524
      %v5025 = vpack.c.b16 %v3529, %v3525
      %v5026 = vpack.c.b16 %v3530, %v3526
      %v5027 = vpack.c.b16 %v3531, %v3527
      %v5028 = vpack.c.b16 %v3536, %v3532
      %v5029 = vpack.c.b16 %v3537, %v3533
      %v5030 = vpack.c.b16 %v3538, %v3534
      %v5031 = vpack.c.b16 %v3539, %v3535
      %v5032 = vpack.c.b16 %v3544, %v3540
      %v5033 = vpack.c.b16 %v3545, %v3541
      %v5034 = vpack.c.b16 %v3546, %v3542
      %v5035 = vpack.c.b16 %v3547, %v3543
      %v5036 = vpack.c.b16 %v3552, %v3548
      %v5037 = vpack.c.b16 %v3553, %v3549
      %v5038 = vpack.c.b16 %v3554, %v3550
      %v5039 = vpack.c.b16 %v3555, %v3551
      %v5040 = vpack.c.b16 %v3560, %v3556
      %v5041 = vpack.c.b16 %v3561, %v3557
      %v5042 = vpack.c.b16 %v3562, %v3558
      %v5043 = vpack.c.b16 %v3563, %v3559
      %v5044 = vpack.c.b16 %v3568, %v3564
      %v5045 = vpack.c.b16 %v3569, %v3565
      %v5046 = vpack.c.b16 %v3570, %v3566
      %v5047 = vpack.c.b16 %v3571, %v3567
      %v5048 = vpack.c.b16 %v3576, %v3572
      %v5049 = vpack.c.b16 %v3577, %v3573
      %v5050 = vpack.c.b16 %v3578, %v3574
      %v5051 = vpack.c.b16 %v3579, %v3575
      %v5052 = vpack.c.b16 %v3584, %v3580
      %v5053 = vpack.c.b16 %v3585, %v3581
      %v5054 = vpack.c.b16 %v3586, %v3582
      %v5055 = vpack.c.b16 %v3587, %v3583
      %v5056 = vpack.c.b16 %v3592, %v3588
      %v5057 = vpack.c.b16 %v3593, %v3589
      %v5058 = vpack.c.b16 %v3594, %v3590
      %v5059 = vpack.c.b16 %v3595, %v3591
      %v5060 = vpack.c.b16 %v3600, %v3596
      %v5061 = vpack.c.b16 %v3601, %v3597
      %v5062 = vpack.c.b16 %v3602, %v3598
      %v5063 = vpack.c.b16 %v3603, %v3599
      %v5064 = vpack.c.b16 %v3608, %v3604
      %v5065 = vpack.c.b16 %v3609, %v3605
      %v5066 = vpack.c.b16 %v3610, %v3606
      %v5067 = vpack.c.b16 %v3611, %v3607
      %v5068 = vpack.c.b16 %v3616, %v3612
      %v5069 = vpack.c.b16 %v3617, %v3613
      %v5070 = vpack.c.b16 %v3618, %v3614
      %v5071 = vpack.c.b16 %v3619, %v3615
      %v5072 = vpack.c.b16 %v3624, %v3620
      %v5073 = vpack.c.b16 %v3625, %v3621
      %v5074 = vpack.c.b16 %v3626, %v3622
      %v5075 = vpack.c.b16 %v3627, %v3623
      %v5076 = vpack.c.b16 %v3632, %v3628
      %v5077 = vpack.c.b16 %v3633, %v3629
      %v5078 = vpack.c.b16 %v3634, %v3630
      %v5079 = vpack.c.b16 %v3635, %v3631
      %v5080 = vpack.c.b16 %v3640, %v3636
      %v5081 = vpack.c.b16 %v3641, %v3637
      %v5082 = vpack.c.b16 %v3642, %v3638
      %v5083 = vpack.c.b16 %v3643, %v3639
      %v5084 = vpack.c.b16 %v3648, %v3644
      %v5085 = vpack.c.b16 %v3649, %v3645
      %v5086 = vpack.c.b16 %v3650, %v3646
      %v5087 = vpack.c.b16 %v3651, %v3647
      %v5088 = vpack.c.b16 %v3656, %v3652
      %v5089 = vpack.c.b16 %v3657, %v3653
      %v5090 = vpack.c.b16 %v3658, %v3654
      %v5091 = vpack.c.b16 %v3659, %v3655
      %v5092 = vpack.c.b16 %v3664, %v3660
      %v5093 = vpack.c.b16 %v3665, %v3661
      %v5094 = vpack.c.b16 %v3666, %v3662
      %v5095 = vpack.c.b16 %v3667, %v3663
      %v5096 = vpack.c.b16 %v3672, %v3668
      %v5097 = vpack.c.b16 %v3673, %v3669
      %v5098 = vpack.c.b16 %v3674, %v3670
      %v5099 = vpack.c.b16 %v3675, %v3671
      %v5100 = vpack.c.b16 %v3680, %v3676
      %v5101 = vpack.c.b16 %v3681, %v3677
      %v5102 = vpack.c.b16 %v3682, %v3678
      %v5103 = vpack.c.b16 %v3683, %v3679
      %v5104 = vpack.c.b16 %v3688, %v3684
      %v5105 = vpack.c.b16 %v3689, %v3685
      %v5106 = vpack.c.b16 %v3690, %v3686
      %v5107 = vpack.c.b16 %v3691, %v3687
      %v5108 = vpack.c.b16 %v3696, %v3692
      %v5109 = vpack.c.b16 %v3697, %v3693
      %v5110 = vpack.c.b16 %v3698, %v3694
      %v5111 = vpack.c.b16 %v3699, %v3695
      %v5112 = vpack.c.b16 %v3704, %v3700
      %v5113 = vpack.c.b16 %v3705, %v3701
      %v5114 = vpack.c.b16 %v3706, %v3702
      %v5115 = vpack.c.b16 %v3707, %v3703
      %v5116 = vpack.c.b16 %v3712, %v3708
      %v5117 = vpack.c.b16 %v3713, %v3709
      %v5118 = vpack.c.b16 %v3714, %v3710
      %v5119 = vpack.c.b16 %v3715, %v3711
      %v5120 = vpack.c.b16 %v3720, %v3716
      %v5121 = vpack.c.b16 %v3721, %v3717
      %v5122 = vpack.c.b16 %v3722, %v3718
      %v5123 = vpack.c.b16 %v3723, %v3719
      %v5124 = vpack.c.b16 %v3728, %v3724
      %v5125 = vpack.c.b16 %v3729, %v3725
      %v5126 = vpack.c.b16 %v3730, %v3726
      %v5127 = vpack.c.b16 %v3731, %v3727
      %v5128 = vpack.c.b16 %v3736, %v3732
      %v5129 = vpack.c.b16 %v3737, %v3733
      %v5130 = vpack.c.b16 %v3738, %v3734
      %v5131 = vpack.c.b16 %v3739, %v3735
      %v5132 = vpack.c.b16 %v3744, %v3740
      %v5133 = vpack.c.b16 %v3745, %v3741
      %v5134 = vpack.c.b16 %v3746, %v3742
      %v5135 = vpack.c.b16 %v3747, %v3743
      %v5136 = vpack.c.b16 %v3752, %v3748
      %v5137 = vpack.c.b16 %v3753, %v3749
      %v5138 = vpack.c.b16 %v3754, %v3750
      %v5139 = vpack.c.b16 %v3755, %v3751
      %v5140 = vpack.c.b16 %v3760, %v3756
      %v5141 = vpack.c.b16 %v3761, %v3757
      %v5142 = vpack.c.b16 %v3762, %v3758
      %v5143 = vpack.c.b16 %v3763, %v3759
      %v5144 = vpack.c.b16 %v3768, %v3764
      %v5145 = vpack.c.b16 %v3769, %v3765
      %v5146 = vpack.c.b16 %v3770, %v3766
      %v5147 = vpack.c.b16 %v3771, %v3767
      %v5148 = vpack.c.b16 %v3776, %v3772
      %v5149 = vpack.c.b16 %v3777, %v3773
      %v5150 = vpack.c.b16 %v3778, %v3774
      %v5151 = vpack.c.b16 %v3779, %v3775
      %v5152 = vpack.c.b16 %v3784, %v3780
      %v5153 = vpack.c.b16 %v3785, %v3781
      %v5154 = vpack.c.b16 %v3786, %v3782
      %v5155 = vpack.c.b16 %v3787, %v3783
      %v5156 = vpack.c.b16 %v3792, %v3788
      %v5157 = vpack.c.b16 %v3793, %v3789
      %v5158 = vpack.c.b16 %v3794, %v3790
      %v5159 = vpack.c.b16 %v3795, %v3791
      %v5160 = vpack.c.b16 %v3800, %v3796
      %v5161 = vpack.c.b16 %v3801, %v3797
      %v5162 = vpack.c.b16 %v3802, %v3798
      %v5163 = vpack.c.b16 %v3803, %v3799
      %v5164 = vpack.c.b16 %v3808, %v3804
      %v5165 = vpack.c.b16 %v3809, %v3805
      %v5166 = vpack.c.b16 %v3810, %v3806
      %v5167 = vpack.c.b16 %v3811, %v3807
      %v5168 = vpack.c.b16 %v3816, %v3812
      %v5169 = vpack.c.b16 %v3817, %v3813
      %v5170 = vpack.c.b16 %v3818, %v3814
      %v5171 = vpack.c.b16 %v3819, %v3815
      %v5172 = vpack.c.b16 %v3824, %v3820
      %v5173 = vpack.c.b16 %v3825, %v3821
      %v5174 = vpack.c.b16 %v3826, %v3822
      %v5175 = vpack.c.b16 %v3827, %v3823
      %v5176 = vpack.c.b16 %v3832, %v3828
      %v5177 = vpack.c.b16 %v3833, %v3829
      %v5178 = vpack.c.b16 %v3834, %v3830
      %v5179 = vpack.c.b16 %v3835, %v3831
      %v5180 = vpack.c.b16 %v3840, %v3836
      %v5181 = vpack.c.b16 %v3841, %v3837
      %v5182 = vpack.c.b16 %v3842, %v3838
      %v5183 = vpack.c.b16 %v3843, %v3839
      %v5184 = vpack.c.b16 %v3848, %v3844
      %v5185 = vpack.c.b16 %v3849, %v3845
      %v5186 = vpack.c.b16 %v3850, %v3846
      %v5187 = vpack.c.b16 %v3851, %v3847
      %v5188 = vpack.c.b16 %v3856, %v3852
      %v5189 = vpack.c.b16 %v3857, %v3853
      %v5190 = vpack.c.b16 %v3858, %v3854
      %v5191 = vpack.c.b16 %v3859, %v3855
      %v5192 = vpack.c.b16 %v3864, %v3860
      %v5193 = vpack.c.b16 %v3865, %v3861
      %v5194 = vpack.c.b16 %v3866, %v3862
      %v5195 = vpack.c.b16 %v3867, %v3863
      %v5196 = vpack.c.b16 %v3872, %v3868
      %v5197 = vpack.c.b16 %v3873, %v3869
      %v5198 = vpack.c.b16 %v3874, %v3870
      %v5199 = vpack.c.b16 %v3875, %v3871
      %v5200 = vpack.c.b16 %v3880, %v3876
      %v5201 = vpack.c.b16 %v3881, %v3877
      %v5202 = vpack.c.b16 %v3882, %v3878
      %v5203 = vpack.c.b16 %v3883, %v3879
      %v5204 = vpack.c.b16 %v3888, %v3884
      %v5205 = vpack.c.b16 %v3889, %v3885
      %v5206 = vpack.c.b16 %v3890, %v3886
      %v5207 = vpack.c.b16 %v3891, %v3887
      %v5208 = vpack.c.b16 %v3896, %v3892
      %v5209 = vpack.c.b16 %v3897, %v3893
      %v5210 = vpack.c.b16 %v3898, %v3894
      %v5211 = vpack.c.b16 %v3899, %v3895
      %v5212 = vpack.c.b16 %v3904, %v3900
      %v5213 = vpack.c.b16 %v3905, %v3901
      %v5214 = vpack.c.b16 %v3906, %v3902
      %v5215 = vpack.c.b16 %v3907, %v3903
      %v5216 = vpack.c.b16 %v3912, %v3908
      %v5217 = vpack.c.b16 %v3913, %v3909
      %v5218 = vpack.c.b16 %v3914, %v3910
      %v5219 = vpack.c.b16 %v3915, %v3911
      %v5220 = vpack.c.b16 %v3920, %v3916
      %v5221 = vpack.c.b16 %v3921, %v3917
      %v5222 = vpack.c.b16 %v3922, %v3918
      %v5223 = vpack.c.b16 %v3923, %v3919
      %v5224 = vpack.c.b16 %v3928, %v3924
      %v5225 = vpack.c.b16 %v3929, %v3925
      %v5226 = vpack.c.b16 %v3930, %v3926
      %v5227 = vpack.c.b16 %v3931, %v3927
      %v5228 = vpack.c.b16 %v3936, %v3932
      %v5229 = vpack.c.b16 %v3937, %v3933
      %v5230 = vpack.c.b16 %v3938, %v3934
      %v5231 = vpack.c.b16 %v3939, %v3935
      %v5232 = vpack.c.b16 %v3944, %v3940
      %v5233 = vpack.c.b16 %v3945, %v3941
      %v5234 = vpack.c.b16 %v3946, %v3942
      %v5235 = vpack.c.b16 %v3947, %v3943
      %v5236 = vpack.c.b16 %v3952, %v3948
      %v5237 = vpack.c.b16 %v3953, %v3949
      %v5238 = vpack.c.b16 %v3954, %v3950
      %v5239 = vpack.c.b16 %v3955, %v3951
      %v5240 = vpack.c.b16 %v3960, %v3956
      %v5241 = vpack.c.b16 %v3961, %v3957
      %v5242 = vpack.c.b16 %v3962, %v3958
      %v5243 = vpack.c.b16 %v3963, %v3959
      %v5244 = vpack.c.b16 %v3968, %v3964
      %v5245 = vpack.c.b16 %v3969, %v3965
      %v5246 = vpack.c.b16 %v3970, %v3966
      %v5247 = vpack.c.b16 %v3971, %v3967
      %v5248 = vpack.c.b16 %v3976, %v3972
      %v5249 = vpack.c.b16 %v3977, %v3973
      %v5250 = vpack.c.b16 %v3978, %v3974
      %v5251 = vpack.c.b16 %v3979, %v3975
      %v5252 = vpack.c.b16 %v3984, %v3980
      %v5253 = vpack.c.b16 %v3985, %v3981
      %v5254 = vpack.c.b16 %v3986, %v3982
      %v5255 = vpack.c.b16 %v3987, %v3983
      %v5256 = vpack.c.b16 %v3992, %v3988
      %v5257 = vpack.c.b16 %v3993, %v3989
      %v5258 = vpack.c.b16 %v3994, %v3990
      %v5259 = vpack.c.b16 %v3995, %v3991
      %v5260 = vpack.c.b16 %v4000, %v3996
      %v5261 = vpack.c.b16 %v4001, %v3997
      %v5262 = vpack.c.b16 %v4002, %v3998
      %v5263 = vpack.c.b16 %v4003, %v3999
      %v5264 = vpack.c.b16 %v4008, %v4004
      %v5265 = vpack.c.b16 %v4009, %v4005
      %v5266 = vpack.c.b16 %v4010, %v4006
      %v5267 = vpack.c.b16 %v4011, %v4007
      %v5268 = vpack.c.b16 %v4016, %v4012
      %v5269 = vpack.c.b16 %v4017, %v4013
      %v5270 = vpack.c.b16 %v4018, %v4014
      %v5271 = vpack.c.b16 %v4019, %v4015
      %v5272 = vpack.c.b16 %v4024, %v4020
      %v5273 = vpack.c.b16 %v4025, %v4021
      %v5274 = vpack.c.b16 %v4026, %v4022
      %v5275 = vpack.c.b16 %v4027, %v4023
      %v5276 = vpack.c.b16 %v4032, %v4028
      %v5277 = vpack.c.b16 %v4033, %v4029
      %v5278 = vpack.c.b16 %v4034, %v4030
      %v5279 = vpack.c.b16 %v4035, %v4031
      %v5280 = vpack.c.b16 %v4040, %v4036
      %v5281 = vpack.c.b16 %v4041, %v4037
      %v5282 = vpack.c.b16 %v4042, %v4038
      %v5283 = vpack.c.b16 %v4043, %v4039
      %v5284 = vpack.c.b16 %v4048, %v4044
      %v5285 = vpack.c.b16 %v4049, %v4045
      %v5286 = vpack.c.b16 %v4050, %v4046
      %v5287 = vpack.c.b16 %v4051, %v4047
      %v5288 = vpack.c.b16 %v4056, %v4052
      %v5289 = vpack.c.b16 %v4057, %v4053
      %v5290 = vpack.c.b16 %v4058, %v4054
      %v5291 = vpack.c.b16 %v4059, %v4055
      %v5292 = vpack.c.b16 %v4064, %v4060
      %v5293 = vpack.c.b16 %v4065, %v4061
      %v5294 = vpack.c.b16 %v4066, %v4062
      %v5295 = vpack.c.b16 %v4067, %v4063
      %v5296 = vpack.c.b16 %v4072, %v4068
      %v5297 = vpack.c.b16 %v4073, %v4069
      %v5298 = vpack.c.b16 %v4074, %v4070
      %v5299 = vpack.c.b16 %v4075, %v4071
      %v5300 = vpack.c.b16 %v4080, %v4076
      %v5301 = vpack.c.b16 %v4081, %v4077
      %v5302 = vpack.c.b16 %v4082, %v4078
      %v5303 = vpack.c.b16 %v4083, %v4079
      %v5304 = vpack.c.b16 %v4088, %v4084
      %v5305 = vpack.c.b16 %v4089, %v4085
      %v5306 = vpack.c.b16 %v4090, %v4086
      %v5307 = vpack.c.b16 %v4091, %v4087
      %v5308 = vpack.c.b16 %v4096, %v4092
      %v5309 = vpack.c.b16 %v4097, %v4093
      %v5310 = vpack.c.b16 %v4098, %v4094
      %v5311 = vpack.c.b16 %v4099, %v4095
      %v5312 = vpack.c.b16 %v4104, %v4100
      %v5313 = vpack.c.b16 %v4105, %v4101
      %v5314 = vpack.c.b16 %v4106, %v4102
      %v5315 = vpack.c.b16 %v4107, %v4103
      %v5316 = vpack.c.b16 %v4112, %v4108
      %v5317 = vpack.c.b16 %v4113, %v4109
      %v5318 = vpack.c.b16 %v4114, %v4110
      %v5319 = vpack.c.b16 %v4115, %v4111
      %v5320 = vpack.c.b16 %v4120, %v4116
      %v5321 = vpack.c.b16 %v4121, %v4117
      %v5322 = vpack.c.b16 %v4122, %v4118
      %v5323 = vpack.c.b16 %v4123, %v4119
      %v5324 = vpack.c.b16 %v4128, %v4124
      %v5325 = vpack.c.b16 %v4129, %v4125
      %v5326 = vpack.c.b16 %v4130, %v4126
      %v5327 = vpack.c.b16 %v4131, %v4127
      %v5328 = vpack.c.b16 %v4136, %v4132
      %v5329 = vpack.c.b16 %v4137, %v4133
      %v5330 = vpack.c.b16 %v4138, %v4134
      %v5331 = vpack.c.b16 %v4139, %v4135
      %v5332 = vpack.c.b16 %v4144, %v4140
      %v5333 = vpack.c.b16 %v4145, %v4141
      %v5334 = vpack.c.b16 %v4146, %v4142
      %v5335 = vpack.c.b16 %v4147, %v4143
      %v5336 = vpack.c.b16 %v4152, %v4148
      %v5337 = vpack.c.b16 %v4153, %v4149
      %v5338 = vpack.c.b16 %v4154, %v4150
      %v5339 = vpack.c.b16 %v4155, %v4151
      %v5340 = vpack.c.b16 %v4160, %v4156
      %v5341 = vpack.c.b16 %v4161, %v4157
      %v5342 = vpack.c.b16 %v4162, %v4158
      %v5343 = vpack.c.b16 %v4163, %v4159
      %v5344 = vpack.c.b16 %v4168, %v4164
      %v5345 = vpack.c.b16 %v4169, %v4165
      %v5346 = vpack.c.b16 %v4170, %v4166
      %v5347 = vpack.c.b16 %v4171, %v4167
      %v5348 = vpack.c.b16 %v4176, %v4172
      %v5349 = vpack.c.b16 %v4177, %v4173
      %v5350 = vpack.c.b16 %v4178, %v4174
      %v5351 = vpack.c.b16 %v4179, %v4175
      %v5352 = vpack.c.b16 %v4184, %v4180
      %v5353 = vpack.c.b16 %v4185, %v4181
      %v5354 = vpack.c.b16 %v4186, %v4182
      %v5355 = vpack.c.b16 %v4187, %v4183
      %v5356 = vpack.c.b16 %v4192, %v4188
      %v5357 = vpack.c.b16 %v4193, %v4189
      %v5358 = vpack.c.b16 %v4194, %v4190
      %v5359 = vpack.c.b16 %v4195, %v4191
      %v5360 = vpack.c.b16 %v4200, %v4196
      %v5361 = vpack.c.b16 %v4201, %v4197
      %v5362 = vpack.c.b16 %v4202, %v4198
      %v5363 = vpack.c.b16 %v4203, %v4199
      %v5364 = vpack.c.b16 %v4208, %v4204
      %v5365 = vpack.c.b16 %v4209, %v4205
      %v5366 = vpack.c.b16 %v4210, %v4206
      %v5367 = vpack.c.b16 %v4211, %v4207
      %v5368 = vpack.c.b16 %v4216, %v4212
      %v5369 = vpack.c.b16 %v4217, %v4213
      %v5370 = vpack.c.b16 %v4218, %v4214
      %v5371 = vpack.c.b16 %v4219, %v4215
      %v5372 = vpack.c.b16 %v4224, %v4220
      %v5373 = vpack.c.b16 %v4225, %v4221
      %v5374 = vpack.c.b16 %v4226, %v4222
      %v5375 = vpack.c.b16 %v4227, %v4223
      %v5376 = vpack.c.b16 %v4232, %v4228
      %v5377 = vpack.c.b16 %v4233, %v4229
      %v5378 = vpack.c.b16 %v4234, %v4230
      %v5379 = vpack.c.b16 %v4235, %v4231
      %v5380 = vpack.c.b16 %v4240, %v4236
      %v5381 = vpack.c.b16 %v4241, %v4237
      %v5382 = vpack.c.b16 %v4242, %v4238
      %v5383 = vpack.c.b16 %v4243, %v4239
      %v5384 = vpack.c.b16 %v4248, %v4244
      %v5385 = vpack.c.b16 %v4249, %v4245
      %v5386 = vpack.c.b16 %v4250, %v4246
      %v5387 = vpack.c.b16 %v4251, %v4247
      %v5388 = vpack.c.b16 %v4256, %v4252
      %v5389 = vpack.c.b16 %v4257, %v4253
      %v5390 = vpack.c.b16 %v4258, %v4254
      %v5391 = vpack.c.b16 %v4259, %v4255
      %v5392 = vpack.c.b16 %v4264, %v4260
      %v5393 = vpack.c.b16 %v4265, %v4261
      %v5394 = vpack.c.b16 %v4266, %v4262
      %v5395 = vpack.c.b16 %v4267, %v4263
      %v5396 = vpack.c.b16 %v4272, %v4268
      %v5397 = vpack.c.b16 %v4273, %v4269
      %v5398 = vpack.c.b16 %v4274, %v4270
      %v5399 = vpack.c.b16 %v4275, %v4271
      %v5400 = vpack.c.b16 %v4280, %v4276
      %v5401 = vpack.c.b16 %v4281, %v4277
      %v5402 = vpack.c.b16 %v4282, %v4278
      %v5403 = vpack.c.b16 %v4283, %v4279
      %v5404 = vpack.c.b16 %v4288, %v4284
      %v5405 = vpack.c.b16 %v4289, %v4285
      %v5406 = vpack.c.b16 %v4290, %v4286
      %v5407 = vpack.c.b16 %v4291, %v4287
      %v5408 = vpack.c.b16 %v4296, %v4292
      %v5409 = vpack.c.b16 %v4297, %v4293
      %v5410 = vpack.c.b16 %v4298, %v4294
      %v5411 = vpack.c.b16 %v4299, %v4295
      %v5412 = vpack.c.b16 %v4304, %v4300
      %v5413 = vpack.c.b16 %v4305, %v4301
      %v5414 = vpack.c.b16 %v4306, %v4302
      %v5415 = vpack.c.b16 %v4307, %v4303
      %v5416 = vpack.c.b16 %v4312, %v4308
      %v5417 = vpack.c.b16 %v4313, %v4309
      %v5418 = vpack.c.b16 %v4314, %v4310
      %v5419 = vpack.c.b16 %v4315, %v4311
      %v5420 = vpack.c.b16 %v4320, %v4316
      %v5421 = vpack.c.b16 %v4321, %v4317
      %v5422 = vpack.c.b16 %v4322, %v4318
      %v5423 = vpack.c.b16 %v4323, %v4319
      %v5424 = vpack.c.b16 %v4328, %v4324
      %v5425 = vpack.c.b16 %v4329, %v4325
      %v5426 = vpack.c.b16 %v4330, %v4326
      %v5427 = vpack.c.b16 %v4331, %v4327
      %v5428 = vpack.c.b16 %v4336, %v4332
      %v5429 = vpack.c.b16 %v4337, %v4333
      %v5430 = vpack.c.b16 %v4338, %v4334
      %v5431 = vpack.c.b16 %v4339, %v4335
      %v5432 = vpack.c.b16 %v4344, %v4340
      %v5433 = vpack.c.b16 %v4345, %v4341
      %v5434 = vpack.c.b16 %v4346, %v4342
      %v5435 = vpack.c.b16 %v4347, %v4343
      %v5436 = vpack.c.b16 %v4352, %v4348
      %v5437 = vpack.c.b16 %v4353, %v4349
      %v5438 = vpack.c.b16 %v4354, %v4350
      %v5439 = vpack.c.b16 %v4355, %v4351
      %v5440 = vpack.c.b16 %v4360, %v4356
      %v5441 = vpack.c.b16 %v4361, %v4357
      %v5442 = vpack.c.b16 %v4362, %v4358
      %v5443 = vpack.c.b16 %v4363, %v4359
      %v5444 = vpack.c.b16 %v4368, %v4364
      %v5445 = vpack.c.b16 %v4369, %v4365
      %v5446 = vpack.c.b16 %v4370, %v4366
      %v5447 = vpack.c.b16 %v4371, %v4367
      %v5448 = vpack.c.b16 %v4376, %v4372
      %v5449 = vpack.c.b16 %v4377, %v4373
      %v5450 = vpack.c.b16 %v4378, %v4374
      %v5451 = vpack.c.b16 %v4379, %v4375
      %v5452 = vpack.c.b16 %v4384, %v4380
      %v5453 = vpack.c.b16 %v4385, %v4381
      %v5454 = vpack.c.b16 %v4386, %v4382
      %v5455 = vpack.c.b16 %v4387, %v4383
      %v5456 = vpack.c.b16 %v4392, %v4388
      %v5457 = vpack.c.b16 %v4393, %v4389
      %v5458 = vpack.c.b16 %v4394, %v4390
      %v5459 = vpack.c.b16 %v4395, %v4391
      %v5460 = vpack.c.b16 %v4400, %v4396
      %v5461 = vpack.c.b16 %v4401, %v4397
      %v5462 = vpack.c.b16 %v4402, %v4398
      %v5463 = vpack.c.b16 %v4403, %v4399
      %v5464 = vpack.c.b16 %v4408, %v4404
      %v5465 = vpack.c.b16 %v4409, %v4405
      %v5466 = vpack.c.b16 %v4410, %v4406
      %v5467 = vpack.c.b16 %v4411, %v4407
      %v5468 = vpack.c.b16 %v4416, %v4412
      %v5469 = vpack.c.b16 %v4417, %v4413
      %v5470 = vpack.c.b16 %v4418, %v4414
      %v5471 = vpack.c.b16 %v4419, %v4415
      %v5472 = vpack.c.b16 %v4424, %v4420
      %v5473 = vpack.c.b16 %v4425, %v4421
      %v5474 = vpack.c.b16 %v4426, %v4422
      %v5475 = vpack.c.b16 %v4427, %v4423
      %v5476 = vpack.c.b16 %v4432, %v4428
      %v5477 = vpack.c.b16 %v4433, %v4429
      %v5478 = vpack.c.b16 %v4434, %v4430
      %v5479 = vpack.c.b16 %v4435, %v4431
      %v5480 = vpack.c.b16 %v4440, %v4436
      %v5481 = vpack.c.b16 %v4441, %v4437
      %v5482 = vpack.c.b16 %v4442, %v4438
      %v5483 = vpack.c.b16 %v4443, %v4439
      %v5484 = vpack.c.b16 %v4448, %v4444
      %v5485 = vpack.c.b16 %v4449, %v4445
      %v5486 = vpack.c.b16 %v4450, %v4446
      %v5487 = vpack.c.b16 %v4451, %v4447
      %v5488 = vpack.c.b16 %v4456, %v4452
      %v5489 = vpack.c.b16 %v4457, %v4453
      %v5490 = vpack.c.b16 %v4458, %v4454
      %v5491 = vpack.c.b16 %v4459, %v4455
      %v5492 = vpack.c.b16 %v4464, %v4460
      %v5493 = vpack.c.b16 %v4465, %v4461
      %v5494 = vpack.c.b16 %v4466, %v4462
      %v5495 = vpack.c.b16 %v4467, %v4463
      %v5496 = vpack.c.b16 %v4472, %v4468
      %v5497 = vpack.c.b16 %v4473, %v4469
      %v5498 = vpack.c.b16 %v4474, %v4470
      %v5499 = vpack.c.b16 %v4475, %v4471
      %6524 = vmatpush.bf16.msra.mxu0 %v4504
      %6525 = vmatpush.bf16.msra.mxu0 %v4500
      %6526 = vmatpush.bf16.msra.mxu0 %v4496
      %6527 = vmatpush.bf16.msra.mxu0 %v4492
      %6528 = vmatpush.bf16.msra.mxu0 %v4488
      %6529 = vmatpush.bf16.msra.mxu0 %v4484
      %6530 = vmatpush.bf16.msra.mxu0 %v4480
      %6531 = vmatpush.bf16.msra.mxu0 %v4476
      %6532 = vmatmul.bf16.gmra.mxu0 %v1340
      %v6533 = vpop.f32.mrf.mxu0
      %v6534 = vadd.f32 0.0, %v6533
      %v6535 = vpop.f32.mrf.mxu0
      %v6536 = vadd.f32 0.0, %v6535
      %6537 = vdwg.mxu0
      %6538 = vmatpush.bf16.msra.mxu0 %v4536
      %6539 = vmatpush.bf16.msra.mxu0 %v4532
      %6540 = vmatpush.bf16.msra.mxu0 %v4528
      %6541 = vmatpush.bf16.msra.mxu0 %v4524
      %6542 = vmatpush.bf16.msra.mxu0 %v4520
      %6543 = vmatpush.bf16.msra.mxu0 %v4516
      %6544 = vmatpush.bf16.msra.mxu0 %v4512
      %6545 = vmatpush.bf16.msra.mxu0 %v4508
      %6546 = vmatmul.bf16.gmra.mxu0 %v1341
      %v6547 = vpop.f32.mrf.mxu0
      %v6548 = vadd.f32 %v6534, %v6547
      %v6549 = vpop.f32.mrf.mxu0
      %v6550 = vadd.f32 %v6536, %v6549
      %6551 = vdwg.mxu0
      %6552 = vmatpush.bf16.msra.mxu0 %v4568
      %6553 = vmatpush.bf16.msra.mxu0 %v4564
      %6554 = vmatpush.bf16.msra.mxu0 %v4560
      %6555 = vmatpush.bf16.msra.mxu0 %v4556
      %6556 = vmatpush.bf16.msra.mxu0 %v4552
      %6557 = vmatpush.bf16.msra.mxu0 %v4548
      %6558 = vmatpush.bf16.msra.mxu0 %v4544
      %6559 = vmatpush.bf16.msra.mxu0 %v4540
      %6560 = vmatmul.bf16.gmra.mxu0 %v1342
      %v6561 = vpop.f32.mrf.mxu0
      %v6562 = vadd.f32 %v6548, %v6561
      %v6563 = vpop.f32.mrf.mxu0
      %v6564 = vadd.f32 %v6550, %v6563
      %6565 = vdwg.mxu0
      %6566 = vmatpush.bf16.msra.mxu0 %v4600
      %6567 = vmatpush.bf16.msra.mxu0 %v4596
      %6568 = vmatpush.bf16.msra.mxu0 %v4592
      %6569 = vmatpush.bf16.msra.mxu0 %v4588
      %6570 = vmatpush.bf16.msra.mxu0 %v4584
      %6571 = vmatpush.bf16.msra.mxu0 %v4580
      %6572 = vmatpush.bf16.msra.mxu0 %v4576
      %6573 = vmatpush.bf16.msra.mxu0 %v4572
      %6574 = vmatmul.bf16.gmra.mxu0 %v1343
      %v6575 = vpop.f32.mrf.mxu0
      %v6576 = vadd.f32 %v6562, %v6575
      %v6577 = vpop.f32.mrf.mxu0
      %v6578 = vadd.f32 %v6564, %v6577
      %6579 = vdwg.mxu0
      %6580 = vmatpush.bf16.msra.mxu0 %v4632
      %6581 = vmatpush.bf16.msra.mxu0 %v4628
      %6582 = vmatpush.bf16.msra.mxu0 %v4624
      %6583 = vmatpush.bf16.msra.mxu0 %v4620
      %6584 = vmatpush.bf16.msra.mxu0 %v4616
      %6585 = vmatpush.bf16.msra.mxu0 %v4612
      %6586 = vmatpush.bf16.msra.mxu0 %v4608
      %6587 = vmatpush.bf16.msra.mxu0 %v4604
      %6588 = vmatmul.bf16.gmra.mxu0 %v1344
      %v6589 = vpop.f32.mrf.mxu0
      %v6590 = vadd.f32 %v6576, %v6589
      %v6591 = vpop.f32.mrf.mxu0
      %v6592 = vadd.f32 %v6578, %v6591
      %6593 = vdwg.mxu0
      %6594 = vmatpush.bf16.msra.mxu0 %v4664
      %6595 = vmatpush.bf16.msra.mxu0 %v4660
      %6596 = vmatpush.bf16.msra.mxu0 %v4656
      %6597 = vmatpush.bf16.msra.mxu0 %v4652
      %6598 = vmatpush.bf16.msra.mxu0 %v4648
      %6599 = vmatpush.bf16.msra.mxu0 %v4644
      %6600 = vmatpush.bf16.msra.mxu0 %v4640
      %6601 = vmatpush.bf16.msra.mxu0 %v4636
      %6602 = vmatmul.bf16.gmra.mxu0 %v1345
      %v6603 = vpop.f32.mrf.mxu0
      %v6604 = vadd.f32 %v6590, %v6603
      %v6605 = vpop.f32.mrf.mxu0
      %v6606 = vadd.f32 %v6592, %v6605
      %6607 = vdwg.mxu0
      %6608 = vmatpush.bf16.msra.mxu0 %v4696
      %6609 = vmatpush.bf16.msra.mxu0 %v4692
      %6610 = vmatpush.bf16.msra.mxu0 %v4688
      %6611 = vmatpush.bf16.msra.mxu0 %v4684
      %6612 = vmatpush.bf16.msra.mxu0 %v4680
      %6613 = vmatpush.bf16.msra.mxu0 %v4676
      %6614 = vmatpush.bf16.msra.mxu0 %v4672
      %6615 = vmatpush.bf16.msra.mxu0 %v4668
      %6616 = vmatmul.bf16.gmra.mxu0 %v1346
      %v6617 = vpop.f32.mrf.mxu0
      %v6618 = vadd.f32 %v6604, %v6617
      %v6619 = vpop.f32.mrf.mxu0
      %v6620 = vadd.f32 %v6606, %v6619
      %6621 = vdwg.mxu0
      %6622 = vmatpush.bf16.msra.mxu0 %v4728
      %6623 = vmatpush.bf16.msra.mxu0 %v4724
      %6624 = vmatpush.bf16.msra.mxu0 %v4720
      %6625 = vmatpush.bf16.msra.mxu0 %v4716
      %6626 = vmatpush.bf16.msra.mxu0 %v4712
      %6627 = vmatpush.bf16.msra.mxu0 %v4708
      %6628 = vmatpush.bf16.msra.mxu0 %v4704
      %6629 = vmatpush.bf16.msra.mxu0 %v4700
      %6630 = vmatmul.bf16.gmra.mxu0 %v1347
      %v6631 = vpop.f32.mrf.mxu0
      %v6632 = vadd.f32 %v6618, %v6631
      %v6633 = vpop.f32.mrf.mxu0
      %v6634 = vadd.f32 %v6620, %v6633
      %6635 = vdwg.mxu0
      %6636 = vmatpush.bf16.msra.mxu0 %v4760
      %6637 = vmatpush.bf16.msra.mxu0 %v4756
      %6638 = vmatpush.bf16.msra.mxu0 %v4752
      %6639 = vmatpush.bf16.msra.mxu0 %v4748
      %6640 = vmatpush.bf16.msra.mxu0 %v4744
      %6641 = vmatpush.bf16.msra.mxu0 %v4740
      %6642 = vmatpush.bf16.msra.mxu0 %v4736
      %6643 = vmatpush.bf16.msra.mxu0 %v4732
      %6644 = vmatmul.bf16.gmra.mxu0 %v1348
      %v6645 = vpop.f32.mrf.mxu0
      %v6646 = vadd.f32 %v6632, %v6645
      %v6647 = vpop.f32.mrf.mxu0
      %v6648 = vadd.f32 %v6634, %v6647
      %6649 = vdwg.mxu0
      %6650 = vmatpush.bf16.msra.mxu0 %v4792
      %6651 = vmatpush.bf16.msra.mxu0 %v4788
      %6652 = vmatpush.bf16.msra.mxu0 %v4784
      %6653 = vmatpush.bf16.msra.mxu0 %v4780
      %6654 = vmatpush.bf16.msra.mxu0 %v4776
      %6655 = vmatpush.bf16.msra.mxu0 %v4772
      %6656 = vmatpush.bf16.msra.mxu0 %v4768
      %6657 = vmatpush.bf16.msra.mxu0 %v4764
      %6658 = vmatmul.bf16.gmra.mxu0 %v1349
      %v6659 = vpop.f32.mrf.mxu0
      %v6660 = vadd.f32 %v6646, %v6659
      %v6661 = vpop.f32.mrf.mxu0
      %v6662 = vadd.f32 %v6648, %v6661
      %6663 = vdwg.mxu0
      %6664 = vmatpush.bf16.msra.mxu0 %v4824
      %6665 = vmatpush.bf16.msra.mxu0 %v4820
      %6666 = vmatpush.bf16.msra.mxu0 %v4816
      %6667 = vmatpush.bf16.msra.mxu0 %v4812
      %6668 = vmatpush.bf16.msra.mxu0 %v4808
      %6669 = vmatpush.bf16.msra.mxu0 %v4804
      %6670 = vmatpush.bf16.msra.mxu0 %v4800
      %6671 = vmatpush.bf16.msra.mxu0 %v4796
      %6672 = vmatmul.bf16.gmra.mxu0 %v1350
      %v6673 = vpop.f32.mrf.mxu0
      %v6674 = vadd.f32 %v6660, %v6673
      %v6675 = vpop.f32.mrf.mxu0
      %v6676 = vadd.f32 %v6662, %v6675
      %6677 = vdwg.mxu0
      %6678 = vmatpush.bf16.msra.mxu0 %v4856
      %6679 = vmatpush.bf16.msra.mxu0 %v4852
      %6680 = vmatpush.bf16.msra.mxu0 %v4848
      %6681 = vmatpush.bf16.msra.mxu0 %v4844
      %6682 = vmatpush.bf16.msra.mxu0 %v4840
      %6683 = vmatpush.bf16.msra.mxu0 %v4836
      %6684 = vmatpush.bf16.msra.mxu0 %v4832
      %6685 = vmatpush.bf16.msra.mxu0 %v4828
      %6686 = vmatmul.bf16.gmra.mxu0 %v1351
      %v6687 = vpop.f32.mrf.mxu0
      %v6688 = vadd.f32 %v6674, %v6687
      %v6689 = vpop.f32.mrf.mxu0
      %v6690 = vadd.f32 %v6676, %v6689
      %6691 = vdwg.mxu0
      %6692 = vmatpush.bf16.msra.mxu0 %v4888
      %6693 = vmatpush.bf16.msra.mxu0 %v4884
      %6694 = vmatpush.bf16.msra.mxu0 %v4880
      %6695 = vmatpush.bf16.msra.mxu0 %v4876
      %6696 = vmatpush.bf16.msra.mxu0 %v4872
      %6697 = vmatpush.bf16.msra.mxu0 %v4868
      %6698 = vmatpush.bf16.msra.mxu0 %v4864
      %6699 = vmatpush.bf16.msra.mxu0 %v4860
      %6700 = vmatmul.bf16.gmra.mxu0 %v1352
      %v6701 = vpop.f32.mrf.mxu0
      %v6702 = vadd.f32 %v6688, %v6701
      %v6703 = vpop.f32.mrf.mxu0
      %v6704 = vadd.f32 %v6690, %v6703
      %6705 = vdwg.mxu0
      %6706 = vmatpush.bf16.msra.mxu0 %v4920
      %6707 = vmatpush.bf16.msra.mxu0 %v4916
      %6708 = vmatpush.bf16.msra.mxu0 %v4912
      %6709 = vmatpush.bf16.msra.mxu0 %v4908
      %6710 = vmatpush.bf16.msra.mxu0 %v4904
      %6711 = vmatpush.bf16.msra.mxu0 %v4900
      %6712 = vmatpush.bf16.msra.mxu0 %v4896
      %6713 = vmatpush.bf16.msra.mxu0 %v4892
      %6714 = vmatmul.bf16.gmra.mxu0 %v1353
      %v6715 = vpop.f32.mrf.mxu0
      %v6716 = vadd.f32 %v6702, %v6715
      %v6717 = vpop.f32.mrf.mxu0
      %v6718 = vadd.f32 %v6704, %v6717
      %6719 = vdwg.mxu0
      %6720 = vmatpush.bf16.msra.mxu0 %v4952
      %6721 = vmatpush.bf16.msra.mxu0 %v4948
      %6722 = vmatpush.bf16.msra.mxu0 %v4944
      %6723 = vmatpush.bf16.msra.mxu0 %v4940
      %6724 = vmatpush.bf16.msra.mxu0 %v4936
      %6725 = vmatpush.bf16.msra.mxu0 %v4932
      %6726 = vmatpush.bf16.msra.mxu0 %v4928
      %6727 = vmatpush.bf16.msra.mxu0 %v4924
      %6728 = vmatmul.bf16.gmra.mxu0 %v1354
      %v6729 = vpop.f32.mrf.mxu0
      %v6730 = vadd.f32 %v6716, %v6729
      %v6731 = vpop.f32.mrf.mxu0
      %v6732 = vadd.f32 %v6718, %v6731
      %6733 = vdwg.mxu0
      %6734 = vmatpush.bf16.msra.mxu0 %v4984
      %6735 = vmatpush.bf16.msra.mxu0 %v4980
      %6736 = vmatpush.bf16.msra.mxu0 %v4976
      %6737 = vmatpush.bf16.msra.mxu0 %v4972
      %6738 = vmatpush.bf16.msra.mxu0 %v4968
      %6739 = vmatpush.bf16.msra.mxu0 %v4964
      %6740 = vmatpush.bf16.msra.mxu0 %v4960
      %6741 = vmatpush.bf16.msra.mxu0 %v4956
      %6742 = vmatmul.bf16.gmra.mxu0 %v1355
      %v6743 = vpop.f32.mrf.mxu0
      %v6744 = vadd.f32 %v6730, %v6743
      %v6745 = vpop.f32.mrf.mxu0
      %v6746 = vadd.f32 %v6732, %v6745
      %6747 = vdwg.mxu0
      %6748 = vmatpush.bf16.msra.mxu0 %v5016
      %6749 = vmatpush.bf16.msra.mxu0 %v5012
      %6750 = vmatpush.bf16.msra.mxu0 %v5008
      %6751 = vmatpush.bf16.msra.mxu0 %v5004
      %6752 = vmatpush.bf16.msra.mxu0 %v5000
      %6753 = vmatpush.bf16.msra.mxu0 %v4996
      %6754 = vmatpush.bf16.msra.mxu0 %v4992
      %6755 = vmatpush.bf16.msra.mxu0 %v4988
      %6756 = vmatmul.bf16.gmra.mxu0 %v1356
      %v6757 = vpop.f32.mrf.mxu0
      %v6758 = vadd.f32 %v6744, %v6757
      %v6759 = vpop.f32.mrf.mxu0
      %v6760 = vadd.f32 %v6746, %v6759
      %6761 = vdwg.mxu0
      %6762 = vmatpush.bf16.msra.mxu0 %v5048
      %6763 = vmatpush.bf16.msra.mxu0 %v5044
      %6764 = vmatpush.bf16.msra.mxu0 %v5040
      %6765 = vmatpush.bf16.msra.mxu0 %v5036
      %6766 = vmatpush.bf16.msra.mxu0 %v5032
      %6767 = vmatpush.bf16.msra.mxu0 %v5028
      %6768 = vmatpush.bf16.msra.mxu0 %v5024
      %6769 = vmatpush.bf16.msra.mxu0 %v5020
      %6770 = vmatmul.bf16.gmra.mxu0 %v1357
      %v6771 = vpop.f32.mrf.mxu0
      %v6772 = vadd.f32 %v6758, %v6771
      %v6773 = vpop.f32.mrf.mxu0
      %v6774 = vadd.f32 %v6760, %v6773
      %6775 = vdwg.mxu0
      %6776 = vmatpush.bf16.msra.mxu0 %v5080
      %6777 = vmatpush.bf16.msra.mxu0 %v5076
      %6778 = vmatpush.bf16.msra.mxu0 %v5072
      %6779 = vmatpush.bf16.msra.mxu0 %v5068
      %6780 = vmatpush.bf16.msra.mxu0 %v5064
      %6781 = vmatpush.bf16.msra.mxu0 %v5060
      %6782 = vmatpush.bf16.msra.mxu0 %v5056
      %6783 = vmatpush.bf16.msra.mxu0 %v5052
      %6784 = vmatmul.bf16.gmra.mxu0 %v1358
      %v6785 = vpop.f32.mrf.mxu0
      %v6786 = vadd.f32 %v6772, %v6785
      %v6787 = vpop.f32.mrf.mxu0
      %v6788 = vadd.f32 %v6774, %v6787
      %6789 = vdwg.mxu0
      %6790 = vmatpush.bf16.msra.mxu0 %v5112
      %6791 = vmatpush.bf16.msra.mxu0 %v5108
      %6792 = vmatpush.bf16.msra.mxu0 %v5104
      %6793 = vmatpush.bf16.msra.mxu0 %v5100
      %6794 = vmatpush.bf16.msra.mxu0 %v5096
      %6795 = vmatpush.bf16.msra.mxu0 %v5092
      %6796 = vmatpush.bf16.msra.mxu0 %v5088
      %6797 = vmatpush.bf16.msra.mxu0 %v5084
      %6798 = vmatmul.bf16.gmra.mxu0 %v1359
      %v6799 = vpop.f32.mrf.mxu0
      %v6800 = vadd.f32 %v6786, %v6799
      %v6801 = vpop.f32.mrf.mxu0
      %v6802 = vadd.f32 %v6788, %v6801
      %6803 = vdwg.mxu0
      %6804 = vmatpush.bf16.msra.mxu0 %v5144
      %6805 = vmatpush.bf16.msra.mxu0 %v5140
      %6806 = vmatpush.bf16.msra.mxu0 %v5136
      %6807 = vmatpush.bf16.msra.mxu0 %v5132
      %6808 = vmatpush.bf16.msra.mxu0 %v5128
      %6809 = vmatpush.bf16.msra.mxu0 %v5124
      %6810 = vmatpush.bf16.msra.mxu0 %v5120
      %6811 = vmatpush.bf16.msra.mxu0 %v5116
      %6812 = vmatmul.bf16.gmra.mxu0 %v1360
      %v6813 = vpop.f32.mrf.mxu0
      %v6814 = vadd.f32 %v6800, %v6813
      %v6815 = vpop.f32.mrf.mxu0
      %v6816 = vadd.f32 %v6802, %v6815
      %6817 = vdwg.mxu0
      %6818 = vmatpush.bf16.msra.mxu0 %v5176
      %6819 = vmatpush.bf16.msra.mxu0 %v5172
      %6820 = vmatpush.bf16.msra.mxu0 %v5168
      %6821 = vmatpush.bf16.msra.mxu0 %v5164
      %6822 = vmatpush.bf16.msra.mxu0 %v5160
      %6823 = vmatpush.bf16.msra.mxu0 %v5156
      %6824 = vmatpush.bf16.msra.mxu0 %v5152
      %6825 = vmatpush.bf16.msra.mxu0 %v5148
      %6826 = vmatmul.bf16.gmra.mxu0 %v1361
      %v6827 = vpop.f32.mrf.mxu0
      %v6828 = vadd.f32 %v6814, %v6827
      %v6829 = vpop.f32.mrf.mxu0
      %v6830 = vadd.f32 %v6816, %v6829
      %6831 = vdwg.mxu0
      %6832 = vmatpush.bf16.msra.mxu0 %v5208
      %6833 = vmatpush.bf16.msra.mxu0 %v5204
      %6834 = vmatpush.bf16.msra.mxu0 %v5200
      %6835 = vmatpush.bf16.msra.mxu0 %v5196
      %6836 = vmatpush.bf16.msra.mxu0 %v5192
      %6837 = vmatpush.bf16.msra.mxu0 %v5188
      %6838 = vmatpush.bf16.msra.mxu0 %v5184
      %6839 = vmatpush.bf16.msra.mxu0 %v5180
      %6840 = vmatmul.bf16.gmra.mxu0 %v1362
      %v6841 = vpop.f32.mrf.mxu0
      %v6842 = vadd.f32 %v6828, %v6841
      %v6843 = vpop.f32.mrf.mxu0
      %v6844 = vadd.f32 %v6830, %v6843
      %6845 = vdwg.mxu0
      %6846 = vmatpush.bf16.msra.mxu0 %v5240
      %6847 = vmatpush.bf16.msra.mxu0 %v5236
      %6848 = vmatpush.bf16.msra.mxu0 %v5232
      %6849 = vmatpush.bf16.msra.mxu0 %v5228
      %6850 = vmatpush.bf16.msra.mxu0 %v5224
      %6851 = vmatpush.bf16.msra.mxu0 %v5220
      %6852 = vmatpush.bf16.msra.mxu0 %v5216
      %6853 = vmatpush.bf16.msra.mxu0 %v5212
      %6854 = vmatmul.bf16.gmra.mxu0 %v1363
      %v6855 = vpop.f32.mrf.mxu0
      %v6856 = vadd.f32 %v6842, %v6855
      %v6857 = vpop.f32.mrf.mxu0
      %v6858 = vadd.f32 %v6844, %v6857
      %6859 = vdwg.mxu0
      %6860 = vmatpush.bf16.msra.mxu0 %v5272
      %6861 = vmatpush.bf16.msra.mxu0 %v5268
      %6862 = vmatpush.bf16.msra.mxu0 %v5264
      %6863 = vmatpush.bf16.msra.mxu0 %v5260
      %6864 = vmatpush.bf16.msra.mxu0 %v5256
      %6865 = vmatpush.bf16.msra.mxu0 %v5252
      %6866 = vmatpush.bf16.msra.mxu0 %v5248
      %6867 = vmatpush.bf16.msra.mxu0 %v5244
      %6868 = vmatmul.bf16.gmra.mxu0 %v1364
      %v6869 = vpop.f32.mrf.mxu0
      %v6870 = vadd.f32 %v6856, %v6869
      %v6871 = vpop.f32.mrf.mxu0
      %v6872 = vadd.f32 %v6858, %v6871
      %6873 = vdwg.mxu0
      %6874 = vmatpush.bf16.msra.mxu0 %v5304
      %6875 = vmatpush.bf16.msra.mxu0 %v5300
      %6876 = vmatpush.bf16.msra.mxu0 %v5296
      %6877 = vmatpush.bf16.msra.mxu0 %v5292
      %6878 = vmatpush.bf16.msra.mxu0 %v5288
      %6879 = vmatpush.bf16.msra.mxu0 %v5284
      %6880 = vmatpush.bf16.msra.mxu0 %v5280
      %6881 = vmatpush.bf16.msra.mxu0 %v5276
      %6882 = vmatmul.bf16.gmra.mxu0 %v1365
      %v6883 = vpop.f32.mrf.mxu0
      %v6884 = vadd.f32 %v6870, %v6883
      %v6885 = vpop.f32.mrf.mxu0
      %v6886 = vadd.f32 %v6872, %v6885
      %6887 = vdwg.mxu0
      %6888 = vmatpush.bf16.msra.mxu0 %v5336
      %6889 = vmatpush.bf16.msra.mxu0 %v5332
      %6890 = vmatpush.bf16.msra.mxu0 %v5328
      %6891 = vmatpush.bf16.msra.mxu0 %v5324
      %6892 = vmatpush.bf16.msra.mxu0 %v5320
      %6893 = vmatpush.bf16.msra.mxu0 %v5316
      %6894 = vmatpush.bf16.msra.mxu0 %v5312
      %6895 = vmatpush.bf16.msra.mxu0 %v5308
      %6896 = vmatmul.bf16.gmra.mxu0 %v1366
      %v6897 = vpop.f32.mrf.mxu0
      %v6898 = vadd.f32 %v6884, %v6897
      %v6899 = vpop.f32.mrf.mxu0
      %v6900 = vadd.f32 %v6886, %v6899
      %6901 = vdwg.mxu0
      %6902 = vmatpush.bf16.msra.mxu0 %v5368
      %6903 = vmatpush.bf16.msra.mxu0 %v5364
      %6904 = vmatpush.bf16.msra.mxu0 %v5360
      %6905 = vmatpush.bf16.msra.mxu0 %v5356
      %6906 = vmatpush.bf16.msra.mxu0 %v5352
      %6907 = vmatpush.bf16.msra.mxu0 %v5348
      %6908 = vmatpush.bf16.msra.mxu0 %v5344
      %6909 = vmatpush.bf16.msra.mxu0 %v5340
      %6910 = vmatmul.bf16.gmra.mxu0 %v1367
      %v6911 = vpop.f32.mrf.mxu0
      %v6912 = vadd.f32 %v6898, %v6911
      %v6913 = vpop.f32.mrf.mxu0
      %v6914 = vadd.f32 %v6900, %v6913
      %6915 = vdwg.mxu0
      %6916 = vmatpush.bf16.msra.mxu0 %v5400
      %6917 = vmatpush.bf16.msra.mxu0 %v5396
      %6918 = vmatpush.bf16.msra.mxu0 %v5392
      %6919 = vmatpush.bf16.msra.mxu0 %v5388
      %6920 = vmatpush.bf16.msra.mxu0 %v5384
      %6921 = vmatpush.bf16.msra.mxu0 %v5380
      %6922 = vmatpush.bf16.msra.mxu0 %v5376
      %6923 = vmatpush.bf16.msra.mxu0 %v5372
      %6924 = vmatmul.bf16.gmra.mxu0 %v1368
      %v6925 = vpop.f32.mrf.mxu0
      %v6926 = vadd.f32 %v6912, %v6925
      %v6927 = vpop.f32.mrf.mxu0
      %v6928 = vadd.f32 %v6914, %v6927
      %6929 = vdwg.mxu0
      %6930 = vmatpush.bf16.msra.mxu0 %v5432
      %6931 = vmatpush.bf16.msra.mxu0 %v5428
      %6932 = vmatpush.bf16.msra.mxu0 %v5424
      %6933 = vmatpush.bf16.msra.mxu0 %v5420
      %6934 = vmatpush.bf16.msra.mxu0 %v5416
      %6935 = vmatpush.bf16.msra.mxu0 %v5412
      %6936 = vmatpush.bf16.msra.mxu0 %v5408
      %6937 = vmatpush.bf16.msra.mxu0 %v5404
      %6938 = vmatmul.bf16.gmra.mxu0 %v1369
      %v6939 = vpop.f32.mrf.mxu0
      %v6940 = vadd.f32 %v6926, %v6939
      %v6941 = vpop.f32.mrf.mxu0
      %v6942 = vadd.f32 %v6928, %v6941
      %6943 = vdwg.mxu0
      %6944 = vmatpush.bf16.msra.mxu0 %v5464
      %6945 = vmatpush.bf16.msra.mxu0 %v5460
      %6946 = vmatpush.bf16.msra.mxu0 %v5456
      %6947 = vmatpush.bf16.msra.mxu0 %v5452
      %6948 = vmatpush.bf16.msra.mxu0 %v5448
      %6949 = vmatpush.bf16.msra.mxu0 %v5444
      %6950 = vmatpush.bf16.msra.mxu0 %v5440
      %6951 = vmatpush.bf16.msra.mxu0 %v5436
      %6952 = vmatmul.bf16.gmra.mxu0 %v1370
      %v6953 = vpop.f32.mrf.mxu0
      %v6954 = vadd.f32 %v6940, %v6953
      %v6955 = vpop.f32.mrf.mxu0
      %v6956 = vadd.f32 %v6942, %v6955
      %6957 = vdwg.mxu0
      %6958 = vmatpush.bf16.msra.mxu0 %v5496
      %6959 = vmatpush.bf16.msra.mxu0 %v5492
      %6960 = vmatpush.bf16.msra.mxu0 %v5488
      %6961 = vmatpush.bf16.msra.mxu0 %v5484
      %6962 = vmatpush.bf16.msra.mxu0 %v5480
      %6963 = vmatpush.bf16.msra.mxu0 %v5476
      %6964 = vmatpush.bf16.msra.mxu0 %v5472
      %6965 = vmatpush.bf16.msra.mxu0 %v5468
      %6966 = vmatmul.bf16.gmra.mxu0 %v1371
      %v6967 = vpop.f32.mrf.mxu0
      %v6968 = vadd.f32 %v6954, %v6967
      %v6969 = vpop.f32.mrf.mxu0
      %v6970 = vadd.f32 %v6956, %v6969
      %6971 = vdwg.mxu0
      %6972 = vmatpush.bf16.msra.mxu0 %v4505
      %6973 = vmatpush.bf16.msra.mxu0 %v4501
      %6974 = vmatpush.bf16.msra.mxu0 %v4497
      %6975 = vmatpush.bf16.msra.mxu0 %v4493
      %6976 = vmatpush.bf16.msra.mxu0 %v4489
      %6977 = vmatpush.bf16.msra.mxu0 %v4485
      %6978 = vmatpush.bf16.msra.mxu0 %v4481
      %6979 = vmatpush.bf16.msra.mxu0 %v4477
      %6980 = vmatmul.bf16.gmra.mxu0 %v1340
      %v6981 = vpop.f32.mrf.mxu0
      %v6982 = vadd.f32 0.0, %v6981
      %v6983 = vpop.f32.mrf.mxu0
      %v6984 = vadd.f32 0.0, %v6983
      %6985 = vdwg.mxu0
      %6986 = vmatpush.bf16.msra.mxu0 %v4537
      %6987 = vmatpush.bf16.msra.mxu0 %v4533
      %6988 = vmatpush.bf16.msra.mxu0 %v4529
      %6989 = vmatpush.bf16.msra.mxu0 %v4525
      %6990 = vmatpush.bf16.msra.mxu0 %v4521
      %6991 = vmatpush.bf16.msra.mxu0 %v4517
      %6992 = vmatpush.bf16.msra.mxu0 %v4513
      %6993 = vmatpush.bf16.msra.mxu0 %v4509
      %6994 = vmatmul.bf16.gmra.mxu0 %v1341
      %v6995 = vpop.f32.mrf.mxu0
      %v6996 = vadd.f32 %v6982, %v6995
      %v6997 = vpop.f32.mrf.mxu0
      %v6998 = vadd.f32 %v6984, %v6997
      %6999 = vdwg.mxu0
      %7000 = vmatpush.bf16.msra.mxu0 %v4569
      %7001 = vmatpush.bf16.msra.mxu0 %v4565
      %7002 = vmatpush.bf16.msra.mxu0 %v4561
      %7003 = vmatpush.bf16.msra.mxu0 %v4557
      %7004 = vmatpush.bf16.msra.mxu0 %v4553
      %7005 = vmatpush.bf16.msra.mxu0 %v4549
      %7006 = vmatpush.bf16.msra.mxu0 %v4545
      %7007 = vmatpush.bf16.msra.mxu0 %v4541
      %7008 = vmatmul.bf16.gmra.mxu0 %v1342
      %v7009 = vpop.f32.mrf.mxu0
      %v7010 = vadd.f32 %v6996, %v7009
      %v7011 = vpop.f32.mrf.mxu0
      %v7012 = vadd.f32 %v6998, %v7011
      %7013 = vdwg.mxu0
      %7014 = vmatpush.bf16.msra.mxu0 %v4601
      %7015 = vmatpush.bf16.msra.mxu0 %v4597
      %7016 = vmatpush.bf16.msra.mxu0 %v4593
      %7017 = vmatpush.bf16.msra.mxu0 %v4589
      %7018 = vmatpush.bf16.msra.mxu0 %v4585
      %7019 = vmatpush.bf16.msra.mxu0 %v4581
      %7020 = vmatpush.bf16.msra.mxu0 %v4577
      %7021 = vmatpush.bf16.msra.mxu0 %v4573
      %7022 = vmatmul.bf16.gmra.mxu0 %v1343
      %v7023 = vpop.f32.mrf.mxu0
      %v7024 = vadd.f32 %v7010, %v7023
      %v7025 = vpop.f32.mrf.mxu0
      %v7026 = vadd.f32 %v7012, %v7025
      %7027 = vdwg.mxu0
      %7028 = vmatpush.bf16.msra.mxu0 %v4633
      %7029 = vmatpush.bf16.msra.mxu0 %v4629
      %7030 = vmatpush.bf16.msra.mxu0 %v4625
      %7031 = vmatpush.bf16.msra.mxu0 %v4621
      %7032 = vmatpush.bf16.msra.mxu0 %v4617
      %7033 = vmatpush.bf16.msra.mxu0 %v4613
      %7034 = vmatpush.bf16.msra.mxu0 %v4609
      %7035 = vmatpush.bf16.msra.mxu0 %v4605
      %7036 = vmatmul.bf16.gmra.mxu0 %v1344
      %v7037 = vpop.f32.mrf.mxu0
      %v7038 = vadd.f32 %v7024, %v7037
      %v7039 = vpop.f32.mrf.mxu0
      %v7040 = vadd.f32 %v7026, %v7039
      %7041 = vdwg.mxu0
      %7042 = vmatpush.bf16.msra.mxu0 %v4665
      %7043 = vmatpush.bf16.msra.mxu0 %v4661
      %7044 = vmatpush.bf16.msra.mxu0 %v4657
      %7045 = vmatpush.bf16.msra.mxu0 %v4653
      %7046 = vmatpush.bf16.msra.mxu0 %v4649
      %7047 = vmatpush.bf16.msra.mxu0 %v4645
      %7048 = vmatpush.bf16.msra.mxu0 %v4641
      %7049 = vmatpush.bf16.msra.mxu0 %v4637
      %7050 = vmatmul.bf16.gmra.mxu0 %v1345
      %v7051 = vpop.f32.mrf.mxu0
      %v7052 = vadd.f32 %v7038, %v7051
      %v7053 = vpop.f32.mrf.mxu0
      %v7054 = vadd.f32 %v7040, %v7053
      %7055 = vdwg.mxu0
      %7056 = vmatpush.bf16.msra.mxu0 %v4697
      %7057 = vmatpush.bf16.msra.mxu0 %v4693
      %7058 = vmatpush.bf16.msra.mxu0 %v4689
      %7059 = vmatpush.bf16.msra.mxu0 %v4685
      %7060 = vmatpush.bf16.msra.mxu0 %v4681
      %7061 = vmatpush.bf16.msra.mxu0 %v4677
      %7062 = vmatpush.bf16.msra.mxu0 %v4673
      %7063 = vmatpush.bf16.msra.mxu0 %v4669
      %7064 = vmatmul.bf16.gmra.mxu0 %v1346
      %v7065 = vpop.f32.mrf.mxu0
      %v7066 = vadd.f32 %v7052, %v7065
      %v7067 = vpop.f32.mrf.mxu0
      %v7068 = vadd.f32 %v7054, %v7067
      %7069 = vdwg.mxu0
      %7070 = vmatpush.bf16.msra.mxu0 %v4729
      %7071 = vmatpush.bf16.msra.mxu0 %v4725
      %7072 = vmatpush.bf16.msra.mxu0 %v4721
      %7073 = vmatpush.bf16.msra.mxu0 %v4717
      %7074 = vmatpush.bf16.msra.mxu0 %v4713
      %7075 = vmatpush.bf16.msra.mxu0 %v4709
      %7076 = vmatpush.bf16.msra.mxu0 %v4705
      %7077 = vmatpush.bf16.msra.mxu0 %v4701
      %7078 = vmatmul.bf16.gmra.mxu0 %v1347
      %v7079 = vpop.f32.mrf.mxu0
      %v7080 = vadd.f32 %v7066, %v7079
      %v7081 = vpop.f32.mrf.mxu0
      %v7082 = vadd.f32 %v7068, %v7081
      %7083 = vdwg.mxu0
      %7084 = vmatpush.bf16.msra.mxu0 %v4761
      %7085 = vmatpush.bf16.msra.mxu0 %v4757
      %7086 = vmatpush.bf16.msra.mxu0 %v4753
      %7087 = vmatpush.bf16.msra.mxu0 %v4749
      %7088 = vmatpush.bf16.msra.mxu0 %v4745
      %7089 = vmatpush.bf16.msra.mxu0 %v4741
      %7090 = vmatpush.bf16.msra.mxu0 %v4737
      %7091 = vmatpush.bf16.msra.mxu0 %v4733
      %7092 = vmatmul.bf16.gmra.mxu0 %v1348
      %v7093 = vpop.f32.mrf.mxu0
      %v7094 = vadd.f32 %v7080, %v7093
      %v7095 = vpop.f32.mrf.mxu0
      %v7096 = vadd.f32 %v7082, %v7095
      %7097 = vdwg.mxu0
      %7098 = vmatpush.bf16.msra.mxu0 %v4793
      %7099 = vmatpush.bf16.msra.mxu0 %v4789
      %7100 = vmatpush.bf16.msra.mxu0 %v4785
      %7101 = vmatpush.bf16.msra.mxu0 %v4781
      %7102 = vmatpush.bf16.msra.mxu0 %v4777
      %7103 = vmatpush.bf16.msra.mxu0 %v4773
      %7104 = vmatpush.bf16.msra.mxu0 %v4769
      %7105 = vmatpush.bf16.msra.mxu0 %v4765
      %7106 = vmatmul.bf16.gmra.mxu0 %v1349
      %v7107 = vpop.f32.mrf.mxu0
      %v7108 = vadd.f32 %v7094, %v7107
      %v7109 = vpop.f32.mrf.mxu0
      %v7110 = vadd.f32 %v7096, %v7109
      %7111 = vdwg.mxu0
      %7112 = vmatpush.bf16.msra.mxu0 %v4825
      %7113 = vmatpush.bf16.msra.mxu0 %v4821
      %7114 = vmatpush.bf16.msra.mxu0 %v4817
      %7115 = vmatpush.bf16.msra.mxu0 %v4813
      %7116 = vmatpush.bf16.msra.mxu0 %v4809
      %7117 = vmatpush.bf16.msra.mxu0 %v4805
      %7118 = vmatpush.bf16.msra.mxu0 %v4801
      %7119 = vmatpush.bf16.msra.mxu0 %v4797
      %7120 = vmatmul.bf16.gmra.mxu0 %v1350
      %v7121 = vpop.f32.mrf.mxu0
      %v7122 = vadd.f32 %v7108, %v7121
      %v7123 = vpop.f32.mrf.mxu0
      %v7124 = vadd.f32 %v7110, %v7123
      %7125 = vdwg.mxu0
      %7126 = vmatpush.bf16.msra.mxu0 %v4857
      %7127 = vmatpush.bf16.msra.mxu0 %v4853
      %7128 = vmatpush.bf16.msra.mxu0 %v4849
      %7129 = vmatpush.bf16.msra.mxu0 %v4845
      %7130 = vmatpush.bf16.msra.mxu0 %v4841
      %7131 = vmatpush.bf16.msra.mxu0 %v4837
      %7132 = vmatpush.bf16.msra.mxu0 %v4833
      %7133 = vmatpush.bf16.msra.mxu0 %v4829
      %7134 = vmatmul.bf16.gmra.mxu0 %v1351
      %v7135 = vpop.f32.mrf.mxu0
      %v7136 = vadd.f32 %v7122, %v7135
      %v7137 = vpop.f32.mrf.mxu0
      %v7138 = vadd.f32 %v7124, %v7137
      %7139 = vdwg.mxu0
      %7140 = vmatpush.bf16.msra.mxu0 %v4889
      %7141 = vmatpush.bf16.msra.mxu0 %v4885
      %7142 = vmatpush.bf16.msra.mxu0 %v4881
      %7143 = vmatpush.bf16.msra.mxu0 %v4877
      %7144 = vmatpush.bf16.msra.mxu0 %v4873
      %7145 = vmatpush.bf16.msra.mxu0 %v4869
      %7146 = vmatpush.bf16.msra.mxu0 %v4865
      %7147 = vmatpush.bf16.msra.mxu0 %v4861
      %7148 = vmatmul.bf16.gmra.mxu0 %v1352
      %v7149 = vpop.f32.mrf.mxu0
      %v7150 = vadd.f32 %v7136, %v7149
      %v7151 = vpop.f32.mrf.mxu0
      %v7152 = vadd.f32 %v7138, %v7151
      %7153 = vdwg.mxu0
      %7154 = vmatpush.bf16.msra.mxu0 %v4921
      %7155 = vmatpush.bf16.msra.mxu0 %v4917
      %7156 = vmatpush.bf16.msra.mxu0 %v4913
      %7157 = vmatpush.bf16.msra.mxu0 %v4909
      %7158 = vmatpush.bf16.msra.mxu0 %v4905
      %7159 = vmatpush.bf16.msra.mxu0 %v4901
      %7160 = vmatpush.bf16.msra.mxu0 %v4897
      %7161 = vmatpush.bf16.msra.mxu0 %v4893
      %7162 = vmatmul.bf16.gmra.mxu0 %v1353
      %v7163 = vpop.f32.mrf.mxu0
      %v7164 = vadd.f32 %v7150, %v7163
      %v7165 = vpop.f32.mrf.mxu0
      %v7166 = vadd.f32 %v7152, %v7165
      %7167 = vdwg.mxu0
      %7168 = vmatpush.bf16.msra.mxu0 %v4953
      %7169 = vmatpush.bf16.msra.mxu0 %v4949
      %7170 = vmatpush.bf16.msra.mxu0 %v4945
      %7171 = vmatpush.bf16.msra.mxu0 %v4941
      %7172 = vmatpush.bf16.msra.mxu0 %v4937
      %7173 = vmatpush.bf16.msra.mxu0 %v4933
      %7174 = vmatpush.bf16.msra.mxu0 %v4929
      %7175 = vmatpush.bf16.msra.mxu0 %v4925
      %7176 = vmatmul.bf16.gmra.mxu0 %v1354
      %v7177 = vpop.f32.mrf.mxu0
      %v7178 = vadd.f32 %v7164, %v7177
      %v7179 = vpop.f32.mrf.mxu0
      %v7180 = vadd.f32 %v7166, %v7179
      %7181 = vdwg.mxu0
      %7182 = vmatpush.bf16.msra.mxu0 %v4985
      %7183 = vmatpush.bf16.msra.mxu0 %v4981
      %7184 = vmatpush.bf16.msra.mxu0 %v4977
      %7185 = vmatpush.bf16.msra.mxu0 %v4973
      %7186 = vmatpush.bf16.msra.mxu0 %v4969
      %7187 = vmatpush.bf16.msra.mxu0 %v4965
      %7188 = vmatpush.bf16.msra.mxu0 %v4961
      %7189 = vmatpush.bf16.msra.mxu0 %v4957
      %7190 = vmatmul.bf16.gmra.mxu0 %v1355
      %v7191 = vpop.f32.mrf.mxu0
      %v7192 = vadd.f32 %v7178, %v7191
      %v7193 = vpop.f32.mrf.mxu0
      %v7194 = vadd.f32 %v7180, %v7193
      %7195 = vdwg.mxu0
      %7196 = vmatpush.bf16.msra.mxu0 %v5017
      %7197 = vmatpush.bf16.msra.mxu0 %v5013
      %7198 = vmatpush.bf16.msra.mxu0 %v5009
      %7199 = vmatpush.bf16.msra.mxu0 %v5005
      %7200 = vmatpush.bf16.msra.mxu0 %v5001
      %7201 = vmatpush.bf16.msra.mxu0 %v4997
      %7202 = vmatpush.bf16.msra.mxu0 %v4993
      %7203 = vmatpush.bf16.msra.mxu0 %v4989
      %7204 = vmatmul.bf16.gmra.mxu0 %v1356
      %v7205 = vpop.f32.mrf.mxu0
      %v7206 = vadd.f32 %v7192, %v7205
      %v7207 = vpop.f32.mrf.mxu0
      %v7208 = vadd.f32 %v7194, %v7207
      %7209 = vdwg.mxu0
      %7210 = vmatpush.bf16.msra.mxu0 %v5049
      %7211 = vmatpush.bf16.msra.mxu0 %v5045
      %7212 = vmatpush.bf16.msra.mxu0 %v5041
      %7213 = vmatpush.bf16.msra.mxu0 %v5037
      %7214 = vmatpush.bf16.msra.mxu0 %v5033
      %7215 = vmatpush.bf16.msra.mxu0 %v5029
      %7216 = vmatpush.bf16.msra.mxu0 %v5025
      %7217 = vmatpush.bf16.msra.mxu0 %v5021
      %7218 = vmatmul.bf16.gmra.mxu0 %v1357
      %v7219 = vpop.f32.mrf.mxu0
      %v7220 = vadd.f32 %v7206, %v7219
      %v7221 = vpop.f32.mrf.mxu0
      %v7222 = vadd.f32 %v7208, %v7221
      %7223 = vdwg.mxu0
      %7224 = vmatpush.bf16.msra.mxu0 %v5081
      %7225 = vmatpush.bf16.msra.mxu0 %v5077
      %7226 = vmatpush.bf16.msra.mxu0 %v5073
      %7227 = vmatpush.bf16.msra.mxu0 %v5069
      %7228 = vmatpush.bf16.msra.mxu0 %v5065
      %7229 = vmatpush.bf16.msra.mxu0 %v5061
      %7230 = vmatpush.bf16.msra.mxu0 %v5057
      %7231 = vmatpush.bf16.msra.mxu0 %v5053
      %7232 = vmatmul.bf16.gmra.mxu0 %v1358
      %v7233 = vpop.f32.mrf.mxu0
      %v7234 = vadd.f32 %v7220, %v7233
      %v7235 = vpop.f32.mrf.mxu0
      %v7236 = vadd.f32 %v7222, %v7235
      %7237 = vdwg.mxu0
      %7238 = vmatpush.bf16.msra.mxu0 %v5113
      %7239 = vmatpush.bf16.msra.mxu0 %v5109
      %7240 = vmatpush.bf16.msra.mxu0 %v5105
      %7241 = vmatpush.bf16.msra.mxu0 %v5101
      %7242 = vmatpush.bf16.msra.mxu0 %v5097
      %7243 = vmatpush.bf16.msra.mxu0 %v5093
      %7244 = vmatpush.bf16.msra.mxu0 %v5089
      %7245 = vmatpush.bf16.msra.mxu0 %v5085
      %7246 = vmatmul.bf16.gmra.mxu0 %v1359
      %v7247 = vpop.f32.mrf.mxu0
      %v7248 = vadd.f32 %v7234, %v7247
      %v7249 = vpop.f32.mrf.mxu0
      %v7250 = vadd.f32 %v7236, %v7249
      %7251 = vdwg.mxu0
      %7252 = vmatpush.bf16.msra.mxu0 %v5145
      %7253 = vmatpush.bf16.msra.mxu0 %v5141
      %7254 = vmatpush.bf16.msra.mxu0 %v5137
      %7255 = vmatpush.bf16.msra.mxu0 %v5133
      %7256 = vmatpush.bf16.msra.mxu0 %v5129
      %7257 = vmatpush.bf16.msra.mxu0 %v5125
      %7258 = vmatpush.bf16.msra.mxu0 %v5121
      %7259 = vmatpush.bf16.msra.mxu0 %v5117
      %7260 = vmatmul.bf16.gmra.mxu0 %v1360
      %v7261 = vpop.f32.mrf.mxu0
      %v7262 = vadd.f32 %v7248, %v7261
      %v7263 = vpop.f32.mrf.mxu0
      %v7264 = vadd.f32 %v7250, %v7263
      %7265 = vdwg.mxu0
      %7266 = vmatpush.bf16.msra.mxu0 %v5177
      %7267 = vmatpush.bf16.msra.mxu0 %v5173
      %7268 = vmatpush.bf16.msra.mxu0 %v5169
      %7269 = vmatpush.bf16.msra.mxu0 %v5165
      %7270 = vmatpush.bf16.msra.mxu0 %v5161
      %7271 = vmatpush.bf16.msra.mxu0 %v5157
      %7272 = vmatpush.bf16.msra.mxu0 %v5153
      %7273 = vmatpush.bf16.msra.mxu0 %v5149
      %7274 = vmatmul.bf16.gmra.mxu0 %v1361
      %v7275 = vpop.f32.mrf.mxu0
      %v7276 = vadd.f32 %v7262, %v7275
      %v7277 = vpop.f32.mrf.mxu0
      %v7278 = vadd.f32 %v7264, %v7277
      %7279 = vdwg.mxu0
      %7280 = vmatpush.bf16.msra.mxu0 %v5209
      %7281 = vmatpush.bf16.msra.mxu0 %v5205
      %7282 = vmatpush.bf16.msra.mxu0 %v5201
      %7283 = vmatpush.bf16.msra.mxu0 %v5197
      %7284 = vmatpush.bf16.msra.mxu0 %v5193
      %7285 = vmatpush.bf16.msra.mxu0 %v5189
      %7286 = vmatpush.bf16.msra.mxu0 %v5185
      %7287 = vmatpush.bf16.msra.mxu0 %v5181
      %7288 = vmatmul.bf16.gmra.mxu0 %v1362
      %v7289 = vpop.f32.mrf.mxu0
      %v7290 = vadd.f32 %v7276, %v7289
      %v7291 = vpop.f32.mrf.mxu0
      %v7292 = vadd.f32 %v7278, %v7291
      %7293 = vdwg.mxu0
      %7294 = vmatpush.bf16.msra.mxu0 %v5241
      %7295 = vmatpush.bf16.msra.mxu0 %v5237
      %7296 = vmatpush.bf16.msra.mxu0 %v5233
      %7297 = vmatpush.bf16.msra.mxu0 %v5229
      %7298 = vmatpush.bf16.msra.mxu0 %v5225
      %7299 = vmatpush.bf16.msra.mxu0 %v5221
      %7300 = vmatpush.bf16.msra.mxu0 %v5217
      %7301 = vmatpush.bf16.msra.mxu0 %v5213
      %7302 = vmatmul.bf16.gmra.mxu0 %v1363
      %v7303 = vpop.f32.mrf.mxu0
      %v7304 = vadd.f32 %v7290, %v7303
      %v7305 = vpop.f32.mrf.mxu0
      %v7306 = vadd.f32 %v7292, %v7305
      %7307 = vdwg.mxu0
      %7308 = vmatpush.bf16.msra.mxu0 %v5273
      %7309 = vmatpush.bf16.msra.mxu0 %v5269
      %7310 = vmatpush.bf16.msra.mxu0 %v5265
      %7311 = vmatpush.bf16.msra.mxu0 %v5261
      %7312 = vmatpush.bf16.msra.mxu0 %v5257
      %7313 = vmatpush.bf16.msra.mxu0 %v5253
      %7314 = vmatpush.bf16.msra.mxu0 %v5249
      %7315 = vmatpush.bf16.msra.mxu0 %v5245
      %7316 = vmatmul.bf16.gmra.mxu0 %v1364
      %v7317 = vpop.f32.mrf.mxu0
      %v7318 = vadd.f32 %v7304, %v7317
      %v7319 = vpop.f32.mrf.mxu0
      %v7320 = vadd.f32 %v7306, %v7319
      %7321 = vdwg.mxu0
      %7322 = vmatpush.bf16.msra.mxu0 %v5305
      %7323 = vmatpush.bf16.msra.mxu0 %v5301
      %7324 = vmatpush.bf16.msra.mxu0 %v5297
      %7325 = vmatpush.bf16.msra.mxu0 %v5293
      %7326 = vmatpush.bf16.msra.mxu0 %v5289
      %7327 = vmatpush.bf16.msra.mxu0 %v5285
      %7328 = vmatpush.bf16.msra.mxu0 %v5281
      %7329 = vmatpush.bf16.msra.mxu0 %v5277
      %7330 = vmatmul.bf16.gmra.mxu0 %v1365
      %v7331 = vpop.f32.mrf.mxu0
      %v7332 = vadd.f32 %v7318, %v7331
      %v7333 = vpop.f32.mrf.mxu0
      %v7334 = vadd.f32 %v7320, %v7333
      %7335 = vdwg.mxu0
      %7336 = vmatpush.bf16.msra.mxu0 %v5337
      %7337 = vmatpush.bf16.msra.mxu0 %v5333
      %7338 = vmatpush.bf16.msra.mxu0 %v5329
      %7339 = vmatpush.bf16.msra.mxu0 %v5325
      %7340 = vmatpush.bf16.msra.mxu0 %v5321
      %7341 = vmatpush.bf16.msra.mxu0 %v5317
      %7342 = vmatpush.bf16.msra.mxu0 %v5313
      %7343 = vmatpush.bf16.msra.mxu0 %v5309
      %7344 = vmatmul.bf16.gmra.mxu0 %v1366
      %v7345 = vpop.f32.mrf.mxu0
      %v7346 = vadd.f32 %v7332, %v7345
      %v7347 = vpop.f32.mrf.mxu0
      %v7348 = vadd.f32 %v7334, %v7347
      %7349 = vdwg.mxu0
      %7350 = vmatpush.bf16.msra.mxu0 %v5369
      %7351 = vmatpush.bf16.msra.mxu0 %v5365
      %7352 = vmatpush.bf16.msra.mxu0 %v5361
      %7353 = vmatpush.bf16.msra.mxu0 %v5357
      %7354 = vmatpush.bf16.msra.mxu0 %v5353
      %7355 = vmatpush.bf16.msra.mxu0 %v5349
      %7356 = vmatpush.bf16.msra.mxu0 %v5345
      %7357 = vmatpush.bf16.msra.mxu0 %v5341
      %7358 = vmatmul.bf16.gmra.mxu0 %v1367
      %v7359 = vpop.f32.mrf.mxu0
      %v7360 = vadd.f32 %v7346, %v7359
      %v7361 = vpop.f32.mrf.mxu0
      %v7362 = vadd.f32 %v7348, %v7361
      %7363 = vdwg.mxu0
      %7364 = vmatpush.bf16.msra.mxu0 %v5401
      %7365 = vmatpush.bf16.msra.mxu0 %v5397
      %7366 = vmatpush.bf16.msra.mxu0 %v5393
      %7367 = vmatpush.bf16.msra.mxu0 %v5389
      %7368 = vmatpush.bf16.msra.mxu0 %v5385
      %7369 = vmatpush.bf16.msra.mxu0 %v5381
      %7370 = vmatpush.bf16.msra.mxu0 %v5377
      %7371 = vmatpush.bf16.msra.mxu0 %v5373
      %7372 = vmatmul.bf16.gmra.mxu0 %v1368
      %v7373 = vpop.f32.mrf.mxu0
      %v7374 = vadd.f32 %v7360, %v7373
      %v7375 = vpop.f32.mrf.mxu0
      %v7376 = vadd.f32 %v7362, %v7375
      %7377 = vdwg.mxu0
      %7378 = vmatpush.bf16.msra.mxu0 %v5433
      %7379 = vmatpush.bf16.msra.mxu0 %v5429
      %7380 = vmatpush.bf16.msra.mxu0 %v5425
      %7381 = vmatpush.bf16.msra.mxu0 %v5421
      %7382 = vmatpush.bf16.msra.mxu0 %v5417
      %7383 = vmatpush.bf16.msra.mxu0 %v5413
      %7384 = vmatpush.bf16.msra.mxu0 %v5409
      %7385 = vmatpush.bf16.msra.mxu0 %v5405
      %7386 = vmatmul.bf16.gmra.mxu0 %v1369
      %v7387 = vpop.f32.mrf.mxu0
      %v7388 = vadd.f32 %v7374, %v7387
      %v7389 = vpop.f32.mrf.mxu0
      %v7390 = vadd.f32 %v7376, %v7389
      %7391 = vdwg.mxu0
      %7392 = vmatpush.bf16.msra.mxu0 %v5465
      %7393 = vmatpush.bf16.msra.mxu0 %v5461
      %7394 = vmatpush.bf16.msra.mxu0 %v5457
      %7395 = vmatpush.bf16.msra.mxu0 %v5453
      %7396 = vmatpush.bf16.msra.mxu0 %v5449
      %7397 = vmatpush.bf16.msra.mxu0 %v5445
      %7398 = vmatpush.bf16.msra.mxu0 %v5441
      %7399 = vmatpush.bf16.msra.mxu0 %v5437
      %7400 = vmatmul.bf16.gmra.mxu0 %v1370
      %v7401 = vpop.f32.mrf.mxu0
      %v7402 = vadd.f32 %v7388, %v7401
      %v7403 = vpop.f32.mrf.mxu0
      %v7404 = vadd.f32 %v7390, %v7403
      %7405 = vdwg.mxu0
      %7406 = vmatpush.bf16.msra.mxu0 %v5497
      %7407 = vmatpush.bf16.msra.mxu0 %v5493
      %7408 = vmatpush.bf16.msra.mxu0 %v5489
      %7409 = vmatpush.bf16.msra.mxu0 %v5485
      %7410 = vmatpush.bf16.msra.mxu0 %v5481
      %7411 = vmatpush.bf16.msra.mxu0 %v5477
      %7412 = vmatpush.bf16.msra.mxu0 %v5473
      %7413 = vmatpush.bf16.msra.mxu0 %v5469
      %7414 = vmatmul.bf16.gmra.mxu0 %v1371
      %v7415 = vpop.f32.mrf.mxu0
      %v7416 = vadd.f32 %v7402, %v7415
      %v7417 = vpop.f32.mrf.mxu0
      %v7418 = vadd.f32 %v7404, %v7417
      %7419 = vdwg.mxu0
      %7420 = vmatpush.bf16.msra.mxu0 %v4506
      %7421 = vmatpush.bf16.msra.mxu0 %v4502
      %7422 = vmatpush.bf16.msra.mxu0 %v4498
      %7423 = vmatpush.bf16.msra.mxu0 %v4494
      %7424 = vmatpush.bf16.msra.mxu0 %v4490
      %7425 = vmatpush.bf16.msra.mxu0 %v4486
      %7426 = vmatpush.bf16.msra.mxu0 %v4482
      %7427 = vmatpush.bf16.msra.mxu0 %v4478
      %7428 = vmatmul.bf16.gmra.mxu0 %v1340
      %v7429 = vpop.f32.mrf.mxu0
      %v7430 = vadd.f32 0.0, %v7429
      %v7431 = vpop.f32.mrf.mxu0
      %v7432 = vadd.f32 0.0, %v7431
      %7433 = vdwg.mxu0
      %7434 = vmatpush.bf16.msra.mxu0 %v4538
      %7435 = vmatpush.bf16.msra.mxu0 %v4534
      %7436 = vmatpush.bf16.msra.mxu0 %v4530
      %7437 = vmatpush.bf16.msra.mxu0 %v4526
      %7438 = vmatpush.bf16.msra.mxu0 %v4522
      %7439 = vmatpush.bf16.msra.mxu0 %v4518
      %7440 = vmatpush.bf16.msra.mxu0 %v4514
      %7441 = vmatpush.bf16.msra.mxu0 %v4510
      %7442 = vmatmul.bf16.gmra.mxu0 %v1341
      %v7443 = vpop.f32.mrf.mxu0
      %v7444 = vadd.f32 %v7430, %v7443
      %v7445 = vpop.f32.mrf.mxu0
      %v7446 = vadd.f32 %v7432, %v7445
      %7447 = vdwg.mxu0
      %7448 = vmatpush.bf16.msra.mxu0 %v4570
      %7449 = vmatpush.bf16.msra.mxu0 %v4566
      %7450 = vmatpush.bf16.msra.mxu0 %v4562
      %7451 = vmatpush.bf16.msra.mxu0 %v4558
      %7452 = vmatpush.bf16.msra.mxu0 %v4554
      %7453 = vmatpush.bf16.msra.mxu0 %v4550
      %7454 = vmatpush.bf16.msra.mxu0 %v4546
      %7455 = vmatpush.bf16.msra.mxu0 %v4542
      %7456 = vmatmul.bf16.gmra.mxu0 %v1342
      %v7457 = vpop.f32.mrf.mxu0
      %v7458 = vadd.f32 %v7444, %v7457
      %v7459 = vpop.f32.mrf.mxu0
      %v7460 = vadd.f32 %v7446, %v7459
      %7461 = vdwg.mxu0
      %7462 = vmatpush.bf16.msra.mxu0 %v4602
      %7463 = vmatpush.bf16.msra.mxu0 %v4598
      %7464 = vmatpush.bf16.msra.mxu0 %v4594
      %7465 = vmatpush.bf16.msra.mxu0 %v4590
      %7466 = vmatpush.bf16.msra.mxu0 %v4586
      %7467 = vmatpush.bf16.msra.mxu0 %v4582
      %7468 = vmatpush.bf16.msra.mxu0 %v4578
      %7469 = vmatpush.bf16.msra.mxu0 %v4574
      %7470 = vmatmul.bf16.gmra.mxu0 %v1343
      %v7471 = vpop.f32.mrf.mxu0
      %v7472 = vadd.f32 %v7458, %v7471
      %v7473 = vpop.f32.mrf.mxu0
      %v7474 = vadd.f32 %v7460, %v7473
      %7475 = vdwg.mxu0
      %7476 = vmatpush.bf16.msra.mxu0 %v4634
      %7477 = vmatpush.bf16.msra.mxu0 %v4630
      %7478 = vmatpush.bf16.msra.mxu0 %v4626
      %7479 = vmatpush.bf16.msra.mxu0 %v4622
      %7480 = vmatpush.bf16.msra.mxu0 %v4618
      %7481 = vmatpush.bf16.msra.mxu0 %v4614
      %7482 = vmatpush.bf16.msra.mxu0 %v4610
      %7483 = vmatpush.bf16.msra.mxu0 %v4606
      %7484 = vmatmul.bf16.gmra.mxu0 %v1344
      %v7485 = vpop.f32.mrf.mxu0
      %v7486 = vadd.f32 %v7472, %v7485
      %v7487 = vpop.f32.mrf.mxu0
      %v7488 = vadd.f32 %v7474, %v7487
      %7489 = vdwg.mxu0
      %7490 = vmatpush.bf16.msra.mxu0 %v4666
      %7491 = vmatpush.bf16.msra.mxu0 %v4662
      %7492 = vmatpush.bf16.msra.mxu0 %v4658
      %7493 = vmatpush.bf16.msra.mxu0 %v4654
      %7494 = vmatpush.bf16.msra.mxu0 %v4650
      %7495 = vmatpush.bf16.msra.mxu0 %v4646
      %7496 = vmatpush.bf16.msra.mxu0 %v4642
      %7497 = vmatpush.bf16.msra.mxu0 %v4638
      %7498 = vmatmul.bf16.gmra.mxu0 %v1345
      %v7499 = vpop.f32.mrf.mxu0
      %v7500 = vadd.f32 %v7486, %v7499
      %v7501 = vpop.f32.mrf.mxu0
      %v7502 = vadd.f32 %v7488, %v7501
      %7503 = vdwg.mxu0
      %7504 = vmatpush.bf16.msra.mxu0 %v4698
      %7505 = vmatpush.bf16.msra.mxu0 %v4694
      %7506 = vmatpush.bf16.msra.mxu0 %v4690
      %7507 = vmatpush.bf16.msra.mxu0 %v4686
      %7508 = vmatpush.bf16.msra.mxu0 %v4682
      %7509 = vmatpush.bf16.msra.mxu0 %v4678
      %7510 = vmatpush.bf16.msra.mxu0 %v4674
      %7511 = vmatpush.bf16.msra.mxu0 %v4670
      %7512 = vmatmul.bf16.gmra.mxu0 %v1346
      %v7513 = vpop.f32.mrf.mxu0
      %v7514 = vadd.f32 %v7500, %v7513
      %v7515 = vpop.f32.mrf.mxu0
      %v7516 = vadd.f32 %v7502, %v7515
      %7517 = vdwg.mxu0
      %7518 = vmatpush.bf16.msra.mxu0 %v4730
      %7519 = vmatpush.bf16.msra.mxu0 %v4726
      %7520 = vmatpush.bf16.msra.mxu0 %v4722
      %7521 = vmatpush.bf16.msra.mxu0 %v4718
      %7522 = vmatpush.bf16.msra.mxu0 %v4714
      %7523 = vmatpush.bf16.msra.mxu0 %v4710
      %7524 = vmatpush.bf16.msra.mxu0 %v4706
      %7525 = vmatpush.bf16.msra.mxu0 %v4702
      %7526 = vmatmul.bf16.gmra.mxu0 %v1347
      %v7527 = vpop.f32.mrf.mxu0
      %v7528 = vadd.f32 %v7514, %v7527
      %v7529 = vpop.f32.mrf.mxu0
      %v7530 = vadd.f32 %v7516, %v7529
      %7531 = vdwg.mxu0
      %7532 = vmatpush.bf16.msra.mxu0 %v4762
      %7533 = vmatpush.bf16.msra.mxu0 %v4758
      %7534 = vmatpush.bf16.msra.mxu0 %v4754
      %7535 = vmatpush.bf16.msra.mxu0 %v4750
      %7536 = vmatpush.bf16.msra.mxu0 %v4746
      %7537 = vmatpush.bf16.msra.mxu0 %v4742
      %7538 = vmatpush.bf16.msra.mxu0 %v4738
      %7539 = vmatpush.bf16.msra.mxu0 %v4734
      %7540 = vmatmul.bf16.gmra.mxu0 %v1348
      %v7541 = vpop.f32.mrf.mxu0
      %v7542 = vadd.f32 %v7528, %v7541
      %v7543 = vpop.f32.mrf.mxu0
      %v7544 = vadd.f32 %v7530, %v7543
      %7545 = vdwg.mxu0
      %7546 = vmatpush.bf16.msra.mxu0 %v4794
      %7547 = vmatpush.bf16.msra.mxu0 %v4790
      %7548 = vmatpush.bf16.msra.mxu0 %v4786
      %7549 = vmatpush.bf16.msra.mxu0 %v4782
      %7550 = vmatpush.bf16.msra.mxu0 %v4778
      %7551 = vmatpush.bf16.msra.mxu0 %v4774
      %7552 = vmatpush.bf16.msra.mxu0 %v4770
      %7553 = vmatpush.bf16.msra.mxu0 %v4766
      %7554 = vmatmul.bf16.gmra.mxu0 %v1349
      %v7555 = vpop.f32.mrf.mxu0
      %v7556 = vadd.f32 %v7542, %v7555
      %v7557 = vpop.f32.mrf.mxu0
      %v7558 = vadd.f32 %v7544, %v7557
      %7559 = vdwg.mxu0
      %7560 = vmatpush.bf16.msra.mxu0 %v4826
      %7561 = vmatpush.bf16.msra.mxu0 %v4822
      %7562 = vmatpush.bf16.msra.mxu0 %v4818
      %7563 = vmatpush.bf16.msra.mxu0 %v4814
      %7564 = vmatpush.bf16.msra.mxu0 %v4810
      %7565 = vmatpush.bf16.msra.mxu0 %v4806
      %7566 = vmatpush.bf16.msra.mxu0 %v4802
      %7567 = vmatpush.bf16.msra.mxu0 %v4798
      %7568 = vmatmul.bf16.gmra.mxu0 %v1350
      %v7569 = vpop.f32.mrf.mxu0
      %v7570 = vadd.f32 %v7556, %v7569
      %v7571 = vpop.f32.mrf.mxu0
      %v7572 = vadd.f32 %v7558, %v7571
      %7573 = vdwg.mxu0
      %7574 = vmatpush.bf16.msra.mxu0 %v4858
      %7575 = vmatpush.bf16.msra.mxu0 %v4854
      %7576 = vmatpush.bf16.msra.mxu0 %v4850
      %7577 = vmatpush.bf16.msra.mxu0 %v4846
      %7578 = vmatpush.bf16.msra.mxu0 %v4842
      %7579 = vmatpush.bf16.msra.mxu0 %v4838
      %7580 = vmatpush.bf16.msra.mxu0 %v4834
      %7581 = vmatpush.bf16.msra.mxu0 %v4830
      %7582 = vmatmul.bf16.gmra.mxu0 %v1351
      %v7583 = vpop.f32.mrf.mxu0
      %v7584 = vadd.f32 %v7570, %v7583
      %v7585 = vpop.f32.mrf.mxu0
      %v7586 = vadd.f32 %v7572, %v7585
      %7587 = vdwg.mxu0
      %7588 = vmatpush.bf16.msra.mxu0 %v4890
      %7589 = vmatpush.bf16.msra.mxu0 %v4886
      %7590 = vmatpush.bf16.msra.mxu0 %v4882
      %7591 = vmatpush.bf16.msra.mxu0 %v4878
      %7592 = vmatpush.bf16.msra.mxu0 %v4874
      %7593 = vmatpush.bf16.msra.mxu0 %v4870
      %7594 = vmatpush.bf16.msra.mxu0 %v4866
      %7595 = vmatpush.bf16.msra.mxu0 %v4862
      %7596 = vmatmul.bf16.gmra.mxu0 %v1352
      %v7597 = vpop.f32.mrf.mxu0
      %v7598 = vadd.f32 %v7584, %v7597
      %v7599 = vpop.f32.mrf.mxu0
      %v7600 = vadd.f32 %v7586, %v7599
      %7601 = vdwg.mxu0
      %7602 = vmatpush.bf16.msra.mxu0 %v4922
      %7603 = vmatpush.bf16.msra.mxu0 %v4918
      %7604 = vmatpush.bf16.msra.mxu0 %v4914
      %7605 = vmatpush.bf16.msra.mxu0 %v4910
      %7606 = vmatpush.bf16.msra.mxu0 %v4906
      %7607 = vmatpush.bf16.msra.mxu0 %v4902
      %7608 = vmatpush.bf16.msra.mxu0 %v4898
      %7609 = vmatpush.bf16.msra.mxu0 %v4894
      %7610 = vmatmul.bf16.gmra.mxu0 %v1353
      %v7611 = vpop.f32.mrf.mxu0
      %v7612 = vadd.f32 %v7598, %v7611
      %v7613 = vpop.f32.mrf.mxu0
      %v7614 = vadd.f32 %v7600, %v7613
      %7615 = vdwg.mxu0
      %7616 = vmatpush.bf16.msra.mxu0 %v4954
      %7617 = vmatpush.bf16.msra.mxu0 %v4950
      %7618 = vmatpush.bf16.msra.mxu0 %v4946
      %7619 = vmatpush.bf16.msra.mxu0 %v4942
      %7620 = vmatpush.bf16.msra.mxu0 %v4938
      %7621 = vmatpush.bf16.msra.mxu0 %v4934
      %7622 = vmatpush.bf16.msra.mxu0 %v4930
      %7623 = vmatpush.bf16.msra.mxu0 %v4926
      %7624 = vmatmul.bf16.gmra.mxu0 %v1354
      %v7625 = vpop.f32.mrf.mxu0
      %v7626 = vadd.f32 %v7612, %v7625
      %v7627 = vpop.f32.mrf.mxu0
      %v7628 = vadd.f32 %v7614, %v7627
      %7629 = vdwg.mxu0
      %7630 = vmatpush.bf16.msra.mxu0 %v4986
      %7631 = vmatpush.bf16.msra.mxu0 %v4982
      %7632 = vmatpush.bf16.msra.mxu0 %v4978
      %7633 = vmatpush.bf16.msra.mxu0 %v4974
      %7634 = vmatpush.bf16.msra.mxu0 %v4970
      %7635 = vmatpush.bf16.msra.mxu0 %v4966
      %7636 = vmatpush.bf16.msra.mxu0 %v4962
      %7637 = vmatpush.bf16.msra.mxu0 %v4958
      %7638 = vmatmul.bf16.gmra.mxu0 %v1355
      %v7639 = vpop.f32.mrf.mxu0
      %v7640 = vadd.f32 %v7626, %v7639
      %v7641 = vpop.f32.mrf.mxu0
      %v7642 = vadd.f32 %v7628, %v7641
      %7643 = vdwg.mxu0
      %7644 = vmatpush.bf16.msra.mxu0 %v5018
      %7645 = vmatpush.bf16.msra.mxu0 %v5014
      %7646 = vmatpush.bf16.msra.mxu0 %v5010
      %7647 = vmatpush.bf16.msra.mxu0 %v5006
      %7648 = vmatpush.bf16.msra.mxu0 %v5002
      %7649 = vmatpush.bf16.msra.mxu0 %v4998
      %7650 = vmatpush.bf16.msra.mxu0 %v4994
      %7651 = vmatpush.bf16.msra.mxu0 %v4990
      %7652 = vmatmul.bf16.gmra.mxu0 %v1356
      %v7653 = vpop.f32.mrf.mxu0
      %v7654 = vadd.f32 %v7640, %v7653
      %v7655 = vpop.f32.mrf.mxu0
      %v7656 = vadd.f32 %v7642, %v7655
      %7657 = vdwg.mxu0
      %7658 = vmatpush.bf16.msra.mxu0 %v5050
      %7659 = vmatpush.bf16.msra.mxu0 %v5046
      %7660 = vmatpush.bf16.msra.mxu0 %v5042
      %7661 = vmatpush.bf16.msra.mxu0 %v5038
      %7662 = vmatpush.bf16.msra.mxu0 %v5034
      %7663 = vmatpush.bf16.msra.mxu0 %v5030
      %7664 = vmatpush.bf16.msra.mxu0 %v5026
      %7665 = vmatpush.bf16.msra.mxu0 %v5022
      %7666 = vmatmul.bf16.gmra.mxu0 %v1357
      %v7667 = vpop.f32.mrf.mxu0
      %v7668 = vadd.f32 %v7654, %v7667
      %v7669 = vpop.f32.mrf.mxu0
      %v7670 = vadd.f32 %v7656, %v7669
      %7671 = vdwg.mxu0
      %7672 = vmatpush.bf16.msra.mxu0 %v5082
      %7673 = vmatpush.bf16.msra.mxu0 %v5078
      %7674 = vmatpush.bf16.msra.mxu0 %v5074
      %7675 = vmatpush.bf16.msra.mxu0 %v5070
      %7676 = vmatpush.bf16.msra.mxu0 %v5066
      %7677 = vmatpush.bf16.msra.mxu0 %v5062
      %7678 = vmatpush.bf16.msra.mxu0 %v5058
      %7679 = vmatpush.bf16.msra.mxu0 %v5054
      %7680 = vmatmul.bf16.gmra.mxu0 %v1358
      %v7681 = vpop.f32.mrf.mxu0
      %v7682 = vadd.f32 %v7668, %v7681
      %v7683 = vpop.f32.mrf.mxu0
      %v7684 = vadd.f32 %v7670, %v7683
      %7685 = vdwg.mxu0
      %7686 = vmatpush.bf16.msra.mxu0 %v5114
      %7687 = vmatpush.bf16.msra.mxu0 %v5110
      %7688 = vmatpush.bf16.msra.mxu0 %v5106
      %7689 = vmatpush.bf16.msra.mxu0 %v5102
      %7690 = vmatpush.bf16.msra.mxu0 %v5098
      %7691 = vmatpush.bf16.msra.mxu0 %v5094
      %7692 = vmatpush.bf16.msra.mxu0 %v5090
      %7693 = vmatpush.bf16.msra.mxu0 %v5086
      %7694 = vmatmul.bf16.gmra.mxu0 %v1359
      %v7695 = vpop.f32.mrf.mxu0
      %v7696 = vadd.f32 %v7682, %v7695
      %v7697 = vpop.f32.mrf.mxu0
      %v7698 = vadd.f32 %v7684, %v7697
      %7699 = vdwg.mxu0
      %7700 = vmatpush.bf16.msra.mxu0 %v5146
      %7701 = vmatpush.bf16.msra.mxu0 %v5142
      %7702 = vmatpush.bf16.msra.mxu0 %v5138
      %7703 = vmatpush.bf16.msra.mxu0 %v5134
      %7704 = vmatpush.bf16.msra.mxu0 %v5130
      %7705 = vmatpush.bf16.msra.mxu0 %v5126
      %7706 = vmatpush.bf16.msra.mxu0 %v5122
      %7707 = vmatpush.bf16.msra.mxu0 %v5118
      %7708 = vmatmul.bf16.gmra.mxu0 %v1360
      %v7709 = vpop.f32.mrf.mxu0
      %v7710 = vadd.f32 %v7696, %v7709
      %v7711 = vpop.f32.mrf.mxu0
      %v7712 = vadd.f32 %v7698, %v7711
      %7713 = vdwg.mxu0
      %7714 = vmatpush.bf16.msra.mxu0 %v5178
      %7715 = vmatpush.bf16.msra.mxu0 %v5174
      %7716 = vmatpush.bf16.msra.mxu0 %v5170
      %7717 = vmatpush.bf16.msra.mxu0 %v5166
      %7718 = vmatpush.bf16.msra.mxu0 %v5162
      %7719 = vmatpush.bf16.msra.mxu0 %v5158
      %7720 = vmatpush.bf16.msra.mxu0 %v5154
      %7721 = vmatpush.bf16.msra.mxu0 %v5150
      %7722 = vmatmul.bf16.gmra.mxu0 %v1361
      %v7723 = vpop.f32.mrf.mxu0
      %v7724 = vadd.f32 %v7710, %v7723
      %v7725 = vpop.f32.mrf.mxu0
      %v7726 = vadd.f32 %v7712, %v7725
      %7727 = vdwg.mxu0
      %7728 = vmatpush.bf16.msra.mxu0 %v5210
      %7729 = vmatpush.bf16.msra.mxu0 %v5206
      %7730 = vmatpush.bf16.msra.mxu0 %v5202
      %7731 = vmatpush.bf16.msra.mxu0 %v5198
      %7732 = vmatpush.bf16.msra.mxu0 %v5194
      %7733 = vmatpush.bf16.msra.mxu0 %v5190
      %7734 = vmatpush.bf16.msra.mxu0 %v5186
      %7735 = vmatpush.bf16.msra.mxu0 %v5182
      %7736 = vmatmul.bf16.gmra.mxu0 %v1362
      %v7737 = vpop.f32.mrf.mxu0
      %v7738 = vadd.f32 %v7724, %v7737
      %v7739 = vpop.f32.mrf.mxu0
      %v7740 = vadd.f32 %v7726, %v7739
      %7741 = vdwg.mxu0
      %7742 = vmatpush.bf16.msra.mxu0 %v5242
      %7743 = vmatpush.bf16.msra.mxu0 %v5238
      %7744 = vmatpush.bf16.msra.mxu0 %v5234
      %7745 = vmatpush.bf16.msra.mxu0 %v5230
      %7746 = vmatpush.bf16.msra.mxu0 %v5226
      %7747 = vmatpush.bf16.msra.mxu0 %v5222
      %7748 = vmatpush.bf16.msra.mxu0 %v5218
      %7749 = vmatpush.bf16.msra.mxu0 %v5214
      %7750 = vmatmul.bf16.gmra.mxu0 %v1363
      %v7751 = vpop.f32.mrf.mxu0
      %v7752 = vadd.f32 %v7738, %v7751
      %v7753 = vpop.f32.mrf.mxu0
      %v7754 = vadd.f32 %v7740, %v7753
      %7755 = vdwg.mxu0
      %7756 = vmatpush.bf16.msra.mxu0 %v5274
      %7757 = vmatpush.bf16.msra.mxu0 %v5270
      %7758 = vmatpush.bf16.msra.mxu0 %v5266
      %7759 = vmatpush.bf16.msra.mxu0 %v5262
      %7760 = vmatpush.bf16.msra.mxu0 %v5258
      %7761 = vmatpush.bf16.msra.mxu0 %v5254
      %7762 = vmatpush.bf16.msra.mxu0 %v5250
      %7763 = vmatpush.bf16.msra.mxu0 %v5246
      %7764 = vmatmul.bf16.gmra.mxu0 %v1364
      %v7765 = vpop.f32.mrf.mxu0
      %v7766 = vadd.f32 %v7752, %v7765
      %v7767 = vpop.f32.mrf.mxu0
      %v7768 = vadd.f32 %v7754, %v7767
      %7769 = vdwg.mxu0
      %7770 = vmatpush.bf16.msra.mxu0 %v5306
      %7771 = vmatpush.bf16.msra.mxu0 %v5302
      %7772 = vmatpush.bf16.msra.mxu0 %v5298
      %7773 = vmatpush.bf16.msra.mxu0 %v5294
      %7774 = vmatpush.bf16.msra.mxu0 %v5290
      %7775 = vmatpush.bf16.msra.mxu0 %v5286
      %7776 = vmatpush.bf16.msra.mxu0 %v5282
      %7777 = vmatpush.bf16.msra.mxu0 %v5278
      %7778 = vmatmul.bf16.gmra.mxu0 %v1365
      %v7779 = vpop.f32.mrf.mxu0
      %v7780 = vadd.f32 %v7766, %v7779
      %v7781 = vpop.f32.mrf.mxu0
      %v7782 = vadd.f32 %v7768, %v7781
      %7783 = vdwg.mxu0
      %7784 = vmatpush.bf16.msra.mxu0 %v5338
      %7785 = vmatpush.bf16.msra.mxu0 %v5334
      %7786 = vmatpush.bf16.msra.mxu0 %v5330
      %7787 = vmatpush.bf16.msra.mxu0 %v5326
      %7788 = vmatpush.bf16.msra.mxu0 %v5322
      %7789 = vmatpush.bf16.msra.mxu0 %v5318
      %7790 = vmatpush.bf16.msra.mxu0 %v5314
      %7791 = vmatpush.bf16.msra.mxu0 %v5310
      %7792 = vmatmul.bf16.gmra.mxu0 %v1366
      %v7793 = vpop.f32.mrf.mxu0
      %v7794 = vadd.f32 %v7780, %v7793
      %v7795 = vpop.f32.mrf.mxu0
      %v7796 = vadd.f32 %v7782, %v7795
      %7797 = vdwg.mxu0
      %7798 = vmatpush.bf16.msra.mxu0 %v5370
      %7799 = vmatpush.bf16.msra.mxu0 %v5366
      %7800 = vmatpush.bf16.msra.mxu0 %v5362
      %7801 = vmatpush.bf16.msra.mxu0 %v5358
      %7802 = vmatpush.bf16.msra.mxu0 %v5354
      %7803 = vmatpush.bf16.msra.mxu0 %v5350
      %7804 = vmatpush.bf16.msra.mxu0 %v5346
      %7805 = vmatpush.bf16.msra.mxu0 %v5342
      %7806 = vmatmul.bf16.gmra.mxu0 %v1367
      %v7807 = vpop.f32.mrf.mxu0
      %v7808 = vadd.f32 %v7794, %v7807
      %v7809 = vpop.f32.mrf.mxu0
      %v7810 = vadd.f32 %v7796, %v7809
      %7811 = vdwg.mxu0
      %7812 = vmatpush.bf16.msra.mxu0 %v5402
      %7813 = vmatpush.bf16.msra.mxu0 %v5398
      %7814 = vmatpush.bf16.msra.mxu0 %v5394
      %7815 = vmatpush.bf16.msra.mxu0 %v5390
      %7816 = vmatpush.bf16.msra.mxu0 %v5386
      %7817 = vmatpush.bf16.msra.mxu0 %v5382
      %7818 = vmatpush.bf16.msra.mxu0 %v5378
      %7819 = vmatpush.bf16.msra.mxu0 %v5374
      %7820 = vmatmul.bf16.gmra.mxu0 %v1368
      %v7821 = vpop.f32.mrf.mxu0
      %v7822 = vadd.f32 %v7808, %v7821
      %v7823 = vpop.f32.mrf.mxu0
      %v7824 = vadd.f32 %v7810, %v7823
      %7825 = vdwg.mxu0
      %7826 = vmatpush.bf16.msra.mxu0 %v5434
      %7827 = vmatpush.bf16.msra.mxu0 %v5430
      %7828 = vmatpush.bf16.msra.mxu0 %v5426
      %7829 = vmatpush.bf16.msra.mxu0 %v5422
      %7830 = vmatpush.bf16.msra.mxu0 %v5418
      %7831 = vmatpush.bf16.msra.mxu0 %v5414
      %7832 = vmatpush.bf16.msra.mxu0 %v5410
      %7833 = vmatpush.bf16.msra.mxu0 %v5406
      %7834 = vmatmul.bf16.gmra.mxu0 %v1369
      %v7835 = vpop.f32.mrf.mxu0
      %v7836 = vadd.f32 %v7822, %v7835
      %v7837 = vpop.f32.mrf.mxu0
      %v7838 = vadd.f32 %v7824, %v7837
      %7839 = vdwg.mxu0
      %7840 = vmatpush.bf16.msra.mxu0 %v5466
      %7841 = vmatpush.bf16.msra.mxu0 %v5462
      %7842 = vmatpush.bf16.msra.mxu0 %v5458
      %7843 = vmatpush.bf16.msra.mxu0 %v5454
      %7844 = vmatpush.bf16.msra.mxu0 %v5450
      %7845 = vmatpush.bf16.msra.mxu0 %v5446
      %7846 = vmatpush.bf16.msra.mxu0 %v5442
      %7847 = vmatpush.bf16.msra.mxu0 %v5438
      %7848 = vmatmul.bf16.gmra.mxu0 %v1370
      %v7849 = vpop.f32.mrf.mxu0
      %v7850 = vadd.f32 %v7836, %v7849
      %v7851 = vpop.f32.mrf.mxu0
      %v7852 = vadd.f32 %v7838, %v7851
      %7853 = vdwg.mxu0
      %7854 = vmatpush.bf16.msra.mxu0 %v5498
      %7855 = vmatpush.bf16.msra.mxu0 %v5494
      %7856 = vmatpush.bf16.msra.mxu0 %v5490
      %7857 = vmatpush.bf16.msra.mxu0 %v5486
      %7858 = vmatpush.bf16.msra.mxu0 %v5482
      %7859 = vmatpush.bf16.msra.mxu0 %v5478
      %7860 = vmatpush.bf16.msra.mxu0 %v5474
      %7861 = vmatpush.bf16.msra.mxu0 %v5470
      %7862 = vmatmul.bf16.gmra.mxu0 %v1371
      %v7863 = vpop.f32.mrf.mxu0
      %v7864 = vadd.f32 %v7850, %v7863
      %v7865 = vpop.f32.mrf.mxu0
      %v7866 = vadd.f32 %v7852, %v7865
      %7867 = vdwg.mxu0
      %7868 = vmatpush.bf16.msra.mxu0 %v4507
      %7869 = vmatpush.bf16.msra.mxu0 %v4503
      %7870 = vmatpush.bf16.msra.mxu0 %v4499
      %7871 = vmatpush.bf16.msra.mxu0 %v4495
      %7872 = vmatpush.bf16.msra.mxu0 %v4491
      %7873 = vmatpush.bf16.msra.mxu0 %v4487
      %7874 = vmatpush.bf16.msra.mxu0 %v4483
      %7875 = vmatpush.bf16.msra.mxu0 %v4479
      %7876 = vmatmul.bf16.gmra.mxu0 %v1340
      %v7877 = vpop.f32.mrf.mxu0
      %v7878 = vadd.f32 0.0, %v7877
      %v7879 = vpop.f32.mrf.mxu0
      %v7880 = vadd.f32 0.0, %v7879
      %7881 = vdwg.mxu0
      %7882 = vmatpush.bf16.msra.mxu0 %v4539
      %7883 = vmatpush.bf16.msra.mxu0 %v4535
      %7884 = vmatpush.bf16.msra.mxu0 %v4531
      %7885 = vmatpush.bf16.msra.mxu0 %v4527
      %7886 = vmatpush.bf16.msra.mxu0 %v4523
      %7887 = vmatpush.bf16.msra.mxu0 %v4519
      %7888 = vmatpush.bf16.msra.mxu0 %v4515
      %7889 = vmatpush.bf16.msra.mxu0 %v4511
      %7890 = vmatmul.bf16.gmra.mxu0 %v1341
      %v7891 = vpop.f32.mrf.mxu0
      %v7892 = vadd.f32 %v7878, %v7891
      %v7893 = vpop.f32.mrf.mxu0
      %v7894 = vadd.f32 %v7880, %v7893
      %7895 = vdwg.mxu0
      %7896 = vmatpush.bf16.msra.mxu0 %v4571
      %7897 = vmatpush.bf16.msra.mxu0 %v4567
      %7898 = vmatpush.bf16.msra.mxu0 %v4563
      %7899 = vmatpush.bf16.msra.mxu0 %v4559
      %7900 = vmatpush.bf16.msra.mxu0 %v4555
      %7901 = vmatpush.bf16.msra.mxu0 %v4551
      %7902 = vmatpush.bf16.msra.mxu0 %v4547
      %7903 = vmatpush.bf16.msra.mxu0 %v4543
      %7904 = vmatmul.bf16.gmra.mxu0 %v1342
      %v7905 = vpop.f32.mrf.mxu0
      %v7906 = vadd.f32 %v7892, %v7905
      %v7907 = vpop.f32.mrf.mxu0
      %v7908 = vadd.f32 %v7894, %v7907
      %7909 = vdwg.mxu0
      %7910 = vmatpush.bf16.msra.mxu0 %v4603
      %7911 = vmatpush.bf16.msra.mxu0 %v4599
      %7912 = vmatpush.bf16.msra.mxu0 %v4595
      %7913 = vmatpush.bf16.msra.mxu0 %v4591
      %7914 = vmatpush.bf16.msra.mxu0 %v4587
      %7915 = vmatpush.bf16.msra.mxu0 %v4583
      %7916 = vmatpush.bf16.msra.mxu0 %v4579
      %7917 = vmatpush.bf16.msra.mxu0 %v4575
      %7918 = vmatmul.bf16.gmra.mxu0 %v1343
      %v7919 = vpop.f32.mrf.mxu0
      %v7920 = vadd.f32 %v7906, %v7919
      %v7921 = vpop.f32.mrf.mxu0
      %v7922 = vadd.f32 %v7908, %v7921
      %7923 = vdwg.mxu0
      %7924 = vmatpush.bf16.msra.mxu0 %v4635
      %7925 = vmatpush.bf16.msra.mxu0 %v4631
      %7926 = vmatpush.bf16.msra.mxu0 %v4627
      %7927 = vmatpush.bf16.msra.mxu0 %v4623
      %7928 = vmatpush.bf16.msra.mxu0 %v4619
      %7929 = vmatpush.bf16.msra.mxu0 %v4615
      %7930 = vmatpush.bf16.msra.mxu0 %v4611
      %7931 = vmatpush.bf16.msra.mxu0 %v4607
      %7932 = vmatmul.bf16.gmra.mxu0 %v1344
      %v7933 = vpop.f32.mrf.mxu0
      %v7934 = vadd.f32 %v7920, %v7933
      %v7935 = vpop.f32.mrf.mxu0
      %v7936 = vadd.f32 %v7922, %v7935
      %7937 = vdwg.mxu0
      %7938 = vmatpush.bf16.msra.mxu0 %v4667
      %7939 = vmatpush.bf16.msra.mxu0 %v4663
      %7940 = vmatpush.bf16.msra.mxu0 %v4659
      %7941 = vmatpush.bf16.msra.mxu0 %v4655
      %7942 = vmatpush.bf16.msra.mxu0 %v4651
      %7943 = vmatpush.bf16.msra.mxu0 %v4647
      %7944 = vmatpush.bf16.msra.mxu0 %v4643
      %7945 = vmatpush.bf16.msra.mxu0 %v4639
      %7946 = vmatmul.bf16.gmra.mxu0 %v1345
      %v7947 = vpop.f32.mrf.mxu0
      %v7948 = vadd.f32 %v7934, %v7947
      %v7949 = vpop.f32.mrf.mxu0
      %v7950 = vadd.f32 %v7936, %v7949
      %7951 = vdwg.mxu0
      %7952 = vmatpush.bf16.msra.mxu0 %v4699
      %7953 = vmatpush.bf16.msra.mxu0 %v4695
      %7954 = vmatpush.bf16.msra.mxu0 %v4691
      %7955 = vmatpush.bf16.msra.mxu0 %v4687
      %7956 = vmatpush.bf16.msra.mxu0 %v4683
      %7957 = vmatpush.bf16.msra.mxu0 %v4679
      %7958 = vmatpush.bf16.msra.mxu0 %v4675
      %7959 = vmatpush.bf16.msra.mxu0 %v4671
      %7960 = vmatmul.bf16.gmra.mxu0 %v1346
      %v7961 = vpop.f32.mrf.mxu0
      %v7962 = vadd.f32 %v7948, %v7961
      %v7963 = vpop.f32.mrf.mxu0
      %v7964 = vadd.f32 %v7950, %v7963
      %7965 = vdwg.mxu0
      %7966 = vmatpush.bf16.msra.mxu0 %v4731
      %7967 = vmatpush.bf16.msra.mxu0 %v4727
      %7968 = vmatpush.bf16.msra.mxu0 %v4723
      %7969 = vmatpush.bf16.msra.mxu0 %v4719
      %7970 = vmatpush.bf16.msra.mxu0 %v4715
      %7971 = vmatpush.bf16.msra.mxu0 %v4711
      %7972 = vmatpush.bf16.msra.mxu0 %v4707
      %7973 = vmatpush.bf16.msra.mxu0 %v4703
      %7974 = vmatmul.bf16.gmra.mxu0 %v1347
      %v7975 = vpop.f32.mrf.mxu0
      %v7976 = vadd.f32 %v7962, %v7975
      %v7977 = vpop.f32.mrf.mxu0
      %v7978 = vadd.f32 %v7964, %v7977
      %7979 = vdwg.mxu0
      %7980 = vmatpush.bf16.msra.mxu0 %v4763
      %7981 = vmatpush.bf16.msra.mxu0 %v4759
      %7982 = vmatpush.bf16.msra.mxu0 %v4755
      %7983 = vmatpush.bf16.msra.mxu0 %v4751
      %7984 = vmatpush.bf16.msra.mxu0 %v4747
      %7985 = vmatpush.bf16.msra.mxu0 %v4743
      %7986 = vmatpush.bf16.msra.mxu0 %v4739
      %7987 = vmatpush.bf16.msra.mxu0 %v4735
      %7988 = vmatmul.bf16.gmra.mxu0 %v1348
      %v7989 = vpop.f32.mrf.mxu0
      %v7990 = vadd.f32 %v7976, %v7989
      %v7991 = vpop.f32.mrf.mxu0
      %v7992 = vadd.f32 %v7978, %v7991
      %7993 = vdwg.mxu0
      %7994 = vmatpush.bf16.msra.mxu0 %v4795
      %7995 = vmatpush.bf16.msra.mxu0 %v4791
      %7996 = vmatpush.bf16.msra.mxu0 %v4787
      %7997 = vmatpush.bf16.msra.mxu0 %v4783
      %7998 = vmatpush.bf16.msra.mxu0 %v4779
      %7999 = vmatpush.bf16.msra.mxu0 %v4775
      %8000 = vmatpush.bf16.msra.mxu0 %v4771
      %8001 = vmatpush.bf16.msra.mxu0 %v4767
      %8002 = vmatmul.bf16.gmra.mxu0 %v1349
      %v8003 = vpop.f32.mrf.mxu0
      %v8004 = vadd.f32 %v7990, %v8003
      %v8005 = vpop.f32.mrf.mxu0
      %v8006 = vadd.f32 %v7992, %v8005
      %8007 = vdwg.mxu0
      %8008 = vmatpush.bf16.msra.mxu0 %v4827
      %8009 = vmatpush.bf16.msra.mxu0 %v4823
      %8010 = vmatpush.bf16.msra.mxu0 %v4819
      %8011 = vmatpush.bf16.msra.mxu0 %v4815
      %8012 = vmatpush.bf16.msra.mxu0 %v4811
      %8013 = vmatpush.bf16.msra.mxu0 %v4807
      %8014 = vmatpush.bf16.msra.mxu0 %v4803
      %8015 = vmatpush.bf16.msra.mxu0 %v4799
      %8016 = vmatmul.bf16.gmra.mxu0 %v1350
      %v8017 = vpop.f32.mrf.mxu0
      %v8018 = vadd.f32 %v8004, %v8017
      %v8019 = vpop.f32.mrf.mxu0
      %v8020 = vadd.f32 %v8006, %v8019
      %8021 = vdwg.mxu0
      %8022 = vmatpush.bf16.msra.mxu0 %v4859
      %8023 = vmatpush.bf16.msra.mxu0 %v4855
      %8024 = vmatpush.bf16.msra.mxu0 %v4851
      %8025 = vmatpush.bf16.msra.mxu0 %v4847
      %8026 = vmatpush.bf16.msra.mxu0 %v4843
      %8027 = vmatpush.bf16.msra.mxu0 %v4839
      %8028 = vmatpush.bf16.msra.mxu0 %v4835
      %8029 = vmatpush.bf16.msra.mxu0 %v4831
      %8030 = vmatmul.bf16.gmra.mxu0 %v1351
      %v8031 = vpop.f32.mrf.mxu0
      %v8032 = vadd.f32 %v8018, %v8031
      %v8033 = vpop.f32.mrf.mxu0
      %v8034 = vadd.f32 %v8020, %v8033
      %8035 = vdwg.mxu0
      %8036 = vmatpush.bf16.msra.mxu0 %v4891
      %8037 = vmatpush.bf16.msra.mxu0 %v4887
      %8038 = vmatpush.bf16.msra.mxu0 %v4883
      %8039 = vmatpush.bf16.msra.mxu0 %v4879
      %8040 = vmatpush.bf16.msra.mxu0 %v4875
      %8041 = vmatpush.bf16.msra.mxu0 %v4871
      %8042 = vmatpush.bf16.msra.mxu0 %v4867
      %8043 = vmatpush.bf16.msra.mxu0 %v4863
      %8044 = vmatmul.bf16.gmra.mxu0 %v1352
      %v8045 = vpop.f32.mrf.mxu0
      %v8046 = vadd.f32 %v8032, %v8045
      %v8047 = vpop.f32.mrf.mxu0
      %v8048 = vadd.f32 %v8034, %v8047
      %8049 = vdwg.mxu0
      %8050 = vmatpush.bf16.msra.mxu0 %v4923
      %8051 = vmatpush.bf16.msra.mxu0 %v4919
      %8052 = vmatpush.bf16.msra.mxu0 %v4915
      %8053 = vmatpush.bf16.msra.mxu0 %v4911
      %8054 = vmatpush.bf16.msra.mxu0 %v4907
      %8055 = vmatpush.bf16.msra.mxu0 %v4903
      %8056 = vmatpush.bf16.msra.mxu0 %v4899
      %8057 = vmatpush.bf16.msra.mxu0 %v4895
      %8058 = vmatmul.bf16.gmra.mxu0 %v1353
      %v8059 = vpop.f32.mrf.mxu0
      %v8060 = vadd.f32 %v8046, %v8059
      %v8061 = vpop.f32.mrf.mxu0
      %v8062 = vadd.f32 %v8048, %v8061
      %8063 = vdwg.mxu0
      %8064 = vmatpush.bf16.msra.mxu0 %v4955
      %8065 = vmatpush.bf16.msra.mxu0 %v4951
      %8066 = vmatpush.bf16.msra.mxu0 %v4947
      %8067 = vmatpush.bf16.msra.mxu0 %v4943
      %8068 = vmatpush.bf16.msra.mxu0 %v4939
      %8069 = vmatpush.bf16.msra.mxu0 %v4935
      %8070 = vmatpush.bf16.msra.mxu0 %v4931
      %8071 = vmatpush.bf16.msra.mxu0 %v4927
      %8072 = vmatmul.bf16.gmra.mxu0 %v1354
      %v8073 = vpop.f32.mrf.mxu0
      %v8074 = vadd.f32 %v8060, %v8073
      %v8075 = vpop.f32.mrf.mxu0
      %v8076 = vadd.f32 %v8062, %v8075
      %8077 = vdwg.mxu0
      %8078 = vmatpush.bf16.msra.mxu0 %v4987
      %8079 = vmatpush.bf16.msra.mxu0 %v4983
      %8080 = vmatpush.bf16.msra.mxu0 %v4979
      %8081 = vmatpush.bf16.msra.mxu0 %v4975
      %8082 = vmatpush.bf16.msra.mxu0 %v4971
      %8083 = vmatpush.bf16.msra.mxu0 %v4967
      %8084 = vmatpush.bf16.msra.mxu0 %v4963
      %8085 = vmatpush.bf16.msra.mxu0 %v4959
      %8086 = vmatmul.bf16.gmra.mxu0 %v1355
      %v8087 = vpop.f32.mrf.mxu0
      %v8088 = vadd.f32 %v8074, %v8087
      %v8089 = vpop.f32.mrf.mxu0
      %v8090 = vadd.f32 %v8076, %v8089
      %8091 = vdwg.mxu0
      %8092 = vmatpush.bf16.msra.mxu0 %v5019
      %8093 = vmatpush.bf16.msra.mxu0 %v5015
      %8094 = vmatpush.bf16.msra.mxu0 %v5011
      %8095 = vmatpush.bf16.msra.mxu0 %v5007
      %8096 = vmatpush.bf16.msra.mxu0 %v5003
      %8097 = vmatpush.bf16.msra.mxu0 %v4999
      %8098 = vmatpush.bf16.msra.mxu0 %v4995
      %8099 = vmatpush.bf16.msra.mxu0 %v4991
      %8100 = vmatmul.bf16.gmra.mxu0 %v1356
      %v8101 = vpop.f32.mrf.mxu0
      %v8102 = vadd.f32 %v8088, %v8101
      %v8103 = vpop.f32.mrf.mxu0
      %v8104 = vadd.f32 %v8090, %v8103
      %8105 = vdwg.mxu0
      %8106 = vmatpush.bf16.msra.mxu0 %v5051
      %8107 = vmatpush.bf16.msra.mxu0 %v5047
      %8108 = vmatpush.bf16.msra.mxu0 %v5043
      %8109 = vmatpush.bf16.msra.mxu0 %v5039
      %8110 = vmatpush.bf16.msra.mxu0 %v5035
      %8111 = vmatpush.bf16.msra.mxu0 %v5031
      %8112 = vmatpush.bf16.msra.mxu0 %v5027
      %8113 = vmatpush.bf16.msra.mxu0 %v5023
      %8114 = vmatmul.bf16.gmra.mxu0 %v1357
      %v8115 = vpop.f32.mrf.mxu0
      %v8116 = vadd.f32 %v8102, %v8115
      %v8117 = vpop.f32.mrf.mxu0
      %v8118 = vadd.f32 %v8104, %v8117
      %8119 = vdwg.mxu0
      %8120 = vmatpush.bf16.msra.mxu0 %v5083
      %8121 = vmatpush.bf16.msra.mxu0 %v5079
      %8122 = vmatpush.bf16.msra.mxu0 %v5075
      %8123 = vmatpush.bf16.msra.mxu0 %v5071
      %8124 = vmatpush.bf16.msra.mxu0 %v5067
      %8125 = vmatpush.bf16.msra.mxu0 %v5063
      %8126 = vmatpush.bf16.msra.mxu0 %v5059
      %8127 = vmatpush.bf16.msra.mxu0 %v5055
      %8128 = vmatmul.bf16.gmra.mxu0 %v1358
      %v8129 = vpop.f32.mrf.mxu0
      %v8130 = vadd.f32 %v8116, %v8129
      %v8131 = vpop.f32.mrf.mxu0
      %v8132 = vadd.f32 %v8118, %v8131
      %8133 = vdwg.mxu0
      %8134 = vmatpush.bf16.msra.mxu0 %v5115
      %8135 = vmatpush.bf16.msra.mxu0 %v5111
      %8136 = vmatpush.bf16.msra.mxu0 %v5107
      %8137 = vmatpush.bf16.msra.mxu0 %v5103
      %8138 = vmatpush.bf16.msra.mxu0 %v5099
      %8139 = vmatpush.bf16.msra.mxu0 %v5095
      %8140 = vmatpush.bf16.msra.mxu0 %v5091
      %8141 = vmatpush.bf16.msra.mxu0 %v5087
      %8142 = vmatmul.bf16.gmra.mxu0 %v1359
      %v8143 = vpop.f32.mrf.mxu0
      %v8144 = vadd.f32 %v8130, %v8143
      %v8145 = vpop.f32.mrf.mxu0
      %v8146 = vadd.f32 %v8132, %v8145
      %8147 = vdwg.mxu0
      %8148 = vmatpush.bf16.msra.mxu0 %v5147
      %8149 = vmatpush.bf16.msra.mxu0 %v5143
      %8150 = vmatpush.bf16.msra.mxu0 %v5139
      %8151 = vmatpush.bf16.msra.mxu0 %v5135
      %8152 = vmatpush.bf16.msra.mxu0 %v5131
      %8153 = vmatpush.bf16.msra.mxu0 %v5127
      %8154 = vmatpush.bf16.msra.mxu0 %v5123
      %8155 = vmatpush.bf16.msra.mxu0 %v5119
      %8156 = vmatmul.bf16.gmra.mxu0 %v1360
      %v8157 = vpop.f32.mrf.mxu0
      %v8158 = vadd.f32 %v8144, %v8157
      %v8159 = vpop.f32.mrf.mxu0
      %v8160 = vadd.f32 %v8146, %v8159
      %8161 = vdwg.mxu0
      %8162 = vmatpush.bf16.msra.mxu0 %v5179
      %8163 = vmatpush.bf16.msra.mxu0 %v5175
      %8164 = vmatpush.bf16.msra.mxu0 %v5171
      %8165 = vmatpush.bf16.msra.mxu0 %v5167
      %8166 = vmatpush.bf16.msra.mxu0 %v5163
      %8167 = vmatpush.bf16.msra.mxu0 %v5159
      %8168 = vmatpush.bf16.msra.mxu0 %v5155
      %8169 = vmatpush.bf16.msra.mxu0 %v5151
      %8170 = vmatmul.bf16.gmra.mxu0 %v1361
      %v8171 = vpop.f32.mrf.mxu0
      %v8172 = vadd.f32 %v8158, %v8171
      %v8173 = vpop.f32.mrf.mxu0
      %v8174 = vadd.f32 %v8160, %v8173
      %8175 = vdwg.mxu0
      %8176 = vmatpush.bf16.msra.mxu0 %v5211
      %8177 = vmatpush.bf16.msra.mxu0 %v5207
      %8178 = vmatpush.bf16.msra.mxu0 %v5203
      %8179 = vmatpush.bf16.msra.mxu0 %v5199
      %8180 = vmatpush.bf16.msra.mxu0 %v5195
      %8181 = vmatpush.bf16.msra.mxu0 %v5191
      %8182 = vmatpush.bf16.msra.mxu0 %v5187
      %8183 = vmatpush.bf16.msra.mxu0 %v5183
      %8184 = vmatmul.bf16.gmra.mxu0 %v1362
      %v8185 = vpop.f32.mrf.mxu0
      %v8186 = vadd.f32 %v8172, %v8185
      %v8187 = vpop.f32.mrf.mxu0
      %v8188 = vadd.f32 %v8174, %v8187
      %8189 = vdwg.mxu0
      %8190 = vmatpush.bf16.msra.mxu0 %v5243
      %8191 = vmatpush.bf16.msra.mxu0 %v5239
      %8192 = vmatpush.bf16.msra.mxu0 %v5235
      %8193 = vmatpush.bf16.msra.mxu0 %v5231
      %8194 = vmatpush.bf16.msra.mxu0 %v5227
      %8195 = vmatpush.bf16.msra.mxu0 %v5223
      %8196 = vmatpush.bf16.msra.mxu0 %v5219
      %8197 = vmatpush.bf16.msra.mxu0 %v5215
      %8198 = vmatmul.bf16.gmra.mxu0 %v1363
      %v8199 = vpop.f32.mrf.mxu0
      %v8200 = vadd.f32 %v8186, %v8199
      %v8201 = vpop.f32.mrf.mxu0
      %v8202 = vadd.f32 %v8188, %v8201
      %8203 = vdwg.mxu0
      %8204 = vmatpush.bf16.msra.mxu0 %v5275
      %8205 = vmatpush.bf16.msra.mxu0 %v5271
      %8206 = vmatpush.bf16.msra.mxu0 %v5267
      %8207 = vmatpush.bf16.msra.mxu0 %v5263
      %8208 = vmatpush.bf16.msra.mxu0 %v5259
      %8209 = vmatpush.bf16.msra.mxu0 %v5255
      %8210 = vmatpush.bf16.msra.mxu0 %v5251
      %8211 = vmatpush.bf16.msra.mxu0 %v5247
      %8212 = vmatmul.bf16.gmra.mxu0 %v1364
      %v8213 = vpop.f32.mrf.mxu0
      %v8214 = vadd.f32 %v8200, %v8213
      %v8215 = vpop.f32.mrf.mxu0
      %v8216 = vadd.f32 %v8202, %v8215
      %8217 = vdwg.mxu0
      %8218 = vmatpush.bf16.msra.mxu0 %v5307
      %8219 = vmatpush.bf16.msra.mxu0 %v5303
      %8220 = vmatpush.bf16.msra.mxu0 %v5299
      %8221 = vmatpush.bf16.msra.mxu0 %v5295
      %8222 = vmatpush.bf16.msra.mxu0 %v5291
      %8223 = vmatpush.bf16.msra.mxu0 %v5287
      %8224 = vmatpush.bf16.msra.mxu0 %v5283
      %8225 = vmatpush.bf16.msra.mxu0 %v5279
      %8226 = vmatmul.bf16.gmra.mxu0 %v1365
      %v8227 = vpop.f32.mrf.mxu0
      %v8228 = vadd.f32 %v8214, %v8227
      %v8229 = vpop.f32.mrf.mxu0
      %v8230 = vadd.f32 %v8216, %v8229
      %8231 = vdwg.mxu0
      %8232 = vmatpush.bf16.msra.mxu0 %v5339
      %8233 = vmatpush.bf16.msra.mxu0 %v5335
      %8234 = vmatpush.bf16.msra.mxu0 %v5331
      %8235 = vmatpush.bf16.msra.mxu0 %v5327
      %8236 = vmatpush.bf16.msra.mxu0 %v5323
      %8237 = vmatpush.bf16.msra.mxu0 %v5319
      %8238 = vmatpush.bf16.msra.mxu0 %v5315
      %8239 = vmatpush.bf16.msra.mxu0 %v5311
      %8240 = vmatmul.bf16.gmra.mxu0 %v1366
      %v8241 = vpop.f32.mrf.mxu0
      %v8242 = vadd.f32 %v8228, %v8241
      %v8243 = vpop.f32.mrf.mxu0
      %v8244 = vadd.f32 %v8230, %v8243
      %8245 = vdwg.mxu0
      %8246 = vmatpush.bf16.msra.mxu0 %v5371
      %8247 = vmatpush.bf16.msra.mxu0 %v5367
      %8248 = vmatpush.bf16.msra.mxu0 %v5363
      %8249 = vmatpush.bf16.msra.mxu0 %v5359
      %8250 = vmatpush.bf16.msra.mxu0 %v5355
      %8251 = vmatpush.bf16.msra.mxu0 %v5351
      %8252 = vmatpush.bf16.msra.mxu0 %v5347
      %8253 = vmatpush.bf16.msra.mxu0 %v5343
      %8254 = vmatmul.bf16.gmra.mxu0 %v1367
      %v8255 = vpop.f32.mrf.mxu0
      %v8256 = vadd.f32 %v8242, %v8255
      %v8257 = vpop.f32.mrf.mxu0
      %v8258 = vadd.f32 %v8244, %v8257
      %8259 = vdwg.mxu0
      %8260 = vmatpush.bf16.msra.mxu0 %v5403
      %8261 = vmatpush.bf16.msra.mxu0 %v5399
      %8262 = vmatpush.bf16.msra.mxu0 %v5395
      %8263 = vmatpush.bf16.msra.mxu0 %v5391
      %8264 = vmatpush.bf16.msra.mxu0 %v5387
      %8265 = vmatpush.bf16.msra.mxu0 %v5383
      %8266 = vmatpush.bf16.msra.mxu0 %v5379
      %8267 = vmatpush.bf16.msra.mxu0 %v5375
      %8268 = vmatmul.bf16.gmra.mxu0 %v1368
      %v8269 = vpop.f32.mrf.mxu0
      %v8270 = vadd.f32 %v8256, %v8269
      %v8271 = vpop.f32.mrf.mxu0
      %v8272 = vadd.f32 %v8258, %v8271
      %8273 = vdwg.mxu0
      %8274 = vmatpush.bf16.msra.mxu0 %v5435
      %8275 = vmatpush.bf16.msra.mxu0 %v5431
      %8276 = vmatpush.bf16.msra.mxu0 %v5427
      %8277 = vmatpush.bf16.msra.mxu0 %v5423
      %8278 = vmatpush.bf16.msra.mxu0 %v5419
      %8279 = vmatpush.bf16.msra.mxu0 %v5415
      %8280 = vmatpush.bf16.msra.mxu0 %v5411
      %8281 = vmatpush.bf16.msra.mxu0 %v5407
      %8282 = vmatmul.bf16.gmra.mxu0 %v1369
      %v8283 = vpop.f32.mrf.mxu0
      %v8284 = vadd.f32 %v8270, %v8283
      %v8285 = vpop.f32.mrf.mxu0
      %v8286 = vadd.f32 %v8272, %v8285
      %8287 = vdwg.mxu0
      %8288 = vmatpush.bf16.msra.mxu0 %v5467
      %8289 = vmatpush.bf16.msra.mxu0 %v5463
      %8290 = vmatpush.bf16.msra.mxu0 %v5459
      %8291 = vmatpush.bf16.msra.mxu0 %v5455
      %8292 = vmatpush.bf16.msra.mxu0 %v5451
      %8293 = vmatpush.bf16.msra.mxu0 %v5447
      %8294 = vmatpush.bf16.msra.mxu0 %v5443
      %8295 = vmatpush.bf16.msra.mxu0 %v5439
      %8296 = vmatmul.bf16.gmra.mxu0 %v1370
      %v8297 = vpop.f32.mrf.mxu0
      %v8298 = vadd.f32 %v8284, %v8297
      %v8299 = vpop.f32.mrf.mxu0
      %v8300 = vadd.f32 %v8286, %v8299
      %8301 = vdwg.mxu0
      %8302 = vmatpush.bf16.msra.mxu0 %v5499
      %8303 = vmatpush.bf16.msra.mxu0 %v5495
      %8304 = vmatpush.bf16.msra.mxu0 %v5491
      %8305 = vmatpush.bf16.msra.mxu0 %v5487
      %8306 = vmatpush.bf16.msra.mxu0 %v5483
      %8307 = vmatpush.bf16.msra.mxu0 %v5479
      %8308 = vmatpush.bf16.msra.mxu0 %v5475
      %8309 = vmatpush.bf16.msra.mxu0 %v5471
      %8310 = vmatmul.bf16.gmra.mxu0 %v1371
      %v8311 = vpop.f32.mrf.mxu0
      %v8312 = vadd.f32 %v8298, %v8311
      %v8313 = vpop.f32.mrf.mxu0
      %v8314 = vadd.f32 %v8300, %v8313
      %8315 = vdwg.mxu0
      %vm8316 = vcmask 1040384
      %v8317 = vsel %vm8316, %v6970, 0.0
      %v8318 = vadd.f32 %v6968, %v8317
      %v8319 = vrot.slane %v8318, 4
      %v8320 = vadd.f32 %v8318, %v8319
      %v8321 = vrot.slane %v8320, 2
      %v8322 = vadd.f32 %v8320, %v8321
      %v8323 = vrot.slane %v8322, 1
      %v8324 = vadd.f32 %v8322, %v8323
      %v8325 = vsel %vm8316, %v7418, 0.0
      %v8326 = vadd.f32 %v7416, %v8325
      %v8327 = vrot.slane %v8326, 4
      %v8328 = vadd.f32 %v8326, %v8327
      %v8329 = vrot.slane %v8328, 2
      %v8330 = vadd.f32 %v8328, %v8329
      %v8331 = vrot.slane %v8330, 1
      %v8332 = vadd.f32 %v8330, %v8331
      %v8333 = vsel %vm8316, %v7866, 0.0
      %v8334 = vadd.f32 %v7864, %v8333
      %v8335 = vrot.slane %v8334, 4
      %v8336 = vadd.f32 %v8334, %v8335
      %v8337 = vrot.slane %v8336, 2
      %v8338 = vadd.f32 %v8336, %v8337
      %v8339 = vrot.slane %v8338, 1
      %v8340 = vadd.f32 %v8338, %v8339
      %v8341 = vsel %vm8316, %v8314, 0.0
      %v8342 = vadd.f32 %v8312, %v8341
      %v8343 = vrot.slane %v8342, 4
      %v8344 = vadd.f32 %v8342, %v8343
      %v8345 = vrot.slane %v8344, 2
      %v8346 = vadd.f32 %v8344, %v8345
      %v8347 = vrot.slane %v8346, 1
      %v8348 = vadd.f32 %v8346, %v8347
      %v8349 = vrcp.pop 9.0
      %v8350 = vmul.f32 9.0, %v8349
      %v8351 = vsub.f32 1.0, %v8350
      %v8352 = vmul.f32 %v8349, %v8351
      %v8353 = vadd.f32 %v8349, %v8352
      %vm8354 = vweird.f32 %v8349
      %v8355 = vsel %vm8354, %v8349, %v8353
      %v8356 = vmul.f32 %v8324, %v8355
      %v8357 = vmul.f32 %v8332, %v8355
      %v8358 = vmul.f32 %v8340, %v8355
      %v8359 = vmul.f32 %v8348, %v8355
      %v8360 = vmul.f32 %v6968, %v6968
      %v8361 = vmul.f32 %v7416, %v7416
      %v8362 = vmul.f32 %v7864, %v7864
      %v8363 = vmul.f32 %v8312, %v8312
      %v8364 = vmul.f32 %v6970, %v6970
      %v8365 = vmul.f32 %v7418, %v7418
      %v8366 = vmul.f32 %v7866, %v7866
      %v8367 = vmul.f32 %v8314, %v8314
      %v8368 = vsel %vm8316, %v8364, 0.0
      %v8369 = vadd.f32 %v8360, %v8368
      %v8370 = vrot.slane %v8369, 4
      %v8371 = vadd.f32 %v8369, %v8370
      %v8372 = vrot.slane %v8371, 2
      %v8373 = vadd.f32 %v8371, %v8372
      %v8374 = vrot.slane %v8373, 1
      %v8375 = vadd.f32 %v8373, %v8374
      %v8376 = vsel %vm8316, %v8365, 0.0
      %v8377 = vadd.f32 %v8361, %v8376
      %v8378 = vrot.slane %v8377, 4
      %v8379 = vadd.f32 %v8377, %v8378
      %v8380 = vrot.slane %v8379, 2
      %v8381 = vadd.f32 %v8379, %v8380
      %v8382 = vrot.slane %v8381, 1
      %v8383 = vadd.f32 %v8381, %v8382
      %v8384 = vsel %vm8316, %v8366, 0.0
      %v8385 = vadd.f32 %v8362, %v8384
      %v8386 = vrot.slane %v8385, 4
      %v8387 = vadd.f32 %v8385, %v8386
      %v8388 = vrot.slane %v8387, 2
      %v8389 = vadd.f32 %v8387, %v8388
      %v8390 = vrot.slane %v8389, 1
      %v8391 = vadd.f32 %v8389, %v8390
      %v8392 = vsel %vm8316, %v8367, 0.0
      %v8393 = vadd.f32 %v8363, %v8392
      %v8394 = vrot.slane %v8393, 4
      %v8395 = vadd.f32 %v8393, %v8394
      %v8396 = vrot.slane %v8395, 2
      %v8397 = vadd.f32 %v8395, %v8396
      %v8398 = vrot.slane %v8397, 1
      %v8399 = vadd.f32 %v8397, %v8398
      %v8400 = vmul.f32 %v8375, %v8355
      %v8401 = vmul.f32 %v8383, %v8355
      %v8402 = vmul.f32 %v8391, %v8355
      %v8403 = vmul.f32 %v8399, %v8355
      %v8404 = vmul.f32 %v8356, %v8356
      %v8405 = vmul.f32 %v8357, %v8357
      %v8406 = vmul.f32 %v8358, %v8358
      %v8407 = vmul.f32 %v8359, %v8359
      %v8408 = vsub.f32 %v8400, %v8404
      %v8409 = vsub.f32 %v8401, %v8405
      %v8410 = vsub.f32 %v8402, %v8406
      %v8411 = vsub.f32 %v8403, %v8407
      %v8412 = vmax.f32 %v8408, 0.0
      %v8413 = vmax.f32 %v8409, 0.0
      %v8414 = vmax.f32 %v8410, 0.0
      %v8415 = vmax.f32 %v8411, 0.0
      %v8416 = vsub.f32 %v6968, %v8356
      %v8417 = vsub.f32 %v7416, %v8357
      %v8418 = vsub.f32 %v7864, %v8358
      %v8419 = vsub.f32 %v8312, %v8359
      %v8420 = vsub.f32 %v6970, %v8356
      %v8421 = vsub.f32 %v7418, %v8357
      %v8422 = vsub.f32 %v7866, %v8358
      %v8423 = vsub.f32 %v8314, %v8359
      %v8424 = vadd.f32 %v8412, 1e-05
      %v8425 = vadd.f32 %v8413, 1e-05
      %v8426 = vadd.f32 %v8414, 1e-05
      %v8427 = vadd.f32 %v8415, 1e-05
      %v8428 = vrsqrt.pop %v8424
      %v8429 = vmul.f32 %v8428, %v8424
      %v8430 = vmul.f32 %v8429, %v8428
      %v8431 = vmul.f32 0.5, %v8430
      %v8432 = vsub.f32 1.5, %v8431
      %v8433 = vmul.f32 %v8428, %v8432
      %vm8434 = vweird.f32 %v8424
      %vm8435 = vweird.f32 %v8428
      %vm8436 = vmor %vm8434, %vm8435
      %v8437 = vsel %vm8436, %v8428, %v8433
      %v8438 = vrsqrt.pop %v8425
      %v8439 = vmul.f32 %v8438, %v8425
      %v8440 = vmul.f32 %v8439, %v8438
      %v8441 = vmul.f32 0.5, %v8440
      %v8442 = vsub.f32 1.5, %v8441
      %v8443 = vmul.f32 %v8438, %v8442
      %vm8444 = vweird.f32 %v8425
      %vm8445 = vweird.f32 %v8438
      %vm8446 = vmor %vm8444, %vm8445
      %v8447 = vsel %vm8446, %v8438, %v8443
      %v8448 = vrsqrt.pop %v8426
      %v8449 = vmul.f32 %v8448, %v8426
      %v8450 = vmul.f32 %v8449, %v8448
      %v8451 = vmul.f32 0.5, %v8450
      %v8452 = vsub.f32 1.5, %v8451
      %v8453 = vmul.f32 %v8448, %v8452
      %vm8454 = vweird.f32 %v8426
      %vm8455 = vweird.f32 %v8448
      %vm8456 = vmor %vm8454, %vm8455
      %v8457 = vsel %vm8456, %v8448, %v8453
      %v8458 = vrsqrt.pop %v8427
      %v8459 = vmul.f32 %v8458, %v8427
      %v8460 = vmul.f32 %v8459, %v8458
      %v8461 = vmul.f32 0.5, %v8460
      %v8462 = vsub.f32 1.5, %v8461
      %v8463 = vmul.f32 %v8458, %v8462
      %vm8464 = vweird.f32 %v8427
      %vm8465 = vweird.f32 %v8458
      %vm8466 = vmor %vm8464, %vm8465
      %v8467 = vsel %vm8466, %v8458, %v8463
      %v8468 = vmul.f32 %v8416, %v8437
      %v8469 = vmul.f32 %v8417, %v8447
      %v8470 = vmul.f32 %v8418, %v8457
      %v8471 = vmul.f32 %v8419, %v8467
      %v8472 = vmul.f32 %v8420, %v8437
      %v8473 = vmul.f32 %v8421, %v8447
      %v8474 = vmul.f32 %v8422, %v8457
      %v8475 = vmul.f32 %v8423, %v8467
      %vm8476 = vcmp.ge.f32.partialorder %v8468, 0.0
      %vm8477 = vcmp.ge.f32.partialorder %v8469, 0.0
      %vm8478 = vcmp.ge.f32.partialorder %v8470, 0.0
      %vm8479 = vcmp.ge.f32.partialorder %v8471, 0.0
      %vm8480 = vcmp.ge.f32.partialorder %v8472, 0.0
      %vm8481 = vcmp.ge.f32.partialorder %v8473, 0.0
      %vm8482 = vcmp.ge.f32.partialorder %v8474, 0.0
      %vm8483 = vcmp.ge.f32.partialorder %v8475, 0.0
      %v8484 = vmul.f32 %v8468, 0.2
      %v8485 = vmul.f32 %v8469, 0.2
      %v8486 = vmul.f32 %v8470, 0.2
      %v8487 = vmul.f32 %v8471, 0.2
      %v8488 = vmul.f32 %v8472, 0.2
      %v8489 = vmul.f32 %v8473, 0.2
      %v8490 = vmul.f32 %v8474, 0.2
      %v8491 = vmul.f32 %v8475, 0.2
      %v8492 = vsel %vm8476, %v8468, %v8484
      %v8493 = vsel %vm8477, %v8469, %v8485
      %v8494 = vsel %vm8478, %v8470, %v8486
      %v8495 = vsel %vm8479, %v8471, %v8487
      %v8496 = vsel %vm8480, %v8472, %v8488
      %v8497 = vsel %vm8481, %v8473, %v8489
      %v8498 = vsel %vm8482, %v8474, %v8490
      %v8499 = vsel %vm8483, %v8475, %v8491
      %v8500 = vpack.c.bf16 %v8493, %v8492
      %v8501 = vpack.c.bf16 %v8495, %v8494
      %v8502 = vpack.c.bf16 %v8497, %v8496
      %v8503 = vpack.c.bf16 %v8499, %v8498
      %8504 = vst [vmem:[%s186] sm:$0xff] %v8500
      %8505 = vst [vmem:[%s186 + $0x8] sm:$0xff] %v8501
      %vm8506 = vcmask 1040384
      %vm8507 = vsmask.f32 256
      %vm8508 = vmand %vm8506, %vm8507
      %vm8509 = vcmask 1044484
      %vm8510 = vsmask.f32 4352
      %vm8511 = vmand %vm8509, %vm8510
      %vm8512 = vmor %vm8511, %vm8508
      %v8513 = vld [vmem:[%s186 + $0x10] sm:$0x11]
      %v8514 = vsel %vm8512, %v8502, %v8513
      %8515 = vst [vmem:[%s186 + $0x10] sm:$0x11] %v8514
      %v8516 = vld [vmem:[%s186 + $0x18] sm:$0x11]
      %v8517 = vsel %vm8512, %v8503, %v8516
      %8518 = vst [vmem:[%s186 + $0x18] sm:$0x11] %v8517
      %s8519 = smul.u32 2, %s18
      %p8520 = scmp.lt.s32.totalorder %s17, 1
      %s8521 = scalar_select %p8520, %s17, 1
      %p8522 = scmp.lt.s32.totalorder %s8519, 1
      %s8523 = scalar_select %p8522, %s8519, 1
      %s8524 = smul.addr %s8523, 4
      %s8525 = smul.addr %s8521, 8
      %s8526 = sadd.s32 %s8524, %s8525
      %s8527 = smul.addr %s8526, 4
      %s8528 = scalar_lea.vmem %s2, %s8527
      // Predicated region
      $region29: #{discriminator.8} parent=27 // pred_check
        %p8529 = pneg %p94
      $region30: #{discriminator.8} parent=27 // pred_check_branch
        %8531 = sbr.rel (%p8529) target = $region32
      $region31: #{discriminator.8} parent=27 // pred_region
        %s8532 = smul.u32 2, %s18
      $region32: #{discriminator.8} parent=27 // pred_fallthru
        _
    $region28: #{discriminator.8} parent=5 // pred_fallthru
      _
    %p8533 = scmp.le.s32.totalorder 2, %s8
    // Predicated region
    $region33: #{discriminator.8} parent=5 // pred_check
      %p8534 = pneg %p8533
    $region34: #{discriminator.8} parent=5 // pred_check_branch
      %8536 = sbr.rel (%p8534) target = $region36
    $region35: #{discriminator.8} parent=5 // pred_region
      %s8537 = ssub.s32 %s8, 2
      // Predicated region
      $region37: #{discriminator.8} parent=35 // pred_check
        %p8538 = pneg %p100
      $region38: #{discriminator.8} parent=35 // pred_check_branch
        %8540 = sbr.rel (%p8538) target = $region40
      $region39: #{discriminator.8} parent=35 // pred_region
        %s8541 = smul.u32 2, %s20
        %p8542 = scmp.lt.s32.totalorder %s19, 1
        %s8543 = scalar_select %p8542, %s19, 1
        %p8544 = scmp.lt.s32.totalorder %s8541, 1
        %s8545 = scalar_select %p8544, %s8541, 1
        %s8546 = smul.addr %s8545, 4
        %s8547 = smul.addr %s8543, 8
        %s8548 = sadd.s32 %s8546, %s8547
        %s8549 = smul.addr %s8548, 4
        %s8550 = scalar_lea.vmem %s2, %s8549
      $region40: #{discriminator.8} parent=35 // pred_fallthru
        _
    $region36: #{discriminator.8} parent=5 // pred_fallthru
      _
  $region6: #{discriminator.8} parent=0 // loop_footer
    %s12 = sadd.s32 1, %s8
  $region7: #{discriminator.8} parent=0 // loop_footer_branch
    %7 = sbr.rel target = $region3
  $region8: #{discriminator.8} parent=0 // loop_exit
    _

</llo_original>
